<compile_context>
chip_gen: v6e
topology: v6e:2x2x1
jax: 0.10.0
libtpu: 0.0.40
codegen_flags: <defaults>
</compile_context>

<pallas_src>
import functools

import jax
import jax.numpy as jnp
from jax.experimental import pallas as pl
from jax.experimental.pallas import tpu as pltpu

# Keep f32 matmul semantics identical between the Pallas kernels and the pure-JAX reference.
jax.config.update("jax_default_matmul_precision", "highest")


# ----------------------------------------------------------------------------------------------
# Kernels
# ----------------------------------------------------------------------------------------------
def _attn_kernel(x_ref, g_ref, b_ref, wq_ref, wk_ref, wv_ref, wo_ref, bo_ref, o_ref,
                 *, heads, scale, eps):
    """PreNorm + multi-head attention + output projection + residual for one batch element."""
    x = x_ref[0].astype(jnp.float32)                          # (n, dim)

    # LayerNorm over channels.
    mu = jnp.mean(x, axis=-1, keepdims=True)
    xc = x - mu
    var = jnp.mean(xc * xc, axis=-1, keepdims=True)
    y = xc * jax.lax.rsqrt(var + eps) * g_ref[...] + b_ref[...]

    proj = jnp.zeros_like(x)
    for h in range(heads):                                    # heads is small and static
        q = jnp.dot(y, wq_ref[h], preferred_element_type=jnp.float32)
        k = jnp.dot(y, wk_ref[h], preferred_element_type=jnp.float32)
        v = jnp.dot(y, wv_ref[h], preferred_element_type=jnp.float32)
        # q @ k^T without materialising a transpose.
        s = jax.lax.dot_general(q, k, (((1,), (1,)), ((), ())),
                                preferred_element_type=jnp.float32) * scale
        m = jnp.max(s, axis=-1, keepdims=True)
        e = jnp.exp(s - m)
        p = e / jnp.sum(e, axis=-1, keepdims=True)
        oh = jnp.dot(p, v, preferred_element_type=jnp.float32)
        # concat over heads followed by the output Linear == sum of per-head projections.
        proj = proj + jnp.dot(oh, wo_ref[h], preferred_element_type=jnp.float32)

    o_ref[0] = (x + proj + bo_ref[...]).astype(o_ref.dtype)


def _ffn_kernel(x_ref, g_ref, b_ref, dww_ref, dwb_ref, pw_ref, pwb_ref,
                bng_ref, bnb_ref, w2_ref, b2_ref, w3_ref, b3_ref,
                o_ref, ypad_ref, *, H, W, pad_rows, eps_ln, eps_bn):
    """PreNorm + depthwise 3x3 + 1x1(->256) + BN + 1x1(->512) + GELU + 1x1(->C) + residuals."""
    M, C = x_ref.shape
    x = x_ref[...].astype(jnp.float32)                        # (rows = batch*H*W, C)

    # PreNorm LayerNorm over channels.
    mu = jnp.mean(x, axis=-1, keepdims=True)
    xc = x - mu
    var = jnp.mean(xc * xc, axis=-1, keepdims=True)
    y = xc * jax.lax.rsqrt(var + eps_ln) * g_ref[...] + b_ref[...]

    # Depthwise 3x3 conv (padding=1, groups=C) on rows flattened as (batch, i, j) row-major.
    # Shifted reads come from a zero-padded VMEM scratch; image-boundary masks also kill any
    # read that would cross a batch-element boundary.
    ypad_ref[...] = jnp.zeros(ypad_ref.shape, jnp.float32)
    ypad_ref[pad_rows:pad_rows + M, :] = y                    # aligned store (pad_rows % 8 == 0)
    row = jax.lax.broadcasted_iota(jnp.int32, (M, 1), 0)
    ii = (row // W) % H
    jj = row % W
    dw = dww_ref[...]                                         # (9, C), taps row-major (ky, kx)
    acc = jnp.zeros((M, C), jnp.float32)
    for t in range(9):
        oy = t // 3 - 1
        ox = t % 3 - 1
        shift = oy * W + ox
        src = ypad_ref[pad_rows + shift:pad_rows + shift + M, :]
        valid = ((ii + oy >= 0) & (ii + oy < H) & (jj + ox >= 0) & (jj + ox < W))
        acc = acc + jnp.where(valid, src, 0.0) * dw[t:t + 1, :]
    y_dw = acc + dwb_ref[...]

    # Pointwise 1x1 conv: C -> 256 (channels on the lane axis -> MXU matmul).
    h1 = jnp.dot(y_dw, pw_ref[...], preferred_element_type=jnp.float32) + pwb_ref[...]

    # BatchNorm2d(256): training-mode batch statistics over (N, H, W) == over all rows.
    mu1 = jnp.mean(h1, axis=0, keepdims=True)
    d1 = h1 - mu1
    var1 = jnp.mean(d1 * d1, axis=0, keepdims=True)
    h1 = d1 * jax.lax.rsqrt(var1 + eps_bn) * bng_ref[...] + bnb_ref[...]

    # 1x1 conv 256 -> 512, GELU, 1x1 conv 512 -> C.
    h2 = jnp.dot(h1, w2_ref[...], preferred_element_type=jnp.float32) + b2_ref[...]
    # TODO(synk): nn.GELU defaults to the exact erf form; the tanh approximation is used here
    # (erf has no guaranteed Mosaic lowering) and identically in the in-script reference.
    h2 = 0.5 * h2 * (1.0 + jnp.tanh(0.7978845608028654 * (h2 + 0.044715 * h2 * h2 * h2)))
    h3 = jnp.dot(h2, w3_ref[...], preferred_element_type=jnp.float32) + b3_ref[...]

    # FeedForward's internal residual (y + Net(y)) plus the Transformer residual (x + ...).
    o_ref[...] = (x + y + h3).astype(o_ref.dtype)


# ----------------------------------------------------------------------------------------------
# Wrappers
# ----------------------------------------------------------------------------------------------
def attention_block(x, p):
    b, n, dim = x.shape
    heads, _, dh = p["wq"].shape
    kern = functools.partial(_attn_kernel, heads=heads, scale=dh ** -0.5, eps=1e-5)
    return pl.pallas_call(
        kern,
        out_shape=jax.ShapeDtypeStruct((b, n, dim), x.dtype),
        grid_spec=pltpu.PrefetchScalarGridSpec(
            num_scalar_prefetch=0,
            grid=(b,),
            in_specs=[
                pl.BlockSpec((1, n, dim), lambda i: (i, 0, 0)),
                pl.BlockSpec((1, dim), lambda i: (0, 0)),
                pl.BlockSpec((1, dim), lambda i: (0, 0)),
                pl.BlockSpec((heads, dim, dh), lambda i: (0, 0, 0)),
                pl.BlockSpec((heads, dim, dh), lambda i: (0, 0, 0)),
                pl.BlockSpec((heads, dim, dh), lambda i: (0, 0, 0)),
                pl.BlockSpec((heads, dh, dim), lambda i: (0, 0, 0)),
                pl.BlockSpec((1, dim), lambda i: (0, 0)),
            ],
            out_specs=pl.BlockSpec((1, n, dim), lambda i: (i, 0, 0)),
        ),
        compiler_params=pltpu.CompilerParams(dimension_semantics=("parallel",)),
    )(x, p["ln_g"], p["ln_b"], p["wq"], p["wk"], p["wv"], p["wo"], p["bo"])


def ffn_block(x, p, H, W):
    b, n, dim = x.shape
    assert n == H * W
    M = b * n
    c1 = p["pw_w"].shape[1]
    c2 = p["w2"].shape[1]
    pad_rows = 16                      # >= W + 1 halo, multiple of 8 so the scratch store is aligned
    xr = x.reshape(M, dim)             # free reshape: tokens stay channel-last, no transposes
    kern = functools.partial(_ffn_kernel, H=H, W=W, pad_rows=pad_rows,
                             eps_ln=1e-5, eps_bn=1e-5)
    # TODO(synk): BatchNorm couples all rows -> single fused grid step; a two-pass
    # (stats, then normalize) kernel would restore multi-step parallelism at larger scale.
    out = pl.pallas_call(
        kern,
        out_shape=jax.ShapeDtypeStruct((M, dim), x.dtype),
        grid_spec=pltpu.PrefetchScalarGridSpec(
            num_scalar_prefetch=0,
            grid=(1,),
            in_specs=[
                pl.BlockSpec((M, dim), lambda i: (0, 0)),     # x rows
                pl.BlockSpec((1, dim), lambda i: (0, 0)),     # ln gamma
                pl.BlockSpec((1, dim), lambda i: (0, 0)),     # ln beta
                pl.BlockSpec((9, dim), lambda i: (0, 0)),     # depthwise taps (9, C)
                pl.BlockSpec((1, dim), lambda i: (0, 0)),     # depthwise bias
                pl.BlockSpec((dim, c1), lambda i: (0, 0)),    # pointwise C->256
                pl.BlockSpec((1, c1), lambda i: (0, 0)),
                pl.BlockSpec((1, c1), lambda i: (0, 0)),      # bn gamma
                pl.BlockSpec((1, c1), lambda i: (0, 0)),      # bn beta
                pl.BlockSpec((c1, c2), lambda i: (0, 0)),     # 256->512
                pl.BlockSpec((1, c2), lambda i: (0, 0)),
                pl.BlockSpec((c2, dim), lambda i: (0, 0)),    # 512->C
                pl.BlockSpec((1, dim), lambda i: (0, 0)),
            ],
            out_specs=pl.BlockSpec((M, dim), lambda i: (0, 0)),
            scratch_shapes=[pltpu.VMEM((M + 2 * pad_rows, dim), jnp.float32)],
        ),
        compiler_params=pltpu.CompilerParams(dimension_semantics=("arbitrary",)),
    )(xr, p["ln_g"], p["ln_b"], p["dw_w"], p["dw_b"], p["pw_w"], p["pw_b"],
      p["bn_g"], p["bn_b"], p["w2"], p["b2"], p["w3"], p["b3"])
    return out.reshape(b, n, dim)


def transformer_forward(x, params, H, W):
    for layer in params:
        x = attention_block(x, layer["attn"])
        x = ffn_block(x, layer["ffn"], H, W)
    return x


# ----------------------------------------------------------------------------------------------
# Pure-JAX reference of the same forward pass
# ----------------------------------------------------------------------------------------------
def _layer_norm_ref(x, g, b, eps=1e-5):
    mu = jnp.mean(x, axis=-1, keepdims=True)
    var = jnp.mean((x - mu) ** 2, axis=-1, keepdims=True)
    return (x - mu) * jax.lax.rsqrt(var + eps) * g + b


def _attention_ref(x, p):
    y = _layer_norm_ref(x, p["ln_g"], p["ln_b"])
    dh = p["wq"].shape[-1]
    q = jnp.einsum("bnd,hde->bhne", y, p["wq"])
    k = jnp.einsum("bnd,hde->bhne", y, p["wk"])
    v = jnp.einsum("bnd,hde->bhne", y, p["wv"])
    s = jnp.einsum("bhne,bhme->bhnm", q, k) * dh ** -0.5
    a = jax.nn.softmax(s, axis=-1)
    o = jnp.einsum("bhnm,bhme->bhne", a, v)
    return x + jnp.einsum("bhne,hed->bnd", o, p["wo"]) + p["bo"]


def _ffn_ref(x, p, H, W):
    b, n, dim = x.shape
    y = _layer_norm_ref(x, p["ln_g"], p["ln_b"])
    img = jnp.transpose(y.reshape(b, H, W, dim), (0, 3, 1, 2))            # 'b (w h) c -> b c w h'
    wd = jnp.transpose(p["dw_w"], (1, 0)).reshape(dim, 1, 3, 3)           # (C,1,3,3) depthwise
    z = jax.lax.conv_general_dilated(
        img, wd, window_strides=(1, 1), padding=((1, 1), (1, 1)),
        dimension_numbers=("NCHW", "OIHW", "NCHW"), feature_group_count=dim,
        precision=jax.lax.Precision.HIGHEST)
    z = z + p["dw_b"].reshape(1, dim, 1, 1)
    h1 = jnp.einsum("nchw,co->nohw", z, p["pw_w"]) + p["pw_b"].reshape(1, -1, 1, 1)
    mu = jnp.mean(h1, axis=(0, 2, 3), keepdims=True)                      # BN, batch stats
    var = jnp.mean((h1 - mu) ** 2, axis=(0, 2, 3), keepdims=True)
    h1 = (h1 - mu) * jax.lax.rsqrt(var + 1e-5) * p["bn_g"].reshape(1, -1, 1, 1) \
        + p["bn_b"].reshape(1, -1, 1, 1)
    h2 = jnp.einsum("nchw,co->nohw", h1, p["w2"]) + p["b2"].reshape(1, -1, 1, 1)
    h2 = 0.5 * h2 * (1.0 + jnp.tanh(0.7978845608028654 * (h2 + 0.044715 * h2 ** 3)))
    h3 = jnp.einsum("nchw,co->nohw", h2, p["w3"]) + p["b3"].reshape(1, -1, 1, 1)
    h3 = jnp.transpose(h3, (0, 2, 3, 1)).reshape(b, n, dim)               # 'b c w h -> b (w h) c'
    return x + y + h3


def transformer_reference(x, params, H, W):
    for layer in params:
        x = _attention_ref(x, layer["attn"])
        x = _ffn_ref(x, layer["ffn"], H, W)
    return x


# ----------------------------------------------------------------------------------------------
# Parameters (deterministic, shapes match the nn.Module parameters up to a fixed transpose)
# ----------------------------------------------------------------------------------------------
def init_params(key, depth, dim, heads, dim_head, c1=256, c2=512):
    layers = []
    f32 = jnp.float32
    for _ in range(depth):
        keys = jax.random.split(key, 14)
        key, k = keys[0], keys[1:]
        attn = dict(
            ln_g=jnp.ones((1, dim), f32), ln_b=jnp.zeros((1, dim), f32),
            # to_qkv.weight (3*inner, dim) split per head and pre-transposed to (heads, dim, dh)
            wq=jax.random.normal(k[0], (heads, dim, dim_head), f32) * dim ** -0.5,
            wk=jax.random.normal(k[1], (heads, dim, dim_head), f32) * dim ** -0.5,
            wv=jax.random.normal(k[2], (heads, dim, dim_head), f32) * dim ** -0.5,
            # to_out[0].weight (dim, inner) pre-transposed/split to (heads, dh, dim)
            wo=jax.random.normal(k[3], (heads, dim_head, dim), f32) * (heads * dim_head) ** -0.5,
            bo=jax.random.normal(k[4], (1, dim), f32) * 0.02,
        )
        ffn = dict(
            ln_g=jnp.ones((1, dim), f32), ln_b=jnp.zeros((1, dim), f32),
            dw_w=jax.random.normal(k[5], (9, dim), f32) / 3.0,             # depth_conv (C,1,3,3) taps
            dw_b=jax.random.normal(k[6], (1, dim), f32) * 0.02,
            pw_w=jax.random.normal(k[7], (dim, c1), f32) * dim ** -0.5,    # point_conv (256,C,1,1)^T
            pw_b=jax.random.normal(k[8], (1, c1), f32) * 0.02,
            bn_g=jnp.ones((1, c1), f32), bn_b=jnp.zeros((1, c1), f32),
            w2=jax.random.normal(k[9], (c1, c2), f32) * c1 ** -0.5,        # Conv2d(256,512,1)^T
            b2=jax.random.normal(k[10], (1, c2), f32) * 0.02,
            w3=jax.random.normal(k[11], (c2, dim), f32) * c2 ** -0.5,      # Conv2d(512,C,1)^T
            b3=jax.random.normal(k[12], (1, dim), f32) * 0.02,
        )
        layers.append({"attn": attn, "ffn": ffn})
    return layers


if __name__ == "__main__":
    # Small config: batch=2, 64 tokens (8x8 spatial grid for FeedForward), dim=channels=16,
    # 2 heads of 16, depth=2.  (FeedForward hard-codes its 256/512 hidden conv channels, and the
    # module's rearrange+conv structure requires channels == dim.)
    B, H, W = 2, 8, 8
    N_TOK = H * W
    DIM = 16
    HEADS, DIM_HEAD = 2, 16
    DEPTH = 2

    root = jax.random.PRNGKey(0)
    root, kx = jax.random.split(root)
    x = jax.random.normal(kx, (B, N_TOK, DIM), jnp.float32)
    params = init_params(root, DEPTH, DIM, HEADS, DIM_HEAD)

    out = transformer_forward(x, params, H, W)
    out = jax.block_until_ready(out)

    ref = transformer_reference(x, params, H, W)
    assert out.shape == (B, N_TOK, DIM)
    max_err = float(jnp.max(jnp.abs(out - ref)))
    assert jnp.allclose(out, ref, atol=2e-3, rtol=2e-3), f"max abs err = {max_err}"
    print("KERNEL_OK")
</pallas_src>

<mosaic_0001>
module attributes {stable_mosaic.version = 11 : i64} {
  func.func @_attn_kernel(%arg0: i32, %arg1: memref<1x64x16xf32, #tpu.memory_space<vmem>>, %arg2: memref<1x16xf32, #tpu.memory_space<vmem>>, %arg3: memref<1x16xf32, #tpu.memory_space<vmem>>, %arg4: memref<2x16x16xf32, #tpu.memory_space<vmem>>, %arg5: memref<2x16x16xf32, #tpu.memory_space<vmem>>, %arg6: memref<2x16x16xf32, #tpu.memory_space<vmem>>, %arg7: memref<2x16x16xf32, #tpu.memory_space<vmem>>, %arg8: memref<1x16xf32, #tpu.memory_space<vmem>>, %arg9: memref<1x64x16xf32, #tpu.memory_space<vmem>>) attributes {dimension_semantics = [#tpu.dimension_semantics<parallel>], iteration_bounds = array<i64: 2>, scalar_prefetch = 0 : i64, scratch_operands = 0 : i64, tpu.core_type = #tpu.core_type<tc>, window_params = [{transform_indices = @transform_0, window_bounds = array<i64: 1, 64, 16>}, {pipeline_mode = #tpu.pipeline_mode<synchronous>, transform_indices = @transform_1, window_bounds = array<i64: 1, 16>}, {pipeline_mode = #tpu.pipeline_mode<synchronous>, transform_indices = @transform_2, window_bounds = array<i64: 1, 16>}, {pipeline_mode = #tpu.pipeline_mode<synchronous>, transform_indices = @transform_3, window_bounds = array<i64: 2, 16, 16>}, {pipeline_mode = #tpu.pipeline_mode<synchronous>, transform_indices = @transform_4, window_bounds = array<i64: 2, 16, 16>}, {pipeline_mode = #tpu.pipeline_mode<synchronous>, transform_indices = @transform_5, window_bounds = array<i64: 2, 16, 16>}, {pipeline_mode = #tpu.pipeline_mode<synchronous>, transform_indices = @transform_6, window_bounds = array<i64: 2, 16, 16>}, {pipeline_mode = #tpu.pipeline_mode<synchronous>, transform_indices = @transform_7, window_bounds = array<i64: 1, 16>}, {transform_indices = @transform_8, window_bounds = array<i64: 1, 64, 16>}]} {
    %c0 = arith.constant 0 : index
    %c0_0 = arith.constant 0 : index
    %c0_1 = arith.constant 0 : index
    %0 = vector.load %arg1[%c0, %c0_0, %c0_1] : memref<1x64x16xf32, #tpu.memory_space<vmem>>, vector<1x64x16xf32>
    %1 = vector.shape_cast %0 : vector<1x64x16xf32> to vector<64x16xf32>
    %cst = arith.constant dense<0.000000e+00> : vector<64xf32>
    %2 = vector.multi_reduction <add>, %1, %cst [1] : vector<64x16xf32> to vector<64xf32>
    %3 = vector.shape_cast %2 : vector<64xf32> to vector<64x1xf32>
    %cst_2 = arith.constant 1.600000e+01 : f32
    %4 = vector.broadcast %cst_2 : f32 to vector<64x1xf32>
    %5 = arith.divf %3, %4 : vector<64x1xf32>
    %6 = vector.broadcast %5 : vector<64x1xf32> to vector<64x16xf32>
    %7 = arith.subf %1, %6 : vector<64x16xf32>
    %8 = arith.mulf %7, %7 : vector<64x16xf32>
    %cst_3 = arith.constant dense<0.000000e+00> : vector<64xf32>
    %9 = vector.multi_reduction <add>, %8, %cst_3 [1] : vector<64x16xf32> to vector<64xf32>
    %10 = vector.shape_cast %9 : vector<64xf32> to vector<64x1xf32>
    %cst_4 = arith.constant 1.600000e+01 : f32
    %11 = vector.broadcast %cst_4 : f32 to vector<64x1xf32>
    %12 = arith.divf %10, %11 : vector<64x1xf32>
    %cst_5 = arith.constant 9.99999974E-6 : f32
    %13 = vector.broadcast %cst_5 : f32 to vector<64x1xf32>
    %14 = arith.addf %12, %13 : vector<64x1xf32>
    %15 = math.rsqrt %14 : vector<64x1xf32>
    %16 = vector.broadcast %15 : vector<64x1xf32> to vector<64x16xf32>
    %17 = arith.mulf %7, %16 : vector<64x16xf32>
    %c0_6 = arith.constant 0 : index
    %c0_7 = arith.constant 0 : index
    %18 = vector.load %arg2[%c0_6, %c0_7] : memref<1x16xf32, #tpu.memory_space<vmem>>, vector<1x16xf32>
    %19 = vector.broadcast %18 : vector<1x16xf32> to vector<64x16xf32>
    %20 = arith.mulf %17, %19 : vector<64x16xf32>
    %c0_8 = arith.constant 0 : index
    %c0_9 = arith.constant 0 : index
    %21 = vector.load %arg3[%c0_8, %c0_9] : memref<1x16xf32, #tpu.memory_space<vmem>>, vector<1x16xf32>
    %22 = vector.broadcast %21 : vector<1x16xf32> to vector<64x16xf32>
    %23 = arith.addf %20, %22 : vector<64x16xf32>
    %cst_10 = arith.constant 0.000000e+00 : f32
    %24 = vector.broadcast %cst_10 : f32 to vector<64x16xf32>
    %c0_11 = arith.constant 0 : index
    %c0_12 = arith.constant 0 : index
    %c0_13 = arith.constant 0 : index
    %25 = vector.load %arg4[%c0_11, %c0_12, %c0_13] : memref<2x16x16xf32, #tpu.memory_space<vmem>>, vector<1x16x16xf32>
    %26 = vector.shape_cast %25 : vector<1x16x16xf32> to vector<16x16xf32>
    %cst_14 = arith.constant dense<0.000000e+00> : vector<64x16xf32>
    %27 = tpu.matmul %23, %26, %cst_14 {dimension_numbers = #tpu.dot_dimension_numbers<[1], [0], [0], [1], [0, 0, 1, 1], [], []>, precision = #tpu.contract_precision<fp32>} : vector<64x16xf32>, vector<16x16xf32>, vector<64x16xf32> -> vector<64x16xf32>
    %c0_15 = arith.constant 0 : index
    %c0_16 = arith.constant 0 : index
    %c0_17 = arith.constant 0 : index
    %28 = vector.load %arg5[%c0_15, %c0_16, %c0_17] : memref<2x16x16xf32, #tpu.memory_space<vmem>>, vector<1x16x16xf32>
    %29 = vector.shape_cast %28 : vector<1x16x16xf32> to vector<16x16xf32>
    %cst_18 = arith.constant dense<0.000000e+00> : vector<64x16xf32>
    %30 = tpu.matmul %23, %29, %cst_18 {dimension_numbers = #tpu.dot_dimension_numbers<[1], [0], [0], [1], [0, 0, 1, 1], [], []>, precision = #tpu.contract_precision<fp32>} : vector<64x16xf32>, vector<16x16xf32>, vector<64x16xf32> -> vector<64x16xf32>
    %c0_19 = arith.constant 0 : index
    %c0_20 = arith.constant 0 : index
    %c0_21 = arith.constant 0 : index
    %31 = vector.load %arg6[%c0_19, %c0_20, %c0_21] : memref<2x16x16xf32, #tpu.memory_space<vmem>>, vector<1x16x16xf32>
    %32 = vector.shape_cast %31 : vector<1x16x16xf32> to vector<16x16xf32>
    %cst_22 = arith.constant dense<0.000000e+00> : vector<64x16xf32>
    %33 = tpu.matmul %23, %32, %cst_22 {dimension_numbers = #tpu.dot_dimension_numbers<[1], [0], [0], [1], [0, 0, 1, 1], [], []>, precision = #tpu.contract_precision<fp32>} : vector<64x16xf32>, vector<16x16xf32>, vector<64x16xf32> -> vector<64x16xf32>
    %cst_23 = arith.constant dense<0.000000e+00> : vector<64x64xf32>
    %34 = tpu.matmul %27, %30, %cst_23 {dimension_numbers = #tpu.dot_dimension_numbers<[1], [1], [0], [0], [0, 0, 1, 0], [], []>, precision = #tpu.contract_precision<fp32>} : vector<64x16xf32>, vector<64x16xf32>, vector<64x64xf32> -> vector<64x64xf32>
    %cst_24 = arith.constant 2.500000e-01 : f32
    %35 = vector.broadcast %cst_24 : f32 to vector<64x64xf32>
    %36 = arith.mulf %34, %35 : vector<64x64xf32>
    %cst_25 = arith.constant dense<0xFF800000> : vector<64xf32>
    %37 = vector.multi_reduction <maximumf>, %36, %cst_25 [1] : vector<64x64xf32> to vector<64xf32>
    %38 = vector.shape_cast %37 : vector<64xf32> to vector<64x1xf32>
    %39 = vector.broadcast %38 : vector<64x1xf32> to vector<64x64xf32>
    %40 = arith.subf %36, %39 : vector<64x64xf32>
    %41 = math.exp %40 : vector<64x64xf32>
    %cst_26 = arith.constant dense<0.000000e+00> : vector<64xf32>
    %42 = vector.multi_reduction <add>, %41, %cst_26 [1] : vector<64x64xf32> to vector<64xf32>
    %43 = vector.shape_cast %42 : vector<64xf32> to vector<64x1xf32>
    %44 = vector.broadcast %43 : vector<64x1xf32> to vector<64x64xf32>
    %45 = arith.divf %41, %44 : vector<64x64xf32>
    %cst_27 = arith.constant dense<0.000000e+00> : vector<64x16xf32>
    %46 = tpu.matmul %45, %33, %cst_27 {dimension_numbers = #tpu.dot_dimension_numbers<[1], [0], [0], [1], [0, 0, 1, 1], [], []>, precision = #tpu.contract_precision<fp32>} : vector<64x64xf32>, vector<64x16xf32>, vector<64x16xf32> -> vector<64x16xf32>
    %c0_28 = arith.constant 0 : index
    %c0_29 = arith.constant 0 : index
    %c0_30 = arith.constant 0 : index
    %47 = vector.load %arg7[%c0_28, %c0_29, %c0_30] : memref<2x16x16xf32, #tpu.memory_space<vmem>>, vector<1x16x16xf32>
    %48 = vector.shape_cast %47 : vector<1x16x16xf32> to vector<16x16xf32>
    %cst_31 = arith.constant dense<0.000000e+00> : vector<64x16xf32>
    %49 = tpu.matmul %46, %48, %cst_31 {dimension_numbers = #tpu.dot_dimension_numbers<[1], [0], [0], [1], [0, 0, 1, 1], [], []>, precision = #tpu.contract_precision<fp32>} : vector<64x16xf32>, vector<16x16xf32>, vector<64x16xf32> -> vector<64x16xf32>
    %50 = arith.addf %24, %49 : vector<64x16xf32>
    %c1 = arith.constant 1 : index
    %c0_32 = arith.constant 0 : index
    %c0_33 = arith.constant 0 : index
    %51 = vector.load %arg4[%c1, %c0_32, %c0_33] : memref<2x16x16xf32, #tpu.memory_space<vmem>>, vector<1x16x16xf32>
    %52 = vector.shape_cast %51 : vector<1x16x16xf32> to vector<16x16xf32>
    %cst_34 = arith.constant dense<0.000000e+00> : vector<64x16xf32>
    %53 = tpu.matmul %23, %52, %cst_34 {dimension_numbers = #tpu.dot_dimension_numbers<[1], [0], [0], [1], [0, 0, 1, 1], [], []>, precision = #tpu.contract_precision<fp32>} : vector<64x16xf32>, vector<16x16xf32>, vector<64x16xf32> -> vector<64x16xf32>
    %c1_35 = arith.constant 1 : index
    %c0_36 = arith.constant 0 : index
    %c0_37 = arith.constant 0 : index
    %54 = vector.load %arg5[%c1_35, %c0_36, %c0_37] : memref<2x16x16xf32, #tpu.memory_space<vmem>>, vector<1x16x16xf32>
    %55 = vector.shape_cast %54 : vector<1x16x16xf32> to vector<16x16xf32>
    %cst_38 = arith.constant dense<0.000000e+00> : vector<64x16xf32>
    %56 = tpu.matmul %23, %55, %cst_38 {dimension_numbers = #tpu.dot_dimension_numbers<[1], [0], [0], [1], [0, 0, 1, 1], [], []>, precision = #tpu.contract_precision<fp32>} : vector<64x16xf32>, vector<16x16xf32>, vector<64x16xf32> -> vector<64x16xf32>
    %c1_39 = arith.constant 1 : index
    %c0_40 = arith.constant 0 : index
    %c0_41 = arith.constant 0 : index
    %57 = vector.load %arg6[%c1_39, %c0_40, %c0_41] : memref<2x16x16xf32, #tpu.memory_space<vmem>>, vector<1x16x16xf32>
    %58 = vector.shape_cast %57 : vector<1x16x16xf32> to vector<16x16xf32>
    %cst_42 = arith.constant dense<0.000000e+00> : vector<64x16xf32>
    %59 = tpu.matmul %23, %58, %cst_42 {dimension_numbers = #tpu.dot_dimension_numbers<[1], [0], [0], [1], [0, 0, 1, 1], [], []>, precision = #tpu.contract_precision<fp32>} : vector<64x16xf32>, vector<16x16xf32>, vector<64x16xf32> -> vector<64x16xf32>
    %cst_43 = arith.constant dense<0.000000e+00> : vector<64x64xf32>
    %60 = tpu.matmul %53, %56, %cst_43 {dimension_numbers = #tpu.dot_dimension_numbers<[1], [1], [0], [0], [0, 0, 1, 0], [], []>, precision = #tpu.contract_precision<fp32>} : vector<64x16xf32>, vector<64x16xf32>, vector<64x64xf32> -> vector<64x64xf32>
    %cst_44 = arith.constant 2.500000e-01 : f32
    %61 = vector.broadcast %cst_44 : f32 to vector<64x64xf32>
    %62 = arith.mulf %60, %61 : vector<64x64xf32>
    %cst_45 = arith.constant dense<0xFF800000> : vector<64xf32>
    %63 = vector.multi_reduction <maximumf>, %62, %cst_45 [1] : vector<64x64xf32> to vector<64xf32>
    %64 = vector.shape_cast %63 : vector<64xf32> to vector<64x1xf32>
    %65 = vector.broadcast %64 : vector<64x1xf32> to vector<64x64xf32>
    %66 = arith.subf %62, %65 : vector<64x64xf32>
    %67 = math.exp %66 : vector<64x64xf32>
    %cst_46 = arith.constant dense<0.000000e+00> : vector<64xf32>
    %68 = vector.multi_reduction <add>, %67, %cst_46 [1] : vector<64x64xf32> to vector<64xf32>
    %69 = vector.shape_cast %68 : vector<64xf32> to vector<64x1xf32>
    %70 = vector.broadcast %69 : vector<64x1xf32> to vector<64x64xf32>
    %71 = arith.divf %67, %70 : vector<64x64xf32>
    %cst_47 = arith.constant dense<0.000000e+00> : vector<64x16xf32>
    %72 = tpu.matmul %71, %59, %cst_47 {dimension_numbers = #tpu.dot_dimension_numbers<[1], [0], [0], [1], [0, 0, 1, 1], [], []>, precision = #tpu.contract_precision<fp32>} : vector<64x64xf32>, vector<64x16xf32>, vector<64x16xf32> -> vector<64x16xf32>
    %c1_48 = arith.constant 1 : index
    %c0_49 = arith.constant 0 : index
    %c0_50 = arith.constant 0 : index
    %73 = vector.load %arg7[%c1_48, %c0_49, %c0_50] : memref<2x16x16xf32, #tpu.memory_space<vmem>>, vector<1x16x16xf32>
    %74 = vector.shape_cast %73 : vector<1x16x16xf32> to vector<16x16xf32>
    %cst_51 = arith.constant dense<0.000000e+00> : vector<64x16xf32>
    %75 = tpu.matmul %72, %74, %cst_51 {dimension_numbers = #tpu.dot_dimension_numbers<[1], [0], [0], [1], [0, 0, 1, 1], [], []>, precision = #tpu.contract_precision<fp32>} : vector<64x16xf32>, vector<16x16xf32>, vector<64x16xf32> -> vector<64x16xf32>
    %76 = arith.addf %50, %75 : vector<64x16xf32>
    %77 = arith.addf %1, %76 : vector<64x16xf32>
    %c0_52 = arith.constant 0 : index
    %c0_53 = arith.constant 0 : index
    %78 = vector.load %arg8[%c0_52, %c0_53] : memref<1x16xf32, #tpu.memory_space<vmem>>, vector<1x16xf32>
    %79 = vector.broadcast %78 : vector<1x16xf32> to vector<64x16xf32>
    %80 = arith.addf %77, %79 : vector<64x16xf32>
    %c0_54 = arith.constant 0 : index
    %c0_55 = arith.constant 0 : index
    %c0_56 = arith.constant 0 : index
    %81 = vector.load %arg9[%c0_54, %c0_55, %c0_56] : memref<1x64x16xf32, #tpu.memory_space<vmem>>, vector<1x64x16xf32>
    %82 = vector.shape_cast %81 : vector<1x64x16xf32> to vector<64x16xf32>
    %83 = vector.shape_cast %80 : vector<64x16xf32> to vector<1x64x16xf32>
    tpu.vector_store %arg9[%c0_54, %c0_55, %c0_56], %83 {strides = array<i32>} : memref<1x64x16xf32, #tpu.memory_space<vmem>>, vector<1x64x16xf32>,
    return
  }
  func.func @transform_0(%arg0: i32) -> (i32, i32, i32) {
    %c0_i32 = arith.constant 0 : i32
    %c0_i32_0 = arith.constant 0 : i32
    %c0_i32_1 = arith.constant 0 : i32
    return %arg0, %c0_i32, %c0_i32_0 : i32, i32, i32
  }
  func.func @transform_1(%arg0: i32) -> (i32, i32) {
    %c0_i32 = arith.constant 0 : i32
    %c0_i32_0 = arith.constant 0 : i32
    %c0_i32_1 = arith.constant 0 : i32
    return %c0_i32, %c0_i32_0 : i32, i32
  }
  func.func @transform_2(%arg0: i32) -> (i32, i32) {
    %c0_i32 = arith.constant 0 : i32
    %c0_i32_0 = arith.constant 0 : i32
    %c0_i32_1 = arith.constant 0 : i32
    return %c0_i32, %c0_i32_0 : i32, i32
  }
  func.func @transform_3(%arg0: i32) -> (i32, i32, i32) {
    %c0_i32 = arith.constant 0 : i32
    %c0_i32_0 = arith.constant 0 : i32
    %c0_i32_1 = arith.constant 0 : i32
    %c0_i32_2 = arith.constant 0 : i32
    return %c0_i32, %c0_i32_0, %c0_i32_1 : i32, i32, i32
  }
  func.func @transform_4(%arg0: i32) -> (i32, i32, i32) {
    %c0_i32 = arith.constant 0 : i32
    %c0_i32_0 = arith.constant 0 : i32
    %c0_i32_1 = arith.constant 0 : i32
    %c0_i32_2 = arith.constant 0 : i32
    return %c0_i32, %c0_i32_0, %c0_i32_1 : i32, i32, i32
  }
  func.func @transform_5(%arg0: i32) -> (i32, i32, i32) {
    %c0_i32 = arith.constant 0 : i32
    %c0_i32_0 = arith.constant 0 : i32
    %c0_i32_1 = arith.constant 0 : i32
    %c0_i32_2 = arith.constant 0 : i32
    return %c0_i32, %c0_i32_0, %c0_i32_1 : i32, i32, i32
  }
  func.func @transform_6(%arg0: i32) -> (i32, i32, i32) {
    %c0_i32 = arith.constant 0 : i32
    %c0_i32_0 = arith.constant 0 : i32
    %c0_i32_1 = arith.constant 0 : i32
    %c0_i32_2 = arith.constant 0 : i32
    return %c0_i32, %c0_i32_0, %c0_i32_1 : i32, i32, i32
  }
  func.func @transform_7(%arg0: i32) -> (i32, i32) {
    %c0_i32 = arith.constant 0 : i32
    %c0_i32_0 = arith.constant 0 : i32
    %c0_i32_1 = arith.constant 0 : i32
    return %c0_i32, %c0_i32_0 : i32, i32
  }
  func.func @transform_8(%arg0: i32) -> (i32, i32, i32) {
    %c0_i32 = arith.constant 0 : i32
    %c0_i32_0 = arith.constant 0 : i32
    %c0_i32_1 = arith.constant 0 : i32
    return %arg0, %c0_i32, %c0_i32_0 : i32, i32, i32
  }
}

</mosaic_0001>

<llo_original>
// kernel: tpu_custom_call.1
$region0: #{tpu_custom_call.1}
  #allocation0 [shape = 'u32[]', space=smem, size = 0x4, offset = 0x4, fixed_abs, tag = 'smem constant byte address 0x4 - core index']
  #allocation1 [shape = 'u32[144,128]{1,0:T(1,128)}', space=vmem, size = 0x12000, scoped, tag = 'internal scratch']
  %s0 = inlined_call_operand.vmem [shape: f32[2,64,16], index: 0, kind: input, shape index: {}]
  %s1 = inlined_call_operand.vmem [shape: f32[1,16], index: 1, kind: input, shape index: {}]
  %s2 = inlined_call_operand.vmem [shape: f32[1,16], index: 2, kind: input, shape index: {}]
  %s3 = inlined_call_operand.vmem [shape: f32[2,16,16], index: 3, kind: input, shape index: {}]
  %s4 = inlined_call_operand.vmem [shape: f32[2,16,16], index: 4, kind: input, shape index: {}]
  %s5 = inlined_call_operand.vmem [shape: f32[2,16,16], index: 5, kind: input, shape index: {}]
  %s6 = inlined_call_operand.vmem [shape: f32[2,16,16], index: 6, kind: input, shape index: {}]
  %s7 = inlined_call_operand.vmem [shape: f32[1,16], index: 7, kind: input, shape index: {}]
  %s8 = inlined_call_operand.vmem [shape: f32[2,64,16], index: 8, kind: output, shape index: {}]
  %s9 = sld [smem:[#allocation0]]
  $region65: #{tpu_custom_call.1} parent=0
    _
  %s11 = ssub.s32 1, %s9
  %s12 = scalar_select 0, %s11, %s9
  loop: start=0, step=1, limit=4
  $region2: #{tpu_custom_call.1} parent=0 // loop_pre_header
    _
  $region3: #{tpu_custom_call.1} parent=0 // loop_header
    %s14 = sphi 0, %s18
    %p15 = scmp.ge.s32.totalorder %s14, 4
    %s24 = sphi 0, %s26
    %s27 = sphi 0, %s24
    %s28 = sphi 0, %s27
    %s44 = sphi 0, %s28
    %s48 = sphi 0, %s48
    %s50 = sphi 0, %s48
    %s51 = sphi 0, %s50
    %s65 = sphi 0, %s51
    %s69 = sphi 0, %s69
    %s71 = sphi 0, %s69
    %s72 = sphi 0, %s71
    %s86 = sphi 0, %s72
    %s90 = sphi 0, %s90
    %s92 = sphi 0, %s90
    %s93 = sphi 0, %s92
    %s107 = sphi 0, %s93
    %s111 = sphi 0, %s111
    %s113 = sphi 0, %s111
    %s114 = sphi 0, %s113
    %s128 = sphi 0, %s114
    %s132 = sphi 0, %s132
    %s134 = sphi 0, %s132
    %s135 = sphi 0, %s134
    %s149 = sphi 0, %s135
    %s153 = sphi 0, %s153
    %s155 = sphi 0, %s153
    %s156 = sphi 0, %s155
    %s170 = sphi 0, %s156
    %s174 = sphi 0, %s174
    %s176 = sphi 0, %s174
    %s177 = sphi 0, %s176
    %s191 = sphi 0, %s177
    %s197 = sphi 0, %s199
    %s200 = sphi 0, %s197
    %s201 = sphi 0, %s200
    %s217 = sphi 0, %s201
  $region4: #{tpu_custom_call.1} parent=0 // loop_header_branch
    %17 = sbr.rel (%p15) target = $region8
  $region5: #{tpu_custom_call.1} parent=0 // loop_body
    %s19 = ssub.s32 %s14, 1
    %s20 = ssub.s32 %s14, 2
    %s21 = sadd.s32 %s14, 1
    %s22 = ssub.s32 %s14, %s21
    %p23 = scmp.eq.s32.totalorder %s22, 0
    %s25 = sadd.s32 %s24, 1
    %s26 = scalar_select %p23, %s24, %s25
    %p29 = pneg %p23
    %p30 = scmp.eq.s32.totalorder %s14, 1
    %p31 = por %p29, %p30
    %p32 = scmp.ne.s32.totalorder %s24, %s27
    %p33 = scmp.eq.s32.totalorder %s14, 0
    %p34 = por %p32, %p33
    %p35 = scmp.ne.s32.totalorder %s24, %s27
    %p36 = scmp.eq.s32.totalorder %s19, 1
    %p37 = por %p35, %p36
    %p38 = scmp.ne.s32.totalorder %s27, %s28
    %p39 = scmp.eq.s32.totalorder %s19, 0
    %p40 = por %p38, %p39
    %p41 = scmp.ne.s32.totalorder %s27, %s28
    %p42 = scmp.eq.s32.totalorder %s20, 1
    %p43 = por %p41, %p42
    %p45 = scmp.ne.s32.totalorder %s28, %s44
    %p46 = scmp.eq.s32.totalorder %s20, 0
    %p47 = por %p45, %p46
    %s49 = sadd.s32 %s48, 1
    %p52 = scmp.eq.s32.totalorder %s14, 1
    %p53 = scmp.ne.s32.totalorder %s48, %s50
    %p54 = scmp.eq.s32.totalorder %s14, 0
    %p55 = por %p53, %p54
    %p56 = scmp.ne.s32.totalorder %s48, %s50
    %p57 = scmp.eq.s32.totalorder %s19, 1
    %p58 = por %p56, %p57
    %p59 = scmp.ne.s32.totalorder %s50, %s51
    %p60 = scmp.eq.s32.totalorder %s19, 0
    %p61 = por %p59, %p60
    %p62 = scmp.ne.s32.totalorder %s50, %s51
    %p63 = scmp.eq.s32.totalorder %s20, 1
    %p64 = por %p62, %p63
    %p66 = scmp.ne.s32.totalorder %s51, %s65
    %p67 = scmp.eq.s32.totalorder %s20, 0
    %p68 = por %p66, %p67
    %s70 = sadd.s32 %s69, 1
    %p73 = scmp.eq.s32.totalorder %s14, 1
    %p74 = scmp.ne.s32.totalorder %s69, %s71
    %p75 = scmp.eq.s32.totalorder %s14, 0
    %p76 = por %p74, %p75
    %p77 = scmp.ne.s32.totalorder %s69, %s71
    %p78 = scmp.eq.s32.totalorder %s19, 1
    %p79 = por %p77, %p78
    %p80 = scmp.ne.s32.totalorder %s71, %s72
    %p81 = scmp.eq.s32.totalorder %s19, 0
    %p82 = por %p80, %p81
    %p83 = scmp.ne.s32.totalorder %s71, %s72
    %p84 = scmp.eq.s32.totalorder %s20, 1
    %p85 = por %p83, %p84
    %p87 = scmp.ne.s32.totalorder %s72, %s86
    %p88 = scmp.eq.s32.totalorder %s20, 0
    %p89 = por %p87, %p88
    %s91 = sadd.s32 %s90, 1
    %p94 = scmp.eq.s32.totalorder %s14, 1
    %p95 = scmp.ne.s32.totalorder %s90, %s92
    %p96 = scmp.eq.s32.totalorder %s14, 0
    %p97 = por %p95, %p96
    %p98 = scmp.ne.s32.totalorder %s90, %s92
    %p99 = scmp.eq.s32.totalorder %s19, 1
    %p100 = por %p98, %p99
    %p101 = scmp.ne.s32.totalorder %s92, %s93
    %p102 = scmp.eq.s32.totalorder %s19, 0
    %p103 = por %p101, %p102
    %p104 = scmp.ne.s32.totalorder %s92, %s93
    %p105 = scmp.eq.s32.totalorder %s20, 1
    %p106 = por %p104, %p105
    %p108 = scmp.ne.s32.totalorder %s93, %s107
    %p109 = scmp.eq.s32.totalorder %s20, 0
    %p110 = por %p108, %p109
    %s112 = sadd.s32 %s111, 1
    %p115 = scmp.eq.s32.totalorder %s14, 1
    %p116 = scmp.ne.s32.totalorder %s111, %s113
    %p117 = scmp.eq.s32.totalorder %s14, 0
    %p118 = por %p116, %p117
    %p119 = scmp.ne.s32.totalorder %s111, %s113
    %p120 = scmp.eq.s32.totalorder %s19, 1
    %p121 = por %p119, %p120
    %p122 = scmp.ne.s32.totalorder %s113, %s114
    %p123 = scmp.eq.s32.totalorder %s19, 0
    %p124 = por %p122, %p123
    %p125 = scmp.ne.s32.totalorder %s113, %s114
    %p126 = scmp.eq.s32.totalorder %s20, 1
    %p127 = por %p125, %p126
    %p129 = scmp.ne.s32.totalorder %s114, %s128
    %p130 = scmp.eq.s32.totalorder %s20, 0
    %p131 = por %p129, %p130
    %s133 = sadd.s32 %s132, 1
    %p136 = scmp.eq.s32.totalorder %s14, 1
    %p137 = scmp.ne.s32.totalorder %s132, %s134
    %p138 = scmp.eq.s32.totalorder %s14, 0
    %p139 = por %p137, %p138
    %p140 = scmp.ne.s32.totalorder %s132, %s134
    %p141 = scmp.eq.s32.totalorder %s19, 1
    %p142 = por %p140, %p141
    %p143 = scmp.ne.s32.totalorder %s134, %s135
    %p144 = scmp.eq.s32.totalorder %s19, 0
    %p145 = por %p143, %p144
    %p146 = scmp.ne.s32.totalorder %s134, %s135
    %p147 = scmp.eq.s32.totalorder %s20, 1
    %p148 = por %p146, %p147
    %p150 = scmp.ne.s32.totalorder %s135, %s149
    %p151 = scmp.eq.s32.totalorder %s20, 0
    %p152 = por %p150, %p151
    %s154 = sadd.s32 %s153, 1
    %p157 = scmp.eq.s32.totalorder %s14, 1
    %p158 = scmp.ne.s32.totalorder %s153, %s155
    %p159 = scmp.eq.s32.totalorder %s14, 0
    %p160 = por %p158, %p159
    %p161 = scmp.ne.s32.totalorder %s153, %s155
    %p162 = scmp.eq.s32.totalorder %s19, 1
    %p163 = por %p161, %p162
    %p164 = scmp.ne.s32.totalorder %s155, %s156
    %p165 = scmp.eq.s32.totalorder %s19, 0
    %p166 = por %p164, %p165
    %p167 = scmp.ne.s32.totalorder %s155, %s156
    %p168 = scmp.eq.s32.totalorder %s20, 1
    %p169 = por %p167, %p168
    %p171 = scmp.ne.s32.totalorder %s156, %s170
    %p172 = scmp.eq.s32.totalorder %s20, 0
    %p173 = por %p171, %p172
    %s175 = sadd.s32 %s174, 1
    %p178 = scmp.eq.s32.totalorder %s14, 1
    %p179 = scmp.ne.s32.totalorder %s174, %s176
    %p180 = scmp.eq.s32.totalorder %s14, 0
    %p181 = por %p179, %p180
    %p182 = scmp.ne.s32.totalorder %s174, %s176
    %p183 = scmp.eq.s32.totalorder %s19, 1
    %p184 = por %p182, %p183
    %p185 = scmp.ne.s32.totalorder %s176, %s177
    %p186 = scmp.eq.s32.totalorder %s19, 0
    %p187 = por %p185, %p186
    %p188 = scmp.ne.s32.totalorder %s176, %s177
    %p189 = scmp.eq.s32.totalorder %s20, 1
    %p190 = por %p188, %p189
    %p192 = scmp.ne.s32.totalorder %s177, %s191
    %p193 = scmp.eq.s32.totalorder %s20, 0
    %p194 = por %p192, %p193
    %s195 = ssub.s32 %s14, %s21
    %p196 = scmp.eq.s32.totalorder %s195, 0
    %s198 = sadd.s32 %s197, 1
    %s199 = scalar_select %p196, %s197, %s198
    %p202 = pneg %p196
    %p203 = scmp.eq.s32.totalorder %s14, 1
    %p204 = por %p202, %p203
    %p205 = scmp.ne.s32.totalorder %s197, %s200
    %p206 = scmp.eq.s32.totalorder %s14, 0
    %p207 = por %p205, %p206
    %p208 = scmp.ne.s32.totalorder %s197, %s200
    %p209 = scmp.eq.s32.totalorder %s19, 1
    %p210 = por %p208, %p209
    %p211 = scmp.ne.s32.totalorder %s200, %s201
    %p212 = scmp.eq.s32.totalorder %s19, 0
    %p213 = por %p211, %p212
    %p214 = scmp.ne.s32.totalorder %s200, %s201
    %p215 = scmp.eq.s32.totalorder %s20, 1
    %p216 = por %p214, %p215
    %p218 = scmp.ne.s32.totalorder %s201, %s217
    %p219 = scmp.eq.s32.totalorder %s20, 0
    %p220 = por %p218, %p219
    %p221 = scmp.le.s32.totalorder 1, %s14
    %p222 = scmp.lt.s32.totalorder %s14, 3
    %p223 = pnand %p221, %p222
    %p224 = pneg %p223
    // Predicated region
    $region9: #{tpu_custom_call.1} parent=5 // pred_check
      _
    $region10: #{tpu_custom_call.1} parent=5 // pred_check_branch
      %226 = sbr.rel (%p223) target = $region12
    $region11: #{tpu_custom_call.1} parent=5 // pred_region
      %s227 = ssub.s32 %s14, 1
      // Predicated region
      $region13: #{tpu_custom_call.1} parent=11 // pred_check
        %p228 = pneg %p61
      $region14: #{tpu_custom_call.1} parent=11 // pred_check_branch
        %230 = sbr.rel (%p228) target = $region16
      $region15: #{tpu_custom_call.1} parent=11 // pred_region
        _
      $region16: #{tpu_custom_call.1} parent=11 // pred_fallthru
        _
      // Predicated region
      $region17: #{tpu_custom_call.1} parent=11 // pred_check
        %p231 = pneg %p82
      $region18: #{tpu_custom_call.1} parent=11 // pred_check_branch
        %233 = sbr.rel (%p231) target = $region20
      $region19: #{tpu_custom_call.1} parent=11 // pred_region
        _
      $region20: #{tpu_custom_call.1} parent=11 // pred_fallthru
        _
      // Predicated region
      $region21: #{tpu_custom_call.1} parent=11 // pred_check
        %p234 = pneg %p103
      $region22: #{tpu_custom_call.1} parent=11 // pred_check_branch
        %236 = sbr.rel (%p234) target = $region24
      $region23: #{tpu_custom_call.1} parent=11 // pred_region
        _
      $region24: #{tpu_custom_call.1} parent=11 // pred_fallthru
        _
      // Predicated region
      $region25: #{tpu_custom_call.1} parent=11 // pred_check
        %p237 = pneg %p124
      $region26: #{tpu_custom_call.1} parent=11 // pred_check_branch
        %239 = sbr.rel (%p237) target = $region28
      $region27: #{tpu_custom_call.1} parent=11 // pred_region
        _
      $region28: #{tpu_custom_call.1} parent=11 // pred_fallthru
        _
      // Predicated region
      $region29: #{tpu_custom_call.1} parent=11 // pred_check
        %p240 = pneg %p145
      $region30: #{tpu_custom_call.1} parent=11 // pred_check_branch
        %242 = sbr.rel (%p240) target = $region32
      $region31: #{tpu_custom_call.1} parent=11 // pred_region
        _
      $region32: #{tpu_custom_call.1} parent=11 // pred_fallthru
        _
      // Predicated region
      $region33: #{tpu_custom_call.1} parent=11 // pred_check
        %p243 = pneg %p166
      $region34: #{tpu_custom_call.1} parent=11 // pred_check_branch
        %245 = sbr.rel (%p243) target = $region36
      $region35: #{tpu_custom_call.1} parent=11 // pred_region
        _
      $region36: #{tpu_custom_call.1} parent=11 // pred_fallthru
        _
      // Predicated region
      $region37: #{tpu_custom_call.1} parent=11 // pred_check
        %p246 = pneg %p187
      $region38: #{tpu_custom_call.1} parent=11 // pred_check_branch
        %248 = sbr.rel (%p246) target = $region40
      $region39: #{tpu_custom_call.1} parent=11 // pred_region
        _
      $region40: #{tpu_custom_call.1} parent=11 // pred_fallthru
        _
    $region12: #{tpu_custom_call.1} parent=5 // pred_fallthru
      _
    %p249 = scmp.lt.s32.totalorder %s14, 2
    // Predicated region
    $region41: #{tpu_custom_call.1} parent=5 // pred_check
      %p250 = pneg %p249
    $region42: #{tpu_custom_call.1} parent=5 // pred_check_branch
      %252 = sbr.rel (%p250) target = $region44
    $region43: #{tpu_custom_call.1} parent=5 // pred_region
      // Predicated region
      $region45: #{tpu_custom_call.1} parent=43 // pred_check
        %p253 = pneg %p34
      $region46: #{tpu_custom_call.1} parent=43 // pred_check_branch
        %255 = sbr.rel (%p253) target = $region48
      $region47: #{tpu_custom_call.1} parent=43 // pred_region
        %p256 = scmp.lt.s32.totalorder %s14, 1
        %s257 = scalar_select %p256, %s14, 1
        %s258 = smul.addr %s257, 8
        %s259 = smul.addr %s258, 8
        %s260 = scalar_lea.vmem %s0, %s259
      $region48: #{tpu_custom_call.1} parent=43 // pred_fallthru
        _
    $region44: #{tpu_custom_call.1} parent=5 // pred_fallthru
      _
    %p261 = scmp.le.s32.totalorder 1, %s14
    %p262 = scmp.lt.s32.totalorder %s14, 3
    %p263 = pnand %p261, %p262
    %p264 = pneg %p263
    // Predicated region
    $region49: #{tpu_custom_call.1} parent=5 // pred_check
      _
    $region50: #{tpu_custom_call.1} parent=5 // pred_check_branch
      %266 = sbr.rel (%p263) target = $region52
    $region51: #{tpu_custom_call.1} parent=5 // pred_region
      %s267 = ssub.s32 %s14, 1
      %p268 = scmp.lt.s32.totalorder %s19, 1
      %s269 = scalar_select %p268, %s19, 1
      %s270 = smul.addr %s269, 8
      %s271 = smul.addr %s270, 8
      %s272 = scalar_lea.vmem %s0, %s271
      %p273 = pneg %p40
      %p274 = pneg %p37
      %p275 = pneg %p61
      %p276 = pneg %p58
      %p277 = pneg %p82
      %p278 = pneg %p79
      %p279 = pneg %p103
      %p280 = pneg %p100
      %p281 = pneg %p124
      %p282 = pneg %p121
      %p283 = pneg %p145
      %p284 = pneg %p142
      %p285 = pneg %p166
      %p286 = pneg %p163
      %p287 = pneg %p187
      %p288 = pneg %p184
      %p289 = pneg %p213
      %p290 = pneg %p210
      %p291 = scmp.lt.s32.totalorder %s19, 1
      %s292 = scalar_select %p291, %s19, 1
      %s293 = smul.addr %s292, 8
      %s294 = smul.addr %s293, 8
      %s295 = scalar_lea.vmem %s8, %s294
      %p296 = scmp.lt.s32.totalorder %s19, 1
      %s297 = scalar_select %p296, %s19, 1
      %s298 = smul.addr %s297, 8
      %s299 = smul.addr %s298, 8
      %s300 = scalar_lea.vmem %s0, %s299
      %p301 = scmp.lt.s32.totalorder %s19, 1
      %s302 = scalar_select %p301, %s19, 1
      %s303 = smul.addr %s302, 8
      %s304 = smul.addr %s303, 8
      %s305 = scalar_lea.vmem %s8, %s304
      %v306 = vld [vmem:[%s300] sm:$0xff]
      %v307 = vld [vmem:[%s300 + $0x8] sm:$0xff]
      %v308 = vld [vmem:[%s300 + $0x10] sm:$0xff]
      %v309 = vld [vmem:[%s300 + $0x18] sm:$0xff]
      %v310 = vld [vmem:[%s300 + $0x20] sm:$0xff]
      %v311 = vld [vmem:[%s300 + $0x28] sm:$0xff]
      %v312 = vld [vmem:[%s300 + $0x30] sm:$0xff]
      %v313 = vld [vmem:[%s300 + $0x38] sm:$0xff]
      %vm314 = vcmask 130048
      %v315 = vsel %vm314, %v306, 0.0
      %316 = vadd.xlane.f32.xlu0 %v315
      %v317 = vpop.xlane.xlu0 %316
      %v318 = vsel %vm314, %v307, 0.0
      %319 = vadd.xlane.f32.xlu0 %v318
      %v320 = vpop.xlane.xlu0 %319
      %v321 = vsel %vm314, %v308, 0.0
      %322 = vadd.xlane.f32.xlu0 %v321
      %v323 = vpop.xlane.xlu0 %322
      %v324 = vsel %vm314, %v309, 0.0
      %325 = vadd.xlane.f32.xlu0 %v324
      %v326 = vpop.xlane.xlu0 %325
      %v327 = vsel %vm314, %v310, 0.0
      %328 = vadd.xlane.f32.xlu0 %v327
      %v329 = vpop.xlane.xlu0 %328
      %v330 = vsel %vm314, %v311, 0.0
      %331 = vadd.xlane.f32.xlu0 %v330
      %v332 = vpop.xlane.xlu0 %331
      %v333 = vsel %vm314, %v312, 0.0
      %334 = vadd.xlane.f32.xlu0 %v333
      %v335 = vpop.xlane.xlu0 %334
      %v336 = vsel %vm314, %v313, 0.0
      %337 = vadd.xlane.f32.xlu0 %v336
      %v338 = vpop.xlane.xlu0 %337
      %v339 = vrcp.pop 16.0
      %v340 = vmul.f32 %v317, %v339
      %v341 = vmul.f32 %v320, %v339
      %v342 = vmul.f32 %v323, %v339
      %v343 = vmul.f32 %v326, %v339
      %v344 = vmul.f32 %v329, %v339
      %v345 = vmul.f32 %v332, %v339
      %v346 = vmul.f32 %v335, %v339
      %v347 = vmul.f32 %v338, %v339
      %v348 = vsub.f32 %v306, %v340
      %v349 = vsub.f32 %v307, %v341
      %v350 = vsub.f32 %v308, %v342
      %v351 = vsub.f32 %v309, %v343
      %v352 = vsub.f32 %v310, %v344
      %v353 = vsub.f32 %v311, %v345
      %v354 = vsub.f32 %v312, %v346
      %v355 = vsub.f32 %v313, %v347
      %v356 = vmul.f32 %v348, %v348
      %v357 = vmul.f32 %v349, %v349
      %v358 = vmul.f32 %v350, %v350
      %v359 = vmul.f32 %v351, %v351
      %v360 = vmul.f32 %v352, %v352
      %v361 = vmul.f32 %v353, %v353
      %v362 = vmul.f32 %v354, %v354
      %v363 = vmul.f32 %v355, %v355
      %v364 = vsel %vm314, %v356, 0.0
      %365 = vadd.xlane.f32.xlu0 %v364
      %v366 = vpop.xlane.xlu0 %365
      %v367 = vsel %vm314, %v357, 0.0
      %368 = vadd.xlane.f32.xlu0 %v367
      %v369 = vpop.xlane.xlu0 %368
      %v370 = vsel %vm314, %v358, 0.0
      %371 = vadd.xlane.f32.xlu0 %v370
      %v372 = vpop.xlane.xlu0 %371
      %v373 = vsel %vm314, %v359, 0.0
      %374 = vadd.xlane.f32.xlu0 %v373
      %v375 = vpop.xlane.xlu0 %374
      %v376 = vsel %vm314, %v360, 0.0
      %377 = vadd.xlane.f32.xlu0 %v376
      %v378 = vpop.xlane.xlu0 %377
      %v379 = vsel %vm314, %v361, 0.0
      %380 = vadd.xlane.f32.xlu0 %v379
      %v381 = vpop.xlane.xlu0 %380
      %v382 = vsel %vm314, %v362, 0.0
      %383 = vadd.xlane.f32.xlu0 %v382
      %v384 = vpop.xlane.xlu0 %383
      %v385 = vsel %vm314, %v363, 0.0
      %386 = vadd.xlane.f32.xlu0 %v385
      %v387 = vpop.xlane.xlu0 %386
      %v388 = vmul.f32 %v366, %v339
      %v389 = vmul.f32 %v369, %v339
      %v390 = vmul.f32 %v372, %v339
      %v391 = vmul.f32 %v375, %v339
      %v392 = vmul.f32 %v378, %v339
      %v393 = vmul.f32 %v381, %v339
      %v394 = vmul.f32 %v384, %v339
      %v395 = vmul.f32 %v387, %v339
      %v396 = vadd.f32 %v388, 1e-05
      %v397 = vadd.f32 %v389, 1e-05
      %v398 = vadd.f32 %v390, 1e-05
      %v399 = vadd.f32 %v391, 1e-05
      %v400 = vadd.f32 %v392, 1e-05
      %v401 = vadd.f32 %v393, 1e-05
      %v402 = vadd.f32 %v394, 1e-05
      %v403 = vadd.f32 %v395, 1e-05
      %v404 = vrsqrt.pop %v396
      %v405 = vrsqrt.pop %v397
      %v406 = vrsqrt.pop %v398
      %v407 = vrsqrt.pop %v399
      %v408 = vrsqrt.pop %v400
      %v409 = vrsqrt.pop %v401
      %v410 = vrsqrt.pop %v402
      %v411 = vrsqrt.pop %v403
      %v412 = vmul.f32 %v348, %v404
      %v413 = vmul.f32 %v349, %v405
      %v414 = vmul.f32 %v350, %v406
      %v415 = vmul.f32 %v351, %v407
      %v416 = vmul.f32 %v352, %v408
      %v417 = vmul.f32 %v353, %v409
      %v418 = vmul.f32 %v354, %v410
      %v419 = vmul.f32 %v355, %v411
      %v420 = vld [vmem:[%s1] sm:$0x1]
      %v422 = vlaneseq
      %v423 = vshrl.u32 %v422, 7
      %v424 = vsub.s32 0, %v423
      %v425 = vrot.slane %v420, %v424
      %v427 = vmul.f32 %v412, %v425
      %v428 = vmul.f32 %v413, %v425
      %v429 = vmul.f32 %v414, %v425
      %v430 = vmul.f32 %v415, %v425
      %v431 = vmul.f32 %v416, %v425
      %v432 = vmul.f32 %v417, %v425
      %v433 = vmul.f32 %v418, %v425
      %v434 = vmul.f32 %v419, %v425
      %v435 = vld [vmem:[%s2] sm:$0x1]
      %v437 = vlaneseq
      %v438 = vshrl.u32 %v437, 7
      %v439 = vsub.s32 0, %v438
      %v440 = vrot.slane %v435, %v439
      %v442 = vadd.f32 %v427, %v440
      %v443 = vadd.f32 %v428, %v440
      %v444 = vadd.f32 %v429, %v440
      %v445 = vadd.f32 %v430, %v440
      %v446 = vadd.f32 %v431, %v440
      %v447 = vadd.f32 %v432, %v440
      %v448 = vadd.f32 %v433, %v440
      %v449 = vadd.f32 %v434, %v440
      %v450 = vld [vmem:[%s3] sm:$0xff]
      %v451 = vld [vmem:[%s3 + $0x8] sm:$0xff]
      %v453 = vsel %vm314, %v442, 0
      %v456 = vsel %vm314, %v443, 0
      %v459 = vsel %vm314, %v444, 0
      %v462 = vsel %vm314, %v445, 0
      %v465 = vsel %vm314, %v446, 0
      %v468 = vsel %vm314, %v447, 0
      %v471 = vsel %vm314, %v448, 0
      %v474 = vsel %vm314, %v449, 0
      %476 = vmatprep.subr.mxu0 0.0
      %477 = vmatpush1.msra.mxu0 0.0
      %478 = vmatprep.subr.mxu0 0.0
      %479 = vmatpush1.msra.mxu0 0.0
      %480 = vmatprep.subr.mxu0 0.0
      %481 = vmatpush1.msra.mxu0 0.0
      %482 = vmatprep.subr.mxu0 0.0
      %483 = vmatpush1.msra.mxu0 0.0
      %484 = vmatprep.subr.mxu0 0.0
      %485 = vmatpush1.msra.mxu0 0.0
      %486 = vmatprep.subr.mxu0 0.0
      %487 = vmatpush1.msra.mxu0 0.0
      %488 = vmatprep.subr.mxu0 0.0
      %489 = vmatpush1.msra.mxu0 0.0
      %490 = vmatprep.subr.mxu0 0.0
      %491 = vmatpush1.msra.mxu0 0.0
      %492 = vmatprep.subr.mxu0 0.0
      %493 = vmatpush1.msra.mxu0 0.0
      %494 = vmatprep.subr.mxu0 0.0
      %495 = vmatpush1.msra.mxu0 0.0
      %496 = vmatprep.subr.mxu0 0.0
      %497 = vmatpush1.msra.mxu0 0.0
      %498 = vmatprep.subr.mxu0 0.0
      %499 = vmatpush1.msra.mxu0 0.0
      %500 = vmatprep.subr.mxu0 0.0
      %501 = vmatpush1.msra.mxu0 0.0
      %502 = vmatprep.subr.mxu0 0.0
      %503 = vmatpush1.msra.mxu0 0.0
      %504 = vmatprep.subr.mxu0 0.0
      %v505 = vand.u32 %v451, 4294901760
      %506 = vmatpush1.msra.mxu0 %v505
      %507 = vmatprep.subr.mxu0 0.0
      %v508 = vand.u32 %v450, 4294901760
      %509 = vmatpush1.msra.mxu0 %v508
      %510 = vmatprep.subr.mxu0 0.0
      %511 = vmatpush2.msra.mxu0 0.0
      %512 = vmatprep.subr.mxu0 0.0
      %513 = vmatpush2.msra.mxu0 0.0
      %514 = vmatprep.subr.mxu0 0.0
      %515 = vmatpush2.msra.mxu0 0.0
      %516 = vmatprep.subr.mxu0 0.0
      %517 = vmatpush2.msra.mxu0 0.0
      %518 = vmatprep.subr.mxu0 0.0
      %519 = vmatpush2.msra.mxu0 0.0
      %520 = vmatprep.subr.mxu0 0.0
      %521 = vmatpush2.msra.mxu0 0.0
      %522 = vmatprep.subr.mxu0 0.0
      %523 = vmatpush2.msra.mxu0 0.0
      %524 = vmatprep.subr.mxu0 0.0
      %525 = vmatpush2.msra.mxu0 0.0
      %526 = vmatprep.subr.mxu0 0.0
      %527 = vmatpush2.msra.mxu0 0.0
      %528 = vmatprep.subr.mxu0 0.0
      %529 = vmatpush2.msra.mxu0 0.0
      %530 = vmatprep.subr.mxu0 0.0
      %531 = vmatpush2.msra.mxu0 0.0
      %532 = vmatprep.subr.mxu0 0.0
      %533 = vmatpush2.msra.mxu0 0.0
      %534 = vmatprep.subr.mxu0 0.0
      %535 = vmatpush2.msra.mxu0 0.0
      %536 = vmatprep.subr.mxu0 0.0
      %537 = vmatpush2.msra.mxu0 0.0
      %538 = vmatprep.subr.mxu0 0.0
      %539 = vmatpush2.msra.mxu0 0.0
      %540 = vmatprep.subr.mxu0 0.0
      %541 = vmatpush2.msra.mxu0 0.0
      %542 = vmatprep.mubr.f32.mxu0 0.0
      %v543 = vand.u32 %v453, 4294901760
      %v544 = vsub.f32 %v453, %v543
      %v545 = vand.u32 %v544, 4294901760
      %v546 = vsub.f32 %v544, %v545
      %v547 = vand.u32 %v546, 4294901760
      %548 = vmatmul.mubr.f32.gmra.mxu0 %v547
      %v549 = vpop.f32.mrf.mxu0
      %v550 = vadd.f32 0.0, %v549
      %v551 = vpop.f32.mrf.mxu0
      %552 = vmatprep.mubr.f32.mxu0 0.0
      %v553 = vand.u32 %v456, 4294901760
      %v554 = vsub.f32 %v456, %v553
      %v555 = vand.u32 %v554, 4294901760
      %v556 = vsub.f32 %v554, %v555
      %v557 = vand.u32 %v556, 4294901760
      %558 = vmatmul.mubr.f32.gmra.mxu0 %v557
      %v559 = vpop.f32.mrf.mxu0
      %v560 = vadd.f32 0.0, %v559
      %v561 = vpop.f32.mrf.mxu0
      %562 = vmatprep.mubr.f32.mxu0 0.0
      %v563 = vand.u32 %v459, 4294901760
      %v564 = vsub.f32 %v459, %v563
      %v565 = vand.u32 %v564, 4294901760
      %v566 = vsub.f32 %v564, %v565
      %v567 = vand.u32 %v566, 4294901760
      %568 = vmatmul.mubr.f32.gmra.mxu0 %v567
      %v569 = vpop.f32.mrf.mxu0
      %v570 = vadd.f32 0.0, %v569
      %v571 = vpop.f32.mrf.mxu0
      %572 = vmatprep.mubr.f32.mxu0 0.0
      %v573 = vand.u32 %v462, 4294901760
      %v574 = vsub.f32 %v462, %v573
      %v575 = vand.u32 %v574, 4294901760
      %v576 = vsub.f32 %v574, %v575
      %v577 = vand.u32 %v576, 4294901760
      %578 = vmatmul.mubr.f32.gmra.mxu0 %v577
      %v579 = vpop.f32.mrf.mxu0
      %v580 = vadd.f32 0.0, %v579
      %v581 = vpop.f32.mrf.mxu0
      %582 = vmatprep.mubr.f32.mxu0 0.0
      %v583 = vand.u32 %v465, 4294901760
      %v584 = vsub.f32 %v465, %v583
      %v585 = vand.u32 %v584, 4294901760
      %v586 = vsub.f32 %v584, %v585
      %v587 = vand.u32 %v586, 4294901760
      %588 = vmatmul.mubr.f32.gmra.mxu0 %v587
      %v589 = vpop.f32.mrf.mxu0
      %v590 = vadd.f32 0.0, %v589
      %v591 = vpop.f32.mrf.mxu0
      %592 = vmatprep.mubr.f32.mxu0 0.0
      %v593 = vand.u32 %v468, 4294901760
      %v594 = vsub.f32 %v468, %v593
      %v595 = vand.u32 %v594, 4294901760
      %v596 = vsub.f32 %v594, %v595
      %v597 = vand.u32 %v596, 4294901760
      %598 = vmatmul.mubr.f32.gmra.mxu0 %v597
      %v599 = vpop.f32.mrf.mxu0
      %v600 = vadd.f32 0.0, %v599
      %v601 = vpop.f32.mrf.mxu0
      %602 = vmatprep.mubr.f32.mxu0 0.0
      %v603 = vand.u32 %v471, 4294901760
      %v604 = vsub.f32 %v471, %v603
      %v605 = vand.u32 %v604, 4294901760
      %v606 = vsub.f32 %v604, %v605
      %v607 = vand.u32 %v606, 4294901760
      %608 = vmatmul.mubr.f32.gmra.mxu0 %v607
      %v609 = vpop.f32.mrf.mxu0
      %v610 = vadd.f32 0.0, %v609
      %v611 = vpop.f32.mrf.mxu0
      %612 = vmatprep.mubr.f32.mxu0 0.0
      %v613 = vand.u32 %v474, 4294901760
      %v614 = vsub.f32 %v474, %v613
      %v615 = vand.u32 %v614, 4294901760
      %v616 = vsub.f32 %v614, %v615
      %v617 = vand.u32 %v616, 4294901760
      %618 = vmatmul.mubr.f32.gmra.mxu0 %v617
      %v619 = vpop.f32.mrf.mxu0
      %v620 = vadd.f32 0.0, %v619
      %v621 = vpop.f32.mrf.mxu0
      %622 = vdwg.mxu0
      %623 = vmatprep.subr.mxu0 0.0
      %624 = vmatpush1.msra.mxu0 0.0
      %625 = vmatprep.subr.mxu0 0.0
      %626 = vmatpush1.msra.mxu0 0.0
      %627 = vmatprep.subr.mxu0 0.0
      %628 = vmatpush1.msra.mxu0 0.0
      %629 = vmatprep.subr.mxu0 0.0
      %630 = vmatpush1.msra.mxu0 0.0
      %631 = vmatprep.subr.mxu0 0.0
      %632 = vmatpush1.msra.mxu0 0.0
      %633 = vmatprep.subr.mxu0 0.0
      %634 = vmatpush1.msra.mxu0 0.0
      %635 = vmatprep.subr.mxu0 0.0
      %636 = vmatpush1.msra.mxu0 0.0
      %637 = vmatprep.subr.mxu0 0.0
      %638 = vmatpush1.msra.mxu0 0.0
      %639 = vmatprep.subr.mxu0 0.0
      %640 = vmatpush1.msra.mxu0 0.0
      %641 = vmatprep.subr.mxu0 0.0
      %642 = vmatpush1.msra.mxu0 0.0
      %643 = vmatprep.subr.mxu0 0.0
      %644 = vmatpush1.msra.mxu0 0.0
      %645 = vmatprep.subr.mxu0 0.0
      %646 = vmatpush1.msra.mxu0 0.0
      %647 = vmatprep.subr.mxu0 0.0
      %648 = vmatpush1.msra.mxu0 0.0
      %649 = vmatprep.subr.mxu0 0.0
      %650 = vmatpush1.msra.mxu0 0.0
      %651 = vmatprep.subr.mxu0 0.0
      %v652 = vand.u32 %v451, 4294901760
      %v653 = vsub.f32 %v451, %v652
      %v654 = vand.u32 %v653, 4294901760
      %v655 = vsub.f32 %v653, %v654
      %v656 = vand.u32 %v655, 4294901760
      %657 = vmatpush1.msra.mxu0 %v656
      %658 = vmatprep.subr.mxu0 0.0
      %v659 = vand.u32 %v450, 4294901760
      %v660 = vsub.f32 %v450, %v659
      %v661 = vand.u32 %v660, 4294901760
      %v662 = vsub.f32 %v660, %v661
      %v663 = vand.u32 %v662, 4294901760
      %664 = vmatpush1.msra.mxu0 %v663
      %665 = vmatprep.subr.mxu0 0.0
      %666 = vmatpush2.msra.mxu0 0.0
      %667 = vmatprep.subr.mxu0 0.0
      %668 = vmatpush2.msra.mxu0 0.0
      %669 = vmatprep.subr.mxu0 0.0
      %670 = vmatpush2.msra.mxu0 0.0
      %671 = vmatprep.subr.mxu0 0.0
      %672 = vmatpush2.msra.mxu0 0.0
      %673 = vmatprep.subr.mxu0 0.0
      %674 = vmatpush2.msra.mxu0 0.0
      %675 = vmatprep.subr.mxu0 0.0
      %676 = vmatpush2.msra.mxu0 0.0
      %677 = vmatprep.subr.mxu0 0.0
      %678 = vmatpush2.msra.mxu0 0.0
      %679 = vmatprep.subr.mxu0 0.0
      %680 = vmatpush2.msra.mxu0 0.0
      %681 = vmatprep.subr.mxu0 0.0
      %682 = vmatpush2.msra.mxu0 0.0
      %683 = vmatprep.subr.mxu0 0.0
      %684 = vmatpush2.msra.mxu0 0.0
      %685 = vmatprep.subr.mxu0 0.0
      %686 = vmatpush2.msra.mxu0 0.0
      %687 = vmatprep.subr.mxu0 0.0
      %688 = vmatpush2.msra.mxu0 0.0
      %689 = vmatprep.subr.mxu0 0.0
      %690 = vmatpush2.msra.mxu0 0.0
      %691 = vmatprep.subr.mxu0 0.0
      %692 = vmatpush2.msra.mxu0 0.0
      %693 = vmatprep.subr.mxu0 0.0
      %694 = vmatpush2.msra.mxu0 0.0
      %695 = vmatprep.subr.mxu0 0.0
      %696 = vmatpush2.msra.mxu0 0.0
      %697 = vmatprep.mubr.f32.mxu0 0.0
      %v698 = vand.u32 %v453, 4294901760
      %699 = vmatmul.mubr.f32.gmra.mxu0 %v698
      %v700 = vpop.f32.mrf.mxu0
      %v701 = vadd.f32 %v550, %v700
      %v702 = vpop.f32.mrf.mxu0
      %703 = vmatprep.mubr.f32.mxu0 0.0
      %v704 = vand.u32 %v456, 4294901760
      %705 = vmatmul.mubr.f32.gmra.mxu0 %v704
      %v706 = vpop.f32.mrf.mxu0
      %v707 = vadd.f32 %v560, %v706
      %v708 = vpop.f32.mrf.mxu0
      %709 = vmatprep.mubr.f32.mxu0 0.0
      %v710 = vand.u32 %v459, 4294901760
      %711 = vmatmul.mubr.f32.gmra.mxu0 %v710
      %v712 = vpop.f32.mrf.mxu0
      %v713 = vadd.f32 %v570, %v712
      %v714 = vpop.f32.mrf.mxu0
      %715 = vmatprep.mubr.f32.mxu0 0.0
      %v716 = vand.u32 %v462, 4294901760
      %717 = vmatmul.mubr.f32.gmra.mxu0 %v716
      %v718 = vpop.f32.mrf.mxu0
      %v719 = vadd.f32 %v580, %v718
      %v720 = vpop.f32.mrf.mxu0
      %721 = vmatprep.mubr.f32.mxu0 0.0
      %v722 = vand.u32 %v465, 4294901760
      %723 = vmatmul.mubr.f32.gmra.mxu0 %v722
      %v724 = vpop.f32.mrf.mxu0
      %v725 = vadd.f32 %v590, %v724
      %v726 = vpop.f32.mrf.mxu0
      %727 = vmatprep.mubr.f32.mxu0 0.0
      %v728 = vand.u32 %v468, 4294901760
      %729 = vmatmul.mubr.f32.gmra.mxu0 %v728
      %v730 = vpop.f32.mrf.mxu0
      %v731 = vadd.f32 %v600, %v730
      %v732 = vpop.f32.mrf.mxu0
      %733 = vmatprep.mubr.f32.mxu0 0.0
      %v734 = vand.u32 %v471, 4294901760
      %735 = vmatmul.mubr.f32.gmra.mxu0 %v734
      %v736 = vpop.f32.mrf.mxu0
      %v737 = vadd.f32 %v610, %v736
      %v738 = vpop.f32.mrf.mxu0
      %739 = vmatprep.mubr.f32.mxu0 0.0
      %v740 = vand.u32 %v474, 4294901760
      %741 = vmatmul.mubr.f32.gmra.mxu0 %v740
      %v742 = vpop.f32.mrf.mxu0
      %v743 = vadd.f32 %v620, %v742
      %v744 = vpop.f32.mrf.mxu0
      %745 = vdwg.mxu0
      %746 = vmatprep.subr.mxu0 0.0
      %747 = vmatpush1.msra.mxu0 0.0
      %748 = vmatprep.subr.mxu0 0.0
      %749 = vmatpush1.msra.mxu0 0.0
      %750 = vmatprep.subr.mxu0 0.0
      %751 = vmatpush1.msra.mxu0 0.0
      %752 = vmatprep.subr.mxu0 0.0
      %753 = vmatpush1.msra.mxu0 0.0
      %754 = vmatprep.subr.mxu0 0.0
      %755 = vmatpush1.msra.mxu0 0.0
      %756 = vmatprep.subr.mxu0 0.0
      %757 = vmatpush1.msra.mxu0 0.0
      %758 = vmatprep.subr.mxu0 0.0
      %759 = vmatpush1.msra.mxu0 0.0
      %760 = vmatprep.subr.mxu0 0.0
      %761 = vmatpush1.msra.mxu0 0.0
      %762 = vmatprep.subr.mxu0 0.0
      %763 = vmatpush1.msra.mxu0 0.0
      %764 = vmatprep.subr.mxu0 0.0
      %765 = vmatpush1.msra.mxu0 0.0
      %766 = vmatprep.subr.mxu0 0.0
      %767 = vmatpush1.msra.mxu0 0.0
      %768 = vmatprep.subr.mxu0 0.0
      %769 = vmatpush1.msra.mxu0 0.0
      %770 = vmatprep.subr.mxu0 0.0
      %771 = vmatpush1.msra.mxu0 0.0
      %772 = vmatprep.subr.mxu0 0.0
      %773 = vmatpush1.msra.mxu0 0.0
      %774 = vmatprep.subr.mxu0 0.0
      %v775 = vand.u32 %v451, 4294901760
      %v776 = vsub.f32 %v451, %v775
      %777 = vmatpush1.msra.mxu0 %v776
      %778 = vmatprep.subr.mxu0 0.0
      %v779 = vand.u32 %v450, 4294901760
      %v780 = vsub.f32 %v450, %v779
      %781 = vmatpush1.msra.mxu0 %v780
      %782 = vmatprep.subr.mxu0 0.0
      %783 = vmatpush2.msra.mxu0 0.0
      %784 = vmatprep.subr.mxu0 0.0
      %785 = vmatpush2.msra.mxu0 0.0
      %786 = vmatprep.subr.mxu0 0.0
      %787 = vmatpush2.msra.mxu0 0.0
      %788 = vmatprep.subr.mxu0 0.0
      %789 = vmatpush2.msra.mxu0 0.0
      %790 = vmatprep.subr.mxu0 0.0
      %791 = vmatpush2.msra.mxu0 0.0
      %792 = vmatprep.subr.mxu0 0.0
      %793 = vmatpush2.msra.mxu0 0.0
      %794 = vmatprep.subr.mxu0 0.0
      %795 = vmatpush2.msra.mxu0 0.0
      %796 = vmatprep.subr.mxu0 0.0
      %797 = vmatpush2.msra.mxu0 0.0
      %798 = vmatprep.subr.mxu0 0.0
      %799 = vmatpush2.msra.mxu0 0.0
      %800 = vmatprep.subr.mxu0 0.0
      %801 = vmatpush2.msra.mxu0 0.0
      %802 = vmatprep.subr.mxu0 0.0
      %803 = vmatpush2.msra.mxu0 0.0
      %804 = vmatprep.subr.mxu0 0.0
      %805 = vmatpush2.msra.mxu0 0.0
      %806 = vmatprep.subr.mxu0 0.0
      %807 = vmatpush2.msra.mxu0 0.0
      %808 = vmatprep.subr.mxu0 0.0
      %809 = vmatpush2.msra.mxu0 0.0
      %810 = vmatprep.subr.mxu0 0.0
      %811 = vmatpush2.msra.mxu0 0.0
      %812 = vmatprep.subr.mxu0 0.0
      %813 = vmatpush2.msra.mxu0 0.0
      %814 = vmatprep.mubr.f32.mxu0 0.0
      %v815 = vand.u32 %v453, 4294901760
      %v816 = vsub.f32 %v453, %v815
      %817 = vmatmul.mubr.f32.gmra.mxu0 %v816
      %v818 = vpop.f32.mrf.mxu0
      %v819 = vadd.f32 %v701, %v818
      %v820 = vpop.f32.mrf.mxu0
      %821 = vmatprep.mubr.f32.mxu0 0.0
      %v822 = vand.u32 %v456, 4294901760
      %v823 = vsub.f32 %v456, %v822
      %824 = vmatmul.mubr.f32.gmra.mxu0 %v823
      %v825 = vpop.f32.mrf.mxu0
      %v826 = vadd.f32 %v707, %v825
      %v827 = vpop.f32.mrf.mxu0
      %828 = vmatprep.mubr.f32.mxu0 0.0
      %v829 = vand.u32 %v459, 4294901760
      %v830 = vsub.f32 %v459, %v829
      %831 = vmatmul.mubr.f32.gmra.mxu0 %v830
      %v832 = vpop.f32.mrf.mxu0
      %v833 = vadd.f32 %v713, %v832
      %v834 = vpop.f32.mrf.mxu0
      %835 = vmatprep.mubr.f32.mxu0 0.0
      %v836 = vand.u32 %v462, 4294901760
      %v837 = vsub.f32 %v462, %v836
      %838 = vmatmul.mubr.f32.gmra.mxu0 %v837
      %v839 = vpop.f32.mrf.mxu0
      %v840 = vadd.f32 %v719, %v839
      %v841 = vpop.f32.mrf.mxu0
      %842 = vmatprep.mubr.f32.mxu0 0.0
      %v843 = vand.u32 %v465, 4294901760
      %v844 = vsub.f32 %v465, %v843
      %845 = vmatmul.mubr.f32.gmra.mxu0 %v844
      %v846 = vpop.f32.mrf.mxu0
      %v847 = vadd.f32 %v725, %v846
      %v848 = vpop.f32.mrf.mxu0
      %849 = vmatprep.mubr.f32.mxu0 0.0
      %v850 = vand.u32 %v468, 4294901760
      %v851 = vsub.f32 %v468, %v850
      %852 = vmatmul.mubr.f32.gmra.mxu0 %v851
      %v853 = vpop.f32.mrf.mxu0
      %v854 = vadd.f32 %v731, %v853
      %v855 = vpop.f32.mrf.mxu0
      %856 = vmatprep.mubr.f32.mxu0 0.0
      %v857 = vand.u32 %v471, 4294901760
      %v858 = vsub.f32 %v471, %v857
      %859 = vmatmul.mubr.f32.gmra.mxu0 %v858
      %v860 = vpop.f32.mrf.mxu0
      %v861 = vadd.f32 %v737, %v860
      %v862 = vpop.f32.mrf.mxu0
      %863 = vmatprep.mubr.f32.mxu0 0.0
      %v864 = vand.u32 %v474, 4294901760
      %v865 = vsub.f32 %v474, %v864
      %866 = vmatmul.mubr.f32.gmra.mxu0 %v865
      %v867 = vpop.f32.mrf.mxu0
      %v868 = vadd.f32 %v743, %v867
      %v869 = vpop.f32.mrf.mxu0
      %870 = vdwg.mxu0
      %871 = vmatprep.subr.mxu0 0.0
      %872 = vmatpush1.msra.mxu0 0.0
      %873 = vmatprep.subr.mxu0 0.0
      %874 = vmatpush1.msra.mxu0 0.0
      %875 = vmatprep.subr.mxu0 0.0
      %876 = vmatpush1.msra.mxu0 0.0
      %877 = vmatprep.subr.mxu0 0.0
      %878 = vmatpush1.msra.mxu0 0.0
      %879 = vmatprep.subr.mxu0 0.0
      %880 = vmatpush1.msra.mxu0 0.0
      %881 = vmatprep.subr.mxu0 0.0
      %882 = vmatpush1.msra.mxu0 0.0
      %883 = vmatprep.subr.mxu0 0.0
      %884 = vmatpush1.msra.mxu0 0.0
      %885 = vmatprep.subr.mxu0 0.0
      %886 = vmatpush1.msra.mxu0 0.0
      %887 = vmatprep.subr.mxu0 0.0
      %888 = vmatpush1.msra.mxu0 0.0
      %889 = vmatprep.subr.mxu0 0.0
      %890 = vmatpush1.msra.mxu0 0.0
      %891 = vmatprep.subr.mxu0 0.0
      %892 = vmatpush1.msra.mxu0 0.0
      %893 = vmatprep.subr.mxu0 0.0
      %894 = vmatpush1.msra.mxu0 0.0
      %895 = vmatprep.subr.mxu0 0.0
      %896 = vmatpush1.msra.mxu0 0.0
      %897 = vmatprep.subr.mxu0 0.0
      %898 = vmatpush1.msra.mxu0 0.0
      %899 = vmatprep.subr.mxu0 0.0
      %v900 = vand.u32 %v451, 4294901760
      %901 = vmatpush1.msra.mxu0 %v900
      %902 = vmatprep.subr.mxu0 0.0
      %v903 = vand.u32 %v450, 4294901760
      %904 = vmatpush1.msra.mxu0 %v903
      %905 = vmatprep.subr.mxu0 0.0
      %906 = vmatpush2.msra.mxu0 0.0
      %907 = vmatprep.subr.mxu0 0.0
      %908 = vmatpush2.msra.mxu0 0.0
      %909 = vmatprep.subr.mxu0 0.0
      %910 = vmatpush2.msra.mxu0 0.0
      %911 = vmatprep.subr.mxu0 0.0
      %912 = vmatpush2.msra.mxu0 0.0
      %913 = vmatprep.subr.mxu0 0.0
      %914 = vmatpush2.msra.mxu0 0.0
      %915 = vmatprep.subr.mxu0 0.0
      %916 = vmatpush2.msra.mxu0 0.0
      %917 = vmatprep.subr.mxu0 0.0
      %918 = vmatpush2.msra.mxu0 0.0
      %919 = vmatprep.subr.mxu0 0.0
      %920 = vmatpush2.msra.mxu0 0.0
      %921 = vmatprep.subr.mxu0 0.0
      %922 = vmatpush2.msra.mxu0 0.0
      %923 = vmatprep.subr.mxu0 0.0
      %924 = vmatpush2.msra.mxu0 0.0
      %925 = vmatprep.subr.mxu0 0.0
      %926 = vmatpush2.msra.mxu0 0.0
      %927 = vmatprep.subr.mxu0 0.0
      %928 = vmatpush2.msra.mxu0 0.0
      %929 = vmatprep.subr.mxu0 0.0
      %930 = vmatpush2.msra.mxu0 0.0
      %931 = vmatprep.subr.mxu0 0.0
      %932 = vmatpush2.msra.mxu0 0.0
      %933 = vmatprep.subr.mxu0 0.0
      %934 = vmatpush2.msra.mxu0 0.0
      %935 = vmatprep.subr.mxu0 0.0
      %936 = vmatpush2.msra.mxu0 0.0
      %937 = vmatprep.mubr.f32.mxu0 0.0
      %v938 = vand.u32 %v453, 4294901760
      %v939 = vsub.f32 %v453, %v938
      %v940 = vand.u32 %v939, 4294901760
      %941 = vmatmul.mubr.f32.gmra.mxu0 %v940
      %v942 = vpop.f32.mrf.mxu0
      %v943 = vadd.f32 %v819, %v942
      %v944 = vpop.f32.mrf.mxu0
      %945 = vmatprep.mubr.f32.mxu0 0.0
      %v946 = vand.u32 %v456, 4294901760
      %v947 = vsub.f32 %v456, %v946
      %v948 = vand.u32 %v947, 4294901760
      %949 = vmatmul.mubr.f32.gmra.mxu0 %v948
      %v950 = vpop.f32.mrf.mxu0
      %v951 = vadd.f32 %v826, %v950
      %v952 = vpop.f32.mrf.mxu0
      %953 = vmatprep.mubr.f32.mxu0 0.0
      %v954 = vand.u32 %v459, 4294901760
      %v955 = vsub.f32 %v459, %v954
      %v956 = vand.u32 %v955, 4294901760
      %957 = vmatmul.mubr.f32.gmra.mxu0 %v956
      %v958 = vpop.f32.mrf.mxu0
      %v959 = vadd.f32 %v833, %v958
      %v960 = vpop.f32.mrf.mxu0
      %961 = vmatprep.mubr.f32.mxu0 0.0
      %v962 = vand.u32 %v462, 4294901760
      %v963 = vsub.f32 %v462, %v962
      %v964 = vand.u32 %v963, 4294901760
      %965 = vmatmul.mubr.f32.gmra.mxu0 %v964
      %v966 = vpop.f32.mrf.mxu0
      %v967 = vadd.f32 %v840, %v966
      %v968 = vpop.f32.mrf.mxu0
      %969 = vmatprep.mubr.f32.mxu0 0.0
      %v970 = vand.u32 %v465, 4294901760
      %v971 = vsub.f32 %v465, %v970
      %v972 = vand.u32 %v971, 4294901760
      %973 = vmatmul.mubr.f32.gmra.mxu0 %v972
      %v974 = vpop.f32.mrf.mxu0
      %v975 = vadd.f32 %v847, %v974
      %v976 = vpop.f32.mrf.mxu0
      %977 = vmatprep.mubr.f32.mxu0 0.0
      %v978 = vand.u32 %v468, 4294901760
      %v979 = vsub.f32 %v468, %v978
      %v980 = vand.u32 %v979, 4294901760
      %981 = vmatmul.mubr.f32.gmra.mxu0 %v980
      %v982 = vpop.f32.mrf.mxu0
      %v983 = vadd.f32 %v854, %v982
      %v984 = vpop.f32.mrf.mxu0
      %985 = vmatprep.mubr.f32.mxu0 0.0
      %v986 = vand.u32 %v471, 4294901760
      %v987 = vsub.f32 %v471, %v986
      %v988 = vand.u32 %v987, 4294901760
      %989 = vmatmul.mubr.f32.gmra.mxu0 %v988
      %v990 = vpop.f32.mrf.mxu0
      %v991 = vadd.f32 %v861, %v990
      %v992 = vpop.f32.mrf.mxu0
      %993 = vmatprep.mubr.f32.mxu0 0.0
      %v994 = vand.u32 %v474, 4294901760
      %v995 = vsub.f32 %v474, %v994
      %v996 = vand.u32 %v995, 4294901760
      %997 = vmatmul.mubr.f32.gmra.mxu0 %v996
      %v998 = vpop.f32.mrf.mxu0
      %v999 = vadd.f32 %v868, %v998
      %v1000 = vpop.f32.mrf.mxu0
      %1001 = vdwg.mxu0
      %1002 = vmatprep.subr.mxu0 0.0
      %1003 = vmatpush1.msra.mxu0 0.0
      %1004 = vmatprep.subr.mxu0 0.0
      %1005 = vmatpush1.msra.mxu0 0.0
      %1006 = vmatprep.subr.mxu0 0.0
      %1007 = vmatpush1.msra.mxu0 0.0
      %1008 = vmatprep.subr.mxu0 0.0
      %1009 = vmatpush1.msra.mxu0 0.0
      %1010 = vmatprep.subr.mxu0 0.0
      %1011 = vmatpush1.msra.mxu0 0.0
      %1012 = vmatprep.subr.mxu0 0.0
      %1013 = vmatpush1.msra.mxu0 0.0
      %1014 = vmatprep.subr.mxu0 0.0
      %1015 = vmatpush1.msra.mxu0 0.0
      %1016 = vmatprep.subr.mxu0 0.0
      %1017 = vmatpush1.msra.mxu0 0.0
      %1018 = vmatprep.subr.mxu0 0.0
      %1019 = vmatpush1.msra.mxu0 0.0
      %1020 = vmatprep.subr.mxu0 0.0
      %1021 = vmatpush1.msra.mxu0 0.0
      %1022 = vmatprep.subr.mxu0 0.0
      %1023 = vmatpush1.msra.mxu0 0.0
      %1024 = vmatprep.subr.mxu0 0.0
      %1025 = vmatpush1.msra.mxu0 0.0
      %1026 = vmatprep.subr.mxu0 0.0
      %1027 = vmatpush1.msra.mxu0 0.0
      %1028 = vmatprep.subr.mxu0 0.0
      %1029 = vmatpush1.msra.mxu0 0.0
      %1030 = vmatprep.subr.mxu0 0.0
      %v1031 = vand.u32 %v451, 4294901760
      %v1032 = vsub.f32 %v451, %v1031
      %v1033 = vand.u32 %v1032, 4294901760
      %1034 = vmatpush1.msra.mxu0 %v1033
      %1035 = vmatprep.subr.mxu0 0.0
      %v1036 = vand.u32 %v450, 4294901760
      %v1037 = vsub.f32 %v450, %v1036
      %v1038 = vand.u32 %v1037, 4294901760
      %1039 = vmatpush1.msra.mxu0 %v1038
      %1040 = vmatprep.subr.mxu0 0.0
      %1041 = vmatpush2.msra.mxu0 0.0
      %1042 = vmatprep.subr.mxu0 0.0
      %1043 = vmatpush2.msra.mxu0 0.0
      %1044 = vmatprep.subr.mxu0 0.0
      %1045 = vmatpush2.msra.mxu0 0.0
      %1046 = vmatprep.subr.mxu0 0.0
      %1047 = vmatpush2.msra.mxu0 0.0
      %1048 = vmatprep.subr.mxu0 0.0
      %1049 = vmatpush2.msra.mxu0 0.0
      %1050 = vmatprep.subr.mxu0 0.0
      %1051 = vmatpush2.msra.mxu0 0.0
      %1052 = vmatprep.subr.mxu0 0.0
      %1053 = vmatpush2.msra.mxu0 0.0
      %1054 = vmatprep.subr.mxu0 0.0
      %1055 = vmatpush2.msra.mxu0 0.0
      %1056 = vmatprep.subr.mxu0 0.0
      %1057 = vmatpush2.msra.mxu0 0.0
      %1058 = vmatprep.subr.mxu0 0.0
      %1059 = vmatpush2.msra.mxu0 0.0
      %1060 = vmatprep.subr.mxu0 0.0
      %1061 = vmatpush2.msra.mxu0 0.0
      %1062 = vmatprep.subr.mxu0 0.0
      %1063 = vmatpush2.msra.mxu0 0.0
      %1064 = vmatprep.subr.mxu0 0.0
      %1065 = vmatpush2.msra.mxu0 0.0
      %1066 = vmatprep.subr.mxu0 0.0
      %1067 = vmatpush2.msra.mxu0 0.0
      %1068 = vmatprep.subr.mxu0 0.0
      %1069 = vmatpush2.msra.mxu0 0.0
      %1070 = vmatprep.subr.mxu0 0.0
      %1071 = vmatpush2.msra.mxu0 0.0
      %1072 = vmatprep.mubr.f32.mxu0 0.0
      %v1073 = vand.u32 %v453, 4294901760
      %1074 = vmatmul.mubr.f32.gmra.mxu0 %v1073
      %v1075 = vpop.f32.mrf.mxu0
      %v1076 = vadd.f32 %v943, %v1075
      %v1077 = vpop.f32.mrf.mxu0
      %1078 = vmatprep.mubr.f32.mxu0 0.0
      %v1079 = vand.u32 %v456, 4294901760
      %1080 = vmatmul.mubr.f32.gmra.mxu0 %v1079
      %v1081 = vpop.f32.mrf.mxu0
      %v1082 = vadd.f32 %v951, %v1081
      %v1083 = vpop.f32.mrf.mxu0
      %1084 = vmatprep.mubr.f32.mxu0 0.0
      %v1085 = vand.u32 %v459, 4294901760
      %1086 = vmatmul.mubr.f32.gmra.mxu0 %v1085
      %v1087 = vpop.f32.mrf.mxu0
      %v1088 = vadd.f32 %v959, %v1087
      %v1089 = vpop.f32.mrf.mxu0
      %1090 = vmatprep.mubr.f32.mxu0 0.0
      %v1091 = vand.u32 %v462, 4294901760
      %1092 = vmatmul.mubr.f32.gmra.mxu0 %v1091
      %v1093 = vpop.f32.mrf.mxu0
      %v1094 = vadd.f32 %v967, %v1093
      %v1095 = vpop.f32.mrf.mxu0
      %1096 = vmatprep.mubr.f32.mxu0 0.0
      %v1097 = vand.u32 %v465, 4294901760
      %1098 = vmatmul.mubr.f32.gmra.mxu0 %v1097
      %v1099 = vpop.f32.mrf.mxu0
      %v1100 = vadd.f32 %v975, %v1099
      %v1101 = vpop.f32.mrf.mxu0
      %1102 = vmatprep.mubr.f32.mxu0 0.0
      %v1103 = vand.u32 %v468, 4294901760
      %1104 = vmatmul.mubr.f32.gmra.mxu0 %v1103
      %v1105 = vpop.f32.mrf.mxu0
      %v1106 = vadd.f32 %v983, %v1105
      %v1107 = vpop.f32.mrf.mxu0
      %1108 = vmatprep.mubr.f32.mxu0 0.0
      %v1109 = vand.u32 %v471, 4294901760
      %1110 = vmatmul.mubr.f32.gmra.mxu0 %v1109
      %v1111 = vpop.f32.mrf.mxu0
      %v1112 = vadd.f32 %v991, %v1111
      %v1113 = vpop.f32.mrf.mxu0
      %1114 = vmatprep.mubr.f32.mxu0 0.0
      %v1115 = vand.u32 %v474, 4294901760
      %1116 = vmatmul.mubr.f32.gmra.mxu0 %v1115
      %v1117 = vpop.f32.mrf.mxu0
      %v1118 = vadd.f32 %v999, %v1117
      %v1119 = vpop.f32.mrf.mxu0
      %1120 = vdwg.mxu0
      %1121 = vmatprep.subr.mxu0 0.0
      %1122 = vmatpush1.msra.mxu0 0.0
      %1123 = vmatprep.subr.mxu0 0.0
      %1124 = vmatpush1.msra.mxu0 0.0
      %1125 = vmatprep.subr.mxu0 0.0
      %1126 = vmatpush1.msra.mxu0 0.0
      %1127 = vmatprep.subr.mxu0 0.0
      %1128 = vmatpush1.msra.mxu0 0.0
      %1129 = vmatprep.subr.mxu0 0.0
      %1130 = vmatpush1.msra.mxu0 0.0
      %1131 = vmatprep.subr.mxu0 0.0
      %1132 = vmatpush1.msra.mxu0 0.0
      %1133 = vmatprep.subr.mxu0 0.0
      %1134 = vmatpush1.msra.mxu0 0.0
      %1135 = vmatprep.subr.mxu0 0.0
      %1136 = vmatpush1.msra.mxu0 0.0
      %1137 = vmatprep.subr.mxu0 0.0
      %1138 = vmatpush1.msra.mxu0 0.0
      %1139 = vmatprep.subr.mxu0 0.0
      %1140 = vmatpush1.msra.mxu0 0.0
      %1141 = vmatprep.subr.mxu0 0.0
      %1142 = vmatpush1.msra.mxu0 0.0
      %1143 = vmatprep.subr.mxu0 0.0
      %1144 = vmatpush1.msra.mxu0 0.0
      %1145 = vmatprep.subr.mxu0 0.0
      %1146 = vmatpush1.msra.mxu0 0.0
      %1147 = vmatprep.subr.mxu0 0.0
      %1148 = vmatpush1.msra.mxu0 0.0
      %1149 = vmatprep.subr.mxu0 0.0
      %v1150 = vand.u32 %v451, 4294901760
      %1151 = vmatpush1.msra.mxu0 %v1150
      %1152 = vmatprep.subr.mxu0 0.0
      %v1153 = vand.u32 %v450, 4294901760
      %1154 = vmatpush1.msra.mxu0 %v1153
      %1155 = vmatprep.subr.mxu0 0.0
      %1156 = vmatpush2.msra.mxu0 0.0
      %1157 = vmatprep.subr.mxu0 0.0
      %1158 = vmatpush2.msra.mxu0 0.0
      %1159 = vmatprep.subr.mxu0 0.0
      %1160 = vmatpush2.msra.mxu0 0.0
      %1161 = vmatprep.subr.mxu0 0.0
      %1162 = vmatpush2.msra.mxu0 0.0
      %1163 = vmatprep.subr.mxu0 0.0
      %1164 = vmatpush2.msra.mxu0 0.0
      %1165 = vmatprep.subr.mxu0 0.0
      %1166 = vmatpush2.msra.mxu0 0.0
      %1167 = vmatprep.subr.mxu0 0.0
      %1168 = vmatpush2.msra.mxu0 0.0
      %1169 = vmatprep.subr.mxu0 0.0
      %1170 = vmatpush2.msra.mxu0 0.0
      %1171 = vmatprep.subr.mxu0 0.0
      %1172 = vmatpush2.msra.mxu0 0.0
      %1173 = vmatprep.subr.mxu0 0.0
      %1174 = vmatpush2.msra.mxu0 0.0
      %1175 = vmatprep.subr.mxu0 0.0
      %1176 = vmatpush2.msra.mxu0 0.0
      %1177 = vmatprep.subr.mxu0 0.0
      %1178 = vmatpush2.msra.mxu0 0.0
      %1179 = vmatprep.subr.mxu0 0.0
      %1180 = vmatpush2.msra.mxu0 0.0
      %1181 = vmatprep.subr.mxu0 0.0
      %1182 = vmatpush2.msra.mxu0 0.0
      %1183 = vmatprep.subr.mxu0 0.0
      %1184 = vmatpush2.msra.mxu0 0.0
      %1185 = vmatprep.subr.mxu0 0.0
      %1186 = vmatpush2.msra.mxu0 0.0
      %1187 = vmatprep.mubr.f32.mxu0 0.0
      %v1188 = vand.u32 %v453, 4294901760
      %1189 = vmatmul.mubr.f32.gmra.mxu0 %v1188
      %v1190 = vpop.f32.mrf.mxu0
      %v1191 = vadd.f32 %v1076, %v1190
      %v1192 = vpop.f32.mrf.mxu0
      %1193 = vmatprep.mubr.f32.mxu0 0.0
      %v1194 = vand.u32 %v456, 4294901760
      %1195 = vmatmul.mubr.f32.gmra.mxu0 %v1194
      %v1196 = vpop.f32.mrf.mxu0
      %v1197 = vadd.f32 %v1082, %v1196
      %v1198 = vpop.f32.mrf.mxu0
      %1199 = vmatprep.mubr.f32.mxu0 0.0
      %v1200 = vand.u32 %v459, 4294901760
      %1201 = vmatmul.mubr.f32.gmra.mxu0 %v1200
      %v1202 = vpop.f32.mrf.mxu0
      %v1203 = vadd.f32 %v1088, %v1202
      %v1204 = vpop.f32.mrf.mxu0
      %1205 = vmatprep.mubr.f32.mxu0 0.0
      %v1206 = vand.u32 %v462, 4294901760
      %1207 = vmatmul.mubr.f32.gmra.mxu0 %v1206
      %v1208 = vpop.f32.mrf.mxu0
      %v1209 = vadd.f32 %v1094, %v1208
      %v1210 = vpop.f32.mrf.mxu0
      %1211 = vmatprep.mubr.f32.mxu0 0.0
      %v1212 = vand.u32 %v465, 4294901760
      %1213 = vmatmul.mubr.f32.gmra.mxu0 %v1212
      %v1214 = vpop.f32.mrf.mxu0
      %v1215 = vadd.f32 %v1100, %v1214
      %v1216 = vpop.f32.mrf.mxu0
      %1217 = vmatprep.mubr.f32.mxu0 0.0
      %v1218 = vand.u32 %v468, 4294901760
      %1219 = vmatmul.mubr.f32.gmra.mxu0 %v1218
      %v1220 = vpop.f32.mrf.mxu0
      %v1221 = vadd.f32 %v1106, %v1220
      %v1222 = vpop.f32.mrf.mxu0
      %1223 = vmatprep.mubr.f32.mxu0 0.0
      %v1224 = vand.u32 %v471, 4294901760
      %1225 = vmatmul.mubr.f32.gmra.mxu0 %v1224
      %v1226 = vpop.f32.mrf.mxu0
      %v1227 = vadd.f32 %v1112, %v1226
      %v1228 = vpop.f32.mrf.mxu0
      %1229 = vmatprep.mubr.f32.mxu0 0.0
      %v1230 = vand.u32 %v474, 4294901760
      %1231 = vmatmul.mubr.f32.gmra.mxu0 %v1230
      %v1232 = vpop.f32.mrf.mxu0
      %v1233 = vadd.f32 %v1118, %v1232
      %v1234 = vpop.f32.mrf.mxu0
      %1235 = vdwg.mxu0
      %v1236 = vld [vmem:[%s4] sm:$0xff]
      %v1237 = vld [vmem:[%s4 + $0x8] sm:$0xff]
      %1238 = vmatprep.subr.mxu0 0.0
      %1239 = vmatpush1.msra.mxu0 0.0
      %1240 = vmatprep.subr.mxu0 0.0
      %1241 = vmatpush1.msra.mxu0 0.0
      %1242 = vmatprep.subr.mxu0 0.0
      %1243 = vmatpush1.msra.mxu0 0.0
      %1244 = vmatprep.subr.mxu0 0.0
      %1245 = vmatpush1.msra.mxu0 0.0
      %1246 = vmatprep.subr.mxu0 0.0
      %1247 = vmatpush1.msra.mxu0 0.0
      %1248 = vmatprep.subr.mxu0 0.0
      %1249 = vmatpush1.msra.mxu0 0.0
      %1250 = vmatprep.subr.mxu0 0.0
      %1251 = vmatpush1.msra.mxu0 0.0
      %1252 = vmatprep.subr.mxu0 0.0
      %1253 = vmatpush1.msra.mxu0 0.0
      %1254 = vmatprep.subr.mxu0 0.0
      %1255 = vmatpush1.msra.mxu0 0.0
      %1256 = vmatprep.subr.mxu0 0.0
      %1257 = vmatpush1.msra.mxu0 0.0
      %1258 = vmatprep.subr.mxu0 0.0
      %1259 = vmatpush1.msra.mxu0 0.0
      %1260 = vmatprep.subr.mxu0 0.0
      %1261 = vmatpush1.msra.mxu0 0.0
      %1262 = vmatprep.subr.mxu0 0.0
      %1263 = vmatpush1.msra.mxu0 0.0
      %1264 = vmatprep.subr.mxu0 0.0
      %1265 = vmatpush1.msra.mxu0 0.0
      %1266 = vmatprep.subr.mxu0 0.0
      %v1267 = vand.u32 %v1237, 4294901760
      %1268 = vmatpush1.msra.mxu0 %v1267
      %1269 = vmatprep.subr.mxu0 0.0
      %v1270 = vand.u32 %v1236, 4294901760
      %1271 = vmatpush1.msra.mxu0 %v1270
      %1272 = vmatprep.subr.mxu0 0.0
      %1273 = vmatpush2.msra.mxu0 0.0
      %1274 = vmatprep.subr.mxu0 0.0
      %1275 = vmatpush2.msra.mxu0 0.0
      %1276 = vmatprep.subr.mxu0 0.0
      %1277 = vmatpush2.msra.mxu0 0.0
      %1278 = vmatprep.subr.mxu0 0.0
      %1279 = vmatpush2.msra.mxu0 0.0
      %1280 = vmatprep.subr.mxu0 0.0
      %1281 = vmatpush2.msra.mxu0 0.0
      %1282 = vmatprep.subr.mxu0 0.0
      %1283 = vmatpush2.msra.mxu0 0.0
      %1284 = vmatprep.subr.mxu0 0.0
      %1285 = vmatpush2.msra.mxu0 0.0
      %1286 = vmatprep.subr.mxu0 0.0
      %1287 = vmatpush2.msra.mxu0 0.0
      %1288 = vmatprep.subr.mxu0 0.0
      %1289 = vmatpush2.msra.mxu0 0.0
      %1290 = vmatprep.subr.mxu0 0.0
      %1291 = vmatpush2.msra.mxu0 0.0
      %1292 = vmatprep.subr.mxu0 0.0
      %1293 = vmatpush2.msra.mxu0 0.0
      %1294 = vmatprep.subr.mxu0 0.0
      %1295 = vmatpush2.msra.mxu0 0.0
      %1296 = vmatprep.subr.mxu0 0.0
      %1297 = vmatpush2.msra.mxu0 0.0
      %1298 = vmatprep.subr.mxu0 0.0
      %1299 = vmatpush2.msra.mxu0 0.0
      %1300 = vmatprep.subr.mxu0 0.0
      %1301 = vmatpush2.msra.mxu0 0.0
      %1302 = vmatprep.subr.mxu0 0.0
      %1303 = vmatpush2.msra.mxu0 0.0
      %1304 = vmatprep.mubr.f32.mxu0 0.0
      %v1305 = vand.u32 %v453, 4294901760
      %v1306 = vsub.f32 %v453, %v1305
      %v1307 = vand.u32 %v1306, 4294901760
      %v1308 = vsub.f32 %v1306, %v1307
      %v1309 = vand.u32 %v1308, 4294901760
      %1310 = vmatmul.mubr.f32.gmra.mxu0 %v1309
      %v1311 = vpop.f32.mrf.mxu0
      %v1312 = vadd.f32 0.0, %v1311
      %v1313 = vpop.f32.mrf.mxu0
      %1314 = vmatprep.mubr.f32.mxu0 0.0
      %v1315 = vand.u32 %v456, 4294901760
      %v1316 = vsub.f32 %v456, %v1315
      %v1317 = vand.u32 %v1316, 4294901760
      %v1318 = vsub.f32 %v1316, %v1317
      %v1319 = vand.u32 %v1318, 4294901760
      %1320 = vmatmul.mubr.f32.gmra.mxu0 %v1319
      %v1321 = vpop.f32.mrf.mxu0
      %v1322 = vadd.f32 0.0, %v1321
      %v1323 = vpop.f32.mrf.mxu0
      %1324 = vmatprep.mubr.f32.mxu0 0.0
      %v1325 = vand.u32 %v459, 4294901760
      %v1326 = vsub.f32 %v459, %v1325
      %v1327 = vand.u32 %v1326, 4294901760
      %v1328 = vsub.f32 %v1326, %v1327
      %v1329 = vand.u32 %v1328, 4294901760
      %1330 = vmatmul.mubr.f32.gmra.mxu0 %v1329
      %v1331 = vpop.f32.mrf.mxu0
      %v1332 = vadd.f32 0.0, %v1331
      %v1333 = vpop.f32.mrf.mxu0
      %1334 = vmatprep.mubr.f32.mxu0 0.0
      %v1335 = vand.u32 %v462, 4294901760
      %v1336 = vsub.f32 %v462, %v1335
      %v1337 = vand.u32 %v1336, 4294901760
      %v1338 = vsub.f32 %v1336, %v1337
      %v1339 = vand.u32 %v1338, 4294901760
      %1340 = vmatmul.mubr.f32.gmra.mxu0 %v1339
      %v1341 = vpop.f32.mrf.mxu0
      %v1342 = vadd.f32 0.0, %v1341
      %v1343 = vpop.f32.mrf.mxu0
      %1344 = vmatprep.mubr.f32.mxu0 0.0
      %v1345 = vand.u32 %v465, 4294901760
      %v1346 = vsub.f32 %v465, %v1345
      %v1347 = vand.u32 %v1346, 4294901760
      %v1348 = vsub.f32 %v1346, %v1347
      %v1349 = vand.u32 %v1348, 4294901760
      %1350 = vmatmul.mubr.f32.gmra.mxu0 %v1349
      %v1351 = vpop.f32.mrf.mxu0
      %v1352 = vadd.f32 0.0, %v1351
      %v1353 = vpop.f32.mrf.mxu0
      %1354 = vmatprep.mubr.f32.mxu0 0.0
      %v1355 = vand.u32 %v468, 4294901760
      %v1356 = vsub.f32 %v468, %v1355
      %v1357 = vand.u32 %v1356, 4294901760
      %v1358 = vsub.f32 %v1356, %v1357
      %v1359 = vand.u32 %v1358, 4294901760
      %1360 = vmatmul.mubr.f32.gmra.mxu0 %v1359
      %v1361 = vpop.f32.mrf.mxu0
      %v1362 = vadd.f32 0.0, %v1361
      %v1363 = vpop.f32.mrf.mxu0
      %1364 = vmatprep.mubr.f32.mxu0 0.0
      %v1365 = vand.u32 %v471, 4294901760
      %v1366 = vsub.f32 %v471, %v1365
      %v1367 = vand.u32 %v1366, 4294901760
      %v1368 = vsub.f32 %v1366, %v1367
      %v1369 = vand.u32 %v1368, 4294901760
      %1370 = vmatmul.mubr.f32.gmra.mxu0 %v1369
      %v1371 = vpop.f32.mrf.mxu0
      %v1372 = vadd.f32 0.0, %v1371
      %v1373 = vpop.f32.mrf.mxu0
      %1374 = vmatprep.mubr.f32.mxu0 0.0
      %v1375 = vand.u32 %v474, 4294901760
      %v1376 = vsub.f32 %v474, %v1375
      %v1377 = vand.u32 %v1376, 4294901760
      %v1378 = vsub.f32 %v1376, %v1377
      %v1379 = vand.u32 %v1378, 4294901760
      %1380 = vmatmul.mubr.f32.gmra.mxu0 %v1379
      %v1381 = vpop.f32.mrf.mxu0
      %v1382 = vadd.f32 0.0, %v1381
      %v1383 = vpop.f32.mrf.mxu0
      %1384 = vdwg.mxu0
      %1385 = vmatprep.subr.mxu0 0.0
      %1386 = vmatpush1.msra.mxu0 0.0
      %1387 = vmatprep.subr.mxu0 0.0
      %1388 = vmatpush1.msra.mxu0 0.0
      %1389 = vmatprep.subr.mxu0 0.0
      %1390 = vmatpush1.msra.mxu0 0.0
      %1391 = vmatprep.subr.mxu0 0.0
      %1392 = vmatpush1.msra.mxu0 0.0
      %1393 = vmatprep.subr.mxu0 0.0
      %1394 = vmatpush1.msra.mxu0 0.0
      %1395 = vmatprep.subr.mxu0 0.0
      %1396 = vmatpush1.msra.mxu0 0.0
      %1397 = vmatprep.subr.mxu0 0.0
      %1398 = vmatpush1.msra.mxu0 0.0
      %1399 = vmatprep.subr.mxu0 0.0
      %1400 = vmatpush1.msra.mxu0 0.0
      %1401 = vmatprep.subr.mxu0 0.0
      %1402 = vmatpush1.msra.mxu0 0.0
      %1403 = vmatprep.subr.mxu0 0.0
      %1404 = vmatpush1.msra.mxu0 0.0
      %1405 = vmatprep.subr.mxu0 0.0
      %1406 = vmatpush1.msra.mxu0 0.0
      %1407 = vmatprep.subr.mxu0 0.0
      %1408 = vmatpush1.msra.mxu0 0.0
      %1409 = vmatprep.subr.mxu0 0.0
      %1410 = vmatpush1.msra.mxu0 0.0
      %1411 = vmatprep.subr.mxu0 0.0
      %1412 = vmatpush1.msra.mxu0 0.0
      %1413 = vmatprep.subr.mxu0 0.0
      %v1414 = vand.u32 %v1237, 4294901760
      %v1415 = vsub.f32 %v1237, %v1414
      %v1416 = vand.u32 %v1415, 4294901760
      %v1417 = vsub.f32 %v1415, %v1416
      %v1418 = vand.u32 %v1417, 4294901760
      %1419 = vmatpush1.msra.mxu0 %v1418
      %1420 = vmatprep.subr.mxu0 0.0
      %v1421 = vand.u32 %v1236, 4294901760
      %v1422 = vsub.f32 %v1236, %v1421
      %v1423 = vand.u32 %v1422, 4294901760
      %v1424 = vsub.f32 %v1422, %v1423
      %v1425 = vand.u32 %v1424, 4294901760
      %1426 = vmatpush1.msra.mxu0 %v1425
      %1427 = vmatprep.subr.mxu0 0.0
      %1428 = vmatpush2.msra.mxu0 0.0
      %1429 = vmatprep.subr.mxu0 0.0
      %1430 = vmatpush2.msra.mxu0 0.0
      %1431 = vmatprep.subr.mxu0 0.0
      %1432 = vmatpush2.msra.mxu0 0.0
      %1433 = vmatprep.subr.mxu0 0.0
      %1434 = vmatpush2.msra.mxu0 0.0
      %1435 = vmatprep.subr.mxu0 0.0
      %1436 = vmatpush2.msra.mxu0 0.0
      %1437 = vmatprep.subr.mxu0 0.0
      %1438 = vmatpush2.msra.mxu0 0.0
      %1439 = vmatprep.subr.mxu0 0.0
      %1440 = vmatpush2.msra.mxu0 0.0
      %1441 = vmatprep.subr.mxu0 0.0
      %1442 = vmatpush2.msra.mxu0 0.0
      %1443 = vmatprep.subr.mxu0 0.0
      %1444 = vmatpush2.msra.mxu0 0.0
      %1445 = vmatprep.subr.mxu0 0.0
      %1446 = vmatpush2.msra.mxu0 0.0
      %1447 = vmatprep.subr.mxu0 0.0
      %1448 = vmatpush2.msra.mxu0 0.0
      %1449 = vmatprep.subr.mxu0 0.0
      %1450 = vmatpush2.msra.mxu0 0.0
      %1451 = vmatprep.subr.mxu0 0.0
      %1452 = vmatpush2.msra.mxu0 0.0
      %1453 = vmatprep.subr.mxu0 0.0
      %1454 = vmatpush2.msra.mxu0 0.0
      %1455 = vmatprep.subr.mxu0 0.0
      %1456 = vmatpush2.msra.mxu0 0.0
      %1457 = vmatprep.subr.mxu0 0.0
      %1458 = vmatpush2.msra.mxu0 0.0
      %1459 = vmatprep.mubr.f32.mxu0 0.0
      %v1460 = vand.u32 %v453, 4294901760
      %1461 = vmatmul.mubr.f32.gmra.mxu0 %v1460
      %v1462 = vpop.f32.mrf.mxu0
      %v1463 = vadd.f32 %v1312, %v1462
      %v1464 = vpop.f32.mrf.mxu0
      %1465 = vmatprep.mubr.f32.mxu0 0.0
      %v1466 = vand.u32 %v456, 4294901760
      %1467 = vmatmul.mubr.f32.gmra.mxu0 %v1466
      %v1468 = vpop.f32.mrf.mxu0
      %v1469 = vadd.f32 %v1322, %v1468
      %v1470 = vpop.f32.mrf.mxu0
      %1471 = vmatprep.mubr.f32.mxu0 0.0
      %v1472 = vand.u32 %v459, 4294901760
      %1473 = vmatmul.mubr.f32.gmra.mxu0 %v1472
      %v1474 = vpop.f32.mrf.mxu0
      %v1475 = vadd.f32 %v1332, %v1474
      %v1476 = vpop.f32.mrf.mxu0
      %1477 = vmatprep.mubr.f32.mxu0 0.0
      %v1478 = vand.u32 %v462, 4294901760
      %1479 = vmatmul.mubr.f32.gmra.mxu0 %v1478
      %v1480 = vpop.f32.mrf.mxu0
      %v1481 = vadd.f32 %v1342, %v1480
      %v1482 = vpop.f32.mrf.mxu0
      %1483 = vmatprep.mubr.f32.mxu0 0.0
      %v1484 = vand.u32 %v465, 4294901760
      %1485 = vmatmul.mubr.f32.gmra.mxu0 %v1484
      %v1486 = vpop.f32.mrf.mxu0
      %v1487 = vadd.f32 %v1352, %v1486
      %v1488 = vpop.f32.mrf.mxu0
      %1489 = vmatprep.mubr.f32.mxu0 0.0
      %v1490 = vand.u32 %v468, 4294901760
      %1491 = vmatmul.mubr.f32.gmra.mxu0 %v1490
      %v1492 = vpop.f32.mrf.mxu0
      %v1493 = vadd.f32 %v1362, %v1492
      %v1494 = vpop.f32.mrf.mxu0
      %1495 = vmatprep.mubr.f32.mxu0 0.0
      %v1496 = vand.u32 %v471, 4294901760
      %1497 = vmatmul.mubr.f32.gmra.mxu0 %v1496
      %v1498 = vpop.f32.mrf.mxu0
      %v1499 = vadd.f32 %v1372, %v1498
      %v1500 = vpop.f32.mrf.mxu0
      %1501 = vmatprep.mubr.f32.mxu0 0.0
      %v1502 = vand.u32 %v474, 4294901760
      %1503 = vmatmul.mubr.f32.gmra.mxu0 %v1502
      %v1504 = vpop.f32.mrf.mxu0
      %v1505 = vadd.f32 %v1382, %v1504
      %v1506 = vpop.f32.mrf.mxu0
      %1507 = vdwg.mxu0
      %1508 = vmatprep.subr.mxu0 0.0
      %1509 = vmatpush1.msra.mxu0 0.0
      %1510 = vmatprep.subr.mxu0 0.0
      %1511 = vmatpush1.msra.mxu0 0.0
      %1512 = vmatprep.subr.mxu0 0.0
      %1513 = vmatpush1.msra.mxu0 0.0
      %1514 = vmatprep.subr.mxu0 0.0
      %1515 = vmatpush1.msra.mxu0 0.0
      %1516 = vmatprep.subr.mxu0 0.0
      %1517 = vmatpush1.msra.mxu0 0.0
      %1518 = vmatprep.subr.mxu0 0.0
      %1519 = vmatpush1.msra.mxu0 0.0
      %1520 = vmatprep.subr.mxu0 0.0
      %1521 = vmatpush1.msra.mxu0 0.0
      %1522 = vmatprep.subr.mxu0 0.0
      %1523 = vmatpush1.msra.mxu0 0.0
      %1524 = vmatprep.subr.mxu0 0.0
      %1525 = vmatpush1.msra.mxu0 0.0
      %1526 = vmatprep.subr.mxu0 0.0
      %1527 = vmatpush1.msra.mxu0 0.0
      %1528 = vmatprep.subr.mxu0 0.0
      %1529 = vmatpush1.msra.mxu0 0.0
      %1530 = vmatprep.subr.mxu0 0.0
      %1531 = vmatpush1.msra.mxu0 0.0
      %1532 = vmatprep.subr.mxu0 0.0
      %1533 = vmatpush1.msra.mxu0 0.0
      %1534 = vmatprep.subr.mxu0 0.0
      %1535 = vmatpush1.msra.mxu0 0.0
      %1536 = vmatprep.subr.mxu0 0.0
      %v1537 = vand.u32 %v1237, 4294901760
      %v1538 = vsub.f32 %v1237, %v1537
      %1539 = vmatpush1.msra.mxu0 %v1538
      %1540 = vmatprep.subr.mxu0 0.0
      %v1541 = vand.u32 %v1236, 4294901760
      %v1542 = vsub.f32 %v1236, %v1541
      %1543 = vmatpush1.msra.mxu0 %v1542
      %1544 = vmatprep.subr.mxu0 0.0
      %1545 = vmatpush2.msra.mxu0 0.0
      %1546 = vmatprep.subr.mxu0 0.0
      %1547 = vmatpush2.msra.mxu0 0.0
      %1548 = vmatprep.subr.mxu0 0.0
      %1549 = vmatpush2.msra.mxu0 0.0
      %1550 = vmatprep.subr.mxu0 0.0
      %1551 = vmatpush2.msra.mxu0 0.0
      %1552 = vmatprep.subr.mxu0 0.0
      %1553 = vmatpush2.msra.mxu0 0.0
      %1554 = vmatprep.subr.mxu0 0.0
      %1555 = vmatpush2.msra.mxu0 0.0
      %1556 = vmatprep.subr.mxu0 0.0
      %1557 = vmatpush2.msra.mxu0 0.0
      %1558 = vmatprep.subr.mxu0 0.0
      %1559 = vmatpush2.msra.mxu0 0.0
      %1560 = vmatprep.subr.mxu0 0.0
      %1561 = vmatpush2.msra.mxu0 0.0
      %1562 = vmatprep.subr.mxu0 0.0
      %1563 = vmatpush2.msra.mxu0 0.0
      %1564 = vmatprep.subr.mxu0 0.0
      %1565 = vmatpush2.msra.mxu0 0.0
      %1566 = vmatprep.subr.mxu0 0.0
      %1567 = vmatpush2.msra.mxu0 0.0
      %1568 = vmatprep.subr.mxu0 0.0
      %1569 = vmatpush2.msra.mxu0 0.0
      %1570 = vmatprep.subr.mxu0 0.0
      %1571 = vmatpush2.msra.mxu0 0.0
      %1572 = vmatprep.subr.mxu0 0.0
      %1573 = vmatpush2.msra.mxu0 0.0
      %1574 = vmatprep.subr.mxu0 0.0
      %1575 = vmatpush2.msra.mxu0 0.0
      %1576 = vmatprep.mubr.f32.mxu0 0.0
      %v1577 = vand.u32 %v453, 4294901760
      %v1578 = vsub.f32 %v453, %v1577
      %1579 = vmatmul.mubr.f32.gmra.mxu0 %v1578
      %v1580 = vpop.f32.mrf.mxu0
      %v1581 = vadd.f32 %v1463, %v1580
      %v1582 = vpop.f32.mrf.mxu0
      %1583 = vmatprep.mubr.f32.mxu0 0.0
      %v1584 = vand.u32 %v456, 4294901760
      %v1585 = vsub.f32 %v456, %v1584
      %1586 = vmatmul.mubr.f32.gmra.mxu0 %v1585
      %v1587 = vpop.f32.mrf.mxu0
      %v1588 = vadd.f32 %v1469, %v1587
      %v1589 = vpop.f32.mrf.mxu0
      %1590 = vmatprep.mubr.f32.mxu0 0.0
      %v1591 = vand.u32 %v459, 4294901760
      %v1592 = vsub.f32 %v459, %v1591
      %1593 = vmatmul.mubr.f32.gmra.mxu0 %v1592
      %v1594 = vpop.f32.mrf.mxu0
      %v1595 = vadd.f32 %v1475, %v1594
      %v1596 = vpop.f32.mrf.mxu0
      %1597 = vmatprep.mubr.f32.mxu0 0.0
      %v1598 = vand.u32 %v462, 4294901760
      %v1599 = vsub.f32 %v462, %v1598
      %1600 = vmatmul.mubr.f32.gmra.mxu0 %v1599
      %v1601 = vpop.f32.mrf.mxu0
      %v1602 = vadd.f32 %v1481, %v1601
      %v1603 = vpop.f32.mrf.mxu0
      %1604 = vmatprep.mubr.f32.mxu0 0.0
      %v1605 = vand.u32 %v465, 4294901760
      %v1606 = vsub.f32 %v465, %v1605
      %1607 = vmatmul.mubr.f32.gmra.mxu0 %v1606
      %v1608 = vpop.f32.mrf.mxu0
      %v1609 = vadd.f32 %v1487, %v1608
      %v1610 = vpop.f32.mrf.mxu0
      %1611 = vmatprep.mubr.f32.mxu0 0.0
      %v1612 = vand.u32 %v468, 4294901760
      %v1613 = vsub.f32 %v468, %v1612
      %1614 = vmatmul.mubr.f32.gmra.mxu0 %v1613
      %v1615 = vpop.f32.mrf.mxu0
      %v1616 = vadd.f32 %v1493, %v1615
      %v1617 = vpop.f32.mrf.mxu0
      %1618 = vmatprep.mubr.f32.mxu0 0.0
      %v1619 = vand.u32 %v471, 4294901760
      %v1620 = vsub.f32 %v471, %v1619
      %1621 = vmatmul.mubr.f32.gmra.mxu0 %v1620
      %v1622 = vpop.f32.mrf.mxu0
      %v1623 = vadd.f32 %v1499, %v1622
      %v1624 = vpop.f32.mrf.mxu0
      %1625 = vmatprep.mubr.f32.mxu0 0.0
      %v1626 = vand.u32 %v474, 4294901760
      %v1627 = vsub.f32 %v474, %v1626
      %1628 = vmatmul.mubr.f32.gmra.mxu0 %v1627
      %v1629 = vpop.f32.mrf.mxu0
      %v1630 = vadd.f32 %v1505, %v1629
      %v1631 = vpop.f32.mrf.mxu0
      %1632 = vdwg.mxu0
      %1633 = vmatprep.subr.mxu0 0.0
      %1634 = vmatpush1.msra.mxu0 0.0
      %1635 = vmatprep.subr.mxu0 0.0
      %1636 = vmatpush1.msra.mxu0 0.0
      %1637 = vmatprep.subr.mxu0 0.0
      %1638 = vmatpush1.msra.mxu0 0.0
      %1639 = vmatprep.subr.mxu0 0.0
      %1640 = vmatpush1.msra.mxu0 0.0
      %1641 = vmatprep.subr.mxu0 0.0
      %1642 = vmatpush1.msra.mxu0 0.0
      %1643 = vmatprep.subr.mxu0 0.0
      %1644 = vmatpush1.msra.mxu0 0.0
      %1645 = vmatprep.subr.mxu0 0.0
      %1646 = vmatpush1.msra.mxu0 0.0
      %1647 = vmatprep.subr.mxu0 0.0
      %1648 = vmatpush1.msra.mxu0 0.0
      %1649 = vmatprep.subr.mxu0 0.0
      %1650 = vmatpush1.msra.mxu0 0.0
      %1651 = vmatprep.subr.mxu0 0.0
      %1652 = vmatpush1.msra.mxu0 0.0
      %1653 = vmatprep.subr.mxu0 0.0
      %1654 = vmatpush1.msra.mxu0 0.0
      %1655 = vmatprep.subr.mxu0 0.0
      %1656 = vmatpush1.msra.mxu0 0.0
      %1657 = vmatprep.subr.mxu0 0.0
      %1658 = vmatpush1.msra.mxu0 0.0
      %1659 = vmatprep.subr.mxu0 0.0
      %1660 = vmatpush1.msra.mxu0 0.0
      %1661 = vmatprep.subr.mxu0 0.0
      %v1662 = vand.u32 %v1237, 4294901760
      %1663 = vmatpush1.msra.mxu0 %v1662
      %1664 = vmatprep.subr.mxu0 0.0
      %v1665 = vand.u32 %v1236, 4294901760
      %1666 = vmatpush1.msra.mxu0 %v1665
      %1667 = vmatprep.subr.mxu0 0.0
      %1668 = vmatpush2.msra.mxu0 0.0
      %1669 = vmatprep.subr.mxu0 0.0
      %1670 = vmatpush2.msra.mxu0 0.0
      %1671 = vmatprep.subr.mxu0 0.0
      %1672 = vmatpush2.msra.mxu0 0.0
      %1673 = vmatprep.subr.mxu0 0.0
      %1674 = vmatpush2.msra.mxu0 0.0
      %1675 = vmatprep.subr.mxu0 0.0
      %1676 = vmatpush2.msra.mxu0 0.0
      %1677 = vmatprep.subr.mxu0 0.0
      %1678 = vmatpush2.msra.mxu0 0.0
      %1679 = vmatprep.subr.mxu0 0.0
      %1680 = vmatpush2.msra.mxu0 0.0
      %1681 = vmatprep.subr.mxu0 0.0
      %1682 = vmatpush2.msra.mxu0 0.0
      %1683 = vmatprep.subr.mxu0 0.0
      %1684 = vmatpush2.msra.mxu0 0.0
      %1685 = vmatprep.subr.mxu0 0.0
      %1686 = vmatpush2.msra.mxu0 0.0
      %1687 = vmatprep.subr.mxu0 0.0
      %1688 = vmatpush2.msra.mxu0 0.0
      %1689 = vmatprep.subr.mxu0 0.0
      %1690 = vmatpush2.msra.mxu0 0.0
      %1691 = vmatprep.subr.mxu0 0.0
      %1692 = vmatpush2.msra.mxu0 0.0
      %1693 = vmatprep.subr.mxu0 0.0
      %1694 = vmatpush2.msra.mxu0 0.0
      %1695 = vmatprep.subr.mxu0 0.0
      %1696 = vmatpush2.msra.mxu0 0.0
      %1697 = vmatprep.subr.mxu0 0.0
      %1698 = vmatpush2.msra.mxu0 0.0
      %1699 = vmatprep.mubr.f32.mxu0 0.0
      %v1700 = vand.u32 %v453, 4294901760
      %v1701 = vsub.f32 %v453, %v1700
      %v1702 = vand.u32 %v1701, 4294901760
      %1703 = vmatmul.mubr.f32.gmra.mxu0 %v1702
      %v1704 = vpop.f32.mrf.mxu0
      %v1705 = vadd.f32 %v1581, %v1704
      %v1706 = vpop.f32.mrf.mxu0
      %1707 = vmatprep.mubr.f32.mxu0 0.0
      %v1708 = vand.u32 %v456, 4294901760
      %v1709 = vsub.f32 %v456, %v1708
      %v1710 = vand.u32 %v1709, 4294901760
      %1711 = vmatmul.mubr.f32.gmra.mxu0 %v1710
      %v1712 = vpop.f32.mrf.mxu0
      %v1713 = vadd.f32 %v1588, %v1712
      %v1714 = vpop.f32.mrf.mxu0
      %1715 = vmatprep.mubr.f32.mxu0 0.0
      %v1716 = vand.u32 %v459, 4294901760
      %v1717 = vsub.f32 %v459, %v1716
      %v1718 = vand.u32 %v1717, 4294901760
      %1719 = vmatmul.mubr.f32.gmra.mxu0 %v1718
      %v1720 = vpop.f32.mrf.mxu0
      %v1721 = vadd.f32 %v1595, %v1720
      %v1722 = vpop.f32.mrf.mxu0
      %1723 = vmatprep.mubr.f32.mxu0 0.0
      %v1724 = vand.u32 %v462, 4294901760
      %v1725 = vsub.f32 %v462, %v1724
      %v1726 = vand.u32 %v1725, 4294901760
      %1727 = vmatmul.mubr.f32.gmra.mxu0 %v1726
      %v1728 = vpop.f32.mrf.mxu0
      %v1729 = vadd.f32 %v1602, %v1728
      %v1730 = vpop.f32.mrf.mxu0
      %1731 = vmatprep.mubr.f32.mxu0 0.0
      %v1732 = vand.u32 %v465, 4294901760
      %v1733 = vsub.f32 %v465, %v1732
      %v1734 = vand.u32 %v1733, 4294901760
      %1735 = vmatmul.mubr.f32.gmra.mxu0 %v1734
      %v1736 = vpop.f32.mrf.mxu0
      %v1737 = vadd.f32 %v1609, %v1736
      %v1738 = vpop.f32.mrf.mxu0
      %1739 = vmatprep.mubr.f32.mxu0 0.0
      %v1740 = vand.u32 %v468, 4294901760
      %v1741 = vsub.f32 %v468, %v1740
      %v1742 = vand.u32 %v1741, 4294901760
      %1743 = vmatmul.mubr.f32.gmra.mxu0 %v1742
      %v1744 = vpop.f32.mrf.mxu0
      %v1745 = vadd.f32 %v1616, %v1744
      %v1746 = vpop.f32.mrf.mxu0
      %1747 = vmatprep.mubr.f32.mxu0 0.0
      %v1748 = vand.u32 %v471, 4294901760
      %v1749 = vsub.f32 %v471, %v1748
      %v1750 = vand.u32 %v1749, 4294901760
      %1751 = vmatmul.mubr.f32.gmra.mxu0 %v1750
      %v1752 = vpop.f32.mrf.mxu0
      %v1753 = vadd.f32 %v1623, %v1752
      %v1754 = vpop.f32.mrf.mxu0
      %1755 = vmatprep.mubr.f32.mxu0 0.0
      %v1756 = vand.u32 %v474, 4294901760
      %v1757 = vsub.f32 %v474, %v1756
      %v1758 = vand.u32 %v1757, 4294901760
      %1759 = vmatmul.mubr.f32.gmra.mxu0 %v1758
      %v1760 = vpop.f32.mrf.mxu0
      %v1761 = vadd.f32 %v1630, %v1760
      %v1762 = vpop.f32.mrf.mxu0
      %1763 = vdwg.mxu0
      %1764 = vmatprep.subr.mxu0 0.0
      %1765 = vmatpush1.msra.mxu0 0.0
      %1766 = vmatprep.subr.mxu0 0.0
      %1767 = vmatpush1.msra.mxu0 0.0
      %1768 = vmatprep.subr.mxu0 0.0
      %1769 = vmatpush1.msra.mxu0 0.0
      %1770 = vmatprep.subr.mxu0 0.0
      %1771 = vmatpush1.msra.mxu0 0.0
      %1772 = vmatprep.subr.mxu0 0.0
      %1773 = vmatpush1.msra.mxu0 0.0
      %1774 = vmatprep.subr.mxu0 0.0
      %1775 = vmatpush1.msra.mxu0 0.0
      %1776 = vmatprep.subr.mxu0 0.0
      %1777 = vmatpush1.msra.mxu0 0.0
      %1778 = vmatprep.subr.mxu0 0.0
      %1779 = vmatpush1.msra.mxu0 0.0
      %1780 = vmatprep.subr.mxu0 0.0
      %1781 = vmatpush1.msra.mxu0 0.0
      %1782 = vmatprep.subr.mxu0 0.0
      %1783 = vmatpush1.msra.mxu0 0.0
      %1784 = vmatprep.subr.mxu0 0.0
      %1785 = vmatpush1.msra.mxu0 0.0
      %1786 = vmatprep.subr.mxu0 0.0
      %1787 = vmatpush1.msra.mxu0 0.0
      %1788 = vmatprep.subr.mxu0 0.0
      %1789 = vmatpush1.msra.mxu0 0.0
      %1790 = vmatprep.subr.mxu0 0.0
      %1791 = vmatpush1.msra.mxu0 0.0
      %1792 = vmatprep.subr.mxu0 0.0
      %v1793 = vand.u32 %v1237, 4294901760
      %v1794 = vsub.f32 %v1237, %v1793
      %v1795 = vand.u32 %v1794, 4294901760
      %1796 = vmatpush1.msra.mxu0 %v1795
      %1797 = vmatprep.subr.mxu0 0.0
      %v1798 = vand.u32 %v1236, 4294901760
      %v1799 = vsub.f32 %v1236, %v1798
      %v1800 = vand.u32 %v1799, 4294901760
      %1801 = vmatpush1.msra.mxu0 %v1800
      %1802 = vmatprep.subr.mxu0 0.0
      %1803 = vmatpush2.msra.mxu0 0.0
      %1804 = vmatprep.subr.mxu0 0.0
      %1805 = vmatpush2.msra.mxu0 0.0
      %1806 = vmatprep.subr.mxu0 0.0
      %1807 = vmatpush2.msra.mxu0 0.0
      %1808 = vmatprep.subr.mxu0 0.0
      %1809 = vmatpush2.msra.mxu0 0.0
      %1810 = vmatprep.subr.mxu0 0.0
      %1811 = vmatpush2.msra.mxu0 0.0
      %1812 = vmatprep.subr.mxu0 0.0
      %1813 = vmatpush2.msra.mxu0 0.0
      %1814 = vmatprep.subr.mxu0 0.0
      %1815 = vmatpush2.msra.mxu0 0.0
      %1816 = vmatprep.subr.mxu0 0.0
      %1817 = vmatpush2.msra.mxu0 0.0
      %1818 = vmatprep.subr.mxu0 0.0
      %1819 = vmatpush2.msra.mxu0 0.0
      %1820 = vmatprep.subr.mxu0 0.0
      %1821 = vmatpush2.msra.mxu0 0.0
      %1822 = vmatprep.subr.mxu0 0.0
      %1823 = vmatpush2.msra.mxu0 0.0
      %1824 = vmatprep.subr.mxu0 0.0
      %1825 = vmatpush2.msra.mxu0 0.0
      %1826 = vmatprep.subr.mxu0 0.0
      %1827 = vmatpush2.msra.mxu0 0.0
      %1828 = vmatprep.subr.mxu0 0.0
      %1829 = vmatpush2.msra.mxu0 0.0
      %1830 = vmatprep.subr.mxu0 0.0
      %1831 = vmatpush2.msra.mxu0 0.0
      %1832 = vmatprep.subr.mxu0 0.0
      %1833 = vmatpush2.msra.mxu0 0.0
      %1834 = vmatprep.mubr.f32.mxu0 0.0
      %v1835 = vand.u32 %v453, 4294901760
      %1836 = vmatmul.mubr.f32.gmra.mxu0 %v1835
      %v1837 = vpop.f32.mrf.mxu0
      %v1838 = vadd.f32 %v1705, %v1837
      %v1839 = vpop.f32.mrf.mxu0
      %1840 = vmatprep.mubr.f32.mxu0 0.0
      %v1841 = vand.u32 %v456, 4294901760
      %1842 = vmatmul.mubr.f32.gmra.mxu0 %v1841
      %v1843 = vpop.f32.mrf.mxu0
      %v1844 = vadd.f32 %v1713, %v1843
      %v1845 = vpop.f32.mrf.mxu0
      %1846 = vmatprep.mubr.f32.mxu0 0.0
      %v1847 = vand.u32 %v459, 4294901760
      %1848 = vmatmul.mubr.f32.gmra.mxu0 %v1847
      %v1849 = vpop.f32.mrf.mxu0
      %v1850 = vadd.f32 %v1721, %v1849
      %v1851 = vpop.f32.mrf.mxu0
      %1852 = vmatprep.mubr.f32.mxu0 0.0
      %v1853 = vand.u32 %v462, 4294901760
      %1854 = vmatmul.mubr.f32.gmra.mxu0 %v1853
      %v1855 = vpop.f32.mrf.mxu0
      %v1856 = vadd.f32 %v1729, %v1855
      %v1857 = vpop.f32.mrf.mxu0
      %1858 = vmatprep.mubr.f32.mxu0 0.0
      %v1859 = vand.u32 %v465, 4294901760
      %1860 = vmatmul.mubr.f32.gmra.mxu0 %v1859
      %v1861 = vpop.f32.mrf.mxu0
      %v1862 = vadd.f32 %v1737, %v1861
      %v1863 = vpop.f32.mrf.mxu0
      %1864 = vmatprep.mubr.f32.mxu0 0.0
      %v1865 = vand.u32 %v468, 4294901760
      %1866 = vmatmul.mubr.f32.gmra.mxu0 %v1865
      %v1867 = vpop.f32.mrf.mxu0
      %v1868 = vadd.f32 %v1745, %v1867
      %v1869 = vpop.f32.mrf.mxu0
      %1870 = vmatprep.mubr.f32.mxu0 0.0
      %v1871 = vand.u32 %v471, 4294901760
      %1872 = vmatmul.mubr.f32.gmra.mxu0 %v1871
      %v1873 = vpop.f32.mrf.mxu0
      %v1874 = vadd.f32 %v1753, %v1873
      %v1875 = vpop.f32.mrf.mxu0
      %1876 = vmatprep.mubr.f32.mxu0 0.0
      %v1877 = vand.u32 %v474, 4294901760
      %1878 = vmatmul.mubr.f32.gmra.mxu0 %v1877
      %v1879 = vpop.f32.mrf.mxu0
      %v1880 = vadd.f32 %v1761, %v1879
      %v1881 = vpop.f32.mrf.mxu0
      %1882 = vdwg.mxu0
      %1883 = vmatprep.subr.mxu0 0.0
      %1884 = vmatpush1.msra.mxu0 0.0
      %1885 = vmatprep.subr.mxu0 0.0
      %1886 = vmatpush1.msra.mxu0 0.0
      %1887 = vmatprep.subr.mxu0 0.0
      %1888 = vmatpush1.msra.mxu0 0.0
      %1889 = vmatprep.subr.mxu0 0.0
      %1890 = vmatpush1.msra.mxu0 0.0
      %1891 = vmatprep.subr.mxu0 0.0
      %1892 = vmatpush1.msra.mxu0 0.0
      %1893 = vmatprep.subr.mxu0 0.0
      %1894 = vmatpush1.msra.mxu0 0.0
      %1895 = vmatprep.subr.mxu0 0.0
      %1896 = vmatpush1.msra.mxu0 0.0
      %1897 = vmatprep.subr.mxu0 0.0
      %1898 = vmatpush1.msra.mxu0 0.0
      %1899 = vmatprep.subr.mxu0 0.0
      %1900 = vmatpush1.msra.mxu0 0.0
      %1901 = vmatprep.subr.mxu0 0.0
      %1902 = vmatpush1.msra.mxu0 0.0
      %1903 = vmatprep.subr.mxu0 0.0
      %1904 = vmatpush1.msra.mxu0 0.0
      %1905 = vmatprep.subr.mxu0 0.0
      %1906 = vmatpush1.msra.mxu0 0.0
      %1907 = vmatprep.subr.mxu0 0.0
      %1908 = vmatpush1.msra.mxu0 0.0
      %1909 = vmatprep.subr.mxu0 0.0
      %1910 = vmatpush1.msra.mxu0 0.0
      %1911 = vmatprep.subr.mxu0 0.0
      %v1912 = vand.u32 %v1237, 4294901760
      %1913 = vmatpush1.msra.mxu0 %v1912
      %1914 = vmatprep.subr.mxu0 0.0
      %v1915 = vand.u32 %v1236, 4294901760
      %1916 = vmatpush1.msra.mxu0 %v1915
      %1917 = vmatprep.subr.mxu0 0.0
      %1918 = vmatpush2.msra.mxu0 0.0
      %1919 = vmatprep.subr.mxu0 0.0
      %1920 = vmatpush2.msra.mxu0 0.0
      %1921 = vmatprep.subr.mxu0 0.0
      %1922 = vmatpush2.msra.mxu0 0.0
      %1923 = vmatprep.subr.mxu0 0.0
      %1924 = vmatpush2.msra.mxu0 0.0
      %1925 = vmatprep.subr.mxu0 0.0
      %1926 = vmatpush2.msra.mxu0 0.0
      %1927 = vmatprep.subr.mxu0 0.0
      %1928 = vmatpush2.msra.mxu0 0.0
      %1929 = vmatprep.subr.mxu0 0.0
      %1930 = vmatpush2.msra.mxu0 0.0
      %1931 = vmatprep.subr.mxu0 0.0
      %1932 = vmatpush2.msra.mxu0 0.0
      %1933 = vmatprep.subr.mxu0 0.0
      %1934 = vmatpush2.msra.mxu0 0.0
      %1935 = vmatprep.subr.mxu0 0.0
      %1936 = vmatpush2.msra.mxu0 0.0
      %1937 = vmatprep.subr.mxu0 0.0
      %1938 = vmatpush2.msra.mxu0 0.0
      %1939 = vmatprep.subr.mxu0 0.0
      %1940 = vmatpush2.msra.mxu0 0.0
      %1941 = vmatprep.subr.mxu0 0.0
      %1942 = vmatpush2.msra.mxu0 0.0
      %1943 = vmatprep.subr.mxu0 0.0
      %1944 = vmatpush2.msra.mxu0 0.0
      %1945 = vmatprep.subr.mxu0 0.0
      %1946 = vmatpush2.msra.mxu0 0.0
      %1947 = vmatprep.subr.mxu0 0.0
      %1948 = vmatpush2.msra.mxu0 0.0
      %1949 = vmatprep.mubr.f32.mxu0 0.0
      %v1950 = vand.u32 %v453, 4294901760
      %1951 = vmatmul.mubr.f32.gmra.mxu0 %v1950
      %v1952 = vpop.f32.mrf.mxu0
      %v1953 = vadd.f32 %v1838, %v1952
      %v1954 = vpop.f32.mrf.mxu0
      %1955 = vmatprep.mubr.f32.mxu0 0.0
      %v1956 = vand.u32 %v456, 4294901760
      %1957 = vmatmul.mubr.f32.gmra.mxu0 %v1956
      %v1958 = vpop.f32.mrf.mxu0
      %v1959 = vadd.f32 %v1844, %v1958
      %v1960 = vpop.f32.mrf.mxu0
      %1961 = vmatprep.mubr.f32.mxu0 0.0
      %v1962 = vand.u32 %v459, 4294901760
      %1963 = vmatmul.mubr.f32.gmra.mxu0 %v1962
      %v1964 = vpop.f32.mrf.mxu0
      %v1965 = vadd.f32 %v1850, %v1964
      %v1966 = vpop.f32.mrf.mxu0
      %1967 = vmatprep.mubr.f32.mxu0 0.0
      %v1968 = vand.u32 %v462, 4294901760
      %1969 = vmatmul.mubr.f32.gmra.mxu0 %v1968
      %v1970 = vpop.f32.mrf.mxu0
      %v1971 = vadd.f32 %v1856, %v1970
      %v1972 = vpop.f32.mrf.mxu0
      %1973 = vmatprep.mubr.f32.mxu0 0.0
      %v1974 = vand.u32 %v465, 4294901760
      %1975 = vmatmul.mubr.f32.gmra.mxu0 %v1974
      %v1976 = vpop.f32.mrf.mxu0
      %v1977 = vadd.f32 %v1862, %v1976
      %v1978 = vpop.f32.mrf.mxu0
      %1979 = vmatprep.mubr.f32.mxu0 0.0
      %v1980 = vand.u32 %v468, 4294901760
      %1981 = vmatmul.mubr.f32.gmra.mxu0 %v1980
      %v1982 = vpop.f32.mrf.mxu0
      %v1983 = vadd.f32 %v1868, %v1982
      %v1984 = vpop.f32.mrf.mxu0
      %1985 = vmatprep.mubr.f32.mxu0 0.0
      %v1986 = vand.u32 %v471, 4294901760
      %1987 = vmatmul.mubr.f32.gmra.mxu0 %v1986
      %v1988 = vpop.f32.mrf.mxu0
      %v1989 = vadd.f32 %v1874, %v1988
      %v1990 = vpop.f32.mrf.mxu0
      %1991 = vmatprep.mubr.f32.mxu0 0.0
      %v1992 = vand.u32 %v474, 4294901760
      %1993 = vmatmul.mubr.f32.gmra.mxu0 %v1992
      %v1994 = vpop.f32.mrf.mxu0
      %v1995 = vadd.f32 %v1880, %v1994
      %v1996 = vpop.f32.mrf.mxu0
      %1997 = vdwg.mxu0
      %v1998 = vld [vmem:[%s5] sm:$0xff]
      %v1999 = vld [vmem:[%s5 + $0x8] sm:$0xff]
      %2000 = vmatprep.subr.mxu0 0.0
      %2001 = vmatpush1.msra.mxu0 0.0
      %2002 = vmatprep.subr.mxu0 0.0
      %2003 = vmatpush1.msra.mxu0 0.0
      %2004 = vmatprep.subr.mxu0 0.0
      %2005 = vmatpush1.msra.mxu0 0.0
      %2006 = vmatprep.subr.mxu0 0.0
      %2007 = vmatpush1.msra.mxu0 0.0
      %2008 = vmatprep.subr.mxu0 0.0
      %2009 = vmatpush1.msra.mxu0 0.0
      %2010 = vmatprep.subr.mxu0 0.0
      %2011 = vmatpush1.msra.mxu0 0.0
      %2012 = vmatprep.subr.mxu0 0.0
      %2013 = vmatpush1.msra.mxu0 0.0
      %2014 = vmatprep.subr.mxu0 0.0
      %2015 = vmatpush1.msra.mxu0 0.0
      %2016 = vmatprep.subr.mxu0 0.0
      %2017 = vmatpush1.msra.mxu0 0.0
      %2018 = vmatprep.subr.mxu0 0.0
      %2019 = vmatpush1.msra.mxu0 0.0
      %2020 = vmatprep.subr.mxu0 0.0
      %2021 = vmatpush1.msra.mxu0 0.0
      %2022 = vmatprep.subr.mxu0 0.0
      %2023 = vmatpush1.msra.mxu0 0.0
      %2024 = vmatprep.subr.mxu0 0.0
      %2025 = vmatpush1.msra.mxu0 0.0
      %2026 = vmatprep.subr.mxu0 0.0
      %2027 = vmatpush1.msra.mxu0 0.0
      %2028 = vmatprep.subr.mxu0 0.0
      %v2029 = vand.u32 %v1999, 4294901760
      %2030 = vmatpush1.msra.mxu0 %v2029
      %2031 = vmatprep.subr.mxu0 0.0
      %v2032 = vand.u32 %v1998, 4294901760
      %2033 = vmatpush1.msra.mxu0 %v2032
      %2034 = vmatprep.subr.mxu0 0.0
      %2035 = vmatpush2.msra.mxu0 0.0
      %2036 = vmatprep.subr.mxu0 0.0
      %2037 = vmatpush2.msra.mxu0 0.0
      %2038 = vmatprep.subr.mxu0 0.0
      %2039 = vmatpush2.msra.mxu0 0.0
      %2040 = vmatprep.subr.mxu0 0.0
      %2041 = vmatpush2.msra.mxu0 0.0
      %2042 = vmatprep.subr.mxu0 0.0
      %2043 = vmatpush2.msra.mxu0 0.0
      %2044 = vmatprep.subr.mxu0 0.0
      %2045 = vmatpush2.msra.mxu0 0.0
      %2046 = vmatprep.subr.mxu0 0.0
      %2047 = vmatpush2.msra.mxu0 0.0
      %2048 = vmatprep.subr.mxu0 0.0
      %2049 = vmatpush2.msra.mxu0 0.0
      %2050 = vmatprep.subr.mxu0 0.0
      %2051 = vmatpush2.msra.mxu0 0.0
      %2052 = vmatprep.subr.mxu0 0.0
      %2053 = vmatpush2.msra.mxu0 0.0
      %2054 = vmatprep.subr.mxu0 0.0
      %2055 = vmatpush2.msra.mxu0 0.0
      %2056 = vmatprep.subr.mxu0 0.0
      %2057 = vmatpush2.msra.mxu0 0.0
      %2058 = vmatprep.subr.mxu0 0.0
      %2059 = vmatpush2.msra.mxu0 0.0
      %2060 = vmatprep.subr.mxu0 0.0
      %2061 = vmatpush2.msra.mxu0 0.0
      %2062 = vmatprep.subr.mxu0 0.0
      %2063 = vmatpush2.msra.mxu0 0.0
      %2064 = vmatprep.subr.mxu0 0.0
      %2065 = vmatpush2.msra.mxu0 0.0
      %2066 = vmatprep.mubr.f32.mxu0 0.0
      %v2067 = vand.u32 %v453, 4294901760
      %v2068 = vsub.f32 %v453, %v2067
      %v2069 = vand.u32 %v2068, 4294901760
      %v2070 = vsub.f32 %v2068, %v2069
      %v2071 = vand.u32 %v2070, 4294901760
      %2072 = vmatmul.mubr.f32.gmra.mxu0 %v2071
      %v2073 = vpop.f32.mrf.mxu0
      %v2074 = vadd.f32 0.0, %v2073
      %v2075 = vpop.f32.mrf.mxu0
      %2076 = vmatprep.mubr.f32.mxu0 0.0
      %v2077 = vand.u32 %v456, 4294901760
      %v2078 = vsub.f32 %v456, %v2077
      %v2079 = vand.u32 %v2078, 4294901760
      %v2080 = vsub.f32 %v2078, %v2079
      %v2081 = vand.u32 %v2080, 4294901760
      %2082 = vmatmul.mubr.f32.gmra.mxu0 %v2081
      %v2083 = vpop.f32.mrf.mxu0
      %v2084 = vadd.f32 0.0, %v2083
      %v2085 = vpop.f32.mrf.mxu0
      %2086 = vmatprep.mubr.f32.mxu0 0.0
      %v2087 = vand.u32 %v459, 4294901760
      %v2088 = vsub.f32 %v459, %v2087
      %v2089 = vand.u32 %v2088, 4294901760
      %v2090 = vsub.f32 %v2088, %v2089
      %v2091 = vand.u32 %v2090, 4294901760
      %2092 = vmatmul.mubr.f32.gmra.mxu0 %v2091
      %v2093 = vpop.f32.mrf.mxu0
      %v2094 = vadd.f32 0.0, %v2093
      %v2095 = vpop.f32.mrf.mxu0
      %2096 = vmatprep.mubr.f32.mxu0 0.0
      %v2097 = vand.u32 %v462, 4294901760
      %v2098 = vsub.f32 %v462, %v2097
      %v2099 = vand.u32 %v2098, 4294901760
      %v2100 = vsub.f32 %v2098, %v2099
      %v2101 = vand.u32 %v2100, 4294901760
      %2102 = vmatmul.mubr.f32.gmra.mxu0 %v2101
      %v2103 = vpop.f32.mrf.mxu0
      %v2104 = vadd.f32 0.0, %v2103
      %v2105 = vpop.f32.mrf.mxu0
      %2106 = vmatprep.mubr.f32.mxu0 0.0
      %v2107 = vand.u32 %v465, 4294901760
      %v2108 = vsub.f32 %v465, %v2107
      %v2109 = vand.u32 %v2108, 4294901760
      %v2110 = vsub.f32 %v2108, %v2109
      %v2111 = vand.u32 %v2110, 4294901760
      %2112 = vmatmul.mubr.f32.gmra.mxu0 %v2111
      %v2113 = vpop.f32.mrf.mxu0
      %v2114 = vadd.f32 0.0, %v2113
      %v2115 = vpop.f32.mrf.mxu0
      %2116 = vmatprep.mubr.f32.mxu0 0.0
      %v2117 = vand.u32 %v468, 4294901760
      %v2118 = vsub.f32 %v468, %v2117
      %v2119 = vand.u32 %v2118, 4294901760
      %v2120 = vsub.f32 %v2118, %v2119
      %v2121 = vand.u32 %v2120, 4294901760
      %2122 = vmatmul.mubr.f32.gmra.mxu0 %v2121
      %v2123 = vpop.f32.mrf.mxu0
      %v2124 = vadd.f32 0.0, %v2123
      %v2125 = vpop.f32.mrf.mxu0
      %2126 = vmatprep.mubr.f32.mxu0 0.0
      %v2127 = vand.u32 %v471, 4294901760
      %v2128 = vsub.f32 %v471, %v2127
      %v2129 = vand.u32 %v2128, 4294901760
      %v2130 = vsub.f32 %v2128, %v2129
      %v2131 = vand.u32 %v2130, 4294901760
      %2132 = vmatmul.mubr.f32.gmra.mxu0 %v2131
      %v2133 = vpop.f32.mrf.mxu0
      %v2134 = vadd.f32 0.0, %v2133
      %v2135 = vpop.f32.mrf.mxu0
      %2136 = vmatprep.mubr.f32.mxu0 0.0
      %v2137 = vand.u32 %v474, 4294901760
      %v2138 = vsub.f32 %v474, %v2137
      %v2139 = vand.u32 %v2138, 4294901760
      %v2140 = vsub.f32 %v2138, %v2139
      %v2141 = vand.u32 %v2140, 4294901760
      %2142 = vmatmul.mubr.f32.gmra.mxu0 %v2141
      %v2143 = vpop.f32.mrf.mxu0
      %v2144 = vadd.f32 0.0, %v2143
      %v2145 = vpop.f32.mrf.mxu0
      %2146 = vdwg.mxu0
      %2147 = vmatprep.subr.mxu0 0.0
      %2148 = vmatpush1.msra.mxu0 0.0
      %2149 = vmatprep.subr.mxu0 0.0
      %2150 = vmatpush1.msra.mxu0 0.0
      %2151 = vmatprep.subr.mxu0 0.0
      %2152 = vmatpush1.msra.mxu0 0.0
      %2153 = vmatprep.subr.mxu0 0.0
      %2154 = vmatpush1.msra.mxu0 0.0
      %2155 = vmatprep.subr.mxu0 0.0
      %2156 = vmatpush1.msra.mxu0 0.0
      %2157 = vmatprep.subr.mxu0 0.0
      %2158 = vmatpush1.msra.mxu0 0.0
      %2159 = vmatprep.subr.mxu0 0.0
      %2160 = vmatpush1.msra.mxu0 0.0
      %2161 = vmatprep.subr.mxu0 0.0
      %2162 = vmatpush1.msra.mxu0 0.0
      %2163 = vmatprep.subr.mxu0 0.0
      %2164 = vmatpush1.msra.mxu0 0.0
      %2165 = vmatprep.subr.mxu0 0.0
      %2166 = vmatpush1.msra.mxu0 0.0
      %2167 = vmatprep.subr.mxu0 0.0
      %2168 = vmatpush1.msra.mxu0 0.0
      %2169 = vmatprep.subr.mxu0 0.0
      %2170 = vmatpush1.msra.mxu0 0.0
      %2171 = vmatprep.subr.mxu0 0.0
      %2172 = vmatpush1.msra.mxu0 0.0
      %2173 = vmatprep.subr.mxu0 0.0
      %2174 = vmatpush1.msra.mxu0 0.0
      %2175 = vmatprep.subr.mxu0 0.0
      %v2176 = vand.u32 %v1999, 4294901760
      %v2177 = vsub.f32 %v1999, %v2176
      %v2178 = vand.u32 %v2177, 4294901760
      %v2179 = vsub.f32 %v2177, %v2178
      %v2180 = vand.u32 %v2179, 4294901760
      %2181 = vmatpush1.msra.mxu0 %v2180
      %2182 = vmatprep.subr.mxu0 0.0
      %v2183 = vand.u32 %v1998, 4294901760
      %v2184 = vsub.f32 %v1998, %v2183
      %v2185 = vand.u32 %v2184, 4294901760
      %v2186 = vsub.f32 %v2184, %v2185
      %v2187 = vand.u32 %v2186, 4294901760
      %2188 = vmatpush1.msra.mxu0 %v2187
      %2189 = vmatprep.subr.mxu0 0.0
      %2190 = vmatpush2.msra.mxu0 0.0
      %2191 = vmatprep.subr.mxu0 0.0
      %2192 = vmatpush2.msra.mxu0 0.0
      %2193 = vmatprep.subr.mxu0 0.0
      %2194 = vmatpush2.msra.mxu0 0.0
      %2195 = vmatprep.subr.mxu0 0.0
      %2196 = vmatpush2.msra.mxu0 0.0
      %2197 = vmatprep.subr.mxu0 0.0
      %2198 = vmatpush2.msra.mxu0 0.0
      %2199 = vmatprep.subr.mxu0 0.0
      %2200 = vmatpush2.msra.mxu0 0.0
      %2201 = vmatprep.subr.mxu0 0.0
      %2202 = vmatpush2.msra.mxu0 0.0
      %2203 = vmatprep.subr.mxu0 0.0
      %2204 = vmatpush2.msra.mxu0 0.0
      %2205 = vmatprep.subr.mxu0 0.0
      %2206 = vmatpush2.msra.mxu0 0.0
      %2207 = vmatprep.subr.mxu0 0.0
      %2208 = vmatpush2.msra.mxu0 0.0
      %2209 = vmatprep.subr.mxu0 0.0
      %2210 = vmatpush2.msra.mxu0 0.0
      %2211 = vmatprep.subr.mxu0 0.0
      %2212 = vmatpush2.msra.mxu0 0.0
      %2213 = vmatprep.subr.mxu0 0.0
      %2214 = vmatpush2.msra.mxu0 0.0
      %2215 = vmatprep.subr.mxu0 0.0
      %2216 = vmatpush2.msra.mxu0 0.0
      %2217 = vmatprep.subr.mxu0 0.0
      %2218 = vmatpush2.msra.mxu0 0.0
      %2219 = vmatprep.subr.mxu0 0.0
      %2220 = vmatpush2.msra.mxu0 0.0
      %2221 = vmatprep.mubr.f32.mxu0 0.0
      %v2222 = vand.u32 %v453, 4294901760
      %2223 = vmatmul.mubr.f32.gmra.mxu0 %v2222
      %v2224 = vpop.f32.mrf.mxu0
      %v2225 = vadd.f32 %v2074, %v2224
      %v2226 = vpop.f32.mrf.mxu0
      %2227 = vmatprep.mubr.f32.mxu0 0.0
      %v2228 = vand.u32 %v456, 4294901760
      %2229 = vmatmul.mubr.f32.gmra.mxu0 %v2228
      %v2230 = vpop.f32.mrf.mxu0
      %v2231 = vadd.f32 %v2084, %v2230
      %v2232 = vpop.f32.mrf.mxu0
      %2233 = vmatprep.mubr.f32.mxu0 0.0
      %v2234 = vand.u32 %v459, 4294901760
      %2235 = vmatmul.mubr.f32.gmra.mxu0 %v2234
      %v2236 = vpop.f32.mrf.mxu0
      %v2237 = vadd.f32 %v2094, %v2236
      %v2238 = vpop.f32.mrf.mxu0
      %2239 = vmatprep.mubr.f32.mxu0 0.0
      %v2240 = vand.u32 %v462, 4294901760
      %2241 = vmatmul.mubr.f32.gmra.mxu0 %v2240
      %v2242 = vpop.f32.mrf.mxu0
      %v2243 = vadd.f32 %v2104, %v2242
      %v2244 = vpop.f32.mrf.mxu0
      %2245 = vmatprep.mubr.f32.mxu0 0.0
      %v2246 = vand.u32 %v465, 4294901760
      %2247 = vmatmul.mubr.f32.gmra.mxu0 %v2246
      %v2248 = vpop.f32.mrf.mxu0
      %v2249 = vadd.f32 %v2114, %v2248
      %v2250 = vpop.f32.mrf.mxu0
      %2251 = vmatprep.mubr.f32.mxu0 0.0
      %v2252 = vand.u32 %v468, 4294901760
      %2253 = vmatmul.mubr.f32.gmra.mxu0 %v2252
      %v2254 = vpop.f32.mrf.mxu0
      %v2255 = vadd.f32 %v2124, %v2254
      %v2256 = vpop.f32.mrf.mxu0
      %2257 = vmatprep.mubr.f32.mxu0 0.0
      %v2258 = vand.u32 %v471, 4294901760
      %2259 = vmatmul.mubr.f32.gmra.mxu0 %v2258
      %v2260 = vpop.f32.mrf.mxu0
      %v2261 = vadd.f32 %v2134, %v2260
      %v2262 = vpop.f32.mrf.mxu0
      %2263 = vmatprep.mubr.f32.mxu0 0.0
      %v2264 = vand.u32 %v474, 4294901760
      %2265 = vmatmul.mubr.f32.gmra.mxu0 %v2264
      %v2266 = vpop.f32.mrf.mxu0
      %v2267 = vadd.f32 %v2144, %v2266
      %v2268 = vpop.f32.mrf.mxu0
      %2269 = vdwg.mxu0
      %2270 = vmatprep.subr.mxu0 0.0
      %2271 = vmatpush1.msra.mxu0 0.0
      %2272 = vmatprep.subr.mxu0 0.0
      %2273 = vmatpush1.msra.mxu0 0.0
      %2274 = vmatprep.subr.mxu0 0.0
      %2275 = vmatpush1.msra.mxu0 0.0
      %2276 = vmatprep.subr.mxu0 0.0
      %2277 = vmatpush1.msra.mxu0 0.0
      %2278 = vmatprep.subr.mxu0 0.0
      %2279 = vmatpush1.msra.mxu0 0.0
      %2280 = vmatprep.subr.mxu0 0.0
      %2281 = vmatpush1.msra.mxu0 0.0
      %2282 = vmatprep.subr.mxu0 0.0
      %2283 = vmatpush1.msra.mxu0 0.0
      %2284 = vmatprep.subr.mxu0 0.0
      %2285 = vmatpush1.msra.mxu0 0.0
      %2286 = vmatprep.subr.mxu0 0.0
      %2287 = vmatpush1.msra.mxu0 0.0
      %2288 = vmatprep.subr.mxu0 0.0
      %2289 = vmatpush1.msra.mxu0 0.0
      %2290 = vmatprep.subr.mxu0 0.0
      %2291 = vmatpush1.msra.mxu0 0.0
      %2292 = vmatprep.subr.mxu0 0.0
      %2293 = vmatpush1.msra.mxu0 0.0
      %2294 = vmatprep.subr.mxu0 0.0
      %2295 = vmatpush1.msra.mxu0 0.0
      %2296 = vmatprep.subr.mxu0 0.0
      %2297 = vmatpush1.msra.mxu0 0.0
      %2298 = vmatprep.subr.mxu0 0.0
      %v2299 = vand.u32 %v1999, 4294901760
      %v2300 = vsub.f32 %v1999, %v2299
      %2301 = vmatpush1.msra.mxu0 %v2300
      %2302 = vmatprep.subr.mxu0 0.0
      %v2303 = vand.u32 %v1998, 4294901760
      %v2304 = vsub.f32 %v1998, %v2303
      %2305 = vmatpush1.msra.mxu0 %v2304
      %2306 = vmatprep.subr.mxu0 0.0
      %2307 = vmatpush2.msra.mxu0 0.0
      %2308 = vmatprep.subr.mxu0 0.0
      %2309 = vmatpush2.msra.mxu0 0.0
      %2310 = vmatprep.subr.mxu0 0.0
      %2311 = vmatpush2.msra.mxu0 0.0
      %2312 = vmatprep.subr.mxu0 0.0
      %2313 = vmatpush2.msra.mxu0 0.0
      %2314 = vmatprep.subr.mxu0 0.0
      %2315 = vmatpush2.msra.mxu0 0.0
      %2316 = vmatprep.subr.mxu0 0.0
      %2317 = vmatpush2.msra.mxu0 0.0
      %2318 = vmatprep.subr.mxu0 0.0
      %2319 = vmatpush2.msra.mxu0 0.0
      %2320 = vmatprep.subr.mxu0 0.0
      %2321 = vmatpush2.msra.mxu0 0.0
      %2322 = vmatprep.subr.mxu0 0.0
      %2323 = vmatpush2.msra.mxu0 0.0
      %2324 = vmatprep.subr.mxu0 0.0
      %2325 = vmatpush2.msra.mxu0 0.0
      %2326 = vmatprep.subr.mxu0 0.0
      %2327 = vmatpush2.msra.mxu0 0.0
      %2328 = vmatprep.subr.mxu0 0.0
      %2329 = vmatpush2.msra.mxu0 0.0
      %2330 = vmatprep.subr.mxu0 0.0
      %2331 = vmatpush2.msra.mxu0 0.0
      %2332 = vmatprep.subr.mxu0 0.0
      %2333 = vmatpush2.msra.mxu0 0.0
      %2334 = vmatprep.subr.mxu0 0.0
      %2335 = vmatpush2.msra.mxu0 0.0
      %2336 = vmatprep.subr.mxu0 0.0
      %2337 = vmatpush2.msra.mxu0 0.0
      %2338 = vmatprep.mubr.f32.mxu0 0.0
      %v2339 = vand.u32 %v453, 4294901760
      %v2340 = vsub.f32 %v453, %v2339
      %2341 = vmatmul.mubr.f32.gmra.mxu0 %v2340
      %v2342 = vpop.f32.mrf.mxu0
      %v2343 = vadd.f32 %v2225, %v2342
      %v2344 = vpop.f32.mrf.mxu0
      %2345 = vmatprep.mubr.f32.mxu0 0.0
      %v2346 = vand.u32 %v456, 4294901760
      %v2347 = vsub.f32 %v456, %v2346
      %2348 = vmatmul.mubr.f32.gmra.mxu0 %v2347
      %v2349 = vpop.f32.mrf.mxu0
      %v2350 = vadd.f32 %v2231, %v2349
      %v2351 = vpop.f32.mrf.mxu0
      %2352 = vmatprep.mubr.f32.mxu0 0.0
      %v2353 = vand.u32 %v459, 4294901760
      %v2354 = vsub.f32 %v459, %v2353
      %2355 = vmatmul.mubr.f32.gmra.mxu0 %v2354
      %v2356 = vpop.f32.mrf.mxu0
      %v2357 = vadd.f32 %v2237, %v2356
      %v2358 = vpop.f32.mrf.mxu0
      %2359 = vmatprep.mubr.f32.mxu0 0.0
      %v2360 = vand.u32 %v462, 4294901760
      %v2361 = vsub.f32 %v462, %v2360
      %2362 = vmatmul.mubr.f32.gmra.mxu0 %v2361
      %v2363 = vpop.f32.mrf.mxu0
      %v2364 = vadd.f32 %v2243, %v2363
      %v2365 = vpop.f32.mrf.mxu0
      %2366 = vmatprep.mubr.f32.mxu0 0.0
      %v2367 = vand.u32 %v465, 4294901760
      %v2368 = vsub.f32 %v465, %v2367
      %2369 = vmatmul.mubr.f32.gmra.mxu0 %v2368
      %v2370 = vpop.f32.mrf.mxu0
      %v2371 = vadd.f32 %v2249, %v2370
      %v2372 = vpop.f32.mrf.mxu0
      %2373 = vmatprep.mubr.f32.mxu0 0.0
      %v2374 = vand.u32 %v468, 4294901760
      %v2375 = vsub.f32 %v468, %v2374
      %2376 = vmatmul.mubr.f32.gmra.mxu0 %v2375
      %v2377 = vpop.f32.mrf.mxu0
      %v2378 = vadd.f32 %v2255, %v2377
      %v2379 = vpop.f32.mrf.mxu0
      %2380 = vmatprep.mubr.f32.mxu0 0.0
      %v2381 = vand.u32 %v471, 4294901760
      %v2382 = vsub.f32 %v471, %v2381
      %2383 = vmatmul.mubr.f32.gmra.mxu0 %v2382
      %v2384 = vpop.f32.mrf.mxu0
      %v2385 = vadd.f32 %v2261, %v2384
      %v2386 = vpop.f32.mrf.mxu0
      %2387 = vmatprep.mubr.f32.mxu0 0.0
      %v2388 = vand.u32 %v474, 4294901760
      %v2389 = vsub.f32 %v474, %v2388
      %2390 = vmatmul.mubr.f32.gmra.mxu0 %v2389
      %v2391 = vpop.f32.mrf.mxu0
      %v2392 = vadd.f32 %v2267, %v2391
      %v2393 = vpop.f32.mrf.mxu0
      %2394 = vdwg.mxu0
      %2395 = vmatprep.subr.mxu0 0.0
      %2396 = vmatpush1.msra.mxu0 0.0
      %2397 = vmatprep.subr.mxu0 0.0
      %2398 = vmatpush1.msra.mxu0 0.0
      %2399 = vmatprep.subr.mxu0 0.0
      %2400 = vmatpush1.msra.mxu0 0.0
      %2401 = vmatprep.subr.mxu0 0.0
      %2402 = vmatpush1.msra.mxu0 0.0
      %2403 = vmatprep.subr.mxu0 0.0
      %2404 = vmatpush1.msra.mxu0 0.0
      %2405 = vmatprep.subr.mxu0 0.0
      %2406 = vmatpush1.msra.mxu0 0.0
      %2407 = vmatprep.subr.mxu0 0.0
      %2408 = vmatpush1.msra.mxu0 0.0
      %2409 = vmatprep.subr.mxu0 0.0
      %2410 = vmatpush1.msra.mxu0 0.0
      %2411 = vmatprep.subr.mxu0 0.0
      %2412 = vmatpush1.msra.mxu0 0.0
      %2413 = vmatprep.subr.mxu0 0.0
      %2414 = vmatpush1.msra.mxu0 0.0
      %2415 = vmatprep.subr.mxu0 0.0
      %2416 = vmatpush1.msra.mxu0 0.0
      %2417 = vmatprep.subr.mxu0 0.0
      %2418 = vmatpush1.msra.mxu0 0.0
      %2419 = vmatprep.subr.mxu0 0.0
      %2420 = vmatpush1.msra.mxu0 0.0
      %2421 = vmatprep.subr.mxu0 0.0
      %2422 = vmatpush1.msra.mxu0 0.0
      %2423 = vmatprep.subr.mxu0 0.0
      %v2424 = vand.u32 %v1999, 4294901760
      %2425 = vmatpush1.msra.mxu0 %v2424
      %2426 = vmatprep.subr.mxu0 0.0
      %v2427 = vand.u32 %v1998, 4294901760
      %2428 = vmatpush1.msra.mxu0 %v2427
      %2429 = vmatprep.subr.mxu0 0.0
      %2430 = vmatpush2.msra.mxu0 0.0
      %2431 = vmatprep.subr.mxu0 0.0
      %2432 = vmatpush2.msra.mxu0 0.0
      %2433 = vmatprep.subr.mxu0 0.0
      %2434 = vmatpush2.msra.mxu0 0.0
      %2435 = vmatprep.subr.mxu0 0.0
      %2436 = vmatpush2.msra.mxu0 0.0
      %2437 = vmatprep.subr.mxu0 0.0
      %2438 = vmatpush2.msra.mxu0 0.0
      %2439 = vmatprep.subr.mxu0 0.0
      %2440 = vmatpush2.msra.mxu0 0.0
      %2441 = vmatprep.subr.mxu0 0.0
      %2442 = vmatpush2.msra.mxu0 0.0
      %2443 = vmatprep.subr.mxu0 0.0
      %2444 = vmatpush2.msra.mxu0 0.0
      %2445 = vmatprep.subr.mxu0 0.0
      %2446 = vmatpush2.msra.mxu0 0.0
      %2447 = vmatprep.subr.mxu0 0.0
      %2448 = vmatpush2.msra.mxu0 0.0
      %2449 = vmatprep.subr.mxu0 0.0
      %2450 = vmatpush2.msra.mxu0 0.0
      %2451 = vmatprep.subr.mxu0 0.0
      %2452 = vmatpush2.msra.mxu0 0.0
      %2453 = vmatprep.subr.mxu0 0.0
      %2454 = vmatpush2.msra.mxu0 0.0
      %2455 = vmatprep.subr.mxu0 0.0
      %2456 = vmatpush2.msra.mxu0 0.0
      %2457 = vmatprep.subr.mxu0 0.0
      %2458 = vmatpush2.msra.mxu0 0.0
      %2459 = vmatprep.subr.mxu0 0.0
      %2460 = vmatpush2.msra.mxu0 0.0
      %2461 = vmatprep.mubr.f32.mxu0 0.0
      %v2462 = vand.u32 %v453, 4294901760
      %v2463 = vsub.f32 %v453, %v2462
      %v2464 = vand.u32 %v2463, 4294901760
      %2465 = vmatmul.mubr.f32.gmra.mxu0 %v2464
      %v2466 = vpop.f32.mrf.mxu0
      %v2467 = vadd.f32 %v2343, %v2466
      %v2468 = vpop.f32.mrf.mxu0
      %2469 = vmatprep.mubr.f32.mxu0 0.0
      %v2470 = vand.u32 %v456, 4294901760
      %v2471 = vsub.f32 %v456, %v2470
      %v2472 = vand.u32 %v2471, 4294901760
      %2473 = vmatmul.mubr.f32.gmra.mxu0 %v2472
      %v2474 = vpop.f32.mrf.mxu0
      %v2475 = vadd.f32 %v2350, %v2474
      %v2476 = vpop.f32.mrf.mxu0
      %2477 = vmatprep.mubr.f32.mxu0 0.0
      %v2478 = vand.u32 %v459, 4294901760
      %v2479 = vsub.f32 %v459, %v2478
      %v2480 = vand.u32 %v2479, 4294901760
      %2481 = vmatmul.mubr.f32.gmra.mxu0 %v2480
      %v2482 = vpop.f32.mrf.mxu0
      %v2483 = vadd.f32 %v2357, %v2482
      %v2484 = vpop.f32.mrf.mxu0
      %2485 = vmatprep.mubr.f32.mxu0 0.0
      %v2486 = vand.u32 %v462, 4294901760
      %v2487 = vsub.f32 %v462, %v2486
      %v2488 = vand.u32 %v2487, 4294901760
      %2489 = vmatmul.mubr.f32.gmra.mxu0 %v2488
      %v2490 = vpop.f32.mrf.mxu0
      %v2491 = vadd.f32 %v2364, %v2490
      %v2492 = vpop.f32.mrf.mxu0
      %2493 = vmatprep.mubr.f32.mxu0 0.0
      %v2494 = vand.u32 %v465, 4294901760
      %v2495 = vsub.f32 %v465, %v2494
      %v2496 = vand.u32 %v2495, 4294901760
      %2497 = vmatmul.mubr.f32.gmra.mxu0 %v2496
      %v2498 = vpop.f32.mrf.mxu0
      %v2499 = vadd.f32 %v2371, %v2498
      %v2500 = vpop.f32.mrf.mxu0
      %2501 = vmatprep.mubr.f32.mxu0 0.0
      %v2502 = vand.u32 %v468, 4294901760
      %v2503 = vsub.f32 %v468, %v2502
      %v2504 = vand.u32 %v2503, 4294901760
      %2505 = vmatmul.mubr.f32.gmra.mxu0 %v2504
      %v2506 = vpop.f32.mrf.mxu0
      %v2507 = vadd.f32 %v2378, %v2506
      %v2508 = vpop.f32.mrf.mxu0
      %2509 = vmatprep.mubr.f32.mxu0 0.0
      %v2510 = vand.u32 %v471, 4294901760
      %v2511 = vsub.f32 %v471, %v2510
      %v2512 = vand.u32 %v2511, 4294901760
      %2513 = vmatmul.mubr.f32.gmra.mxu0 %v2512
      %v2514 = vpop.f32.mrf.mxu0
      %v2515 = vadd.f32 %v2385, %v2514
      %v2516 = vpop.f32.mrf.mxu0
      %2517 = vmatprep.mubr.f32.mxu0 0.0
      %v2518 = vand.u32 %v474, 4294901760
      %v2519 = vsub.f32 %v474, %v2518
      %v2520 = vand.u32 %v2519, 4294901760
      %2521 = vmatmul.mubr.f32.gmra.mxu0 %v2520
      %v2522 = vpop.f32.mrf.mxu0
      %v2523 = vadd.f32 %v2392, %v2522
      %v2524 = vpop.f32.mrf.mxu0
      %2525 = vdwg.mxu0
      %2526 = vmatprep.subr.mxu0 0.0
      %2527 = vmatpush1.msra.mxu0 0.0
      %2528 = vmatprep.subr.mxu0 0.0
      %2529 = vmatpush1.msra.mxu0 0.0
      %2530 = vmatprep.subr.mxu0 0.0
      %2531 = vmatpush1.msra.mxu0 0.0
      %2532 = vmatprep.subr.mxu0 0.0
      %2533 = vmatpush1.msra.mxu0 0.0
      %2534 = vmatprep.subr.mxu0 0.0
      %2535 = vmatpush1.msra.mxu0 0.0
      %2536 = vmatprep.subr.mxu0 0.0
      %2537 = vmatpush1.msra.mxu0 0.0
      %2538 = vmatprep.subr.mxu0 0.0
      %2539 = vmatpush1.msra.mxu0 0.0
      %2540 = vmatprep.subr.mxu0 0.0
      %2541 = vmatpush1.msra.mxu0 0.0
      %2542 = vmatprep.subr.mxu0 0.0
      %2543 = vmatpush1.msra.mxu0 0.0
      %2544 = vmatprep.subr.mxu0 0.0
      %2545 = vmatpush1.msra.mxu0 0.0
      %2546 = vmatprep.subr.mxu0 0.0
      %2547 = vmatpush1.msra.mxu0 0.0
      %2548 = vmatprep.subr.mxu0 0.0
      %2549 = vmatpush1.msra.mxu0 0.0
      %2550 = vmatprep.subr.mxu0 0.0
      %2551 = vmatpush1.msra.mxu0 0.0
      %2552 = vmatprep.subr.mxu0 0.0
      %2553 = vmatpush1.msra.mxu0 0.0
      %2554 = vmatprep.subr.mxu0 0.0
      %v2555 = vand.u32 %v1999, 4294901760
      %v2556 = vsub.f32 %v1999, %v2555
      %v2557 = vand.u32 %v2556, 4294901760
      %2558 = vmatpush1.msra.mxu0 %v2557
      %2559 = vmatprep.subr.mxu0 0.0
      %v2560 = vand.u32 %v1998, 4294901760
      %v2561 = vsub.f32 %v1998, %v2560
      %v2562 = vand.u32 %v2561, 4294901760
      %2563 = vmatpush1.msra.mxu0 %v2562
      %2564 = vmatprep.subr.mxu0 0.0
      %2565 = vmatpush2.msra.mxu0 0.0
      %2566 = vmatprep.subr.mxu0 0.0
      %2567 = vmatpush2.msra.mxu0 0.0
      %2568 = vmatprep.subr.mxu0 0.0
      %2569 = vmatpush2.msra.mxu0 0.0
      %2570 = vmatprep.subr.mxu0 0.0
      %2571 = vmatpush2.msra.mxu0 0.0
      %2572 = vmatprep.subr.mxu0 0.0
      %2573 = vmatpush2.msra.mxu0 0.0
      %2574 = vmatprep.subr.mxu0 0.0
      %2575 = vmatpush2.msra.mxu0 0.0
      %2576 = vmatprep.subr.mxu0 0.0
      %2577 = vmatpush2.msra.mxu0 0.0
      %2578 = vmatprep.subr.mxu0 0.0
      %2579 = vmatpush2.msra.mxu0 0.0
      %2580 = vmatprep.subr.mxu0 0.0
      %2581 = vmatpush2.msra.mxu0 0.0
      %2582 = vmatprep.subr.mxu0 0.0
      %2583 = vmatpush2.msra.mxu0 0.0
      %2584 = vmatprep.subr.mxu0 0.0
      %2585 = vmatpush2.msra.mxu0 0.0
      %2586 = vmatprep.subr.mxu0 0.0
      %2587 = vmatpush2.msra.mxu0 0.0
      %2588 = vmatprep.subr.mxu0 0.0
      %2589 = vmatpush2.msra.mxu0 0.0
      %2590 = vmatprep.subr.mxu0 0.0
      %2591 = vmatpush2.msra.mxu0 0.0
      %2592 = vmatprep.subr.mxu0 0.0
      %2593 = vmatpush2.msra.mxu0 0.0
      %2594 = vmatprep.subr.mxu0 0.0
      %2595 = vmatpush2.msra.mxu0 0.0
      %2596 = vmatprep.mubr.f32.mxu0 0.0
      %v2597 = vand.u32 %v453, 4294901760
      %2598 = vmatmul.mubr.f32.gmra.mxu0 %v2597
      %v2599 = vpop.f32.mrf.mxu0
      %v2600 = vadd.f32 %v2467, %v2599
      %v2601 = vpop.f32.mrf.mxu0
      %2602 = vmatprep.mubr.f32.mxu0 0.0
      %v2603 = vand.u32 %v456, 4294901760
      %2604 = vmatmul.mubr.f32.gmra.mxu0 %v2603
      %v2605 = vpop.f32.mrf.mxu0
      %v2606 = vadd.f32 %v2475, %v2605
      %v2607 = vpop.f32.mrf.mxu0
      %2608 = vmatprep.mubr.f32.mxu0 0.0
      %v2609 = vand.u32 %v459, 4294901760
      %2610 = vmatmul.mubr.f32.gmra.mxu0 %v2609
      %v2611 = vpop.f32.mrf.mxu0
      %v2612 = vadd.f32 %v2483, %v2611
      %v2613 = vpop.f32.mrf.mxu0
      %2614 = vmatprep.mubr.f32.mxu0 0.0
      %v2615 = vand.u32 %v462, 4294901760
      %2616 = vmatmul.mubr.f32.gmra.mxu0 %v2615
      %v2617 = vpop.f32.mrf.mxu0
      %v2618 = vadd.f32 %v2491, %v2617
      %v2619 = vpop.f32.mrf.mxu0
      %2620 = vmatprep.mubr.f32.mxu0 0.0
      %v2621 = vand.u32 %v465, 4294901760
      %2622 = vmatmul.mubr.f32.gmra.mxu0 %v2621
      %v2623 = vpop.f32.mrf.mxu0
      %v2624 = vadd.f32 %v2499, %v2623
      %v2625 = vpop.f32.mrf.mxu0
      %2626 = vmatprep.mubr.f32.mxu0 0.0
      %v2627 = vand.u32 %v468, 4294901760
      %2628 = vmatmul.mubr.f32.gmra.mxu0 %v2627
      %v2629 = vpop.f32.mrf.mxu0
      %v2630 = vadd.f32 %v2507, %v2629
      %v2631 = vpop.f32.mrf.mxu0
      %2632 = vmatprep.mubr.f32.mxu0 0.0
      %v2633 = vand.u32 %v471, 4294901760
      %2634 = vmatmul.mubr.f32.gmra.mxu0 %v2633
      %v2635 = vpop.f32.mrf.mxu0
      %v2636 = vadd.f32 %v2515, %v2635
      %v2637 = vpop.f32.mrf.mxu0
      %2638 = vmatprep.mubr.f32.mxu0 0.0
      %v2639 = vand.u32 %v474, 4294901760
      %2640 = vmatmul.mubr.f32.gmra.mxu0 %v2639
      %v2641 = vpop.f32.mrf.mxu0
      %v2642 = vadd.f32 %v2523, %v2641
      %v2643 = vpop.f32.mrf.mxu0
      %2644 = vdwg.mxu0
      %2645 = vmatprep.subr.mxu0 0.0
      %2646 = vmatpush1.msra.mxu0 0.0
      %2647 = vmatprep.subr.mxu0 0.0
      %2648 = vmatpush1.msra.mxu0 0.0
      %2649 = vmatprep.subr.mxu0 0.0
      %2650 = vmatpush1.msra.mxu0 0.0
      %2651 = vmatprep.subr.mxu0 0.0
      %2652 = vmatpush1.msra.mxu0 0.0
      %2653 = vmatprep.subr.mxu0 0.0
      %2654 = vmatpush1.msra.mxu0 0.0
      %2655 = vmatprep.subr.mxu0 0.0
      %2656 = vmatpush1.msra.mxu0 0.0
      %2657 = vmatprep.subr.mxu0 0.0
      %2658 = vmatpush1.msra.mxu0 0.0
      %2659 = vmatprep.subr.mxu0 0.0
      %2660 = vmatpush1.msra.mxu0 0.0
      %2661 = vmatprep.subr.mxu0 0.0
      %2662 = vmatpush1.msra.mxu0 0.0
      %2663 = vmatprep.subr.mxu0 0.0
      %2664 = vmatpush1.msra.mxu0 0.0
      %2665 = vmatprep.subr.mxu0 0.0
      %2666 = vmatpush1.msra.mxu0 0.0
      %2667 = vmatprep.subr.mxu0 0.0
      %2668 = vmatpush1.msra.mxu0 0.0
      %2669 = vmatprep.subr.mxu0 0.0
      %2670 = vmatpush1.msra.mxu0 0.0
      %2671 = vmatprep.subr.mxu0 0.0
      %2672 = vmatpush1.msra.mxu0 0.0
      %2673 = vmatprep.subr.mxu0 0.0
      %v2674 = vand.u32 %v1999, 4294901760
      %2675 = vmatpush1.msra.mxu0 %v2674
      %2676 = vmatprep.subr.mxu0 0.0
      %v2677 = vand.u32 %v1998, 4294901760
      %2678 = vmatpush1.msra.mxu0 %v2677
      %2679 = vmatprep.subr.mxu0 0.0
      %2680 = vmatpush2.msra.mxu0 0.0
      %2681 = vmatprep.subr.mxu0 0.0
      %2682 = vmatpush2.msra.mxu0 0.0
      %2683 = vmatprep.subr.mxu0 0.0
      %2684 = vmatpush2.msra.mxu0 0.0
      %2685 = vmatprep.subr.mxu0 0.0
      %2686 = vmatpush2.msra.mxu0 0.0
      %2687 = vmatprep.subr.mxu0 0.0
      %2688 = vmatpush2.msra.mxu0 0.0
      %2689 = vmatprep.subr.mxu0 0.0
      %2690 = vmatpush2.msra.mxu0 0.0
      %2691 = vmatprep.subr.mxu0 0.0
      %2692 = vmatpush2.msra.mxu0 0.0
      %2693 = vmatprep.subr.mxu0 0.0
      %2694 = vmatpush2.msra.mxu0 0.0
      %2695 = vmatprep.subr.mxu0 0.0
      %2696 = vmatpush2.msra.mxu0 0.0
      %2697 = vmatprep.subr.mxu0 0.0
      %2698 = vmatpush2.msra.mxu0 0.0
      %2699 = vmatprep.subr.mxu0 0.0
      %2700 = vmatpush2.msra.mxu0 0.0
      %2701 = vmatprep.subr.mxu0 0.0
      %2702 = vmatpush2.msra.mxu0 0.0
      %2703 = vmatprep.subr.mxu0 0.0
      %2704 = vmatpush2.msra.mxu0 0.0
      %2705 = vmatprep.subr.mxu0 0.0
      %2706 = vmatpush2.msra.mxu0 0.0
      %2707 = vmatprep.subr.mxu0 0.0
      %2708 = vmatpush2.msra.mxu0 0.0
      %2709 = vmatprep.subr.mxu0 0.0
      %2710 = vmatpush2.msra.mxu0 0.0
      %2711 = vmatprep.mubr.f32.mxu0 0.0
      %v2712 = vand.u32 %v453, 4294901760
      %2713 = vmatmul.mubr.f32.gmra.mxu0 %v2712
      %v2714 = vpop.f32.mrf.mxu0
      %v2715 = vadd.f32 %v2600, %v2714
      %v2716 = vpop.f32.mrf.mxu0
      %2717 = vmatprep.mubr.f32.mxu0 0.0
      %v2718 = vand.u32 %v456, 4294901760
      %2719 = vmatmul.mubr.f32.gmra.mxu0 %v2718
      %v2720 = vpop.f32.mrf.mxu0
      %v2721 = vadd.f32 %v2606, %v2720
      %v2722 = vpop.f32.mrf.mxu0
      %2723 = vmatprep.mubr.f32.mxu0 0.0
      %v2724 = vand.u32 %v459, 4294901760
      %2725 = vmatmul.mubr.f32.gmra.mxu0 %v2724
      %v2726 = vpop.f32.mrf.mxu0
      %v2727 = vadd.f32 %v2612, %v2726
      %v2728 = vpop.f32.mrf.mxu0
      %2729 = vmatprep.mubr.f32.mxu0 0.0
      %v2730 = vand.u32 %v462, 4294901760
      %2731 = vmatmul.mubr.f32.gmra.mxu0 %v2730
      %v2732 = vpop.f32.mrf.mxu0
      %v2733 = vadd.f32 %v2618, %v2732
      %v2734 = vpop.f32.mrf.mxu0
      %2735 = vmatprep.mubr.f32.mxu0 0.0
      %v2736 = vand.u32 %v465, 4294901760
      %2737 = vmatmul.mubr.f32.gmra.mxu0 %v2736
      %v2738 = vpop.f32.mrf.mxu0
      %v2739 = vadd.f32 %v2624, %v2738
      %v2740 = vpop.f32.mrf.mxu0
      %2741 = vmatprep.mubr.f32.mxu0 0.0
      %v2742 = vand.u32 %v468, 4294901760
      %2743 = vmatmul.mubr.f32.gmra.mxu0 %v2742
      %v2744 = vpop.f32.mrf.mxu0
      %v2745 = vadd.f32 %v2630, %v2744
      %v2746 = vpop.f32.mrf.mxu0
      %2747 = vmatprep.mubr.f32.mxu0 0.0
      %v2748 = vand.u32 %v471, 4294901760
      %2749 = vmatmul.mubr.f32.gmra.mxu0 %v2748
      %v2750 = vpop.f32.mrf.mxu0
      %v2751 = vadd.f32 %v2636, %v2750
      %v2752 = vpop.f32.mrf.mxu0
      %2753 = vmatprep.mubr.f32.mxu0 0.0
      %v2754 = vand.u32 %v474, 4294901760
      %2755 = vmatmul.mubr.f32.gmra.mxu0 %v2754
      %v2756 = vpop.f32.mrf.mxu0
      %v2757 = vadd.f32 %v2642, %v2756
      %v2758 = vpop.f32.mrf.mxu0
      %2759 = vdwg.mxu0
      %v2761 = vsel %vm314, %v1191, 0
      %v2764 = vsel %vm314, %v1197, 0
      %v2767 = vsel %vm314, %v1203, 0
      %v2770 = vsel %vm314, %v1209, 0
      %v2773 = vsel %vm314, %v1215, 0
      %v2776 = vsel %vm314, %v1221, 0
      %v2779 = vsel %vm314, %v1227, 0
      %v2782 = vsel %vm314, %v1233, 0
      %v2785 = vsel %vm314, %v1953, 0
      %v2788 = vsel %vm314, %v1959, 0
      %v2791 = vsel %vm314, %v1965, 0
      %v2794 = vsel %vm314, %v1971, 0
      %v2797 = vsel %vm314, %v1977, 0
      %v2800 = vsel %vm314, %v1983, 0
      %v2803 = vsel %vm314, %v1989, 0
      %v2806 = vsel %vm314, %v1995, 0
      %2808 = vmatprep.subr.mxu0 0.0
      %2809 = vmatpush1.xpose.msra.mxu0 0.0
      %2810 = vmatprep.subr.mxu0 0.0
      %2811 = vmatpush1.xpose.msra.mxu0 0.0
      %2812 = vmatprep.subr.mxu0 0.0
      %2813 = vmatpush1.xpose.msra.mxu0 0.0
      %2814 = vmatprep.subr.mxu0 0.0
      %2815 = vmatpush1.xpose.msra.mxu0 0.0
      %2816 = vmatprep.subr.mxu0 0.0
      %2817 = vmatpush1.xpose.msra.mxu0 0.0
      %2818 = vmatprep.subr.mxu0 0.0
      %2819 = vmatpush1.xpose.msra.mxu0 0.0
      %2820 = vmatprep.subr.mxu0 0.0
      %2821 = vmatpush1.xpose.msra.mxu0 0.0
      %2822 = vmatprep.subr.mxu0 0.0
      %2823 = vmatpush1.xpose.msra.mxu0 0.0
      %2824 = vmatprep.subr.mxu0 0.0
      %v2825 = vand.u32 %v2806, 4294901760
      %2826 = vmatpush1.xpose.msra.mxu0 %v2825
      %2827 = vmatprep.subr.mxu0 0.0
      %v2828 = vand.u32 %v2803, 4294901760
      %2829 = vmatpush1.xpose.msra.mxu0 %v2828
      %2830 = vmatprep.subr.mxu0 0.0
      %v2831 = vand.u32 %v2800, 4294901760
      %2832 = vmatpush1.xpose.msra.mxu0 %v2831
      %2833 = vmatprep.subr.mxu0 0.0
      %v2834 = vand.u32 %v2797, 4294901760
      %2835 = vmatpush1.xpose.msra.mxu0 %v2834
      %2836 = vmatprep.subr.mxu0 0.0
      %v2837 = vand.u32 %v2794, 4294901760
      %2838 = vmatpush1.xpose.msra.mxu0 %v2837
      %2839 = vmatprep.subr.mxu0 0.0
      %v2840 = vand.u32 %v2791, 4294901760
      %2841 = vmatpush1.xpose.msra.mxu0 %v2840
      %2842 = vmatprep.subr.mxu0 0.0
      %v2843 = vand.u32 %v2788, 4294901760
      %2844 = vmatpush1.xpose.msra.mxu0 %v2843
      %2845 = vmatprep.subr.mxu0 0.0
      %v2846 = vand.u32 %v2785, 4294901760
      %2847 = vmatpush1.xpose.msra.mxu0 %v2846
      %2848 = vmatprep.subr.mxu0 0.0
      %2849 = vmatpush2.xpose.msra.mxu0 0.0
      %2850 = vmatprep.subr.mxu0 0.0
      %2851 = vmatpush2.xpose.msra.mxu0 0.0
      %2852 = vmatprep.subr.mxu0 0.0
      %2853 = vmatpush2.xpose.msra.mxu0 0.0
      %2854 = vmatprep.subr.mxu0 0.0
      %2855 = vmatpush2.xpose.msra.mxu0 0.0
      %2856 = vmatprep.subr.mxu0 0.0
      %2857 = vmatpush2.xpose.msra.mxu0 0.0
      %2858 = vmatprep.subr.mxu0 0.0
      %2859 = vmatpush2.xpose.msra.mxu0 0.0
      %2860 = vmatprep.subr.mxu0 0.0
      %2861 = vmatpush2.xpose.msra.mxu0 0.0
      %2862 = vmatprep.subr.mxu0 0.0
      %2863 = vmatpush2.xpose.msra.mxu0 0.0
      %2864 = vmatprep.subr.mxu0 0.0
      %2865 = vmatpush2.xpose.msra.mxu0 0.0
      %2866 = vmatprep.subr.mxu0 0.0
      %2867 = vmatpush2.xpose.msra.mxu0 0.0
      %2868 = vmatprep.subr.mxu0 0.0
      %2869 = vmatpush2.xpose.msra.mxu0 0.0
      %2870 = vmatprep.subr.mxu0 0.0
      %2871 = vmatpush2.xpose.msra.mxu0 0.0
      %2872 = vmatprep.subr.mxu0 0.0
      %2873 = vmatpush2.xpose.msra.mxu0 0.0
      %2874 = vmatprep.subr.mxu0 0.0
      %2875 = vmatpush2.xpose.msra.mxu0 0.0
      %2876 = vmatprep.subr.mxu0 0.0
      %2877 = vmatpush2.xpose.msra.mxu0 0.0
      %2878 = vmatprep.subr.mxu0 0.0
      %2879 = vmatpush2.xpose.msra.mxu0 0.0
      %2880 = vmatprep.mubr.f32.mxu0 0.0
      %v2881 = vand.u32 %v2761, 4294901760
      %v2882 = vsub.f32 %v2761, %v2881
      %v2883 = vand.u32 %v2882, 4294901760
      %v2884 = vsub.f32 %v2882, %v2883
      %v2885 = vand.u32 %v2884, 4294901760
      %2886 = vmatmul.mubr.f32.gmra.mxu0 %v2885
      %v2887 = vpop.f32.mrf.mxu0
      %v2888 = vadd.f32 0.0, %v2887
      %v2889 = vpop.f32.mrf.mxu0
      %2890 = vmatprep.mubr.f32.mxu0 0.0
      %v2891 = vand.u32 %v2764, 4294901760
      %v2892 = vsub.f32 %v2764, %v2891
      %v2893 = vand.u32 %v2892, 4294901760
      %v2894 = vsub.f32 %v2892, %v2893
      %v2895 = vand.u32 %v2894, 4294901760
      %2896 = vmatmul.mubr.f32.gmra.mxu0 %v2895
      %v2897 = vpop.f32.mrf.mxu0
      %v2898 = vadd.f32 0.0, %v2897
      %v2899 = vpop.f32.mrf.mxu0
      %2900 = vmatprep.mubr.f32.mxu0 0.0
      %v2901 = vand.u32 %v2767, 4294901760
      %v2902 = vsub.f32 %v2767, %v2901
      %v2903 = vand.u32 %v2902, 4294901760
      %v2904 = vsub.f32 %v2902, %v2903
      %v2905 = vand.u32 %v2904, 4294901760
      %2906 = vmatmul.mubr.f32.gmra.mxu0 %v2905
      %v2907 = vpop.f32.mrf.mxu0
      %v2908 = vadd.f32 0.0, %v2907
      %v2909 = vpop.f32.mrf.mxu0
      %2910 = vmatprep.mubr.f32.mxu0 0.0
      %v2911 = vand.u32 %v2770, 4294901760
      %v2912 = vsub.f32 %v2770, %v2911
      %v2913 = vand.u32 %v2912, 4294901760
      %v2914 = vsub.f32 %v2912, %v2913
      %v2915 = vand.u32 %v2914, 4294901760
      %2916 = vmatmul.mubr.f32.gmra.mxu0 %v2915
      %v2917 = vpop.f32.mrf.mxu0
      %v2918 = vadd.f32 0.0, %v2917
      %v2919 = vpop.f32.mrf.mxu0
      %2920 = vmatprep.mubr.f32.mxu0 0.0
      %v2921 = vand.u32 %v2773, 4294901760
      %v2922 = vsub.f32 %v2773, %v2921
      %v2923 = vand.u32 %v2922, 4294901760
      %v2924 = vsub.f32 %v2922, %v2923
      %v2925 = vand.u32 %v2924, 4294901760
      %2926 = vmatmul.mubr.f32.gmra.mxu0 %v2925
      %v2927 = vpop.f32.mrf.mxu0
      %v2928 = vadd.f32 0.0, %v2927
      %v2929 = vpop.f32.mrf.mxu0
      %2930 = vmatprep.mubr.f32.mxu0 0.0
      %v2931 = vand.u32 %v2776, 4294901760
      %v2932 = vsub.f32 %v2776, %v2931
      %v2933 = vand.u32 %v2932, 4294901760
      %v2934 = vsub.f32 %v2932, %v2933
      %v2935 = vand.u32 %v2934, 4294901760
      %2936 = vmatmul.mubr.f32.gmra.mxu0 %v2935
      %v2937 = vpop.f32.mrf.mxu0
      %v2938 = vadd.f32 0.0, %v2937
      %v2939 = vpop.f32.mrf.mxu0
      %2940 = vmatprep.mubr.f32.mxu0 0.0
      %v2941 = vand.u32 %v2779, 4294901760
      %v2942 = vsub.f32 %v2779, %v2941
      %v2943 = vand.u32 %v2942, 4294901760
      %v2944 = vsub.f32 %v2942, %v2943
      %v2945 = vand.u32 %v2944, 4294901760
      %2946 = vmatmul.mubr.f32.gmra.mxu0 %v2945
      %v2947 = vpop.f32.mrf.mxu0
      %v2948 = vadd.f32 0.0, %v2947
      %v2949 = vpop.f32.mrf.mxu0
      %2950 = vmatprep.mubr.f32.mxu0 0.0
      %v2951 = vand.u32 %v2782, 4294901760
      %v2952 = vsub.f32 %v2782, %v2951
      %v2953 = vand.u32 %v2952, 4294901760
      %v2954 = vsub.f32 %v2952, %v2953
      %v2955 = vand.u32 %v2954, 4294901760
      %2956 = vmatmul.mubr.f32.gmra.mxu0 %v2955
      %v2957 = vpop.f32.mrf.mxu0
      %v2958 = vadd.f32 0.0, %v2957
      %v2959 = vpop.f32.mrf.mxu0
      %2960 = vdwg.mxu0
      %2961 = vmatprep.subr.mxu0 0.0
      %2962 = vmatpush1.xpose.msra.mxu0 0.0
      %2963 = vmatprep.subr.mxu0 0.0
      %2964 = vmatpush1.xpose.msra.mxu0 0.0
      %2965 = vmatprep.subr.mxu0 0.0
      %2966 = vmatpush1.xpose.msra.mxu0 0.0
      %2967 = vmatprep.subr.mxu0 0.0
      %2968 = vmatpush1.xpose.msra.mxu0 0.0
      %2969 = vmatprep.subr.mxu0 0.0
      %2970 = vmatpush1.xpose.msra.mxu0 0.0
      %2971 = vmatprep.subr.mxu0 0.0
      %2972 = vmatpush1.xpose.msra.mxu0 0.0
      %2973 = vmatprep.subr.mxu0 0.0
      %2974 = vmatpush1.xpose.msra.mxu0 0.0
      %2975 = vmatprep.subr.mxu0 0.0
      %2976 = vmatpush1.xpose.msra.mxu0 0.0
      %2977 = vmatprep.subr.mxu0 0.0
      %v2978 = vand.u32 %v2806, 4294901760
      %v2979 = vsub.f32 %v2806, %v2978
      %v2980 = vand.u32 %v2979, 4294901760
      %v2981 = vsub.f32 %v2979, %v2980
      %v2982 = vand.u32 %v2981, 4294901760
      %2983 = vmatpush1.xpose.msra.mxu0 %v2982
      %2984 = vmatprep.subr.mxu0 0.0
      %v2985 = vand.u32 %v2803, 4294901760
      %v2986 = vsub.f32 %v2803, %v2985
      %v2987 = vand.u32 %v2986, 4294901760
      %v2988 = vsub.f32 %v2986, %v2987
      %v2989 = vand.u32 %v2988, 4294901760
      %2990 = vmatpush1.xpose.msra.mxu0 %v2989
      %2991 = vmatprep.subr.mxu0 0.0
      %v2992 = vand.u32 %v2800, 4294901760
      %v2993 = vsub.f32 %v2800, %v2992
      %v2994 = vand.u32 %v2993, 4294901760
      %v2995 = vsub.f32 %v2993, %v2994
      %v2996 = vand.u32 %v2995, 4294901760
      %2997 = vmatpush1.xpose.msra.mxu0 %v2996
      %2998 = vmatprep.subr.mxu0 0.0
      %v2999 = vand.u32 %v2797, 4294901760
      %v3000 = vsub.f32 %v2797, %v2999
      %v3001 = vand.u32 %v3000, 4294901760
      %v3002 = vsub.f32 %v3000, %v3001
      %v3003 = vand.u32 %v3002, 4294901760
      %3004 = vmatpush1.xpose.msra.mxu0 %v3003
      %3005 = vmatprep.subr.mxu0 0.0
      %v3006 = vand.u32 %v2794, 4294901760
      %v3007 = vsub.f32 %v2794, %v3006
      %v3008 = vand.u32 %v3007, 4294901760
      %v3009 = vsub.f32 %v3007, %v3008
      %v3010 = vand.u32 %v3009, 4294901760
      %3011 = vmatpush1.xpose.msra.mxu0 %v3010
      %3012 = vmatprep.subr.mxu0 0.0
      %v3013 = vand.u32 %v2791, 4294901760
      %v3014 = vsub.f32 %v2791, %v3013
      %v3015 = vand.u32 %v3014, 4294901760
      %v3016 = vsub.f32 %v3014, %v3015
      %v3017 = vand.u32 %v3016, 4294901760
      %3018 = vmatpush1.xpose.msra.mxu0 %v3017
      %3019 = vmatprep.subr.mxu0 0.0
      %v3020 = vand.u32 %v2788, 4294901760
      %v3021 = vsub.f32 %v2788, %v3020
      %v3022 = vand.u32 %v3021, 4294901760
      %v3023 = vsub.f32 %v3021, %v3022
      %v3024 = vand.u32 %v3023, 4294901760
      %3025 = vmatpush1.xpose.msra.mxu0 %v3024
      %3026 = vmatprep.subr.mxu0 0.0
      %v3027 = vand.u32 %v2785, 4294901760
      %v3028 = vsub.f32 %v2785, %v3027
      %v3029 = vand.u32 %v3028, 4294901760
      %v3030 = vsub.f32 %v3028, %v3029
      %v3031 = vand.u32 %v3030, 4294901760
      %3032 = vmatpush1.xpose.msra.mxu0 %v3031
      %3033 = vmatprep.subr.mxu0 0.0
      %3034 = vmatpush2.xpose.msra.mxu0 0.0
      %3035 = vmatprep.subr.mxu0 0.0
      %3036 = vmatpush2.xpose.msra.mxu0 0.0
      %3037 = vmatprep.subr.mxu0 0.0
      %3038 = vmatpush2.xpose.msra.mxu0 0.0
      %3039 = vmatprep.subr.mxu0 0.0
      %3040 = vmatpush2.xpose.msra.mxu0 0.0
      %3041 = vmatprep.subr.mxu0 0.0
      %3042 = vmatpush2.xpose.msra.mxu0 0.0
      %3043 = vmatprep.subr.mxu0 0.0
      %3044 = vmatpush2.xpose.msra.mxu0 0.0
      %3045 = vmatprep.subr.mxu0 0.0
      %3046 = vmatpush2.xpose.msra.mxu0 0.0
      %3047 = vmatprep.subr.mxu0 0.0
      %3048 = vmatpush2.xpose.msra.mxu0 0.0
      %3049 = vmatprep.subr.mxu0 0.0
      %3050 = vmatpush2.xpose.msra.mxu0 0.0
      %3051 = vmatprep.subr.mxu0 0.0
      %3052 = vmatpush2.xpose.msra.mxu0 0.0
      %3053 = vmatprep.subr.mxu0 0.0
      %3054 = vmatpush2.xpose.msra.mxu0 0.0
      %3055 = vmatprep.subr.mxu0 0.0
      %3056 = vmatpush2.xpose.msra.mxu0 0.0
      %3057 = vmatprep.subr.mxu0 0.0
      %3058 = vmatpush2.xpose.msra.mxu0 0.0
      %3059 = vmatprep.subr.mxu0 0.0
      %3060 = vmatpush2.xpose.msra.mxu0 0.0
      %3061 = vmatprep.subr.mxu0 0.0
      %3062 = vmatpush2.xpose.msra.mxu0 0.0
      %3063 = vmatprep.subr.mxu0 0.0
      %3064 = vmatpush2.xpose.msra.mxu0 0.0
      %3065 = vmatprep.mubr.f32.mxu0 0.0
      %v3066 = vand.u32 %v2761, 4294901760
      %3067 = vmatmul.mubr.f32.gmra.mxu0 %v3066
      %v3068 = vpop.f32.mrf.mxu0
      %v3069 = vadd.f32 %v2888, %v3068
      %v3070 = vpop.f32.mrf.mxu0
      %3071 = vmatprep.mubr.f32.mxu0 0.0
      %v3072 = vand.u32 %v2764, 4294901760
      %3073 = vmatmul.mubr.f32.gmra.mxu0 %v3072
      %v3074 = vpop.f32.mrf.mxu0
      %v3075 = vadd.f32 %v2898, %v3074
      %v3076 = vpop.f32.mrf.mxu0
      %3077 = vmatprep.mubr.f32.mxu0 0.0
      %v3078 = vand.u32 %v2767, 4294901760
      %3079 = vmatmul.mubr.f32.gmra.mxu0 %v3078
      %v3080 = vpop.f32.mrf.mxu0
      %v3081 = vadd.f32 %v2908, %v3080
      %v3082 = vpop.f32.mrf.mxu0
      %3083 = vmatprep.mubr.f32.mxu0 0.0
      %v3084 = vand.u32 %v2770, 4294901760
      %3085 = vmatmul.mubr.f32.gmra.mxu0 %v3084
      %v3086 = vpop.f32.mrf.mxu0
      %v3087 = vadd.f32 %v2918, %v3086
      %v3088 = vpop.f32.mrf.mxu0
      %3089 = vmatprep.mubr.f32.mxu0 0.0
      %v3090 = vand.u32 %v2773, 4294901760
      %3091 = vmatmul.mubr.f32.gmra.mxu0 %v3090
      %v3092 = vpop.f32.mrf.mxu0
      %v3093 = vadd.f32 %v2928, %v3092
      %v3094 = vpop.f32.mrf.mxu0
      %3095 = vmatprep.mubr.f32.mxu0 0.0
      %v3096 = vand.u32 %v2776, 4294901760
      %3097 = vmatmul.mubr.f32.gmra.mxu0 %v3096
      %v3098 = vpop.f32.mrf.mxu0
      %v3099 = vadd.f32 %v2938, %v3098
      %v3100 = vpop.f32.mrf.mxu0
      %3101 = vmatprep.mubr.f32.mxu0 0.0
      %v3102 = vand.u32 %v2779, 4294901760
      %3103 = vmatmul.mubr.f32.gmra.mxu0 %v3102
      %v3104 = vpop.f32.mrf.mxu0
      %v3105 = vadd.f32 %v2948, %v3104
      %v3106 = vpop.f32.mrf.mxu0
      %3107 = vmatprep.mubr.f32.mxu0 0.0
      %v3108 = vand.u32 %v2782, 4294901760
      %3109 = vmatmul.mubr.f32.gmra.mxu0 %v3108
      %v3110 = vpop.f32.mrf.mxu0
      %v3111 = vadd.f32 %v2958, %v3110
      %v3112 = vpop.f32.mrf.mxu0
      %3113 = vdwg.mxu0
      %3114 = vmatprep.subr.mxu0 0.0
      %3115 = vmatpush1.xpose.msra.mxu0 0.0
      %3116 = vmatprep.subr.mxu0 0.0
      %3117 = vmatpush1.xpose.msra.mxu0 0.0
      %3118 = vmatprep.subr.mxu0 0.0
      %3119 = vmatpush1.xpose.msra.mxu0 0.0
      %3120 = vmatprep.subr.mxu0 0.0
      %3121 = vmatpush1.xpose.msra.mxu0 0.0
      %3122 = vmatprep.subr.mxu0 0.0
      %3123 = vmatpush1.xpose.msra.mxu0 0.0
      %3124 = vmatprep.subr.mxu0 0.0
      %3125 = vmatpush1.xpose.msra.mxu0 0.0
      %3126 = vmatprep.subr.mxu0 0.0
      %3127 = vmatpush1.xpose.msra.mxu0 0.0
      %3128 = vmatprep.subr.mxu0 0.0
      %3129 = vmatpush1.xpose.msra.mxu0 0.0
      %3130 = vmatprep.subr.mxu0 0.0
      %v3131 = vand.u32 %v2806, 4294901760
      %v3132 = vsub.f32 %v2806, %v3131
      %3133 = vmatpush1.xpose.msra.mxu0 %v3132
      %3134 = vmatprep.subr.mxu0 0.0
      %v3135 = vand.u32 %v2803, 4294901760
      %v3136 = vsub.f32 %v2803, %v3135
      %3137 = vmatpush1.xpose.msra.mxu0 %v3136
      %3138 = vmatprep.subr.mxu0 0.0
      %v3139 = vand.u32 %v2800, 4294901760
      %v3140 = vsub.f32 %v2800, %v3139
      %3141 = vmatpush1.xpose.msra.mxu0 %v3140
      %3142 = vmatprep.subr.mxu0 0.0
      %v3143 = vand.u32 %v2797, 4294901760
      %v3144 = vsub.f32 %v2797, %v3143
      %3145 = vmatpush1.xpose.msra.mxu0 %v3144
      %3146 = vmatprep.subr.mxu0 0.0
      %v3147 = vand.u32 %v2794, 4294901760
      %v3148 = vsub.f32 %v2794, %v3147
      %3149 = vmatpush1.xpose.msra.mxu0 %v3148
      %3150 = vmatprep.subr.mxu0 0.0
      %v3151 = vand.u32 %v2791, 4294901760
      %v3152 = vsub.f32 %v2791, %v3151
      %3153 = vmatpush1.xpose.msra.mxu0 %v3152
      %3154 = vmatprep.subr.mxu0 0.0
      %v3155 = vand.u32 %v2788, 4294901760
      %v3156 = vsub.f32 %v2788, %v3155
      %3157 = vmatpush1.xpose.msra.mxu0 %v3156
      %3158 = vmatprep.subr.mxu0 0.0
      %v3159 = vand.u32 %v2785, 4294901760
      %v3160 = vsub.f32 %v2785, %v3159
      %3161 = vmatpush1.xpose.msra.mxu0 %v3160
      %3162 = vmatprep.subr.mxu0 0.0
      %3163 = vmatpush2.xpose.msra.mxu0 0.0
      %3164 = vmatprep.subr.mxu0 0.0
      %3165 = vmatpush2.xpose.msra.mxu0 0.0
      %3166 = vmatprep.subr.mxu0 0.0
      %3167 = vmatpush2.xpose.msra.mxu0 0.0
      %3168 = vmatprep.subr.mxu0 0.0
      %3169 = vmatpush2.xpose.msra.mxu0 0.0
      %3170 = vmatprep.subr.mxu0 0.0
      %3171 = vmatpush2.xpose.msra.mxu0 0.0
      %3172 = vmatprep.subr.mxu0 0.0
      %3173 = vmatpush2.xpose.msra.mxu0 0.0
      %3174 = vmatprep.subr.mxu0 0.0
      %3175 = vmatpush2.xpose.msra.mxu0 0.0
      %3176 = vmatprep.subr.mxu0 0.0
      %3177 = vmatpush2.xpose.msra.mxu0 0.0
      %3178 = vmatprep.subr.mxu0 0.0
      %3179 = vmatpush2.xpose.msra.mxu0 0.0
      %3180 = vmatprep.subr.mxu0 0.0
      %3181 = vmatpush2.xpose.msra.mxu0 0.0
      %3182 = vmatprep.subr.mxu0 0.0
      %3183 = vmatpush2.xpose.msra.mxu0 0.0
      %3184 = vmatprep.subr.mxu0 0.0
      %3185 = vmatpush2.xpose.msra.mxu0 0.0
      %3186 = vmatprep.subr.mxu0 0.0
      %3187 = vmatpush2.xpose.msra.mxu0 0.0
      %3188 = vmatprep.subr.mxu0 0.0
      %3189 = vmatpush2.xpose.msra.mxu0 0.0
      %3190 = vmatprep.subr.mxu0 0.0
      %3191 = vmatpush2.xpose.msra.mxu0 0.0
      %3192 = vmatprep.subr.mxu0 0.0
      %3193 = vmatpush2.xpose.msra.mxu0 0.0
      %3194 = vmatprep.mubr.f32.mxu0 0.0
      %v3195 = vand.u32 %v2761, 4294901760
      %v3196 = vsub.f32 %v2761, %v3195
      %3197 = vmatmul.mubr.f32.gmra.mxu0 %v3196
      %v3198 = vpop.f32.mrf.mxu0
      %v3199 = vadd.f32 %v3069, %v3198
      %v3200 = vpop.f32.mrf.mxu0
      %3201 = vmatprep.mubr.f32.mxu0 0.0
      %v3202 = vand.u32 %v2764, 4294901760
      %v3203 = vsub.f32 %v2764, %v3202
      %3204 = vmatmul.mubr.f32.gmra.mxu0 %v3203
      %v3205 = vpop.f32.mrf.mxu0
      %v3206 = vadd.f32 %v3075, %v3205
      %v3207 = vpop.f32.mrf.mxu0
      %3208 = vmatprep.mubr.f32.mxu0 0.0
      %v3209 = vand.u32 %v2767, 4294901760
      %v3210 = vsub.f32 %v2767, %v3209
      %3211 = vmatmul.mubr.f32.gmra.mxu0 %v3210
      %v3212 = vpop.f32.mrf.mxu0
      %v3213 = vadd.f32 %v3081, %v3212
      %v3214 = vpop.f32.mrf.mxu0
      %3215 = vmatprep.mubr.f32.mxu0 0.0
      %v3216 = vand.u32 %v2770, 4294901760
      %v3217 = vsub.f32 %v2770, %v3216
      %3218 = vmatmul.mubr.f32.gmra.mxu0 %v3217
      %v3219 = vpop.f32.mrf.mxu0
      %v3220 = vadd.f32 %v3087, %v3219
      %v3221 = vpop.f32.mrf.mxu0
      %3222 = vmatprep.mubr.f32.mxu0 0.0
      %v3223 = vand.u32 %v2773, 4294901760
      %v3224 = vsub.f32 %v2773, %v3223
      %3225 = vmatmul.mubr.f32.gmra.mxu0 %v3224
      %v3226 = vpop.f32.mrf.mxu0
      %v3227 = vadd.f32 %v3093, %v3226
      %v3228 = vpop.f32.mrf.mxu0
      %3229 = vmatprep.mubr.f32.mxu0 0.0
      %v3230 = vand.u32 %v2776, 4294901760
      %v3231 = vsub.f32 %v2776, %v3230
      %3232 = vmatmul.mubr.f32.gmra.mxu0 %v3231
      %v3233 = vpop.f32.mrf.mxu0
      %v3234 = vadd.f32 %v3099, %v3233
      %v3235 = vpop.f32.mrf.mxu0
      %3236 = vmatprep.mubr.f32.mxu0 0.0
      %v3237 = vand.u32 %v2779, 4294901760
      %v3238 = vsub.f32 %v2779, %v3237
      %3239 = vmatmul.mubr.f32.gmra.mxu0 %v3238
      %v3240 = vpop.f32.mrf.mxu0
      %v3241 = vadd.f32 %v3105, %v3240
      %v3242 = vpop.f32.mrf.mxu0
      %3243 = vmatprep.mubr.f32.mxu0 0.0
      %v3244 = vand.u32 %v2782, 4294901760
      %v3245 = vsub.f32 %v2782, %v3244
      %3246 = vmatmul.mubr.f32.gmra.mxu0 %v3245
      %v3247 = vpop.f32.mrf.mxu0
      %v3248 = vadd.f32 %v3111, %v3247
      %v3249 = vpop.f32.mrf.mxu0
      %3250 = vdwg.mxu0
      %3251 = vmatprep.subr.mxu0 0.0
      %3252 = vmatpush1.xpose.msra.mxu0 0.0
      %3253 = vmatprep.subr.mxu0 0.0
      %3254 = vmatpush1.xpose.msra.mxu0 0.0
      %3255 = vmatprep.subr.mxu0 0.0
      %3256 = vmatpush1.xpose.msra.mxu0 0.0
      %3257 = vmatprep.subr.mxu0 0.0
      %3258 = vmatpush1.xpose.msra.mxu0 0.0
      %3259 = vmatprep.subr.mxu0 0.0
      %3260 = vmatpush1.xpose.msra.mxu0 0.0
      %3261 = vmatprep.subr.mxu0 0.0
      %3262 = vmatpush1.xpose.msra.mxu0 0.0
      %3263 = vmatprep.subr.mxu0 0.0
      %3264 = vmatpush1.xpose.msra.mxu0 0.0
      %3265 = vmatprep.subr.mxu0 0.0
      %3266 = vmatpush1.xpose.msra.mxu0 0.0
      %3267 = vmatprep.subr.mxu0 0.0
      %v3268 = vand.u32 %v2806, 4294901760
      %3269 = vmatpush1.xpose.msra.mxu0 %v3268
      %3270 = vmatprep.subr.mxu0 0.0
      %v3271 = vand.u32 %v2803, 4294901760
      %3272 = vmatpush1.xpose.msra.mxu0 %v3271
      %3273 = vmatprep.subr.mxu0 0.0
      %v3274 = vand.u32 %v2800, 4294901760
      %3275 = vmatpush1.xpose.msra.mxu0 %v3274
      %3276 = vmatprep.subr.mxu0 0.0
      %v3277 = vand.u32 %v2797, 4294901760
      %3278 = vmatpush1.xpose.msra.mxu0 %v3277
      %3279 = vmatprep.subr.mxu0 0.0
      %v3280 = vand.u32 %v2794, 4294901760
      %3281 = vmatpush1.xpose.msra.mxu0 %v3280
      %3282 = vmatprep.subr.mxu0 0.0
      %v3283 = vand.u32 %v2791, 4294901760
      %3284 = vmatpush1.xpose.msra.mxu0 %v3283
      %3285 = vmatprep.subr.mxu0 0.0
      %v3286 = vand.u32 %v2788, 4294901760
      %3287 = vmatpush1.xpose.msra.mxu0 %v3286
      %3288 = vmatprep.subr.mxu0 0.0
      %v3289 = vand.u32 %v2785, 4294901760
      %3290 = vmatpush1.xpose.msra.mxu0 %v3289
      %3291 = vmatprep.subr.mxu0 0.0
      %3292 = vmatpush2.xpose.msra.mxu0 0.0
      %3293 = vmatprep.subr.mxu0 0.0
      %3294 = vmatpush2.xpose.msra.mxu0 0.0
      %3295 = vmatprep.subr.mxu0 0.0
      %3296 = vmatpush2.xpose.msra.mxu0 0.0
      %3297 = vmatprep.subr.mxu0 0.0
      %3298 = vmatpush2.xpose.msra.mxu0 0.0
      %3299 = vmatprep.subr.mxu0 0.0
      %3300 = vmatpush2.xpose.msra.mxu0 0.0
      %3301 = vmatprep.subr.mxu0 0.0
      %3302 = vmatpush2.xpose.msra.mxu0 0.0
      %3303 = vmatprep.subr.mxu0 0.0
      %3304 = vmatpush2.xpose.msra.mxu0 0.0
      %3305 = vmatprep.subr.mxu0 0.0
      %3306 = vmatpush2.xpose.msra.mxu0 0.0
      %3307 = vmatprep.subr.mxu0 0.0
      %3308 = vmatpush2.xpose.msra.mxu0 0.0
      %3309 = vmatprep.subr.mxu0 0.0
      %3310 = vmatpush2.xpose.msra.mxu0 0.0
      %3311 = vmatprep.subr.mxu0 0.0
      %3312 = vmatpush2.xpose.msra.mxu0 0.0
      %3313 = vmatprep.subr.mxu0 0.0
      %3314 = vmatpush2.xpose.msra.mxu0 0.0
      %3315 = vmatprep.subr.mxu0 0.0
      %3316 = vmatpush2.xpose.msra.mxu0 0.0
      %3317 = vmatprep.subr.mxu0 0.0
      %3318 = vmatpush2.xpose.msra.mxu0 0.0
      %3319 = vmatprep.subr.mxu0 0.0
      %3320 = vmatpush2.xpose.msra.mxu0 0.0
      %3321 = vmatprep.subr.mxu0 0.0
      %3322 = vmatpush2.xpose.msra.mxu0 0.0
      %3323 = vmatprep.mubr.f32.mxu0 0.0
      %v3324 = vand.u32 %v2761, 4294901760
      %v3325 = vsub.f32 %v2761, %v3324
      %v3326 = vand.u32 %v3325, 4294901760
      %3327 = vmatmul.mubr.f32.gmra.mxu0 %v3326
      %v3328 = vpop.f32.mrf.mxu0
      %v3329 = vadd.f32 %v3199, %v3328
      %v3330 = vpop.f32.mrf.mxu0
      %3331 = vmatprep.mubr.f32.mxu0 0.0
      %v3332 = vand.u32 %v2764, 4294901760
      %v3333 = vsub.f32 %v2764, %v3332
      %v3334 = vand.u32 %v3333, 4294901760
      %3335 = vmatmul.mubr.f32.gmra.mxu0 %v3334
      %v3336 = vpop.f32.mrf.mxu0
      %v3337 = vadd.f32 %v3206, %v3336
      %v3338 = vpop.f32.mrf.mxu0
      %3339 = vmatprep.mubr.f32.mxu0 0.0
      %v3340 = vand.u32 %v2767, 4294901760
      %v3341 = vsub.f32 %v2767, %v3340
      %v3342 = vand.u32 %v3341, 4294901760
      %3343 = vmatmul.mubr.f32.gmra.mxu0 %v3342
      %v3344 = vpop.f32.mrf.mxu0
      %v3345 = vadd.f32 %v3213, %v3344
      %v3346 = vpop.f32.mrf.mxu0
      %3347 = vmatprep.mubr.f32.mxu0 0.0
      %v3348 = vand.u32 %v2770, 4294901760
      %v3349 = vsub.f32 %v2770, %v3348
      %v3350 = vand.u32 %v3349, 4294901760
      %3351 = vmatmul.mubr.f32.gmra.mxu0 %v3350
      %v3352 = vpop.f32.mrf.mxu0
      %v3353 = vadd.f32 %v3220, %v3352
      %v3354 = vpop.f32.mrf.mxu0
      %3355 = vmatprep.mubr.f32.mxu0 0.0
      %v3356 = vand.u32 %v2773, 4294901760
      %v3357 = vsub.f32 %v2773, %v3356
      %v3358 = vand.u32 %v3357, 4294901760
      %3359 = vmatmul.mubr.f32.gmra.mxu0 %v3358
      %v3360 = vpop.f32.mrf.mxu0
      %v3361 = vadd.f32 %v3227, %v3360
      %v3362 = vpop.f32.mrf.mxu0
      %3363 = vmatprep.mubr.f32.mxu0 0.0
      %v3364 = vand.u32 %v2776, 4294901760
      %v3365 = vsub.f32 %v2776, %v3364
      %v3366 = vand.u32 %v3365, 4294901760
      %3367 = vmatmul.mubr.f32.gmra.mxu0 %v3366
      %v3368 = vpop.f32.mrf.mxu0
      %v3369 = vadd.f32 %v3234, %v3368
      %v3370 = vpop.f32.mrf.mxu0
      %3371 = vmatprep.mubr.f32.mxu0 0.0
      %v3372 = vand.u32 %v2779, 4294901760
      %v3373 = vsub.f32 %v2779, %v3372
      %v3374 = vand.u32 %v3373, 4294901760
      %3375 = vmatmul.mubr.f32.gmra.mxu0 %v3374
      %v3376 = vpop.f32.mrf.mxu0
      %v3377 = vadd.f32 %v3241, %v3376
      %v3378 = vpop.f32.mrf.mxu0
      %3379 = vmatprep.mubr.f32.mxu0 0.0
      %v3380 = vand.u32 %v2782, 4294901760
      %v3381 = vsub.f32 %v2782, %v3380
      %v3382 = vand.u32 %v3381, 4294901760
      %3383 = vmatmul.mubr.f32.gmra.mxu0 %v3382
      %v3384 = vpop.f32.mrf.mxu0
      %v3385 = vadd.f32 %v3248, %v3384
      %v3386 = vpop.f32.mrf.mxu0
      %3387 = vdwg.mxu0
      %3388 = vmatprep.subr.mxu0 0.0
      %3389 = vmatpush1.xpose.msra.mxu0 0.0
      %3390 = vmatprep.subr.mxu0 0.0
      %3391 = vmatpush1.xpose.msra.mxu0 0.0
      %3392 = vmatprep.subr.mxu0 0.0
      %3393 = vmatpush1.xpose.msra.mxu0 0.0
      %3394 = vmatprep.subr.mxu0 0.0
      %3395 = vmatpush1.xpose.msra.mxu0 0.0
      %3396 = vmatprep.subr.mxu0 0.0
      %3397 = vmatpush1.xpose.msra.mxu0 0.0
      %3398 = vmatprep.subr.mxu0 0.0
      %3399 = vmatpush1.xpose.msra.mxu0 0.0
      %3400 = vmatprep.subr.mxu0 0.0
      %3401 = vmatpush1.xpose.msra.mxu0 0.0
      %3402 = vmatprep.subr.mxu0 0.0
      %3403 = vmatpush1.xpose.msra.mxu0 0.0
      %3404 = vmatprep.subr.mxu0 0.0
      %v3405 = vand.u32 %v2806, 4294901760
      %v3406 = vsub.f32 %v2806, %v3405
      %v3407 = vand.u32 %v3406, 4294901760
      %3408 = vmatpush1.xpose.msra.mxu0 %v3407
      %3409 = vmatprep.subr.mxu0 0.0
      %v3410 = vand.u32 %v2803, 4294901760
      %v3411 = vsub.f32 %v2803, %v3410
      %v3412 = vand.u32 %v3411, 4294901760
      %3413 = vmatpush1.xpose.msra.mxu0 %v3412
      %3414 = vmatprep.subr.mxu0 0.0
      %v3415 = vand.u32 %v2800, 4294901760
      %v3416 = vsub.f32 %v2800, %v3415
      %v3417 = vand.u32 %v3416, 4294901760
      %3418 = vmatpush1.xpose.msra.mxu0 %v3417
      %3419 = vmatprep.subr.mxu0 0.0
      %v3420 = vand.u32 %v2797, 4294901760
      %v3421 = vsub.f32 %v2797, %v3420
      %v3422 = vand.u32 %v3421, 4294901760
      %3423 = vmatpush1.xpose.msra.mxu0 %v3422
      %3424 = vmatprep.subr.mxu0 0.0
      %v3425 = vand.u32 %v2794, 4294901760
      %v3426 = vsub.f32 %v2794, %v3425
      %v3427 = vand.u32 %v3426, 4294901760
      %3428 = vmatpush1.xpose.msra.mxu0 %v3427
      %3429 = vmatprep.subr.mxu0 0.0
      %v3430 = vand.u32 %v2791, 4294901760
      %v3431 = vsub.f32 %v2791, %v3430
      %v3432 = vand.u32 %v3431, 4294901760
      %3433 = vmatpush1.xpose.msra.mxu0 %v3432
      %3434 = vmatprep.subr.mxu0 0.0
      %v3435 = vand.u32 %v2788, 4294901760
      %v3436 = vsub.f32 %v2788, %v3435
      %v3437 = vand.u32 %v3436, 4294901760
      %3438 = vmatpush1.xpose.msra.mxu0 %v3437
      %3439 = vmatprep.subr.mxu0 0.0
      %v3440 = vand.u32 %v2785, 4294901760
      %v3441 = vsub.f32 %v2785, %v3440
      %v3442 = vand.u32 %v3441, 4294901760
      %3443 = vmatpush1.xpose.msra.mxu0 %v3442
      %3444 = vmatprep.subr.mxu0 0.0
      %3445 = vmatpush2.xpose.msra.mxu0 0.0
      %3446 = vmatprep.subr.mxu0 0.0
      %3447 = vmatpush2.xpose.msra.mxu0 0.0
      %3448 = vmatprep.subr.mxu0 0.0
      %3449 = vmatpush2.xpose.msra.mxu0 0.0
      %3450 = vmatprep.subr.mxu0 0.0
      %3451 = vmatpush2.xpose.msra.mxu0 0.0
      %3452 = vmatprep.subr.mxu0 0.0
      %3453 = vmatpush2.xpose.msra.mxu0 0.0
      %3454 = vmatprep.subr.mxu0 0.0
      %3455 = vmatpush2.xpose.msra.mxu0 0.0
      %3456 = vmatprep.subr.mxu0 0.0
      %3457 = vmatpush2.xpose.msra.mxu0 0.0
      %3458 = vmatprep.subr.mxu0 0.0
      %3459 = vmatpush2.xpose.msra.mxu0 0.0
      %3460 = vmatprep.subr.mxu0 0.0
      %3461 = vmatpush2.xpose.msra.mxu0 0.0
      %3462 = vmatprep.subr.mxu0 0.0
      %3463 = vmatpush2.xpose.msra.mxu0 0.0
      %3464 = vmatprep.subr.mxu0 0.0
      %3465 = vmatpush2.xpose.msra.mxu0 0.0
      %3466 = vmatprep.subr.mxu0 0.0
      %3467 = vmatpush2.xpose.msra.mxu0 0.0
      %3468 = vmatprep.subr.mxu0 0.0
      %3469 = vmatpush2.xpose.msra.mxu0 0.0
      %3470 = vmatprep.subr.mxu0 0.0
      %3471 = vmatpush2.xpose.msra.mxu0 0.0
      %3472 = vmatprep.subr.mxu0 0.0
      %3473 = vmatpush2.xpose.msra.mxu0 0.0
      %3474 = vmatprep.subr.mxu0 0.0
      %3475 = vmatpush2.xpose.msra.mxu0 0.0
      %3476 = vmatprep.mubr.f32.mxu0 0.0
      %v3477 = vand.u32 %v2761, 4294901760
      %3478 = vmatmul.mubr.f32.gmra.mxu0 %v3477
      %v3479 = vpop.f32.mrf.mxu0
      %v3480 = vadd.f32 %v3329, %v3479
      %v3481 = vpop.f32.mrf.mxu0
      %3482 = vmatprep.mubr.f32.mxu0 0.0
      %v3483 = vand.u32 %v2764, 4294901760
      %3484 = vmatmul.mubr.f32.gmra.mxu0 %v3483
      %v3485 = vpop.f32.mrf.mxu0
      %v3486 = vadd.f32 %v3337, %v3485
      %v3487 = vpop.f32.mrf.mxu0
      %3488 = vmatprep.mubr.f32.mxu0 0.0
      %v3489 = vand.u32 %v2767, 4294901760
      %3490 = vmatmul.mubr.f32.gmra.mxu0 %v3489
      %v3491 = vpop.f32.mrf.mxu0
      %v3492 = vadd.f32 %v3345, %v3491
      %v3493 = vpop.f32.mrf.mxu0
      %3494 = vmatprep.mubr.f32.mxu0 0.0
      %v3495 = vand.u32 %v2770, 4294901760
      %3496 = vmatmul.mubr.f32.gmra.mxu0 %v3495
      %v3497 = vpop.f32.mrf.mxu0
      %v3498 = vadd.f32 %v3353, %v3497
      %v3499 = vpop.f32.mrf.mxu0
      %3500 = vmatprep.mubr.f32.mxu0 0.0
      %v3501 = vand.u32 %v2773, 4294901760
      %3502 = vmatmul.mubr.f32.gmra.mxu0 %v3501
      %v3503 = vpop.f32.mrf.mxu0
      %v3504 = vadd.f32 %v3361, %v3503
      %v3505 = vpop.f32.mrf.mxu0
      %3506 = vmatprep.mubr.f32.mxu0 0.0
      %v3507 = vand.u32 %v2776, 4294901760
      %3508 = vmatmul.mubr.f32.gmra.mxu0 %v3507
      %v3509 = vpop.f32.mrf.mxu0
      %v3510 = vadd.f32 %v3369, %v3509
      %v3511 = vpop.f32.mrf.mxu0
      %3512 = vmatprep.mubr.f32.mxu0 0.0
      %v3513 = vand.u32 %v2779, 4294901760
      %3514 = vmatmul.mubr.f32.gmra.mxu0 %v3513
      %v3515 = vpop.f32.mrf.mxu0
      %v3516 = vadd.f32 %v3377, %v3515
      %v3517 = vpop.f32.mrf.mxu0
      %3518 = vmatprep.mubr.f32.mxu0 0.0
      %v3519 = vand.u32 %v2782, 4294901760
      %3520 = vmatmul.mubr.f32.gmra.mxu0 %v3519
      %v3521 = vpop.f32.mrf.mxu0
      %v3522 = vadd.f32 %v3385, %v3521
      %v3523 = vpop.f32.mrf.mxu0
      %3524 = vdwg.mxu0
      %3525 = vmatprep.subr.mxu0 0.0
      %3526 = vmatpush1.xpose.msra.mxu0 0.0
      %3527 = vmatprep.subr.mxu0 0.0
      %3528 = vmatpush1.xpose.msra.mxu0 0.0
      %3529 = vmatprep.subr.mxu0 0.0
      %3530 = vmatpush1.xpose.msra.mxu0 0.0
      %3531 = vmatprep.subr.mxu0 0.0
      %3532 = vmatpush1.xpose.msra.mxu0 0.0
      %3533 = vmatprep.subr.mxu0 0.0
      %3534 = vmatpush1.xpose.msra.mxu0 0.0
      %3535 = vmatprep.subr.mxu0 0.0
      %3536 = vmatpush1.xpose.msra.mxu0 0.0
      %3537 = vmatprep.subr.mxu0 0.0
      %3538 = vmatpush1.xpose.msra.mxu0 0.0
      %3539 = vmatprep.subr.mxu0 0.0
      %3540 = vmatpush1.xpose.msra.mxu0 0.0
      %3541 = vmatprep.subr.mxu0 0.0
      %v3542 = vand.u32 %v2806, 4294901760
      %3543 = vmatpush1.xpose.msra.mxu0 %v3542
      %3544 = vmatprep.subr.mxu0 0.0
      %v3545 = vand.u32 %v2803, 4294901760
      %3546 = vmatpush1.xpose.msra.mxu0 %v3545
      %3547 = vmatprep.subr.mxu0 0.0
      %v3548 = vand.u32 %v2800, 4294901760
      %3549 = vmatpush1.xpose.msra.mxu0 %v3548
      %3550 = vmatprep.subr.mxu0 0.0
      %v3551 = vand.u32 %v2797, 4294901760
      %3552 = vmatpush1.xpose.msra.mxu0 %v3551
      %3553 = vmatprep.subr.mxu0 0.0
      %v3554 = vand.u32 %v2794, 4294901760
      %3555 = vmatpush1.xpose.msra.mxu0 %v3554
      %3556 = vmatprep.subr.mxu0 0.0
      %v3557 = vand.u32 %v2791, 4294901760
      %3558 = vmatpush1.xpose.msra.mxu0 %v3557
      %3559 = vmatprep.subr.mxu0 0.0
      %v3560 = vand.u32 %v2788, 4294901760
      %3561 = vmatpush1.xpose.msra.mxu0 %v3560
      %3562 = vmatprep.subr.mxu0 0.0
      %v3563 = vand.u32 %v2785, 4294901760
      %3564 = vmatpush1.xpose.msra.mxu0 %v3563
      %3565 = vmatprep.subr.mxu0 0.0
      %3566 = vmatpush2.xpose.msra.mxu0 0.0
      %3567 = vmatprep.subr.mxu0 0.0
      %3568 = vmatpush2.xpose.msra.mxu0 0.0
      %3569 = vmatprep.subr.mxu0 0.0
      %3570 = vmatpush2.xpose.msra.mxu0 0.0
      %3571 = vmatprep.subr.mxu0 0.0
      %3572 = vmatpush2.xpose.msra.mxu0 0.0
      %3573 = vmatprep.subr.mxu0 0.0
      %3574 = vmatpush2.xpose.msra.mxu0 0.0
      %3575 = vmatprep.subr.mxu0 0.0
      %3576 = vmatpush2.xpose.msra.mxu0 0.0
      %3577 = vmatprep.subr.mxu0 0.0
      %3578 = vmatpush2.xpose.msra.mxu0 0.0
      %3579 = vmatprep.subr.mxu0 0.0
      %3580 = vmatpush2.xpose.msra.mxu0 0.0
      %3581 = vmatprep.subr.mxu0 0.0
      %3582 = vmatpush2.xpose.msra.mxu0 0.0
      %3583 = vmatprep.subr.mxu0 0.0
      %3584 = vmatpush2.xpose.msra.mxu0 0.0
      %3585 = vmatprep.subr.mxu0 0.0
      %3586 = vmatpush2.xpose.msra.mxu0 0.0
      %3587 = vmatprep.subr.mxu0 0.0
      %3588 = vmatpush2.xpose.msra.mxu0 0.0
      %3589 = vmatprep.subr.mxu0 0.0
      %3590 = vmatpush2.xpose.msra.mxu0 0.0
      %3591 = vmatprep.subr.mxu0 0.0
      %3592 = vmatpush2.xpose.msra.mxu0 0.0
      %3593 = vmatprep.subr.mxu0 0.0
      %3594 = vmatpush2.xpose.msra.mxu0 0.0
      %3595 = vmatprep.subr.mxu0 0.0
      %3596 = vmatpush2.xpose.msra.mxu0 0.0
      %3597 = vmatprep.mubr.f32.mxu0 0.0
      %v3598 = vand.u32 %v2761, 4294901760
      %3599 = vmatmul.mubr.f32.gmra.mxu0 %v3598
      %v3600 = vpop.f32.mrf.mxu0
      %v3601 = vadd.f32 %v3480, %v3600
      %v3602 = vpop.f32.mrf.mxu0
      %3603 = vmatprep.mubr.f32.mxu0 0.0
      %v3604 = vand.u32 %v2764, 4294901760
      %3605 = vmatmul.mubr.f32.gmra.mxu0 %v3604
      %v3606 = vpop.f32.mrf.mxu0
      %v3607 = vadd.f32 %v3486, %v3606
      %v3608 = vpop.f32.mrf.mxu0
      %3609 = vmatprep.mubr.f32.mxu0 0.0
      %v3610 = vand.u32 %v2767, 4294901760
      %3611 = vmatmul.mubr.f32.gmra.mxu0 %v3610
      %v3612 = vpop.f32.mrf.mxu0
      %v3613 = vadd.f32 %v3492, %v3612
      %v3614 = vpop.f32.mrf.mxu0
      %3615 = vmatprep.mubr.f32.mxu0 0.0
      %v3616 = vand.u32 %v2770, 4294901760
      %3617 = vmatmul.mubr.f32.gmra.mxu0 %v3616
      %v3618 = vpop.f32.mrf.mxu0
      %v3619 = vadd.f32 %v3498, %v3618
      %v3620 = vpop.f32.mrf.mxu0
      %3621 = vmatprep.mubr.f32.mxu0 0.0
      %v3622 = vand.u32 %v2773, 4294901760
      %3623 = vmatmul.mubr.f32.gmra.mxu0 %v3622
      %v3624 = vpop.f32.mrf.mxu0
      %v3625 = vadd.f32 %v3504, %v3624
      %v3626 = vpop.f32.mrf.mxu0
      %3627 = vmatprep.mubr.f32.mxu0 0.0
      %v3628 = vand.u32 %v2776, 4294901760
      %3629 = vmatmul.mubr.f32.gmra.mxu0 %v3628
      %v3630 = vpop.f32.mrf.mxu0
      %v3631 = vadd.f32 %v3510, %v3630
      %v3632 = vpop.f32.mrf.mxu0
      %3633 = vmatprep.mubr.f32.mxu0 0.0
      %v3634 = vand.u32 %v2779, 4294901760
      %3635 = vmatmul.mubr.f32.gmra.mxu0 %v3634
      %v3636 = vpop.f32.mrf.mxu0
      %v3637 = vadd.f32 %v3516, %v3636
      %v3638 = vpop.f32.mrf.mxu0
      %3639 = vmatprep.mubr.f32.mxu0 0.0
      %v3640 = vand.u32 %v2782, 4294901760
      %3641 = vmatmul.mubr.f32.gmra.mxu0 %v3640
      %v3642 = vpop.f32.mrf.mxu0
      %v3643 = vadd.f32 %v3522, %v3642
      %v3644 = vpop.f32.mrf.mxu0
      %3645 = vdwg.mxu0
      %v3646 = vmul.f32 %v3601, 0.25
      %v3647 = vmul.f32 %v3607, 0.25
      %v3648 = vmul.f32 %v3613, 0.25
      %v3649 = vmul.f32 %v3619, 0.25
      %v3650 = vmul.f32 %v3625, 0.25
      %v3651 = vmul.f32 %v3631, 0.25
      %v3652 = vmul.f32 %v3637, 0.25
      %v3653 = vmul.f32 %v3643, 0.25
      %vm3654 = vcmask 523264
      %v3655 = vsel %vm3654, %v3646, -inf
      %3656 = vmax.xlane.f32.xlu0 %v3655
      %v3657 = vpop.xlane.xlu0 %3656
      %v3658 = vsel %vm3654, %v3647, -inf
      %3659 = vmax.xlane.f32.xlu0 %v3658
      %v3660 = vpop.xlane.xlu0 %3659
      %v3661 = vsel %vm3654, %v3648, -inf
      %3662 = vmax.xlane.f32.xlu0 %v3661
      %v3663 = vpop.xlane.xlu0 %3662
      %v3664 = vsel %vm3654, %v3649, -inf
      %3665 = vmax.xlane.f32.xlu0 %v3664
      %v3666 = vpop.xlane.xlu0 %3665
      %v3667 = vsel %vm3654, %v3650, -inf
      %3668 = vmax.xlane.f32.xlu0 %v3667
      %v3669 = vpop.xlane.xlu0 %3668
      %v3670 = vsel %vm3654, %v3651, -inf
      %3671 = vmax.xlane.f32.xlu0 %v3670
      %v3672 = vpop.xlane.xlu0 %3671
      %v3673 = vsel %vm3654, %v3652, -inf
      %3674 = vmax.xlane.f32.xlu0 %v3673
      %v3675 = vpop.xlane.xlu0 %3674
      %v3676 = vsel %vm3654, %v3653, -inf
      %3677 = vmax.xlane.f32.xlu0 %v3676
      %v3678 = vpop.xlane.xlu0 %3677
      %v3679 = vsub.f32 %v3646, %v3657
      %v3680 = vsub.f32 %v3647, %v3660
      %v3681 = vsub.f32 %v3648, %v3663
      %v3682 = vsub.f32 %v3649, %v3666
      %v3683 = vsub.f32 %v3650, %v3669
      %v3684 = vsub.f32 %v3651, %v3672
      %v3685 = vsub.f32 %v3652, %v3675
      %v3686 = vsub.f32 %v3653, %v3678
      %v3687 = vmul.f32 %v3679, 1.442695
      %v3688 = vpow.pop %v3687
      %v3689 = vmul.f32 %v3680, 1.442695
      %v3690 = vpow.pop %v3689
      %v3691 = vmul.f32 %v3681, 1.442695
      %v3692 = vpow.pop %v3691
      %v3693 = vmul.f32 %v3682, 1.442695
      %v3694 = vpow.pop %v3693
      %v3695 = vmul.f32 %v3683, 1.442695
      %v3696 = vpow.pop %v3695
      %v3697 = vmul.f32 %v3684, 1.442695
      %v3698 = vpow.pop %v3697
      %v3699 = vmul.f32 %v3685, 1.442695
      %v3700 = vpow.pop %v3699
      %v3701 = vmul.f32 %v3686, 1.442695
      %v3702 = vpow.pop %v3701
      %v3703 = vsel %vm3654, %v3688, 0.0
      %3704 = vadd.xlane.f32.xlu0 %v3703
      %v3705 = vpop.xlane.xlu0 %3704
      %v3706 = vsel %vm3654, %v3690, 0.0
      %3707 = vadd.xlane.f32.xlu0 %v3706
      %v3708 = vpop.xlane.xlu0 %3707
      %v3709 = vsel %vm3654, %v3692, 0.0
      %3710 = vadd.xlane.f32.xlu0 %v3709
      %v3711 = vpop.xlane.xlu0 %3710
      %v3712 = vsel %vm3654, %v3694, 0.0
      %3713 = vadd.xlane.f32.xlu0 %v3712
      %v3714 = vpop.xlane.xlu0 %3713
      %v3715 = vsel %vm3654, %v3696, 0.0
      %3716 = vadd.xlane.f32.xlu0 %v3715
      %v3717 = vpop.xlane.xlu0 %3716
      %v3718 = vsel %vm3654, %v3698, 0.0
      %3719 = vadd.xlane.f32.xlu0 %v3718
      %v3720 = vpop.xlane.xlu0 %3719
      %v3721 = vsel %vm3654, %v3700, 0.0
      %3722 = vadd.xlane.f32.xlu0 %v3721
      %v3723 = vpop.xlane.xlu0 %3722
      %v3724 = vsel %vm3654, %v3702, 0.0
      %3725 = vadd.xlane.f32.xlu0 %v3724
      %v3726 = vpop.xlane.xlu0 %3725
      %v3727 = vrcp.pop %v3705
      %v3728 = vmul.f32 %v3688, %v3727
      %v3729 = vrcp.pop %v3708
      %v3730 = vmul.f32 %v3690, %v3729
      %v3731 = vrcp.pop %v3711
      %v3732 = vmul.f32 %v3692, %v3731
      %v3733 = vrcp.pop %v3714
      %v3734 = vmul.f32 %v3694, %v3733
      %v3735 = vrcp.pop %v3717
      %v3736 = vmul.f32 %v3696, %v3735
      %v3737 = vrcp.pop %v3720
      %v3738 = vmul.f32 %v3698, %v3737
      %v3739 = vrcp.pop %v3723
      %v3740 = vmul.f32 %v3700, %v3739
      %v3741 = vrcp.pop %v3726
      %v3742 = vmul.f32 %v3702, %v3741
      %v3744 = vsel %vm3654, %v3728, 0
      %v3747 = vsel %vm3654, %v3730, 0
      %v3750 = vsel %vm3654, %v3732, 0
      %v3753 = vsel %vm3654, %v3734, 0
      %v3756 = vsel %vm3654, %v3736, 0
      %v3759 = vsel %vm3654, %v3738, 0
      %v3762 = vsel %vm3654, %v3740, 0
      %v3765 = vsel %vm3654, %v3742, 0
      %3767 = vmatprep.subr.mxu0 0.0
      %3768 = vmatpush1.msra.mxu0 0.0
      %3769 = vmatprep.subr.mxu0 0.0
      %3770 = vmatpush1.msra.mxu0 0.0
      %3771 = vmatprep.subr.mxu0 0.0
      %3772 = vmatpush1.msra.mxu0 0.0
      %3773 = vmatprep.subr.mxu0 0.0
      %3774 = vmatpush1.msra.mxu0 0.0
      %3775 = vmatprep.subr.mxu0 0.0
      %3776 = vmatpush1.msra.mxu0 0.0
      %3777 = vmatprep.subr.mxu0 0.0
      %3778 = vmatpush1.msra.mxu0 0.0
      %3779 = vmatprep.subr.mxu0 0.0
      %3780 = vmatpush1.msra.mxu0 0.0
      %3781 = vmatprep.subr.mxu0 0.0
      %3782 = vmatpush1.msra.mxu0 0.0
      %3783 = vmatprep.subr.mxu0 0.0
      %v3784 = vand.u32 %v2757, 4294901760
      %3785 = vmatpush1.msra.mxu0 %v3784
      %3786 = vmatprep.subr.mxu0 0.0
      %v3787 = vand.u32 %v2751, 4294901760
      %3788 = vmatpush1.msra.mxu0 %v3787
      %3789 = vmatprep.subr.mxu0 0.0
      %v3790 = vand.u32 %v2745, 4294901760
      %3791 = vmatpush1.msra.mxu0 %v3790
      %3792 = vmatprep.subr.mxu0 0.0
      %v3793 = vand.u32 %v2739, 4294901760
      %3794 = vmatpush1.msra.mxu0 %v3793
      %3795 = vmatprep.subr.mxu0 0.0
      %v3796 = vand.u32 %v2733, 4294901760
      %3797 = vmatpush1.msra.mxu0 %v3796
      %3798 = vmatprep.subr.mxu0 0.0
      %v3799 = vand.u32 %v2727, 4294901760
      %3800 = vmatpush1.msra.mxu0 %v3799
      %3801 = vmatprep.subr.mxu0 0.0
      %v3802 = vand.u32 %v2721, 4294901760
      %3803 = vmatpush1.msra.mxu0 %v3802
      %3804 = vmatprep.subr.mxu0 0.0
      %v3805 = vand.u32 %v2715, 4294901760
      %3806 = vmatpush1.msra.mxu0 %v3805
      %3807 = vmatprep.subr.mxu0 0.0
      %3808 = vmatpush2.msra.mxu0 0.0
      %3809 = vmatprep.subr.mxu0 0.0
      %3810 = vmatpush2.msra.mxu0 0.0
      %3811 = vmatprep.subr.mxu0 0.0
      %3812 = vmatpush2.msra.mxu0 0.0
      %3813 = vmatprep.subr.mxu0 0.0
      %3814 = vmatpush2.msra.mxu0 0.0
      %3815 = vmatprep.subr.mxu0 0.0
      %3816 = vmatpush2.msra.mxu0 0.0
      %3817 = vmatprep.subr.mxu0 0.0
      %3818 = vmatpush2.msra.mxu0 0.0
      %3819 = vmatprep.subr.mxu0 0.0
      %3820 = vmatpush2.msra.mxu0 0.0
      %3821 = vmatprep.subr.mxu0 0.0
      %3822 = vmatpush2.msra.mxu0 0.0
      %3823 = vmatprep.subr.mxu0 0.0
      %3824 = vmatpush2.msra.mxu0 0.0
      %3825 = vmatprep.subr.mxu0 0.0
      %3826 = vmatpush2.msra.mxu0 0.0
      %3827 = vmatprep.subr.mxu0 0.0
      %3828 = vmatpush2.msra.mxu0 0.0
      %3829 = vmatprep.subr.mxu0 0.0
      %3830 = vmatpush2.msra.mxu0 0.0
      %3831 = vmatprep.subr.mxu0 0.0
      %3832 = vmatpush2.msra.mxu0 0.0
      %3833 = vmatprep.subr.mxu0 0.0
      %3834 = vmatpush2.msra.mxu0 0.0
      %3835 = vmatprep.subr.mxu0 0.0
      %3836 = vmatpush2.msra.mxu0 0.0
      %3837 = vmatprep.subr.mxu0 0.0
      %3838 = vmatpush2.msra.mxu0 0.0
      %3839 = vmatprep.mubr.f32.mxu0 0.0
      %v3840 = vand.u32 %v3744, 4294901760
      %v3841 = vsub.f32 %v3744, %v3840
      %v3842 = vand.u32 %v3841, 4294901760
      %v3843 = vsub.f32 %v3841, %v3842
      %v3844 = vand.u32 %v3843, 4294901760
      %3845 = vmatmul.mubr.f32.gmra.mxu0 %v3844
      %v3846 = vpop.f32.mrf.mxu0
      %v3847 = vadd.f32 0.0, %v3846
      %v3848 = vpop.f32.mrf.mxu0
      %3849 = vmatprep.mubr.f32.mxu0 0.0
      %v3850 = vand.u32 %v3747, 4294901760
      %v3851 = vsub.f32 %v3747, %v3850
      %v3852 = vand.u32 %v3851, 4294901760
      %v3853 = vsub.f32 %v3851, %v3852
      %v3854 = vand.u32 %v3853, 4294901760
      %3855 = vmatmul.mubr.f32.gmra.mxu0 %v3854
      %v3856 = vpop.f32.mrf.mxu0
      %v3857 = vadd.f32 0.0, %v3856
      %v3858 = vpop.f32.mrf.mxu0
      %3859 = vmatprep.mubr.f32.mxu0 0.0
      %v3860 = vand.u32 %v3750, 4294901760
      %v3861 = vsub.f32 %v3750, %v3860
      %v3862 = vand.u32 %v3861, 4294901760
      %v3863 = vsub.f32 %v3861, %v3862
      %v3864 = vand.u32 %v3863, 4294901760
      %3865 = vmatmul.mubr.f32.gmra.mxu0 %v3864
      %v3866 = vpop.f32.mrf.mxu0
      %v3867 = vadd.f32 0.0, %v3866
      %v3868 = vpop.f32.mrf.mxu0
      %3869 = vmatprep.mubr.f32.mxu0 0.0
      %v3870 = vand.u32 %v3753, 4294901760
      %v3871 = vsub.f32 %v3753, %v3870
      %v3872 = vand.u32 %v3871, 4294901760
      %v3873 = vsub.f32 %v3871, %v3872
      %v3874 = vand.u32 %v3873, 4294901760
      %3875 = vmatmul.mubr.f32.gmra.mxu0 %v3874
      %v3876 = vpop.f32.mrf.mxu0
      %v3877 = vadd.f32 0.0, %v3876
      %v3878 = vpop.f32.mrf.mxu0
      %3879 = vmatprep.mubr.f32.mxu0 0.0
      %v3880 = vand.u32 %v3756, 4294901760
      %v3881 = vsub.f32 %v3756, %v3880
      %v3882 = vand.u32 %v3881, 4294901760
      %v3883 = vsub.f32 %v3881, %v3882
      %v3884 = vand.u32 %v3883, 4294901760
      %3885 = vmatmul.mubr.f32.gmra.mxu0 %v3884
      %v3886 = vpop.f32.mrf.mxu0
      %v3887 = vadd.f32 0.0, %v3886
      %v3888 = vpop.f32.mrf.mxu0
      %3889 = vmatprep.mubr.f32.mxu0 0.0
      %v3890 = vand.u32 %v3759, 4294901760
      %v3891 = vsub.f32 %v3759, %v3890
      %v3892 = vand.u32 %v3891, 4294901760
      %v3893 = vsub.f32 %v3891, %v3892
      %v3894 = vand.u32 %v3893, 4294901760
      %3895 = vmatmul.mubr.f32.gmra.mxu0 %v3894
      %v3896 = vpop.f32.mrf.mxu0
      %v3897 = vadd.f32 0.0, %v3896
      %v3898 = vpop.f32.mrf.mxu0
      %3899 = vmatprep.mubr.f32.mxu0 0.0
      %v3900 = vand.u32 %v3762, 4294901760
      %v3901 = vsub.f32 %v3762, %v3900
      %v3902 = vand.u32 %v3901, 4294901760
      %v3903 = vsub.f32 %v3901, %v3902
      %v3904 = vand.u32 %v3903, 4294901760
      %3905 = vmatmul.mubr.f32.gmra.mxu0 %v3904
      %v3906 = vpop.f32.mrf.mxu0
      %v3907 = vadd.f32 0.0, %v3906
      %v3908 = vpop.f32.mrf.mxu0
      %3909 = vmatprep.mubr.f32.mxu0 0.0
      %v3910 = vand.u32 %v3765, 4294901760
      %v3911 = vsub.f32 %v3765, %v3910
      %v3912 = vand.u32 %v3911, 4294901760
      %v3913 = vsub.f32 %v3911, %v3912
      %v3914 = vand.u32 %v3913, 4294901760
      %3915 = vmatmul.mubr.f32.gmra.mxu0 %v3914
      %v3916 = vpop.f32.mrf.mxu0
      %v3917 = vadd.f32 0.0, %v3916
      %v3918 = vpop.f32.mrf.mxu0
      %3919 = vdwg.mxu0
      %3920 = vmatprep.subr.mxu0 0.0
      %3921 = vmatpush1.msra.mxu0 0.0
      %3922 = vmatprep.subr.mxu0 0.0
      %3923 = vmatpush1.msra.mxu0 0.0
      %3924 = vmatprep.subr.mxu0 0.0
      %3925 = vmatpush1.msra.mxu0 0.0
      %3926 = vmatprep.subr.mxu0 0.0
      %3927 = vmatpush1.msra.mxu0 0.0
      %3928 = vmatprep.subr.mxu0 0.0
      %3929 = vmatpush1.msra.mxu0 0.0
      %3930 = vmatprep.subr.mxu0 0.0
      %3931 = vmatpush1.msra.mxu0 0.0
      %3932 = vmatprep.subr.mxu0 0.0
      %3933 = vmatpush1.msra.mxu0 0.0
      %3934 = vmatprep.subr.mxu0 0.0
      %3935 = vmatpush1.msra.mxu0 0.0
      %3936 = vmatprep.subr.mxu0 0.0
      %v3937 = vand.u32 %v2757, 4294901760
      %v3938 = vsub.f32 %v2757, %v3937
      %v3939 = vand.u32 %v3938, 4294901760
      %v3940 = vsub.f32 %v3938, %v3939
      %v3941 = vand.u32 %v3940, 4294901760
      %3942 = vmatpush1.msra.mxu0 %v3941
      %3943 = vmatprep.subr.mxu0 0.0
      %v3944 = vand.u32 %v2751, 4294901760
      %v3945 = vsub.f32 %v2751, %v3944
      %v3946 = vand.u32 %v3945, 4294901760
      %v3947 = vsub.f32 %v3945, %v3946
      %v3948 = vand.u32 %v3947, 4294901760
      %3949 = vmatpush1.msra.mxu0 %v3948
      %3950 = vmatprep.subr.mxu0 0.0
      %v3951 = vand.u32 %v2745, 4294901760
      %v3952 = vsub.f32 %v2745, %v3951
      %v3953 = vand.u32 %v3952, 4294901760
      %v3954 = vsub.f32 %v3952, %v3953
      %v3955 = vand.u32 %v3954, 4294901760
      %3956 = vmatpush1.msra.mxu0 %v3955
      %3957 = vmatprep.subr.mxu0 0.0
      %v3958 = vand.u32 %v2739, 4294901760
      %v3959 = vsub.f32 %v2739, %v3958
      %v3960 = vand.u32 %v3959, 4294901760
      %v3961 = vsub.f32 %v3959, %v3960
      %v3962 = vand.u32 %v3961, 4294901760
      %3963 = vmatpush1.msra.mxu0 %v3962
      %3964 = vmatprep.subr.mxu0 0.0
      %v3965 = vand.u32 %v2733, 4294901760
      %v3966 = vsub.f32 %v2733, %v3965
      %v3967 = vand.u32 %v3966, 4294901760
      %v3968 = vsub.f32 %v3966, %v3967
      %v3969 = vand.u32 %v3968, 4294901760
      %3970 = vmatpush1.msra.mxu0 %v3969
      %3971 = vmatprep.subr.mxu0 0.0
      %v3972 = vand.u32 %v2727, 4294901760
      %v3973 = vsub.f32 %v2727, %v3972
      %v3974 = vand.u32 %v3973, 4294901760
      %v3975 = vsub.f32 %v3973, %v3974
      %v3976 = vand.u32 %v3975, 4294901760
      %3977 = vmatpush1.msra.mxu0 %v3976
      %3978 = vmatprep.subr.mxu0 0.0
      %v3979 = vand.u32 %v2721, 4294901760
      %v3980 = vsub.f32 %v2721, %v3979
      %v3981 = vand.u32 %v3980, 4294901760
      %v3982 = vsub.f32 %v3980, %v3981
      %v3983 = vand.u32 %v3982, 4294901760
      %3984 = vmatpush1.msra.mxu0 %v3983
      %3985 = vmatprep.subr.mxu0 0.0
      %v3986 = vand.u32 %v2715, 4294901760
      %v3987 = vsub.f32 %v2715, %v3986
      %v3988 = vand.u32 %v3987, 4294901760
      %v3989 = vsub.f32 %v3987, %v3988
      %v3990 = vand.u32 %v3989, 4294901760
      %3991 = vmatpush1.msra.mxu0 %v3990
      %3992 = vmatprep.subr.mxu0 0.0
      %3993 = vmatpush2.msra.mxu0 0.0
      %3994 = vmatprep.subr.mxu0 0.0
      %3995 = vmatpush2.msra.mxu0 0.0
      %3996 = vmatprep.subr.mxu0 0.0
      %3997 = vmatpush2.msra.mxu0 0.0
      %3998 = vmatprep.subr.mxu0 0.0
      %3999 = vmatpush2.msra.mxu0 0.0
      %4000 = vmatprep.subr.mxu0 0.0
      %4001 = vmatpush2.msra.mxu0 0.0
      %4002 = vmatprep.subr.mxu0 0.0
      %4003 = vmatpush2.msra.mxu0 0.0
      %4004 = vmatprep.subr.mxu0 0.0
      %4005 = vmatpush2.msra.mxu0 0.0
      %4006 = vmatprep.subr.mxu0 0.0
      %4007 = vmatpush2.msra.mxu0 0.0
      %4008 = vmatprep.subr.mxu0 0.0
      %4009 = vmatpush2.msra.mxu0 0.0
      %4010 = vmatprep.subr.mxu0 0.0
      %4011 = vmatpush2.msra.mxu0 0.0
      %4012 = vmatprep.subr.mxu0 0.0
      %4013 = vmatpush2.msra.mxu0 0.0
      %4014 = vmatprep.subr.mxu0 0.0
      %4015 = vmatpush2.msra.mxu0 0.0
      %4016 = vmatprep.subr.mxu0 0.0
      %4017 = vmatpush2.msra.mxu0 0.0
      %4018 = vmatprep.subr.mxu0 0.0
      %4019 = vmatpush2.msra.mxu0 0.0
      %4020 = vmatprep.subr.mxu0 0.0
      %4021 = vmatpush2.msra.mxu0 0.0
      %4022 = vmatprep.subr.mxu0 0.0
      %4023 = vmatpush2.msra.mxu0 0.0
      %4024 = vmatprep.mubr.f32.mxu0 0.0
      %v4025 = vand.u32 %v3744, 4294901760
      %4026 = vmatmul.mubr.f32.gmra.mxu0 %v4025
      %v4027 = vpop.f32.mrf.mxu0
      %v4028 = vadd.f32 %v3847, %v4027
      %v4029 = vpop.f32.mrf.mxu0
      %4030 = vmatprep.mubr.f32.mxu0 0.0
      %v4031 = vand.u32 %v3747, 4294901760
      %4032 = vmatmul.mubr.f32.gmra.mxu0 %v4031
      %v4033 = vpop.f32.mrf.mxu0
      %v4034 = vadd.f32 %v3857, %v4033
      %v4035 = vpop.f32.mrf.mxu0
      %4036 = vmatprep.mubr.f32.mxu0 0.0
      %v4037 = vand.u32 %v3750, 4294901760
      %4038 = vmatmul.mubr.f32.gmra.mxu0 %v4037
      %v4039 = vpop.f32.mrf.mxu0
      %v4040 = vadd.f32 %v3867, %v4039
      %v4041 = vpop.f32.mrf.mxu0
      %4042 = vmatprep.mubr.f32.mxu0 0.0
      %v4043 = vand.u32 %v3753, 4294901760
      %4044 = vmatmul.mubr.f32.gmra.mxu0 %v4043
      %v4045 = vpop.f32.mrf.mxu0
      %v4046 = vadd.f32 %v3877, %v4045
      %v4047 = vpop.f32.mrf.mxu0
      %4048 = vmatprep.mubr.f32.mxu0 0.0
      %v4049 = vand.u32 %v3756, 4294901760
      %4050 = vmatmul.mubr.f32.gmra.mxu0 %v4049
      %v4051 = vpop.f32.mrf.mxu0
      %v4052 = vadd.f32 %v3887, %v4051
      %v4053 = vpop.f32.mrf.mxu0
      %4054 = vmatprep.mubr.f32.mxu0 0.0
      %v4055 = vand.u32 %v3759, 4294901760
      %4056 = vmatmul.mubr.f32.gmra.mxu0 %v4055
      %v4057 = vpop.f32.mrf.mxu0
      %v4058 = vadd.f32 %v3897, %v4057
      %v4059 = vpop.f32.mrf.mxu0
      %4060 = vmatprep.mubr.f32.mxu0 0.0
      %v4061 = vand.u32 %v3762, 4294901760
      %4062 = vmatmul.mubr.f32.gmra.mxu0 %v4061
      %v4063 = vpop.f32.mrf.mxu0
      %v4064 = vadd.f32 %v3907, %v4063
      %v4065 = vpop.f32.mrf.mxu0
      %4066 = vmatprep.mubr.f32.mxu0 0.0
      %v4067 = vand.u32 %v3765, 4294901760
      %4068 = vmatmul.mubr.f32.gmra.mxu0 %v4067
      %v4069 = vpop.f32.mrf.mxu0
      %v4070 = vadd.f32 %v3917, %v4069
      %v4071 = vpop.f32.mrf.mxu0
      %4072 = vdwg.mxu0
      %4073 = vmatprep.subr.mxu0 0.0
      %4074 = vmatpush1.msra.mxu0 0.0
      %4075 = vmatprep.subr.mxu0 0.0
      %4076 = vmatpush1.msra.mxu0 0.0
      %4077 = vmatprep.subr.mxu0 0.0
      %4078 = vmatpush1.msra.mxu0 0.0
      %4079 = vmatprep.subr.mxu0 0.0
      %4080 = vmatpush1.msra.mxu0 0.0
      %4081 = vmatprep.subr.mxu0 0.0
      %4082 = vmatpush1.msra.mxu0 0.0
      %4083 = vmatprep.subr.mxu0 0.0
      %4084 = vmatpush1.msra.mxu0 0.0
      %4085 = vmatprep.subr.mxu0 0.0
      %4086 = vmatpush1.msra.mxu0 0.0
      %4087 = vmatprep.subr.mxu0 0.0
      %4088 = vmatpush1.msra.mxu0 0.0
      %4089 = vmatprep.subr.mxu0 0.0
      %v4090 = vand.u32 %v2757, 4294901760
      %v4091 = vsub.f32 %v2757, %v4090
      %4092 = vmatpush1.msra.mxu0 %v4091
      %4093 = vmatprep.subr.mxu0 0.0
      %v4094 = vand.u32 %v2751, 4294901760
      %v4095 = vsub.f32 %v2751, %v4094
      %4096 = vmatpush1.msra.mxu0 %v4095
      %4097 = vmatprep.subr.mxu0 0.0
      %v4098 = vand.u32 %v2745, 4294901760
      %v4099 = vsub.f32 %v2745, %v4098
      %4100 = vmatpush1.msra.mxu0 %v4099
      %4101 = vmatprep.subr.mxu0 0.0
      %v4102 = vand.u32 %v2739, 4294901760
      %v4103 = vsub.f32 %v2739, %v4102
      %4104 = vmatpush1.msra.mxu0 %v4103
      %4105 = vmatprep.subr.mxu0 0.0
      %v4106 = vand.u32 %v2733, 4294901760
      %v4107 = vsub.f32 %v2733, %v4106
      %4108 = vmatpush1.msra.mxu0 %v4107
      %4109 = vmatprep.subr.mxu0 0.0
      %v4110 = vand.u32 %v2727, 4294901760
      %v4111 = vsub.f32 %v2727, %v4110
      %4112 = vmatpush1.msra.mxu0 %v4111
      %4113 = vmatprep.subr.mxu0 0.0
      %v4114 = vand.u32 %v2721, 4294901760
      %v4115 = vsub.f32 %v2721, %v4114
      %4116 = vmatpush1.msra.mxu0 %v4115
      %4117 = vmatprep.subr.mxu0 0.0
      %v4118 = vand.u32 %v2715, 4294901760
      %v4119 = vsub.f32 %v2715, %v4118
      %4120 = vmatpush1.msra.mxu0 %v4119
      %4121 = vmatprep.subr.mxu0 0.0
      %4122 = vmatpush2.msra.mxu0 0.0
      %4123 = vmatprep.subr.mxu0 0.0
      %4124 = vmatpush2.msra.mxu0 0.0
      %4125 = vmatprep.subr.mxu0 0.0
      %4126 = vmatpush2.msra.mxu0 0.0
      %4127 = vmatprep.subr.mxu0 0.0
      %4128 = vmatpush2.msra.mxu0 0.0
      %4129 = vmatprep.subr.mxu0 0.0
      %4130 = vmatpush2.msra.mxu0 0.0
      %4131 = vmatprep.subr.mxu0 0.0
      %4132 = vmatpush2.msra.mxu0 0.0
      %4133 = vmatprep.subr.mxu0 0.0
      %4134 = vmatpush2.msra.mxu0 0.0
      %4135 = vmatprep.subr.mxu0 0.0
      %4136 = vmatpush2.msra.mxu0 0.0
      %4137 = vmatprep.subr.mxu0 0.0
      %4138 = vmatpush2.msra.mxu0 0.0
      %4139 = vmatprep.subr.mxu0 0.0
      %4140 = vmatpush2.msra.mxu0 0.0
      %4141 = vmatprep.subr.mxu0 0.0
      %4142 = vmatpush2.msra.mxu0 0.0
      %4143 = vmatprep.subr.mxu0 0.0
      %4144 = vmatpush2.msra.mxu0 0.0
      %4145 = vmatprep.subr.mxu0 0.0
      %4146 = vmatpush2.msra.mxu0 0.0
      %4147 = vmatprep.subr.mxu0 0.0
      %4148 = vmatpush2.msra.mxu0 0.0
      %4149 = vmatprep.subr.mxu0 0.0
      %4150 = vmatpush2.msra.mxu0 0.0
      %4151 = vmatprep.subr.mxu0 0.0
      %4152 = vmatpush2.msra.mxu0 0.0
      %4153 = vmatprep.mubr.f32.mxu0 0.0
      %v4154 = vand.u32 %v3744, 4294901760
      %v4155 = vsub.f32 %v3744, %v4154
      %4156 = vmatmul.mubr.f32.gmra.mxu0 %v4155
      %v4157 = vpop.f32.mrf.mxu0
      %v4158 = vadd.f32 %v4028, %v4157
      %v4159 = vpop.f32.mrf.mxu0
      %4160 = vmatprep.mubr.f32.mxu0 0.0
      %v4161 = vand.u32 %v3747, 4294901760
      %v4162 = vsub.f32 %v3747, %v4161
      %4163 = vmatmul.mubr.f32.gmra.mxu0 %v4162
      %v4164 = vpop.f32.mrf.mxu0
      %v4165 = vadd.f32 %v4034, %v4164
      %v4166 = vpop.f32.mrf.mxu0
      %4167 = vmatprep.mubr.f32.mxu0 0.0
      %v4168 = vand.u32 %v3750, 4294901760
      %v4169 = vsub.f32 %v3750, %v4168
      %4170 = vmatmul.mubr.f32.gmra.mxu0 %v4169
      %v4171 = vpop.f32.mrf.mxu0
      %v4172 = vadd.f32 %v4040, %v4171
      %v4173 = vpop.f32.mrf.mxu0
      %4174 = vmatprep.mubr.f32.mxu0 0.0
      %v4175 = vand.u32 %v3753, 4294901760
      %v4176 = vsub.f32 %v3753, %v4175
      %4177 = vmatmul.mubr.f32.gmra.mxu0 %v4176
      %v4178 = vpop.f32.mrf.mxu0
      %v4179 = vadd.f32 %v4046, %v4178
      %v4180 = vpop.f32.mrf.mxu0
      %4181 = vmatprep.mubr.f32.mxu0 0.0
      %v4182 = vand.u32 %v3756, 4294901760
      %v4183 = vsub.f32 %v3756, %v4182
      %4184 = vmatmul.mubr.f32.gmra.mxu0 %v4183
      %v4185 = vpop.f32.mrf.mxu0
      %v4186 = vadd.f32 %v4052, %v4185
      %v4187 = vpop.f32.mrf.mxu0
      %4188 = vmatprep.mubr.f32.mxu0 0.0
      %v4189 = vand.u32 %v3759, 4294901760
      %v4190 = vsub.f32 %v3759, %v4189
      %4191 = vmatmul.mubr.f32.gmra.mxu0 %v4190
      %v4192 = vpop.f32.mrf.mxu0
      %v4193 = vadd.f32 %v4058, %v4192
      %v4194 = vpop.f32.mrf.mxu0
      %4195 = vmatprep.mubr.f32.mxu0 0.0
      %v4196 = vand.u32 %v3762, 4294901760
      %v4197 = vsub.f32 %v3762, %v4196
      %4198 = vmatmul.mubr.f32.gmra.mxu0 %v4197
      %v4199 = vpop.f32.mrf.mxu0
      %v4200 = vadd.f32 %v4064, %v4199
      %v4201 = vpop.f32.mrf.mxu0
      %4202 = vmatprep.mubr.f32.mxu0 0.0
      %v4203 = vand.u32 %v3765, 4294901760
      %v4204 = vsub.f32 %v3765, %v4203
      %4205 = vmatmul.mubr.f32.gmra.mxu0 %v4204
      %v4206 = vpop.f32.mrf.mxu0
      %v4207 = vadd.f32 %v4070, %v4206
      %v4208 = vpop.f32.mrf.mxu0
      %4209 = vdwg.mxu0
      %4210 = vmatprep.subr.mxu0 0.0
      %4211 = vmatpush1.msra.mxu0 0.0
      %4212 = vmatprep.subr.mxu0 0.0
      %4213 = vmatpush1.msra.mxu0 0.0
      %4214 = vmatprep.subr.mxu0 0.0
      %4215 = vmatpush1.msra.mxu0 0.0
      %4216 = vmatprep.subr.mxu0 0.0
      %4217 = vmatpush1.msra.mxu0 0.0
      %4218 = vmatprep.subr.mxu0 0.0
      %4219 = vmatpush1.msra.mxu0 0.0
      %4220 = vmatprep.subr.mxu0 0.0
      %4221 = vmatpush1.msra.mxu0 0.0
      %4222 = vmatprep.subr.mxu0 0.0
      %4223 = vmatpush1.msra.mxu0 0.0
      %4224 = vmatprep.subr.mxu0 0.0
      %4225 = vmatpush1.msra.mxu0 0.0
      %4226 = vmatprep.subr.mxu0 0.0
      %v4227 = vand.u32 %v2757, 4294901760
      %4228 = vmatpush1.msra.mxu0 %v4227
      %4229 = vmatprep.subr.mxu0 0.0
      %v4230 = vand.u32 %v2751, 4294901760
      %4231 = vmatpush1.msra.mxu0 %v4230
      %4232 = vmatprep.subr.mxu0 0.0
      %v4233 = vand.u32 %v2745, 4294901760
      %4234 = vmatpush1.msra.mxu0 %v4233
      %4235 = vmatprep.subr.mxu0 0.0
      %v4236 = vand.u32 %v2739, 4294901760
      %4237 = vmatpush1.msra.mxu0 %v4236
      %4238 = vmatprep.subr.mxu0 0.0
      %v4239 = vand.u32 %v2733, 4294901760
      %4240 = vmatpush1.msra.mxu0 %v4239
      %4241 = vmatprep.subr.mxu0 0.0
      %v4242 = vand.u32 %v2727, 4294901760
      %4243 = vmatpush1.msra.mxu0 %v4242
      %4244 = vmatprep.subr.mxu0 0.0
      %v4245 = vand.u32 %v2721, 4294901760
      %4246 = vmatpush1.msra.mxu0 %v4245
      %4247 = vmatprep.subr.mxu0 0.0
      %v4248 = vand.u32 %v2715, 4294901760
      %4249 = vmatpush1.msra.mxu0 %v4248
      %4250 = vmatprep.subr.mxu0 0.0
      %4251 = vmatpush2.msra.mxu0 0.0
      %4252 = vmatprep.subr.mxu0 0.0
      %4253 = vmatpush2.msra.mxu0 0.0
      %4254 = vmatprep.subr.mxu0 0.0
      %4255 = vmatpush2.msra.mxu0 0.0
      %4256 = vmatprep.subr.mxu0 0.0
      %4257 = vmatpush2.msra.mxu0 0.0
      %4258 = vmatprep.subr.mxu0 0.0
      %4259 = vmatpush2.msra.mxu0 0.0
      %4260 = vmatprep.subr.mxu0 0.0
      %4261 = vmatpush2.msra.mxu0 0.0
      %4262 = vmatprep.subr.mxu0 0.0
      %4263 = vmatpush2.msra.mxu0 0.0
      %4264 = vmatprep.subr.mxu0 0.0
      %4265 = vmatpush2.msra.mxu0 0.0
      %4266 = vmatprep.subr.mxu0 0.0
      %4267 = vmatpush2.msra.mxu0 0.0
      %4268 = vmatprep.subr.mxu0 0.0
      %4269 = vmatpush2.msra.mxu0 0.0
      %4270 = vmatprep.subr.mxu0 0.0
      %4271 = vmatpush2.msra.mxu0 0.0
      %4272 = vmatprep.subr.mxu0 0.0
      %4273 = vmatpush2.msra.mxu0 0.0
      %4274 = vmatprep.subr.mxu0 0.0
      %4275 = vmatpush2.msra.mxu0 0.0
      %4276 = vmatprep.subr.mxu0 0.0
      %4277 = vmatpush2.msra.mxu0 0.0
      %4278 = vmatprep.subr.mxu0 0.0
      %4279 = vmatpush2.msra.mxu0 0.0
      %4280 = vmatprep.subr.mxu0 0.0
      %4281 = vmatpush2.msra.mxu0 0.0
      %4282 = vmatprep.mubr.f32.mxu0 0.0
      %v4283 = vand.u32 %v3744, 4294901760
      %v4284 = vsub.f32 %v3744, %v4283
      %v4285 = vand.u32 %v4284, 4294901760
      %4286 = vmatmul.mubr.f32.gmra.mxu0 %v4285
      %v4287 = vpop.f32.mrf.mxu0
      %v4288 = vadd.f32 %v4158, %v4287
      %v4289 = vpop.f32.mrf.mxu0
      %4290 = vmatprep.mubr.f32.mxu0 0.0
      %v4291 = vand.u32 %v3747, 4294901760
      %v4292 = vsub.f32 %v3747, %v4291
      %v4293 = vand.u32 %v4292, 4294901760
      %4294 = vmatmul.mubr.f32.gmra.mxu0 %v4293
      %v4295 = vpop.f32.mrf.mxu0
      %v4296 = vadd.f32 %v4165, %v4295
      %v4297 = vpop.f32.mrf.mxu0
      %4298 = vmatprep.mubr.f32.mxu0 0.0
      %v4299 = vand.u32 %v3750, 4294901760
      %v4300 = vsub.f32 %v3750, %v4299
      %v4301 = vand.u32 %v4300, 4294901760
      %4302 = vmatmul.mubr.f32.gmra.mxu0 %v4301
      %v4303 = vpop.f32.mrf.mxu0
      %v4304 = vadd.f32 %v4172, %v4303
      %v4305 = vpop.f32.mrf.mxu0
      %4306 = vmatprep.mubr.f32.mxu0 0.0
      %v4307 = vand.u32 %v3753, 4294901760
      %v4308 = vsub.f32 %v3753, %v4307
      %v4309 = vand.u32 %v4308, 4294901760
      %4310 = vmatmul.mubr.f32.gmra.mxu0 %v4309
      %v4311 = vpop.f32.mrf.mxu0
      %v4312 = vadd.f32 %v4179, %v4311
      %v4313 = vpop.f32.mrf.mxu0
      %4314 = vmatprep.mubr.f32.mxu0 0.0
      %v4315 = vand.u32 %v3756, 4294901760
      %v4316 = vsub.f32 %v3756, %v4315
      %v4317 = vand.u32 %v4316, 4294901760
      %4318 = vmatmul.mubr.f32.gmra.mxu0 %v4317
      %v4319 = vpop.f32.mrf.mxu0
      %v4320 = vadd.f32 %v4186, %v4319
      %v4321 = vpop.f32.mrf.mxu0
      %4322 = vmatprep.mubr.f32.mxu0 0.0
      %v4323 = vand.u32 %v3759, 4294901760
      %v4324 = vsub.f32 %v3759, %v4323
      %v4325 = vand.u32 %v4324, 4294901760
      %4326 = vmatmul.mubr.f32.gmra.mxu0 %v4325
      %v4327 = vpop.f32.mrf.mxu0
      %v4328 = vadd.f32 %v4193, %v4327
      %v4329 = vpop.f32.mrf.mxu0
      %4330 = vmatprep.mubr.f32.mxu0 0.0
      %v4331 = vand.u32 %v3762, 4294901760
      %v4332 = vsub.f32 %v3762, %v4331
      %v4333 = vand.u32 %v4332, 4294901760
      %4334 = vmatmul.mubr.f32.gmra.mxu0 %v4333
      %v4335 = vpop.f32.mrf.mxu0
      %v4336 = vadd.f32 %v4200, %v4335
      %v4337 = vpop.f32.mrf.mxu0
      %4338 = vmatprep.mubr.f32.mxu0 0.0
      %v4339 = vand.u32 %v3765, 4294901760
      %v4340 = vsub.f32 %v3765, %v4339
      %v4341 = vand.u32 %v4340, 4294901760
      %4342 = vmatmul.mubr.f32.gmra.mxu0 %v4341
      %v4343 = vpop.f32.mrf.mxu0
      %v4344 = vadd.f32 %v4207, %v4343
      %v4345 = vpop.f32.mrf.mxu0
      %4346 = vdwg.mxu0
      %4347 = vmatprep.subr.mxu0 0.0
      %4348 = vmatpush1.msra.mxu0 0.0
      %4349 = vmatprep.subr.mxu0 0.0
      %4350 = vmatpush1.msra.mxu0 0.0
      %4351 = vmatprep.subr.mxu0 0.0
      %4352 = vmatpush1.msra.mxu0 0.0
      %4353 = vmatprep.subr.mxu0 0.0
      %4354 = vmatpush1.msra.mxu0 0.0
      %4355 = vmatprep.subr.mxu0 0.0
      %4356 = vmatpush1.msra.mxu0 0.0
      %4357 = vmatprep.subr.mxu0 0.0
      %4358 = vmatpush1.msra.mxu0 0.0
      %4359 = vmatprep.subr.mxu0 0.0
      %4360 = vmatpush1.msra.mxu0 0.0
      %4361 = vmatprep.subr.mxu0 0.0
      %4362 = vmatpush1.msra.mxu0 0.0
      %4363 = vmatprep.subr.mxu0 0.0
      %v4364 = vand.u32 %v2757, 4294901760
      %v4365 = vsub.f32 %v2757, %v4364
      %v4366 = vand.u32 %v4365, 4294901760
      %4367 = vmatpush1.msra.mxu0 %v4366
      %4368 = vmatprep.subr.mxu0 0.0
      %v4369 = vand.u32 %v2751, 4294901760
      %v4370 = vsub.f32 %v2751, %v4369
      %v4371 = vand.u32 %v4370, 4294901760
      %4372 = vmatpush1.msra.mxu0 %v4371
      %4373 = vmatprep.subr.mxu0 0.0
      %v4374 = vand.u32 %v2745, 4294901760
      %v4375 = vsub.f32 %v2745, %v4374
      %v4376 = vand.u32 %v4375, 4294901760
      %4377 = vmatpush1.msra.mxu0 %v4376
      %4378 = vmatprep.subr.mxu0 0.0
      %v4379 = vand.u32 %v2739, 4294901760
      %v4380 = vsub.f32 %v2739, %v4379
      %v4381 = vand.u32 %v4380, 4294901760
      %4382 = vmatpush1.msra.mxu0 %v4381
      %4383 = vmatprep.subr.mxu0 0.0
      %v4384 = vand.u32 %v2733, 4294901760
      %v4385 = vsub.f32 %v2733, %v4384
      %v4386 = vand.u32 %v4385, 4294901760
      %4387 = vmatpush1.msra.mxu0 %v4386
      %4388 = vmatprep.subr.mxu0 0.0
      %v4389 = vand.u32 %v2727, 4294901760
      %v4390 = vsub.f32 %v2727, %v4389
      %v4391 = vand.u32 %v4390, 4294901760
      %4392 = vmatpush1.msra.mxu0 %v4391
      %4393 = vmatprep.subr.mxu0 0.0
      %v4394 = vand.u32 %v2721, 4294901760
      %v4395 = vsub.f32 %v2721, %v4394
      %v4396 = vand.u32 %v4395, 4294901760
      %4397 = vmatpush1.msra.mxu0 %v4396
      %4398 = vmatprep.subr.mxu0 0.0
      %v4399 = vand.u32 %v2715, 4294901760
      %v4400 = vsub.f32 %v2715, %v4399
      %v4401 = vand.u32 %v4400, 4294901760
      %4402 = vmatpush1.msra.mxu0 %v4401
      %4403 = vmatprep.subr.mxu0 0.0
      %4404 = vmatpush2.msra.mxu0 0.0
      %4405 = vmatprep.subr.mxu0 0.0
      %4406 = vmatpush2.msra.mxu0 0.0
      %4407 = vmatprep.subr.mxu0 0.0
      %4408 = vmatpush2.msra.mxu0 0.0
      %4409 = vmatprep.subr.mxu0 0.0
      %4410 = vmatpush2.msra.mxu0 0.0
      %4411 = vmatprep.subr.mxu0 0.0
      %4412 = vmatpush2.msra.mxu0 0.0
      %4413 = vmatprep.subr.mxu0 0.0
      %4414 = vmatpush2.msra.mxu0 0.0
      %4415 = vmatprep.subr.mxu0 0.0
      %4416 = vmatpush2.msra.mxu0 0.0
      %4417 = vmatprep.subr.mxu0 0.0
      %4418 = vmatpush2.msra.mxu0 0.0
      %4419 = vmatprep.subr.mxu0 0.0
      %4420 = vmatpush2.msra.mxu0 0.0
      %4421 = vmatprep.subr.mxu0 0.0
      %4422 = vmatpush2.msra.mxu0 0.0
      %4423 = vmatprep.subr.mxu0 0.0
      %4424 = vmatpush2.msra.mxu0 0.0
      %4425 = vmatprep.subr.mxu0 0.0
      %4426 = vmatpush2.msra.mxu0 0.0
      %4427 = vmatprep.subr.mxu0 0.0
      %4428 = vmatpush2.msra.mxu0 0.0
      %4429 = vmatprep.subr.mxu0 0.0
      %4430 = vmatpush2.msra.mxu0 0.0
      %4431 = vmatprep.subr.mxu0 0.0
      %4432 = vmatpush2.msra.mxu0 0.0
      %4433 = vmatprep.subr.mxu0 0.0
      %4434 = vmatpush2.msra.mxu0 0.0
      %4435 = vmatprep.mubr.f32.mxu0 0.0
      %v4436 = vand.u32 %v3744, 4294901760
      %4437 = vmatmul.mubr.f32.gmra.mxu0 %v4436
      %v4438 = vpop.f32.mrf.mxu0
      %v4439 = vadd.f32 %v4288, %v4438
      %v4440 = vpop.f32.mrf.mxu0
      %4441 = vmatprep.mubr.f32.mxu0 0.0
      %v4442 = vand.u32 %v3747, 4294901760
      %4443 = vmatmul.mubr.f32.gmra.mxu0 %v4442
      %v4444 = vpop.f32.mrf.mxu0
      %v4445 = vadd.f32 %v4296, %v4444
      %v4446 = vpop.f32.mrf.mxu0
      %4447 = vmatprep.mubr.f32.mxu0 0.0
      %v4448 = vand.u32 %v3750, 4294901760
      %4449 = vmatmul.mubr.f32.gmra.mxu0 %v4448
      %v4450 = vpop.f32.mrf.mxu0
      %v4451 = vadd.f32 %v4304, %v4450
      %v4452 = vpop.f32.mrf.mxu0
      %4453 = vmatprep.mubr.f32.mxu0 0.0
      %v4454 = vand.u32 %v3753, 4294901760
      %4455 = vmatmul.mubr.f32.gmra.mxu0 %v4454
      %v4456 = vpop.f32.mrf.mxu0
      %v4457 = vadd.f32 %v4312, %v4456
      %v4458 = vpop.f32.mrf.mxu0
      %4459 = vmatprep.mubr.f32.mxu0 0.0
      %v4460 = vand.u32 %v3756, 4294901760
      %4461 = vmatmul.mubr.f32.gmra.mxu0 %v4460
      %v4462 = vpop.f32.mrf.mxu0
      %v4463 = vadd.f32 %v4320, %v4462
      %v4464 = vpop.f32.mrf.mxu0
      %4465 = vmatprep.mubr.f32.mxu0 0.0
      %v4466 = vand.u32 %v3759, 4294901760
      %4467 = vmatmul.mubr.f32.gmra.mxu0 %v4466
      %v4468 = vpop.f32.mrf.mxu0
      %v4469 = vadd.f32 %v4328, %v4468
      %v4470 = vpop.f32.mrf.mxu0
      %4471 = vmatprep.mubr.f32.mxu0 0.0
      %v4472 = vand.u32 %v3762, 4294901760
      %4473 = vmatmul.mubr.f32.gmra.mxu0 %v4472
      %v4474 = vpop.f32.mrf.mxu0
      %v4475 = vadd.f32 %v4336, %v4474
      %v4476 = vpop.f32.mrf.mxu0
      %4477 = vmatprep.mubr.f32.mxu0 0.0
      %v4478 = vand.u32 %v3765, 4294901760
      %4479 = vmatmul.mubr.f32.gmra.mxu0 %v4478
      %v4480 = vpop.f32.mrf.mxu0
      %v4481 = vadd.f32 %v4344, %v4480
      %v4482 = vpop.f32.mrf.mxu0
      %4483 = vdwg.mxu0
      %4484 = vmatprep.subr.mxu0 0.0
      %4485 = vmatpush1.msra.mxu0 0.0
      %4486 = vmatprep.subr.mxu0 0.0
      %4487 = vmatpush1.msra.mxu0 0.0
      %4488 = vmatprep.subr.mxu0 0.0
      %4489 = vmatpush1.msra.mxu0 0.0
      %4490 = vmatprep.subr.mxu0 0.0
      %4491 = vmatpush1.msra.mxu0 0.0
      %4492 = vmatprep.subr.mxu0 0.0
      %4493 = vmatpush1.msra.mxu0 0.0
      %4494 = vmatprep.subr.mxu0 0.0
      %4495 = vmatpush1.msra.mxu0 0.0
      %4496 = vmatprep.subr.mxu0 0.0
      %4497 = vmatpush1.msra.mxu0 0.0
      %4498 = vmatprep.subr.mxu0 0.0
      %4499 = vmatpush1.msra.mxu0 0.0
      %4500 = vmatprep.subr.mxu0 0.0
      %v4501 = vand.u32 %v2757, 4294901760
      %4502 = vmatpush1.msra.mxu0 %v4501
      %4503 = vmatprep.subr.mxu0 0.0
      %v4504 = vand.u32 %v2751, 4294901760
      %4505 = vmatpush1.msra.mxu0 %v4504
      %4506 = vmatprep.subr.mxu0 0.0
      %v4507 = vand.u32 %v2745, 4294901760
      %4508 = vmatpush1.msra.mxu0 %v4507
      %4509 = vmatprep.subr.mxu0 0.0
      %v4510 = vand.u32 %v2739, 4294901760
      %4511 = vmatpush1.msra.mxu0 %v4510
      %4512 = vmatprep.subr.mxu0 0.0
      %v4513 = vand.u32 %v2733, 4294901760
      %4514 = vmatpush1.msra.mxu0 %v4513
      %4515 = vmatprep.subr.mxu0 0.0
      %v4516 = vand.u32 %v2727, 4294901760
      %4517 = vmatpush1.msra.mxu0 %v4516
      %4518 = vmatprep.subr.mxu0 0.0
      %v4519 = vand.u32 %v2721, 4294901760
      %4520 = vmatpush1.msra.mxu0 %v4519
      %4521 = vmatprep.subr.mxu0 0.0
      %v4522 = vand.u32 %v2715, 4294901760
      %4523 = vmatpush1.msra.mxu0 %v4522
      %4524 = vmatprep.subr.mxu0 0.0
      %4525 = vmatpush2.msra.mxu0 0.0
      %4526 = vmatprep.subr.mxu0 0.0
      %4527 = vmatpush2.msra.mxu0 0.0
      %4528 = vmatprep.subr.mxu0 0.0
      %4529 = vmatpush2.msra.mxu0 0.0
      %4530 = vmatprep.subr.mxu0 0.0
      %4531 = vmatpush2.msra.mxu0 0.0
      %4532 = vmatprep.subr.mxu0 0.0
      %4533 = vmatpush2.msra.mxu0 0.0
      %4534 = vmatprep.subr.mxu0 0.0
      %4535 = vmatpush2.msra.mxu0 0.0
      %4536 = vmatprep.subr.mxu0 0.0
      %4537 = vmatpush2.msra.mxu0 0.0
      %4538 = vmatprep.subr.mxu0 0.0
      %4539 = vmatpush2.msra.mxu0 0.0
      %4540 = vmatprep.subr.mxu0 0.0
      %4541 = vmatpush2.msra.mxu0 0.0
      %4542 = vmatprep.subr.mxu0 0.0
      %4543 = vmatpush2.msra.mxu0 0.0
      %4544 = vmatprep.subr.mxu0 0.0
      %4545 = vmatpush2.msra.mxu0 0.0
      %4546 = vmatprep.subr.mxu0 0.0
      %4547 = vmatpush2.msra.mxu0 0.0
      %4548 = vmatprep.subr.mxu0 0.0
      %4549 = vmatpush2.msra.mxu0 0.0
      %4550 = vmatprep.subr.mxu0 0.0
      %4551 = vmatpush2.msra.mxu0 0.0
      %4552 = vmatprep.subr.mxu0 0.0
      %4553 = vmatpush2.msra.mxu0 0.0
      %4554 = vmatprep.subr.mxu0 0.0
      %4555 = vmatpush2.msra.mxu0 0.0
      %4556 = vmatprep.mubr.f32.mxu0 0.0
      %v4557 = vand.u32 %v3744, 4294901760
      %4558 = vmatmul.mubr.f32.gmra.mxu0 %v4557
      %v4559 = vpop.f32.mrf.mxu0
      %v4560 = vadd.f32 %v4439, %v4559
      %v4561 = vpop.f32.mrf.mxu0
      %4562 = vmatprep.mubr.f32.mxu0 0.0
      %v4563 = vand.u32 %v3747, 4294901760
      %4564 = vmatmul.mubr.f32.gmra.mxu0 %v4563
      %v4565 = vpop.f32.mrf.mxu0
      %v4566 = vadd.f32 %v4445, %v4565
      %v4567 = vpop.f32.mrf.mxu0
      %4568 = vmatprep.mubr.f32.mxu0 0.0
      %v4569 = vand.u32 %v3750, 4294901760
      %4570 = vmatmul.mubr.f32.gmra.mxu0 %v4569
      %v4571 = vpop.f32.mrf.mxu0
      %v4572 = vadd.f32 %v4451, %v4571
      %v4573 = vpop.f32.mrf.mxu0
      %4574 = vmatprep.mubr.f32.mxu0 0.0
      %v4575 = vand.u32 %v3753, 4294901760
      %4576 = vmatmul.mubr.f32.gmra.mxu0 %v4575
      %v4577 = vpop.f32.mrf.mxu0
      %v4578 = vadd.f32 %v4457, %v4577
      %v4579 = vpop.f32.mrf.mxu0
      %4580 = vmatprep.mubr.f32.mxu0 0.0
      %v4581 = vand.u32 %v3756, 4294901760
      %4582 = vmatmul.mubr.f32.gmra.mxu0 %v4581
      %v4583 = vpop.f32.mrf.mxu0
      %v4584 = vadd.f32 %v4463, %v4583
      %v4585 = vpop.f32.mrf.mxu0
      %4586 = vmatprep.mubr.f32.mxu0 0.0
      %v4587 = vand.u32 %v3759, 4294901760
      %4588 = vmatmul.mubr.f32.gmra.mxu0 %v4587
      %v4589 = vpop.f32.mrf.mxu0
      %v4590 = vadd.f32 %v4469, %v4589
      %v4591 = vpop.f32.mrf.mxu0
      %4592 = vmatprep.mubr.f32.mxu0 0.0
      %v4593 = vand.u32 %v3762, 4294901760
      %4594 = vmatmul.mubr.f32.gmra.mxu0 %v4593
      %v4595 = vpop.f32.mrf.mxu0
      %v4596 = vadd.f32 %v4475, %v4595
      %v4597 = vpop.f32.mrf.mxu0
      %4598 = vmatprep.mubr.f32.mxu0 0.0
      %v4599 = vand.u32 %v3765, 4294901760
      %4600 = vmatmul.mubr.f32.gmra.mxu0 %v4599
      %v4601 = vpop.f32.mrf.mxu0
      %v4602 = vadd.f32 %v4481, %v4601
      %v4603 = vpop.f32.mrf.mxu0
      %4604 = vdwg.mxu0
      %v4605 = vld [vmem:[%s6] sm:$0xff]
      %v4606 = vld [vmem:[%s6 + $0x8] sm:$0xff]
      %s4607 = scalar_lea.vmem %s3, 16
      %v4608 = vld [vmem:[%s4607] sm:$0xff]
      %v4609 = vld [vmem:[%s4607 + $0x8] sm:$0xff]
      %4610 = vmatprep.subr.mxu0 0.0
      %4611 = vmatpush1.msra.mxu0 0.0
      %4612 = vmatprep.subr.mxu0 0.0
      %4613 = vmatpush1.msra.mxu0 0.0
      %4614 = vmatprep.subr.mxu0 0.0
      %4615 = vmatpush1.msra.mxu0 0.0
      %4616 = vmatprep.subr.mxu0 0.0
      %4617 = vmatpush1.msra.mxu0 0.0
      %4618 = vmatprep.subr.mxu0 0.0
      %4619 = vmatpush1.msra.mxu0 0.0
      %4620 = vmatprep.subr.mxu0 0.0
      %4621 = vmatpush1.msra.mxu0 0.0
      %4622 = vmatprep.subr.mxu0 0.0
      %4623 = vmatpush1.msra.mxu0 0.0
      %4624 = vmatprep.subr.mxu0 0.0
      %4625 = vmatpush1.msra.mxu0 0.0
      %4626 = vmatprep.subr.mxu0 0.0
      %4627 = vmatpush1.msra.mxu0 0.0
      %4628 = vmatprep.subr.mxu0 0.0
      %4629 = vmatpush1.msra.mxu0 0.0
      %4630 = vmatprep.subr.mxu0 0.0
      %4631 = vmatpush1.msra.mxu0 0.0
      %4632 = vmatprep.subr.mxu0 0.0
      %4633 = vmatpush1.msra.mxu0 0.0
      %4634 = vmatprep.subr.mxu0 0.0
      %4635 = vmatpush1.msra.mxu0 0.0
      %4636 = vmatprep.subr.mxu0 0.0
      %4637 = vmatpush1.msra.mxu0 0.0
      %4638 = vmatprep.subr.mxu0 0.0
      %v4639 = vand.u32 %v4609, 4294901760
      %4640 = vmatpush1.msra.mxu0 %v4639
      %4641 = vmatprep.subr.mxu0 0.0
      %v4642 = vand.u32 %v4608, 4294901760
      %4643 = vmatpush1.msra.mxu0 %v4642
      %4644 = vmatprep.subr.mxu0 0.0
      %4645 = vmatpush2.msra.mxu0 0.0
      %4646 = vmatprep.subr.mxu0 0.0
      %4647 = vmatpush2.msra.mxu0 0.0
      %4648 = vmatprep.subr.mxu0 0.0
      %4649 = vmatpush2.msra.mxu0 0.0
      %4650 = vmatprep.subr.mxu0 0.0
      %4651 = vmatpush2.msra.mxu0 0.0
      %4652 = vmatprep.subr.mxu0 0.0
      %4653 = vmatpush2.msra.mxu0 0.0
      %4654 = vmatprep.subr.mxu0 0.0
      %4655 = vmatpush2.msra.mxu0 0.0
      %4656 = vmatprep.subr.mxu0 0.0
      %4657 = vmatpush2.msra.mxu0 0.0
      %4658 = vmatprep.subr.mxu0 0.0
      %4659 = vmatpush2.msra.mxu0 0.0
      %4660 = vmatprep.subr.mxu0 0.0
      %4661 = vmatpush2.msra.mxu0 0.0
      %4662 = vmatprep.subr.mxu0 0.0
      %4663 = vmatpush2.msra.mxu0 0.0
      %4664 = vmatprep.subr.mxu0 0.0
      %4665 = vmatpush2.msra.mxu0 0.0
      %4666 = vmatprep.subr.mxu0 0.0
      %4667 = vmatpush2.msra.mxu0 0.0
      %4668 = vmatprep.subr.mxu0 0.0
      %4669 = vmatpush2.msra.mxu0 0.0
      %4670 = vmatprep.subr.mxu0 0.0
      %4671 = vmatpush2.msra.mxu0 0.0
      %4672 = vmatprep.subr.mxu0 0.0
      %4673 = vmatpush2.msra.mxu0 0.0
      %4674 = vmatprep.subr.mxu0 0.0
      %4675 = vmatpush2.msra.mxu0 0.0
      %4676 = vmatprep.mubr.f32.mxu0 0.0
      %v4677 = vand.u32 %v453, 4294901760
      %v4678 = vsub.f32 %v453, %v4677
      %v4679 = vand.u32 %v4678, 4294901760
      %v4680 = vsub.f32 %v4678, %v4679
      %v4681 = vand.u32 %v4680, 4294901760
      %4682 = vmatmul.mubr.f32.gmra.mxu0 %v4681
      %v4683 = vpop.f32.mrf.mxu0
      %v4684 = vadd.f32 0.0, %v4683
      %v4685 = vpop.f32.mrf.mxu0
      %4686 = vmatprep.mubr.f32.mxu0 0.0
      %v4687 = vand.u32 %v456, 4294901760
      %v4688 = vsub.f32 %v456, %v4687
      %v4689 = vand.u32 %v4688, 4294901760
      %v4690 = vsub.f32 %v4688, %v4689
      %v4691 = vand.u32 %v4690, 4294901760
      %4692 = vmatmul.mubr.f32.gmra.mxu0 %v4691
      %v4693 = vpop.f32.mrf.mxu0
      %v4694 = vadd.f32 0.0, %v4693
      %v4695 = vpop.f32.mrf.mxu0
      %4696 = vmatprep.mubr.f32.mxu0 0.0
      %v4697 = vand.u32 %v459, 4294901760
      %v4698 = vsub.f32 %v459, %v4697
      %v4699 = vand.u32 %v4698, 4294901760
      %v4700 = vsub.f32 %v4698, %v4699
      %v4701 = vand.u32 %v4700, 4294901760
      %4702 = vmatmul.mubr.f32.gmra.mxu0 %v4701
      %v4703 = vpop.f32.mrf.mxu0
      %v4704 = vadd.f32 0.0, %v4703
      %v4705 = vpop.f32.mrf.mxu0
      %4706 = vmatprep.mubr.f32.mxu0 0.0
      %v4707 = vand.u32 %v462, 4294901760
      %v4708 = vsub.f32 %v462, %v4707
      %v4709 = vand.u32 %v4708, 4294901760
      %v4710 = vsub.f32 %v4708, %v4709
      %v4711 = vand.u32 %v4710, 4294901760
      %4712 = vmatmul.mubr.f32.gmra.mxu0 %v4711
      %v4713 = vpop.f32.mrf.mxu0
      %v4714 = vadd.f32 0.0, %v4713
      %v4715 = vpop.f32.mrf.mxu0
      %4716 = vmatprep.mubr.f32.mxu0 0.0
      %v4717 = vand.u32 %v465, 4294901760
      %v4718 = vsub.f32 %v465, %v4717
      %v4719 = vand.u32 %v4718, 4294901760
      %v4720 = vsub.f32 %v4718, %v4719
      %v4721 = vand.u32 %v4720, 4294901760
      %4722 = vmatmul.mubr.f32.gmra.mxu0 %v4721
      %v4723 = vpop.f32.mrf.mxu0
      %v4724 = vadd.f32 0.0, %v4723
      %v4725 = vpop.f32.mrf.mxu0
      %4726 = vmatprep.mubr.f32.mxu0 0.0
      %v4727 = vand.u32 %v468, 4294901760
      %v4728 = vsub.f32 %v468, %v4727
      %v4729 = vand.u32 %v4728, 4294901760
      %v4730 = vsub.f32 %v4728, %v4729
      %v4731 = vand.u32 %v4730, 4294901760
      %4732 = vmatmul.mubr.f32.gmra.mxu0 %v4731
      %v4733 = vpop.f32.mrf.mxu0
      %v4734 = vadd.f32 0.0, %v4733
      %v4735 = vpop.f32.mrf.mxu0
      %4736 = vmatprep.mubr.f32.mxu0 0.0
      %v4737 = vand.u32 %v471, 4294901760
      %v4738 = vsub.f32 %v471, %v4737
      %v4739 = vand.u32 %v4738, 4294901760
      %v4740 = vsub.f32 %v4738, %v4739
      %v4741 = vand.u32 %v4740, 4294901760
      %4742 = vmatmul.mubr.f32.gmra.mxu0 %v4741
      %v4743 = vpop.f32.mrf.mxu0
      %v4744 = vadd.f32 0.0, %v4743
      %v4745 = vpop.f32.mrf.mxu0
      %4746 = vmatprep.mubr.f32.mxu0 0.0
      %v4747 = vand.u32 %v474, 4294901760
      %v4748 = vsub.f32 %v474, %v4747
      %v4749 = vand.u32 %v4748, 4294901760
      %v4750 = vsub.f32 %v4748, %v4749
      %v4751 = vand.u32 %v4750, 4294901760
      %4752 = vmatmul.mubr.f32.gmra.mxu0 %v4751
      %v4753 = vpop.f32.mrf.mxu0
      %v4754 = vadd.f32 0.0, %v4753
      %v4755 = vpop.f32.mrf.mxu0
      %4756 = vdwg.mxu0
      %4757 = vmatprep.subr.mxu0 0.0
      %4758 = vmatpush1.msra.mxu0 0.0
      %4759 = vmatprep.subr.mxu0 0.0
      %4760 = vmatpush1.msra.mxu0 0.0
      %4761 = vmatprep.subr.mxu0 0.0
      %4762 = vmatpush1.msra.mxu0 0.0
      %4763 = vmatprep.subr.mxu0 0.0
      %4764 = vmatpush1.msra.mxu0 0.0
      %4765 = vmatprep.subr.mxu0 0.0
      %4766 = vmatpush1.msra.mxu0 0.0
      %4767 = vmatprep.subr.mxu0 0.0
      %4768 = vmatpush1.msra.mxu0 0.0
      %4769 = vmatprep.subr.mxu0 0.0
      %4770 = vmatpush1.msra.mxu0 0.0
      %4771 = vmatprep.subr.mxu0 0.0
      %4772 = vmatpush1.msra.mxu0 0.0
      %4773 = vmatprep.subr.mxu0 0.0
      %4774 = vmatpush1.msra.mxu0 0.0
      %4775 = vmatprep.subr.mxu0 0.0
      %4776 = vmatpush1.msra.mxu0 0.0
      %4777 = vmatprep.subr.mxu0 0.0
      %4778 = vmatpush1.msra.mxu0 0.0
      %4779 = vmatprep.subr.mxu0 0.0
      %4780 = vmatpush1.msra.mxu0 0.0
      %4781 = vmatprep.subr.mxu0 0.0
      %4782 = vmatpush1.msra.mxu0 0.0
      %4783 = vmatprep.subr.mxu0 0.0
      %4784 = vmatpush1.msra.mxu0 0.0
      %4785 = vmatprep.subr.mxu0 0.0
      %v4786 = vand.u32 %v4609, 4294901760
      %v4787 = vsub.f32 %v4609, %v4786
      %v4788 = vand.u32 %v4787, 4294901760
      %v4789 = vsub.f32 %v4787, %v4788
      %v4790 = vand.u32 %v4789, 4294901760
      %4791 = vmatpush1.msra.mxu0 %v4790
      %4792 = vmatprep.subr.mxu0 0.0
      %v4793 = vand.u32 %v4608, 4294901760
      %v4794 = vsub.f32 %v4608, %v4793
      %v4795 = vand.u32 %v4794, 4294901760
      %v4796 = vsub.f32 %v4794, %v4795
      %v4797 = vand.u32 %v4796, 4294901760
      %4798 = vmatpush1.msra.mxu0 %v4797
      %4799 = vmatprep.subr.mxu0 0.0
      %4800 = vmatpush2.msra.mxu0 0.0
      %4801 = vmatprep.subr.mxu0 0.0
      %4802 = vmatpush2.msra.mxu0 0.0
      %4803 = vmatprep.subr.mxu0 0.0
      %4804 = vmatpush2.msra.mxu0 0.0
      %4805 = vmatprep.subr.mxu0 0.0
      %4806 = vmatpush2.msra.mxu0 0.0
      %4807 = vmatprep.subr.mxu0 0.0
      %4808 = vmatpush2.msra.mxu0 0.0
      %4809 = vmatprep.subr.mxu0 0.0
      %4810 = vmatpush2.msra.mxu0 0.0
      %4811 = vmatprep.subr.mxu0 0.0
      %4812 = vmatpush2.msra.mxu0 0.0
      %4813 = vmatprep.subr.mxu0 0.0
      %4814 = vmatpush2.msra.mxu0 0.0
      %4815 = vmatprep.subr.mxu0 0.0
      %4816 = vmatpush2.msra.mxu0 0.0
      %4817 = vmatprep.subr.mxu0 0.0
      %4818 = vmatpush2.msra.mxu0 0.0
      %4819 = vmatprep.subr.mxu0 0.0
      %4820 = vmatpush2.msra.mxu0 0.0
      %4821 = vmatprep.subr.mxu0 0.0
      %4822 = vmatpush2.msra.mxu0 0.0
      %4823 = vmatprep.subr.mxu0 0.0
      %4824 = vmatpush2.msra.mxu0 0.0
      %4825 = vmatprep.subr.mxu0 0.0
      %4826 = vmatpush2.msra.mxu0 0.0
      %4827 = vmatprep.subr.mxu0 0.0
      %4828 = vmatpush2.msra.mxu0 0.0
      %4829 = vmatprep.subr.mxu0 0.0
      %4830 = vmatpush2.msra.mxu0 0.0
      %4831 = vmatprep.mubr.f32.mxu0 0.0
      %v4832 = vand.u32 %v453, 4294901760
      %4833 = vmatmul.mubr.f32.gmra.mxu0 %v4832
      %v4834 = vpop.f32.mrf.mxu0
      %v4835 = vadd.f32 %v4684, %v4834
      %v4836 = vpop.f32.mrf.mxu0
      %4837 = vmatprep.mubr.f32.mxu0 0.0
      %v4838 = vand.u32 %v456, 4294901760
      %4839 = vmatmul.mubr.f32.gmra.mxu0 %v4838
      %v4840 = vpop.f32.mrf.mxu0
      %v4841 = vadd.f32 %v4694, %v4840
      %v4842 = vpop.f32.mrf.mxu0
      %4843 = vmatprep.mubr.f32.mxu0 0.0
      %v4844 = vand.u32 %v459, 4294901760
      %4845 = vmatmul.mubr.f32.gmra.mxu0 %v4844
      %v4846 = vpop.f32.mrf.mxu0
      %v4847 = vadd.f32 %v4704, %v4846
      %v4848 = vpop.f32.mrf.mxu0
      %4849 = vmatprep.mubr.f32.mxu0 0.0
      %v4850 = vand.u32 %v462, 4294901760
      %4851 = vmatmul.mubr.f32.gmra.mxu0 %v4850
      %v4852 = vpop.f32.mrf.mxu0
      %v4853 = vadd.f32 %v4714, %v4852
      %v4854 = vpop.f32.mrf.mxu0
      %4855 = vmatprep.mubr.f32.mxu0 0.0
      %v4856 = vand.u32 %v465, 4294901760
      %4857 = vmatmul.mubr.f32.gmra.mxu0 %v4856
      %v4858 = vpop.f32.mrf.mxu0
      %v4859 = vadd.f32 %v4724, %v4858
      %v4860 = vpop.f32.mrf.mxu0
      %4861 = vmatprep.mubr.f32.mxu0 0.0
      %v4862 = vand.u32 %v468, 4294901760
      %4863 = vmatmul.mubr.f32.gmra.mxu0 %v4862
      %v4864 = vpop.f32.mrf.mxu0
      %v4865 = vadd.f32 %v4734, %v4864
      %v4866 = vpop.f32.mrf.mxu0
      %4867 = vmatprep.mubr.f32.mxu0 0.0
      %v4868 = vand.u32 %v471, 4294901760
      %4869 = vmatmul.mubr.f32.gmra.mxu0 %v4868
      %v4870 = vpop.f32.mrf.mxu0
      %v4871 = vadd.f32 %v4744, %v4870
      %v4872 = vpop.f32.mrf.mxu0
      %4873 = vmatprep.mubr.f32.mxu0 0.0
      %v4874 = vand.u32 %v474, 4294901760
      %4875 = vmatmul.mubr.f32.gmra.mxu0 %v4874
      %v4876 = vpop.f32.mrf.mxu0
      %v4877 = vadd.f32 %v4754, %v4876
      %v4878 = vpop.f32.mrf.mxu0
      %4879 = vdwg.mxu0
      %4880 = vmatprep.subr.mxu0 0.0
      %4881 = vmatpush1.msra.mxu0 0.0
      %4882 = vmatprep.subr.mxu0 0.0
      %4883 = vmatpush1.msra.mxu0 0.0
      %4884 = vmatprep.subr.mxu0 0.0
      %4885 = vmatpush1.msra.mxu0 0.0
      %4886 = vmatprep.subr.mxu0 0.0
      %4887 = vmatpush1.msra.mxu0 0.0
      %4888 = vmatprep.subr.mxu0 0.0
      %4889 = vmatpush1.msra.mxu0 0.0
      %4890 = vmatprep.subr.mxu0 0.0
      %4891 = vmatpush1.msra.mxu0 0.0
      %4892 = vmatprep.subr.mxu0 0.0
      %4893 = vmatpush1.msra.mxu0 0.0
      %4894 = vmatprep.subr.mxu0 0.0
      %4895 = vmatpush1.msra.mxu0 0.0
      %4896 = vmatprep.subr.mxu0 0.0
      %4897 = vmatpush1.msra.mxu0 0.0
      %4898 = vmatprep.subr.mxu0 0.0
      %4899 = vmatpush1.msra.mxu0 0.0
      %4900 = vmatprep.subr.mxu0 0.0
      %4901 = vmatpush1.msra.mxu0 0.0
      %4902 = vmatprep.subr.mxu0 0.0
      %4903 = vmatpush1.msra.mxu0 0.0
      %4904 = vmatprep.subr.mxu0 0.0
      %4905 = vmatpush1.msra.mxu0 0.0
      %4906 = vmatprep.subr.mxu0 0.0
      %4907 = vmatpush1.msra.mxu0 0.0
      %4908 = vmatprep.subr.mxu0 0.0
      %v4909 = vand.u32 %v4609, 4294901760
      %v4910 = vsub.f32 %v4609, %v4909
      %4911 = vmatpush1.msra.mxu0 %v4910
      %4912 = vmatprep.subr.mxu0 0.0
      %v4913 = vand.u32 %v4608, 4294901760
      %v4914 = vsub.f32 %v4608, %v4913
      %4915 = vmatpush1.msra.mxu0 %v4914
      %4916 = vmatprep.subr.mxu0 0.0
      %4917 = vmatpush2.msra.mxu0 0.0
      %4918 = vmatprep.subr.mxu0 0.0
      %4919 = vmatpush2.msra.mxu0 0.0
      %4920 = vmatprep.subr.mxu0 0.0
      %4921 = vmatpush2.msra.mxu0 0.0
      %4922 = vmatprep.subr.mxu0 0.0
      %4923 = vmatpush2.msra.mxu0 0.0
      %4924 = vmatprep.subr.mxu0 0.0
      %4925 = vmatpush2.msra.mxu0 0.0
      %4926 = vmatprep.subr.mxu0 0.0
      %4927 = vmatpush2.msra.mxu0 0.0
      %4928 = vmatprep.subr.mxu0 0.0
      %4929 = vmatpush2.msra.mxu0 0.0
      %4930 = vmatprep.subr.mxu0 0.0
      %4931 = vmatpush2.msra.mxu0 0.0
      %4932 = vmatprep.subr.mxu0 0.0
      %4933 = vmatpush2.msra.mxu0 0.0
      %4934 = vmatprep.subr.mxu0 0.0
      %4935 = vmatpush2.msra.mxu0 0.0
      %4936 = vmatprep.subr.mxu0 0.0
      %4937 = vmatpush2.msra.mxu0 0.0
      %4938 = vmatprep.subr.mxu0 0.0
      %4939 = vmatpush2.msra.mxu0 0.0
      %4940 = vmatprep.subr.mxu0 0.0
      %4941 = vmatpush2.msra.mxu0 0.0
      %4942 = vmatprep.subr.mxu0 0.0
      %4943 = vmatpush2.msra.mxu0 0.0
      %4944 = vmatprep.subr.mxu0 0.0
      %4945 = vmatpush2.msra.mxu0 0.0
      %4946 = vmatprep.subr.mxu0 0.0
      %4947 = vmatpush2.msra.mxu0 0.0
      %4948 = vmatprep.mubr.f32.mxu0 0.0
      %v4949 = vand.u32 %v453, 4294901760
      %v4950 = vsub.f32 %v453, %v4949
      %4951 = vmatmul.mubr.f32.gmra.mxu0 %v4950
      %v4952 = vpop.f32.mrf.mxu0
      %v4953 = vadd.f32 %v4835, %v4952
      %v4954 = vpop.f32.mrf.mxu0
      %4955 = vmatprep.mubr.f32.mxu0 0.0
      %v4956 = vand.u32 %v456, 4294901760
      %v4957 = vsub.f32 %v456, %v4956
      %4958 = vmatmul.mubr.f32.gmra.mxu0 %v4957
      %v4959 = vpop.f32.mrf.mxu0
      %v4960 = vadd.f32 %v4841, %v4959
      %v4961 = vpop.f32.mrf.mxu0
      %4962 = vmatprep.mubr.f32.mxu0 0.0
      %v4963 = vand.u32 %v459, 4294901760
      %v4964 = vsub.f32 %v459, %v4963
      %4965 = vmatmul.mubr.f32.gmra.mxu0 %v4964
      %v4966 = vpop.f32.mrf.mxu0
      %v4967 = vadd.f32 %v4847, %v4966
      %v4968 = vpop.f32.mrf.mxu0
      %4969 = vmatprep.mubr.f32.mxu0 0.0
      %v4970 = vand.u32 %v462, 4294901760
      %v4971 = vsub.f32 %v462, %v4970
      %4972 = vmatmul.mubr.f32.gmra.mxu0 %v4971
      %v4973 = vpop.f32.mrf.mxu0
      %v4974 = vadd.f32 %v4853, %v4973
      %v4975 = vpop.f32.mrf.mxu0
      %4976 = vmatprep.mubr.f32.mxu0 0.0
      %v4977 = vand.u32 %v465, 4294901760
      %v4978 = vsub.f32 %v465, %v4977
      %4979 = vmatmul.mubr.f32.gmra.mxu0 %v4978
      %v4980 = vpop.f32.mrf.mxu0
      %v4981 = vadd.f32 %v4859, %v4980
      %v4982 = vpop.f32.mrf.mxu0
      %4983 = vmatprep.mubr.f32.mxu0 0.0
      %v4984 = vand.u32 %v468, 4294901760
      %v4985 = vsub.f32 %v468, %v4984
      %4986 = vmatmul.mubr.f32.gmra.mxu0 %v4985
      %v4987 = vpop.f32.mrf.mxu0
      %v4988 = vadd.f32 %v4865, %v4987
      %v4989 = vpop.f32.mrf.mxu0
      %4990 = vmatprep.mubr.f32.mxu0 0.0
      %v4991 = vand.u32 %v471, 4294901760
      %v4992 = vsub.f32 %v471, %v4991
      %4993 = vmatmul.mubr.f32.gmra.mxu0 %v4992
      %v4994 = vpop.f32.mrf.mxu0
      %v4995 = vadd.f32 %v4871, %v4994
      %v4996 = vpop.f32.mrf.mxu0
      %4997 = vmatprep.mubr.f32.mxu0 0.0
      %v4998 = vand.u32 %v474, 4294901760
      %v4999 = vsub.f32 %v474, %v4998
      %5000 = vmatmul.mubr.f32.gmra.mxu0 %v4999
      %v5001 = vpop.f32.mrf.mxu0
      %v5002 = vadd.f32 %v4877, %v5001
      %v5003 = vpop.f32.mrf.mxu0
      %5004 = vdwg.mxu0
      %5005 = vmatprep.subr.mxu0 0.0
      %5006 = vmatpush1.msra.mxu0 0.0
      %5007 = vmatprep.subr.mxu0 0.0
      %5008 = vmatpush1.msra.mxu0 0.0
      %5009 = vmatprep.subr.mxu0 0.0
      %5010 = vmatpush1.msra.mxu0 0.0
      %5011 = vmatprep.subr.mxu0 0.0
      %5012 = vmatpush1.msra.mxu0 0.0
      %5013 = vmatprep.subr.mxu0 0.0
      %5014 = vmatpush1.msra.mxu0 0.0
      %5015 = vmatprep.subr.mxu0 0.0
      %5016 = vmatpush1.msra.mxu0 0.0
      %5017 = vmatprep.subr.mxu0 0.0
      %5018 = vmatpush1.msra.mxu0 0.0
      %5019 = vmatprep.subr.mxu0 0.0
      %5020 = vmatpush1.msra.mxu0 0.0
      %5021 = vmatprep.subr.mxu0 0.0
      %5022 = vmatpush1.msra.mxu0 0.0
      %5023 = vmatprep.subr.mxu0 0.0
      %5024 = vmatpush1.msra.mxu0 0.0
      %5025 = vmatprep.subr.mxu0 0.0
      %5026 = vmatpush1.msra.mxu0 0.0
      %5027 = vmatprep.subr.mxu0 0.0
      %5028 = vmatpush1.msra.mxu0 0.0
      %5029 = vmatprep.subr.mxu0 0.0
      %5030 = vmatpush1.msra.mxu0 0.0
      %5031 = vmatprep.subr.mxu0 0.0
      %5032 = vmatpush1.msra.mxu0 0.0
      %5033 = vmatprep.subr.mxu0 0.0
      %v5034 = vand.u32 %v4609, 4294901760
      %5035 = vmatpush1.msra.mxu0 %v5034
      %5036 = vmatprep.subr.mxu0 0.0
      %v5037 = vand.u32 %v4608, 4294901760
      %5038 = vmatpush1.msra.mxu0 %v5037
      %5039 = vmatprep.subr.mxu0 0.0
      %5040 = vmatpush2.msra.mxu0 0.0
      %5041 = vmatprep.subr.mxu0 0.0
      %5042 = vmatpush2.msra.mxu0 0.0
      %5043 = vmatprep.subr.mxu0 0.0
      %5044 = vmatpush2.msra.mxu0 0.0
      %5045 = vmatprep.subr.mxu0 0.0
      %5046 = vmatpush2.msra.mxu0 0.0
      %5047 = vmatprep.subr.mxu0 0.0
      %5048 = vmatpush2.msra.mxu0 0.0
      %5049 = vmatprep.subr.mxu0 0.0
      %5050 = vmatpush2.msra.mxu0 0.0
      %5051 = vmatprep.subr.mxu0 0.0
      %5052 = vmatpush2.msra.mxu0 0.0
      %5053 = vmatprep.subr.mxu0 0.0
      %5054 = vmatpush2.msra.mxu0 0.0
      %5055 = vmatprep.subr.mxu0 0.0
      %5056 = vmatpush2.msra.mxu0 0.0
      %5057 = vmatprep.subr.mxu0 0.0
      %5058 = vmatpush2.msra.mxu0 0.0
      %5059 = vmatprep.subr.mxu0 0.0
      %5060 = vmatpush2.msra.mxu0 0.0
      %5061 = vmatprep.subr.mxu0 0.0
      %5062 = vmatpush2.msra.mxu0 0.0
      %5063 = vmatprep.subr.mxu0 0.0
      %5064 = vmatpush2.msra.mxu0 0.0
      %5065 = vmatprep.subr.mxu0 0.0
      %5066 = vmatpush2.msra.mxu0 0.0
      %5067 = vmatprep.subr.mxu0 0.0
      %5068 = vmatpush2.msra.mxu0 0.0
      %5069 = vmatprep.subr.mxu0 0.0
      %5070 = vmatpush2.msra.mxu0 0.0
      %5071 = vmatprep.mubr.f32.mxu0 0.0
      %v5072 = vand.u32 %v453, 4294901760
      %v5073 = vsub.f32 %v453, %v5072
      %v5074 = vand.u32 %v5073, 4294901760
      %5075 = vmatmul.mubr.f32.gmra.mxu0 %v5074
      %v5076 = vpop.f32.mrf.mxu0
      %v5077 = vadd.f32 %v4953, %v5076
      %v5078 = vpop.f32.mrf.mxu0
      %5079 = vmatprep.mubr.f32.mxu0 0.0
      %v5080 = vand.u32 %v456, 4294901760
      %v5081 = vsub.f32 %v456, %v5080
      %v5082 = vand.u32 %v5081, 4294901760
      %5083 = vmatmul.mubr.f32.gmra.mxu0 %v5082
      %v5084 = vpop.f32.mrf.mxu0
      %v5085 = vadd.f32 %v4960, %v5084
      %v5086 = vpop.f32.mrf.mxu0
      %5087 = vmatprep.mubr.f32.mxu0 0.0
      %v5088 = vand.u32 %v459, 4294901760
      %v5089 = vsub.f32 %v459, %v5088
      %v5090 = vand.u32 %v5089, 4294901760
      %5091 = vmatmul.mubr.f32.gmra.mxu0 %v5090
      %v5092 = vpop.f32.mrf.mxu0
      %v5093 = vadd.f32 %v4967, %v5092
      %v5094 = vpop.f32.mrf.mxu0
      %5095 = vmatprep.mubr.f32.mxu0 0.0
      %v5096 = vand.u32 %v462, 4294901760
      %v5097 = vsub.f32 %v462, %v5096
      %v5098 = vand.u32 %v5097, 4294901760
      %5099 = vmatmul.mubr.f32.gmra.mxu0 %v5098
      %v5100 = vpop.f32.mrf.mxu0
      %v5101 = vadd.f32 %v4974, %v5100
      %v5102 = vpop.f32.mrf.mxu0
      %5103 = vmatprep.mubr.f32.mxu0 0.0
      %v5104 = vand.u32 %v465, 4294901760
      %v5105 = vsub.f32 %v465, %v5104
      %v5106 = vand.u32 %v5105, 4294901760
      %5107 = vmatmul.mubr.f32.gmra.mxu0 %v5106
      %v5108 = vpop.f32.mrf.mxu0
      %v5109 = vadd.f32 %v4981, %v5108
      %v5110 = vpop.f32.mrf.mxu0
      %5111 = vmatprep.mubr.f32.mxu0 0.0
      %v5112 = vand.u32 %v468, 4294901760
      %v5113 = vsub.f32 %v468, %v5112
      %v5114 = vand.u32 %v5113, 4294901760
      %5115 = vmatmul.mubr.f32.gmra.mxu0 %v5114
      %v5116 = vpop.f32.mrf.mxu0
      %v5117 = vadd.f32 %v4988, %v5116
      %v5118 = vpop.f32.mrf.mxu0
      %5119 = vmatprep.mubr.f32.mxu0 0.0
      %v5120 = vand.u32 %v471, 4294901760
      %v5121 = vsub.f32 %v471, %v5120
      %v5122 = vand.u32 %v5121, 4294901760
      %5123 = vmatmul.mubr.f32.gmra.mxu0 %v5122
      %v5124 = vpop.f32.mrf.mxu0
      %v5125 = vadd.f32 %v4995, %v5124
      %v5126 = vpop.f32.mrf.mxu0
      %5127 = vmatprep.mubr.f32.mxu0 0.0
      %v5128 = vand.u32 %v474, 4294901760
      %v5129 = vsub.f32 %v474, %v5128
      %v5130 = vand.u32 %v5129, 4294901760
      %5131 = vmatmul.mubr.f32.gmra.mxu0 %v5130
      %v5132 = vpop.f32.mrf.mxu0
      %v5133 = vadd.f32 %v5002, %v5132
      %v5134 = vpop.f32.mrf.mxu0
      %5135 = vdwg.mxu0
      %5136 = vmatprep.subr.mxu0 0.0
      %5137 = vmatpush1.msra.mxu0 0.0
      %5138 = vmatprep.subr.mxu0 0.0
      %5139 = vmatpush1.msra.mxu0 0.0
      %5140 = vmatprep.subr.mxu0 0.0
      %5141 = vmatpush1.msra.mxu0 0.0
      %5142 = vmatprep.subr.mxu0 0.0
      %5143 = vmatpush1.msra.mxu0 0.0
      %5144 = vmatprep.subr.mxu0 0.0
      %5145 = vmatpush1.msra.mxu0 0.0
      %5146 = vmatprep.subr.mxu0 0.0
      %5147 = vmatpush1.msra.mxu0 0.0
      %5148 = vmatprep.subr.mxu0 0.0
      %5149 = vmatpush1.msra.mxu0 0.0
      %5150 = vmatprep.subr.mxu0 0.0
      %5151 = vmatpush1.msra.mxu0 0.0
      %5152 = vmatprep.subr.mxu0 0.0
      %5153 = vmatpush1.msra.mxu0 0.0
      %5154 = vmatprep.subr.mxu0 0.0
      %5155 = vmatpush1.msra.mxu0 0.0
      %5156 = vmatprep.subr.mxu0 0.0
      %5157 = vmatpush1.msra.mxu0 0.0
      %5158 = vmatprep.subr.mxu0 0.0
      %5159 = vmatpush1.msra.mxu0 0.0
      %5160 = vmatprep.subr.mxu0 0.0
      %5161 = vmatpush1.msra.mxu0 0.0
      %5162 = vmatprep.subr.mxu0 0.0
      %5163 = vmatpush1.msra.mxu0 0.0
      %5164 = vmatprep.subr.mxu0 0.0
      %v5165 = vand.u32 %v4609, 4294901760
      %v5166 = vsub.f32 %v4609, %v5165
      %v5167 = vand.u32 %v5166, 4294901760
      %5168 = vmatpush1.msra.mxu0 %v5167
      %5169 = vmatprep.subr.mxu0 0.0
      %v5170 = vand.u32 %v4608, 4294901760
      %v5171 = vsub.f32 %v4608, %v5170
      %v5172 = vand.u32 %v5171, 4294901760
      %5173 = vmatpush1.msra.mxu0 %v5172
      %5174 = vmatprep.subr.mxu0 0.0
      %5175 = vmatpush2.msra.mxu0 0.0
      %5176 = vmatprep.subr.mxu0 0.0
      %5177 = vmatpush2.msra.mxu0 0.0
      %5178 = vmatprep.subr.mxu0 0.0
      %5179 = vmatpush2.msra.mxu0 0.0
      %5180 = vmatprep.subr.mxu0 0.0
      %5181 = vmatpush2.msra.mxu0 0.0
      %5182 = vmatprep.subr.mxu0 0.0
      %5183 = vmatpush2.msra.mxu0 0.0
      %5184 = vmatprep.subr.mxu0 0.0
      %5185 = vmatpush2.msra.mxu0 0.0
      %5186 = vmatprep.subr.mxu0 0.0
      %5187 = vmatpush2.msra.mxu0 0.0
      %5188 = vmatprep.subr.mxu0 0.0
      %5189 = vmatpush2.msra.mxu0 0.0
      %5190 = vmatprep.subr.mxu0 0.0
      %5191 = vmatpush2.msra.mxu0 0.0
      %5192 = vmatprep.subr.mxu0 0.0
      %5193 = vmatpush2.msra.mxu0 0.0
      %5194 = vmatprep.subr.mxu0 0.0
      %5195 = vmatpush2.msra.mxu0 0.0
      %5196 = vmatprep.subr.mxu0 0.0
      %5197 = vmatpush2.msra.mxu0 0.0
      %5198 = vmatprep.subr.mxu0 0.0
      %5199 = vmatpush2.msra.mxu0 0.0
      %5200 = vmatprep.subr.mxu0 0.0
      %5201 = vmatpush2.msra.mxu0 0.0
      %5202 = vmatprep.subr.mxu0 0.0
      %5203 = vmatpush2.msra.mxu0 0.0
      %5204 = vmatprep.subr.mxu0 0.0
      %5205 = vmatpush2.msra.mxu0 0.0
      %5206 = vmatprep.mubr.f32.mxu0 0.0
      %v5207 = vand.u32 %v453, 4294901760
      %5208 = vmatmul.mubr.f32.gmra.mxu0 %v5207
      %v5209 = vpop.f32.mrf.mxu0
      %v5210 = vadd.f32 %v5077, %v5209
      %v5211 = vpop.f32.mrf.mxu0
      %5212 = vmatprep.mubr.f32.mxu0 0.0
      %v5213 = vand.u32 %v456, 4294901760
      %5214 = vmatmul.mubr.f32.gmra.mxu0 %v5213
      %v5215 = vpop.f32.mrf.mxu0
      %v5216 = vadd.f32 %v5085, %v5215
      %v5217 = vpop.f32.mrf.mxu0
      %5218 = vmatprep.mubr.f32.mxu0 0.0
      %v5219 = vand.u32 %v459, 4294901760
      %5220 = vmatmul.mubr.f32.gmra.mxu0 %v5219
      %v5221 = vpop.f32.mrf.mxu0
      %v5222 = vadd.f32 %v5093, %v5221
      %v5223 = vpop.f32.mrf.mxu0
      %5224 = vmatprep.mubr.f32.mxu0 0.0
      %v5225 = vand.u32 %v462, 4294901760
      %5226 = vmatmul.mubr.f32.gmra.mxu0 %v5225
      %v5227 = vpop.f32.mrf.mxu0
      %v5228 = vadd.f32 %v5101, %v5227
      %v5229 = vpop.f32.mrf.mxu0
      %5230 = vmatprep.mubr.f32.mxu0 0.0
      %v5231 = vand.u32 %v465, 4294901760
      %5232 = vmatmul.mubr.f32.gmra.mxu0 %v5231
      %v5233 = vpop.f32.mrf.mxu0
      %v5234 = vadd.f32 %v5109, %v5233
      %v5235 = vpop.f32.mrf.mxu0
      %5236 = vmatprep.mubr.f32.mxu0 0.0
      %v5237 = vand.u32 %v468, 4294901760
      %5238 = vmatmul.mubr.f32.gmra.mxu0 %v5237
      %v5239 = vpop.f32.mrf.mxu0
      %v5240 = vadd.f32 %v5117, %v5239
      %v5241 = vpop.f32.mrf.mxu0
      %5242 = vmatprep.mubr.f32.mxu0 0.0
      %v5243 = vand.u32 %v471, 4294901760
      %5244 = vmatmul.mubr.f32.gmra.mxu0 %v5243
      %v5245 = vpop.f32.mrf.mxu0
      %v5246 = vadd.f32 %v5125, %v5245
      %v5247 = vpop.f32.mrf.mxu0
      %5248 = vmatprep.mubr.f32.mxu0 0.0
      %v5249 = vand.u32 %v474, 4294901760
      %5250 = vmatmul.mubr.f32.gmra.mxu0 %v5249
      %v5251 = vpop.f32.mrf.mxu0
      %v5252 = vadd.f32 %v5133, %v5251
      %v5253 = vpop.f32.mrf.mxu0
      %5254 = vdwg.mxu0
      %5255 = vmatprep.subr.mxu0 0.0
      %5256 = vmatpush1.msra.mxu0 0.0
      %5257 = vmatprep.subr.mxu0 0.0
      %5258 = vmatpush1.msra.mxu0 0.0
      %5259 = vmatprep.subr.mxu0 0.0
      %5260 = vmatpush1.msra.mxu0 0.0
      %5261 = vmatprep.subr.mxu0 0.0
      %5262 = vmatpush1.msra.mxu0 0.0
      %5263 = vmatprep.subr.mxu0 0.0
      %5264 = vmatpush1.msra.mxu0 0.0
      %5265 = vmatprep.subr.mxu0 0.0
      %5266 = vmatpush1.msra.mxu0 0.0
      %5267 = vmatprep.subr.mxu0 0.0
      %5268 = vmatpush1.msra.mxu0 0.0
      %5269 = vmatprep.subr.mxu0 0.0
      %5270 = vmatpush1.msra.mxu0 0.0
      %5271 = vmatprep.subr.mxu0 0.0
      %5272 = vmatpush1.msra.mxu0 0.0
      %5273 = vmatprep.subr.mxu0 0.0
      %5274 = vmatpush1.msra.mxu0 0.0
      %5275 = vmatprep.subr.mxu0 0.0
      %5276 = vmatpush1.msra.mxu0 0.0
      %5277 = vmatprep.subr.mxu0 0.0
      %5278 = vmatpush1.msra.mxu0 0.0
      %5279 = vmatprep.subr.mxu0 0.0
      %5280 = vmatpush1.msra.mxu0 0.0
      %5281 = vmatprep.subr.mxu0 0.0
      %5282 = vmatpush1.msra.mxu0 0.0
      %5283 = vmatprep.subr.mxu0 0.0
      %v5284 = vand.u32 %v4609, 4294901760
      %5285 = vmatpush1.msra.mxu0 %v5284
      %5286 = vmatprep.subr.mxu0 0.0
      %v5287 = vand.u32 %v4608, 4294901760
      %5288 = vmatpush1.msra.mxu0 %v5287
      %5289 = vmatprep.subr.mxu0 0.0
      %5290 = vmatpush2.msra.mxu0 0.0
      %5291 = vmatprep.subr.mxu0 0.0
      %5292 = vmatpush2.msra.mxu0 0.0
      %5293 = vmatprep.subr.mxu0 0.0
      %5294 = vmatpush2.msra.mxu0 0.0
      %5295 = vmatprep.subr.mxu0 0.0
      %5296 = vmatpush2.msra.mxu0 0.0
      %5297 = vmatprep.subr.mxu0 0.0
      %5298 = vmatpush2.msra.mxu0 0.0
      %5299 = vmatprep.subr.mxu0 0.0
      %5300 = vmatpush2.msra.mxu0 0.0
      %5301 = vmatprep.subr.mxu0 0.0
      %5302 = vmatpush2.msra.mxu0 0.0
      %5303 = vmatprep.subr.mxu0 0.0
      %5304 = vmatpush2.msra.mxu0 0.0
      %5305 = vmatprep.subr.mxu0 0.0
      %5306 = vmatpush2.msra.mxu0 0.0
      %5307 = vmatprep.subr.mxu0 0.0
      %5308 = vmatpush2.msra.mxu0 0.0
      %5309 = vmatprep.subr.mxu0 0.0
      %5310 = vmatpush2.msra.mxu0 0.0
      %5311 = vmatprep.subr.mxu0 0.0
      %5312 = vmatpush2.msra.mxu0 0.0
      %5313 = vmatprep.subr.mxu0 0.0
      %5314 = vmatpush2.msra.mxu0 0.0
      %5315 = vmatprep.subr.mxu0 0.0
      %5316 = vmatpush2.msra.mxu0 0.0
      %5317 = vmatprep.subr.mxu0 0.0
      %5318 = vmatpush2.msra.mxu0 0.0
      %5319 = vmatprep.subr.mxu0 0.0
      %5320 = vmatpush2.msra.mxu0 0.0
      %5321 = vmatprep.mubr.f32.mxu0 0.0
      %v5322 = vand.u32 %v453, 4294901760
      %5323 = vmatmul.mubr.f32.gmra.mxu0 %v5322
      %v5324 = vpop.f32.mrf.mxu0
      %v5325 = vadd.f32 %v5210, %v5324
      %v5326 = vpop.f32.mrf.mxu0
      %5327 = vmatprep.mubr.f32.mxu0 0.0
      %v5328 = vand.u32 %v456, 4294901760
      %5329 = vmatmul.mubr.f32.gmra.mxu0 %v5328
      %v5330 = vpop.f32.mrf.mxu0
      %v5331 = vadd.f32 %v5216, %v5330
      %v5332 = vpop.f32.mrf.mxu0
      %5333 = vmatprep.mubr.f32.mxu0 0.0
      %v5334 = vand.u32 %v459, 4294901760
      %5335 = vmatmul.mubr.f32.gmra.mxu0 %v5334
      %v5336 = vpop.f32.mrf.mxu0
      %v5337 = vadd.f32 %v5222, %v5336
      %v5338 = vpop.f32.mrf.mxu0
      %5339 = vmatprep.mubr.f32.mxu0 0.0
      %v5340 = vand.u32 %v462, 4294901760
      %5341 = vmatmul.mubr.f32.gmra.mxu0 %v5340
      %v5342 = vpop.f32.mrf.mxu0
      %v5343 = vadd.f32 %v5228, %v5342
      %v5344 = vpop.f32.mrf.mxu0
      %5345 = vmatprep.mubr.f32.mxu0 0.0
      %v5346 = vand.u32 %v465, 4294901760
      %5347 = vmatmul.mubr.f32.gmra.mxu0 %v5346
      %v5348 = vpop.f32.mrf.mxu0
      %v5349 = vadd.f32 %v5234, %v5348
      %v5350 = vpop.f32.mrf.mxu0
      %5351 = vmatprep.mubr.f32.mxu0 0.0
      %v5352 = vand.u32 %v468, 4294901760
      %5353 = vmatmul.mubr.f32.gmra.mxu0 %v5352
      %v5354 = vpop.f32.mrf.mxu0
      %v5355 = vadd.f32 %v5240, %v5354
      %v5356 = vpop.f32.mrf.mxu0
      %5357 = vmatprep.mubr.f32.mxu0 0.0
      %v5358 = vand.u32 %v471, 4294901760
      %5359 = vmatmul.mubr.f32.gmra.mxu0 %v5358
      %v5360 = vpop.f32.mrf.mxu0
      %v5361 = vadd.f32 %v5246, %v5360
      %v5362 = vpop.f32.mrf.mxu0
      %5363 = vmatprep.mubr.f32.mxu0 0.0
      %v5364 = vand.u32 %v474, 4294901760
      %5365 = vmatmul.mubr.f32.gmra.mxu0 %v5364
      %v5366 = vpop.f32.mrf.mxu0
      %v5367 = vadd.f32 %v5252, %v5366
      %v5368 = vpop.f32.mrf.mxu0
      %5369 = vdwg.mxu0
      %s5370 = scalar_lea.vmem %s4, 16
      %v5371 = vld [vmem:[%s5370] sm:$0xff]
      %v5372 = vld [vmem:[%s5370 + $0x8] sm:$0xff]
      %5373 = vmatprep.subr.mxu0 0.0
      %5374 = vmatpush1.msra.mxu0 0.0
      %5375 = vmatprep.subr.mxu0 0.0
      %5376 = vmatpush1.msra.mxu0 0.0
      %5377 = vmatprep.subr.mxu0 0.0
      %5378 = vmatpush1.msra.mxu0 0.0
      %5379 = vmatprep.subr.mxu0 0.0
      %5380 = vmatpush1.msra.mxu0 0.0
      %5381 = vmatprep.subr.mxu0 0.0
      %5382 = vmatpush1.msra.mxu0 0.0
      %5383 = vmatprep.subr.mxu0 0.0
      %5384 = vmatpush1.msra.mxu0 0.0
      %5385 = vmatprep.subr.mxu0 0.0
      %5386 = vmatpush1.msra.mxu0 0.0
      %5387 = vmatprep.subr.mxu0 0.0
      %5388 = vmatpush1.msra.mxu0 0.0
      %5389 = vmatprep.subr.mxu0 0.0
      %5390 = vmatpush1.msra.mxu0 0.0
      %5391 = vmatprep.subr.mxu0 0.0
      %5392 = vmatpush1.msra.mxu0 0.0
      %5393 = vmatprep.subr.mxu0 0.0
      %5394 = vmatpush1.msra.mxu0 0.0
      %5395 = vmatprep.subr.mxu0 0.0
      %5396 = vmatpush1.msra.mxu0 0.0
      %5397 = vmatprep.subr.mxu0 0.0
      %5398 = vmatpush1.msra.mxu0 0.0
      %5399 = vmatprep.subr.mxu0 0.0
      %5400 = vmatpush1.msra.mxu0 0.0
      %5401 = vmatprep.subr.mxu0 0.0
      %v5402 = vand.u32 %v5372, 4294901760
      %5403 = vmatpush1.msra.mxu0 %v5402
      %5404 = vmatprep.subr.mxu0 0.0
      %v5405 = vand.u32 %v5371, 4294901760
      %5406 = vmatpush1.msra.mxu0 %v5405
      %5407 = vmatprep.subr.mxu0 0.0
      %5408 = vmatpush2.msra.mxu0 0.0
      %5409 = vmatprep.subr.mxu0 0.0
      %5410 = vmatpush2.msra.mxu0 0.0
      %5411 = vmatprep.subr.mxu0 0.0
      %5412 = vmatpush2.msra.mxu0 0.0
      %5413 = vmatprep.subr.mxu0 0.0
      %5414 = vmatpush2.msra.mxu0 0.0
      %5415 = vmatprep.subr.mxu0 0.0
      %5416 = vmatpush2.msra.mxu0 0.0
      %5417 = vmatprep.subr.mxu0 0.0
      %5418 = vmatpush2.msra.mxu0 0.0
      %5419 = vmatprep.subr.mxu0 0.0
      %5420 = vmatpush2.msra.mxu0 0.0
      %5421 = vmatprep.subr.mxu0 0.0
      %5422 = vmatpush2.msra.mxu0 0.0
      %5423 = vmatprep.subr.mxu0 0.0
      %5424 = vmatpush2.msra.mxu0 0.0
      %5425 = vmatprep.subr.mxu0 0.0
      %5426 = vmatpush2.msra.mxu0 0.0
      %5427 = vmatprep.subr.mxu0 0.0
      %5428 = vmatpush2.msra.mxu0 0.0
      %5429 = vmatprep.subr.mxu0 0.0
      %5430 = vmatpush2.msra.mxu0 0.0
      %5431 = vmatprep.subr.mxu0 0.0
      %5432 = vmatpush2.msra.mxu0 0.0
      %5433 = vmatprep.subr.mxu0 0.0
      %5434 = vmatpush2.msra.mxu0 0.0
      %5435 = vmatprep.subr.mxu0 0.0
      %5436 = vmatpush2.msra.mxu0 0.0
      %5437 = vmatprep.subr.mxu0 0.0
      %5438 = vmatpush2.msra.mxu0 0.0
      %5439 = vmatprep.mubr.f32.mxu0 0.0
      %v5440 = vand.u32 %v453, 4294901760
      %v5441 = vsub.f32 %v453, %v5440
      %v5442 = vand.u32 %v5441, 4294901760
      %v5443 = vsub.f32 %v5441, %v5442
      %v5444 = vand.u32 %v5443, 4294901760
      %5445 = vmatmul.mubr.f32.gmra.mxu0 %v5444
      %v5446 = vpop.f32.mrf.mxu0
      %v5447 = vadd.f32 0.0, %v5446
      %v5448 = vpop.f32.mrf.mxu0
      %5449 = vmatprep.mubr.f32.mxu0 0.0
      %v5450 = vand.u32 %v456, 4294901760
      %v5451 = vsub.f32 %v456, %v5450
      %v5452 = vand.u32 %v5451, 4294901760
      %v5453 = vsub.f32 %v5451, %v5452
      %v5454 = vand.u32 %v5453, 4294901760
      %5455 = vmatmul.mubr.f32.gmra.mxu0 %v5454
      %v5456 = vpop.f32.mrf.mxu0
      %v5457 = vadd.f32 0.0, %v5456
      %v5458 = vpop.f32.mrf.mxu0
      %5459 = vmatprep.mubr.f32.mxu0 0.0
      %v5460 = vand.u32 %v459, 4294901760
      %v5461 = vsub.f32 %v459, %v5460
      %v5462 = vand.u32 %v5461, 4294901760
      %v5463 = vsub.f32 %v5461, %v5462
      %v5464 = vand.u32 %v5463, 4294901760
      %5465 = vmatmul.mubr.f32.gmra.mxu0 %v5464
      %v5466 = vpop.f32.mrf.mxu0
      %v5467 = vadd.f32 0.0, %v5466
      %v5468 = vpop.f32.mrf.mxu0
      %5469 = vmatprep.mubr.f32.mxu0 0.0
      %v5470 = vand.u32 %v462, 4294901760
      %v5471 = vsub.f32 %v462, %v5470
      %v5472 = vand.u32 %v5471, 4294901760
      %v5473 = vsub.f32 %v5471, %v5472
      %v5474 = vand.u32 %v5473, 4294901760
      %5475 = vmatmul.mubr.f32.gmra.mxu0 %v5474
      %v5476 = vpop.f32.mrf.mxu0
      %v5477 = vadd.f32 0.0, %v5476
      %v5478 = vpop.f32.mrf.mxu0
      %5479 = vmatprep.mubr.f32.mxu0 0.0
      %v5480 = vand.u32 %v465, 4294901760
      %v5481 = vsub.f32 %v465, %v5480
      %v5482 = vand.u32 %v5481, 4294901760
      %v5483 = vsub.f32 %v5481, %v5482
      %v5484 = vand.u32 %v5483, 4294901760
      %5485 = vmatmul.mubr.f32.gmra.mxu0 %v5484
      %v5486 = vpop.f32.mrf.mxu0
      %v5487 = vadd.f32 0.0, %v5486
      %v5488 = vpop.f32.mrf.mxu0
      %5489 = vmatprep.mubr.f32.mxu0 0.0
      %v5490 = vand.u32 %v468, 4294901760
      %v5491 = vsub.f32 %v468, %v5490
      %v5492 = vand.u32 %v5491, 4294901760
      %v5493 = vsub.f32 %v5491, %v5492
      %v5494 = vand.u32 %v5493, 4294901760
      %5495 = vmatmul.mubr.f32.gmra.mxu0 %v5494
      %v5496 = vpop.f32.mrf.mxu0
      %v5497 = vadd.f32 0.0, %v5496
      %v5498 = vpop.f32.mrf.mxu0
      %5499 = vmatprep.mubr.f32.mxu0 0.0
      %v5500 = vand.u32 %v471, 4294901760
      %v5501 = vsub.f32 %v471, %v5500
      %v5502 = vand.u32 %v5501, 4294901760
      %v5503 = vsub.f32 %v5501, %v5502
      %v5504 = vand.u32 %v5503, 4294901760
      %5505 = vmatmul.mubr.f32.gmra.mxu0 %v5504
      %v5506 = vpop.f32.mrf.mxu0
      %v5507 = vadd.f32 0.0, %v5506
      %v5508 = vpop.f32.mrf.mxu0
      %5509 = vmatprep.mubr.f32.mxu0 0.0
      %v5510 = vand.u32 %v474, 4294901760
      %v5511 = vsub.f32 %v474, %v5510
      %v5512 = vand.u32 %v5511, 4294901760
      %v5513 = vsub.f32 %v5511, %v5512
      %v5514 = vand.u32 %v5513, 4294901760
      %5515 = vmatmul.mubr.f32.gmra.mxu0 %v5514
      %v5516 = vpop.f32.mrf.mxu0
      %v5517 = vadd.f32 0.0, %v5516
      %v5518 = vpop.f32.mrf.mxu0
      %5519 = vdwg.mxu0
      %5520 = vmatprep.subr.mxu0 0.0
      %5521 = vmatpush1.msra.mxu0 0.0
      %5522 = vmatprep.subr.mxu0 0.0
      %5523 = vmatpush1.msra.mxu0 0.0
      %5524 = vmatprep.subr.mxu0 0.0
      %5525 = vmatpush1.msra.mxu0 0.0
      %5526 = vmatprep.subr.mxu0 0.0
      %5527 = vmatpush1.msra.mxu0 0.0
      %5528 = vmatprep.subr.mxu0 0.0
      %5529 = vmatpush1.msra.mxu0 0.0
      %5530 = vmatprep.subr.mxu0 0.0
      %5531 = vmatpush1.msra.mxu0 0.0
      %5532 = vmatprep.subr.mxu0 0.0
      %5533 = vmatpush1.msra.mxu0 0.0
      %5534 = vmatprep.subr.mxu0 0.0
      %5535 = vmatpush1.msra.mxu0 0.0
      %5536 = vmatprep.subr.mxu0 0.0
      %5537 = vmatpush1.msra.mxu0 0.0
      %5538 = vmatprep.subr.mxu0 0.0
      %5539 = vmatpush1.msra.mxu0 0.0
      %5540 = vmatprep.subr.mxu0 0.0
      %5541 = vmatpush1.msra.mxu0 0.0
      %5542 = vmatprep.subr.mxu0 0.0
      %5543 = vmatpush1.msra.mxu0 0.0
      %5544 = vmatprep.subr.mxu0 0.0
      %5545 = vmatpush1.msra.mxu0 0.0
      %5546 = vmatprep.subr.mxu0 0.0
      %5547 = vmatpush1.msra.mxu0 0.0
      %5548 = vmatprep.subr.mxu0 0.0
      %v5549 = vand.u32 %v5372, 4294901760
      %v5550 = vsub.f32 %v5372, %v5549
      %v5551 = vand.u32 %v5550, 4294901760
      %v5552 = vsub.f32 %v5550, %v5551
      %v5553 = vand.u32 %v5552, 4294901760
      %5554 = vmatpush1.msra.mxu0 %v5553
      %5555 = vmatprep.subr.mxu0 0.0
      %v5556 = vand.u32 %v5371, 4294901760
      %v5557 = vsub.f32 %v5371, %v5556
      %v5558 = vand.u32 %v5557, 4294901760
      %v5559 = vsub.f32 %v5557, %v5558
      %v5560 = vand.u32 %v5559, 4294901760
      %5561 = vmatpush1.msra.mxu0 %v5560
      %5562 = vmatprep.subr.mxu0 0.0
      %5563 = vmatpush2.msra.mxu0 0.0
      %5564 = vmatprep.subr.mxu0 0.0
      %5565 = vmatpush2.msra.mxu0 0.0
      %5566 = vmatprep.subr.mxu0 0.0
      %5567 = vmatpush2.msra.mxu0 0.0
      %5568 = vmatprep.subr.mxu0 0.0
      %5569 = vmatpush2.msra.mxu0 0.0
      %5570 = vmatprep.subr.mxu0 0.0
      %5571 = vmatpush2.msra.mxu0 0.0
      %5572 = vmatprep.subr.mxu0 0.0
      %5573 = vmatpush2.msra.mxu0 0.0
      %5574 = vmatprep.subr.mxu0 0.0
      %5575 = vmatpush2.msra.mxu0 0.0
      %5576 = vmatprep.subr.mxu0 0.0
      %5577 = vmatpush2.msra.mxu0 0.0
      %5578 = vmatprep.subr.mxu0 0.0
      %5579 = vmatpush2.msra.mxu0 0.0
      %5580 = vmatprep.subr.mxu0 0.0
      %5581 = vmatpush2.msra.mxu0 0.0
      %5582 = vmatprep.subr.mxu0 0.0
      %5583 = vmatpush2.msra.mxu0 0.0
      %5584 = vmatprep.subr.mxu0 0.0
      %5585 = vmatpush2.msra.mxu0 0.0
      %5586 = vmatprep.subr.mxu0 0.0
      %5587 = vmatpush2.msra.mxu0 0.0
      %5588 = vmatprep.subr.mxu0 0.0
      %5589 = vmatpush2.msra.mxu0 0.0
      %5590 = vmatprep.subr.mxu0 0.0
      %5591 = vmatpush2.msra.mxu0 0.0
      %5592 = vmatprep.subr.mxu0 0.0
      %5593 = vmatpush2.msra.mxu0 0.0
      %5594 = vmatprep.mubr.f32.mxu0 0.0
      %v5595 = vand.u32 %v453, 4294901760
      %5596 = vmatmul.mubr.f32.gmra.mxu0 %v5595
      %v5597 = vpop.f32.mrf.mxu0
      %v5598 = vadd.f32 %v5447, %v5597
      %v5599 = vpop.f32.mrf.mxu0
      %5600 = vmatprep.mubr.f32.mxu0 0.0
      %v5601 = vand.u32 %v456, 4294901760
      %5602 = vmatmul.mubr.f32.gmra.mxu0 %v5601
      %v5603 = vpop.f32.mrf.mxu0
      %v5604 = vadd.f32 %v5457, %v5603
      %v5605 = vpop.f32.mrf.mxu0
      %5606 = vmatprep.mubr.f32.mxu0 0.0
      %v5607 = vand.u32 %v459, 4294901760
      %5608 = vmatmul.mubr.f32.gmra.mxu0 %v5607
      %v5609 = vpop.f32.mrf.mxu0
      %v5610 = vadd.f32 %v5467, %v5609
      %v5611 = vpop.f32.mrf.mxu0
      %5612 = vmatprep.mubr.f32.mxu0 0.0
      %v5613 = vand.u32 %v462, 4294901760
      %5614 = vmatmul.mubr.f32.gmra.mxu0 %v5613
      %v5615 = vpop.f32.mrf.mxu0
      %v5616 = vadd.f32 %v5477, %v5615
      %v5617 = vpop.f32.mrf.mxu0
      %5618 = vmatprep.mubr.f32.mxu0 0.0
      %v5619 = vand.u32 %v465, 4294901760
      %5620 = vmatmul.mubr.f32.gmra.mxu0 %v5619
      %v5621 = vpop.f32.mrf.mxu0
      %v5622 = vadd.f32 %v5487, %v5621
      %v5623 = vpop.f32.mrf.mxu0
      %5624 = vmatprep.mubr.f32.mxu0 0.0
      %v5625 = vand.u32 %v468, 4294901760
      %5626 = vmatmul.mubr.f32.gmra.mxu0 %v5625
      %v5627 = vpop.f32.mrf.mxu0
      %v5628 = vadd.f32 %v5497, %v5627
      %v5629 = vpop.f32.mrf.mxu0
      %5630 = vmatprep.mubr.f32.mxu0 0.0
      %v5631 = vand.u32 %v471, 4294901760
      %5632 = vmatmul.mubr.f32.gmra.mxu0 %v5631
      %v5633 = vpop.f32.mrf.mxu0
      %v5634 = vadd.f32 %v5507, %v5633
      %v5635 = vpop.f32.mrf.mxu0
      %5636 = vmatprep.mubr.f32.mxu0 0.0
      %v5637 = vand.u32 %v474, 4294901760
      %5638 = vmatmul.mubr.f32.gmra.mxu0 %v5637
      %v5639 = vpop.f32.mrf.mxu0
      %v5640 = vadd.f32 %v5517, %v5639
      %v5641 = vpop.f32.mrf.mxu0
      %5642 = vdwg.mxu0
      %5643 = vmatprep.subr.mxu0 0.0
      %5644 = vmatpush1.msra.mxu0 0.0
      %5645 = vmatprep.subr.mxu0 0.0
      %5646 = vmatpush1.msra.mxu0 0.0
      %5647 = vmatprep.subr.mxu0 0.0
      %5648 = vmatpush1.msra.mxu0 0.0
      %5649 = vmatprep.subr.mxu0 0.0
      %5650 = vmatpush1.msra.mxu0 0.0
      %5651 = vmatprep.subr.mxu0 0.0
      %5652 = vmatpush1.msra.mxu0 0.0
      %5653 = vmatprep.subr.mxu0 0.0
      %5654 = vmatpush1.msra.mxu0 0.0
      %5655 = vmatprep.subr.mxu0 0.0
      %5656 = vmatpush1.msra.mxu0 0.0
      %5657 = vmatprep.subr.mxu0 0.0
      %5658 = vmatpush1.msra.mxu0 0.0
      %5659 = vmatprep.subr.mxu0 0.0
      %5660 = vmatpush1.msra.mxu0 0.0
      %5661 = vmatprep.subr.mxu0 0.0
      %5662 = vmatpush1.msra.mxu0 0.0
      %5663 = vmatprep.subr.mxu0 0.0
      %5664 = vmatpush1.msra.mxu0 0.0
      %5665 = vmatprep.subr.mxu0 0.0
      %5666 = vmatpush1.msra.mxu0 0.0
      %5667 = vmatprep.subr.mxu0 0.0
      %5668 = vmatpush1.msra.mxu0 0.0
      %5669 = vmatprep.subr.mxu0 0.0
      %5670 = vmatpush1.msra.mxu0 0.0
      %5671 = vmatprep.subr.mxu0 0.0
      %v5672 = vand.u32 %v5372, 4294901760
      %v5673 = vsub.f32 %v5372, %v5672
      %5674 = vmatpush1.msra.mxu0 %v5673
      %5675 = vmatprep.subr.mxu0 0.0
      %v5676 = vand.u32 %v5371, 4294901760
      %v5677 = vsub.f32 %v5371, %v5676
      %5678 = vmatpush1.msra.mxu0 %v5677
      %5679 = vmatprep.subr.mxu0 0.0
      %5680 = vmatpush2.msra.mxu0 0.0
      %5681 = vmatprep.subr.mxu0 0.0
      %5682 = vmatpush2.msra.mxu0 0.0
      %5683 = vmatprep.subr.mxu0 0.0
      %5684 = vmatpush2.msra.mxu0 0.0
      %5685 = vmatprep.subr.mxu0 0.0
      %5686 = vmatpush2.msra.mxu0 0.0
      %5687 = vmatprep.subr.mxu0 0.0
      %5688 = vmatpush2.msra.mxu0 0.0
      %5689 = vmatprep.subr.mxu0 0.0
      %5690 = vmatpush2.msra.mxu0 0.0
      %5691 = vmatprep.subr.mxu0 0.0
      %5692 = vmatpush2.msra.mxu0 0.0
      %5693 = vmatprep.subr.mxu0 0.0
      %5694 = vmatpush2.msra.mxu0 0.0
      %5695 = vmatprep.subr.mxu0 0.0
      %5696 = vmatpush2.msra.mxu0 0.0
      %5697 = vmatprep.subr.mxu0 0.0
      %5698 = vmatpush2.msra.mxu0 0.0
      %5699 = vmatprep.subr.mxu0 0.0
      %5700 = vmatpush2.msra.mxu0 0.0
      %5701 = vmatprep.subr.mxu0 0.0
      %5702 = vmatpush2.msra.mxu0 0.0
      %5703 = vmatprep.subr.mxu0 0.0
      %5704 = vmatpush2.msra.mxu0 0.0
      %5705 = vmatprep.subr.mxu0 0.0
      %5706 = vmatpush2.msra.mxu0 0.0
      %5707 = vmatprep.subr.mxu0 0.0
      %5708 = vmatpush2.msra.mxu0 0.0
      %5709 = vmatprep.subr.mxu0 0.0
      %5710 = vmatpush2.msra.mxu0 0.0
      %5711 = vmatprep.mubr.f32.mxu0 0.0
      %v5712 = vand.u32 %v453, 4294901760
      %v5713 = vsub.f32 %v453, %v5712
      %5714 = vmatmul.mubr.f32.gmra.mxu0 %v5713
      %v5715 = vpop.f32.mrf.mxu0
      %v5716 = vadd.f32 %v5598, %v5715
      %v5717 = vpop.f32.mrf.mxu0
      %5718 = vmatprep.mubr.f32.mxu0 0.0
      %v5719 = vand.u32 %v456, 4294901760
      %v5720 = vsub.f32 %v456, %v5719
      %5721 = vmatmul.mubr.f32.gmra.mxu0 %v5720
      %v5722 = vpop.f32.mrf.mxu0
      %v5723 = vadd.f32 %v5604, %v5722
      %v5724 = vpop.f32.mrf.mxu0
      %5725 = vmatprep.mubr.f32.mxu0 0.0
      %v5726 = vand.u32 %v459, 4294901760
      %v5727 = vsub.f32 %v459, %v5726
      %5728 = vmatmul.mubr.f32.gmra.mxu0 %v5727
      %v5729 = vpop.f32.mrf.mxu0
      %v5730 = vadd.f32 %v5610, %v5729
      %v5731 = vpop.f32.mrf.mxu0
      %5732 = vmatprep.mubr.f32.mxu0 0.0
      %v5733 = vand.u32 %v462, 4294901760
      %v5734 = vsub.f32 %v462, %v5733
      %5735 = vmatmul.mubr.f32.gmra.mxu0 %v5734
      %v5736 = vpop.f32.mrf.mxu0
      %v5737 = vadd.f32 %v5616, %v5736
      %v5738 = vpop.f32.mrf.mxu0
      %5739 = vmatprep.mubr.f32.mxu0 0.0
      %v5740 = vand.u32 %v465, 4294901760
      %v5741 = vsub.f32 %v465, %v5740
      %5742 = vmatmul.mubr.f32.gmra.mxu0 %v5741
      %v5743 = vpop.f32.mrf.mxu0
      %v5744 = vadd.f32 %v5622, %v5743
      %v5745 = vpop.f32.mrf.mxu0
      %5746 = vmatprep.mubr.f32.mxu0 0.0
      %v5747 = vand.u32 %v468, 4294901760
      %v5748 = vsub.f32 %v468, %v5747
      %5749 = vmatmul.mubr.f32.gmra.mxu0 %v5748
      %v5750 = vpop.f32.mrf.mxu0
      %v5751 = vadd.f32 %v5628, %v5750
      %v5752 = vpop.f32.mrf.mxu0
      %5753 = vmatprep.mubr.f32.mxu0 0.0
      %v5754 = vand.u32 %v471, 4294901760
      %v5755 = vsub.f32 %v471, %v5754
      %5756 = vmatmul.mubr.f32.gmra.mxu0 %v5755
      %v5757 = vpop.f32.mrf.mxu0
      %v5758 = vadd.f32 %v5634, %v5757
      %v5759 = vpop.f32.mrf.mxu0
      %5760 = vmatprep.mubr.f32.mxu0 0.0
      %v5761 = vand.u32 %v474, 4294901760
      %v5762 = vsub.f32 %v474, %v5761
      %5763 = vmatmul.mubr.f32.gmra.mxu0 %v5762
      %v5764 = vpop.f32.mrf.mxu0
      %v5765 = vadd.f32 %v5640, %v5764
      %v5766 = vpop.f32.mrf.mxu0
      %5767 = vdwg.mxu0
      %5768 = vmatprep.subr.mxu0 0.0
      %5769 = vmatpush1.msra.mxu0 0.0
      %5770 = vmatprep.subr.mxu0 0.0
      %5771 = vmatpush1.msra.mxu0 0.0
      %5772 = vmatprep.subr.mxu0 0.0
      %5773 = vmatpush1.msra.mxu0 0.0
      %5774 = vmatprep.subr.mxu0 0.0
      %5775 = vmatpush1.msra.mxu0 0.0
      %5776 = vmatprep.subr.mxu0 0.0
      %5777 = vmatpush1.msra.mxu0 0.0
      %5778 = vmatprep.subr.mxu0 0.0
      %5779 = vmatpush1.msra.mxu0 0.0
      %5780 = vmatprep.subr.mxu0 0.0
      %5781 = vmatpush1.msra.mxu0 0.0
      %5782 = vmatprep.subr.mxu0 0.0
      %5783 = vmatpush1.msra.mxu0 0.0
      %5784 = vmatprep.subr.mxu0 0.0
      %5785 = vmatpush1.msra.mxu0 0.0
      %5786 = vmatprep.subr.mxu0 0.0
      %5787 = vmatpush1.msra.mxu0 0.0
      %5788 = vmatprep.subr.mxu0 0.0
      %5789 = vmatpush1.msra.mxu0 0.0
      %5790 = vmatprep.subr.mxu0 0.0
      %5791 = vmatpush1.msra.mxu0 0.0
      %5792 = vmatprep.subr.mxu0 0.0
      %5793 = vmatpush1.msra.mxu0 0.0
      %5794 = vmatprep.subr.mxu0 0.0
      %5795 = vmatpush1.msra.mxu0 0.0
      %5796 = vmatprep.subr.mxu0 0.0
      %v5797 = vand.u32 %v5372, 4294901760
      %5798 = vmatpush1.msra.mxu0 %v5797
      %5799 = vmatprep.subr.mxu0 0.0
      %v5800 = vand.u32 %v5371, 4294901760
      %5801 = vmatpush1.msra.mxu0 %v5800
      %5802 = vmatprep.subr.mxu0 0.0
      %5803 = vmatpush2.msra.mxu0 0.0
      %5804 = vmatprep.subr.mxu0 0.0
      %5805 = vmatpush2.msra.mxu0 0.0
      %5806 = vmatprep.subr.mxu0 0.0
      %5807 = vmatpush2.msra.mxu0 0.0
      %5808 = vmatprep.subr.mxu0 0.0
      %5809 = vmatpush2.msra.mxu0 0.0
      %5810 = vmatprep.subr.mxu0 0.0
      %5811 = vmatpush2.msra.mxu0 0.0
      %5812 = vmatprep.subr.mxu0 0.0
      %5813 = vmatpush2.msra.mxu0 0.0
      %5814 = vmatprep.subr.mxu0 0.0
      %5815 = vmatpush2.msra.mxu0 0.0
      %5816 = vmatprep.subr.mxu0 0.0
      %5817 = vmatpush2.msra.mxu0 0.0
      %5818 = vmatprep.subr.mxu0 0.0
      %5819 = vmatpush2.msra.mxu0 0.0
      %5820 = vmatprep.subr.mxu0 0.0
      %5821 = vmatpush2.msra.mxu0 0.0
      %5822 = vmatprep.subr.mxu0 0.0
      %5823 = vmatpush2.msra.mxu0 0.0
      %5824 = vmatprep.subr.mxu0 0.0
      %5825 = vmatpush2.msra.mxu0 0.0
      %5826 = vmatprep.subr.mxu0 0.0
      %5827 = vmatpush2.msra.mxu0 0.0
      %5828 = vmatprep.subr.mxu0 0.0
      %5829 = vmatpush2.msra.mxu0 0.0
      %5830 = vmatprep.subr.mxu0 0.0
      %5831 = vmatpush2.msra.mxu0 0.0
      %5832 = vmatprep.subr.mxu0 0.0
      %5833 = vmatpush2.msra.mxu0 0.0
      %5834 = vmatprep.mubr.f32.mxu0 0.0
      %v5835 = vand.u32 %v453, 4294901760
      %v5836 = vsub.f32 %v453, %v5835
      %v5837 = vand.u32 %v5836, 4294901760
      %5838 = vmatmul.mubr.f32.gmra.mxu0 %v5837
      %v5839 = vpop.f32.mrf.mxu0
      %v5840 = vadd.f32 %v5716, %v5839
      %v5841 = vpop.f32.mrf.mxu0
      %5842 = vmatprep.mubr.f32.mxu0 0.0
      %v5843 = vand.u32 %v456, 4294901760
      %v5844 = vsub.f32 %v456, %v5843
      %v5845 = vand.u32 %v5844, 4294901760
      %5846 = vmatmul.mubr.f32.gmra.mxu0 %v5845
      %v5847 = vpop.f32.mrf.mxu0
      %v5848 = vadd.f32 %v5723, %v5847
      %v5849 = vpop.f32.mrf.mxu0
      %5850 = vmatprep.mubr.f32.mxu0 0.0
      %v5851 = vand.u32 %v459, 4294901760
      %v5852 = vsub.f32 %v459, %v5851
      %v5853 = vand.u32 %v5852, 4294901760
      %5854 = vmatmul.mubr.f32.gmra.mxu0 %v5853
      %v5855 = vpop.f32.mrf.mxu0
      %v5856 = vadd.f32 %v5730, %v5855
      %v5857 = vpop.f32.mrf.mxu0
      %5858 = vmatprep.mubr.f32.mxu0 0.0
      %v5859 = vand.u32 %v462, 4294901760
      %v5860 = vsub.f32 %v462, %v5859
      %v5861 = vand.u32 %v5860, 4294901760
      %5862 = vmatmul.mubr.f32.gmra.mxu0 %v5861
      %v5863 = vpop.f32.mrf.mxu0
      %v5864 = vadd.f32 %v5737, %v5863
      %v5865 = vpop.f32.mrf.mxu0
      %5866 = vmatprep.mubr.f32.mxu0 0.0
      %v5867 = vand.u32 %v465, 4294901760
      %v5868 = vsub.f32 %v465, %v5867
      %v5869 = vand.u32 %v5868, 4294901760
      %5870 = vmatmul.mubr.f32.gmra.mxu0 %v5869
      %v5871 = vpop.f32.mrf.mxu0
      %v5872 = vadd.f32 %v5744, %v5871
      %v5873 = vpop.f32.mrf.mxu0
      %5874 = vmatprep.mubr.f32.mxu0 0.0
      %v5875 = vand.u32 %v468, 4294901760
      %v5876 = vsub.f32 %v468, %v5875
      %v5877 = vand.u32 %v5876, 4294901760
      %5878 = vmatmul.mubr.f32.gmra.mxu0 %v5877
      %v5879 = vpop.f32.mrf.mxu0
      %v5880 = vadd.f32 %v5751, %v5879
      %v5881 = vpop.f32.mrf.mxu0
      %5882 = vmatprep.mubr.f32.mxu0 0.0
      %v5883 = vand.u32 %v471, 4294901760
      %v5884 = vsub.f32 %v471, %v5883
      %v5885 = vand.u32 %v5884, 4294901760
      %5886 = vmatmul.mubr.f32.gmra.mxu0 %v5885
      %v5887 = vpop.f32.mrf.mxu0
      %v5888 = vadd.f32 %v5758, %v5887
      %v5889 = vpop.f32.mrf.mxu0
      %5890 = vmatprep.mubr.f32.mxu0 0.0
      %v5891 = vand.u32 %v474, 4294901760
      %v5892 = vsub.f32 %v474, %v5891
      %v5893 = vand.u32 %v5892, 4294901760
      %5894 = vmatmul.mubr.f32.gmra.mxu0 %v5893
      %v5895 = vpop.f32.mrf.mxu0
      %v5896 = vadd.f32 %v5765, %v5895
      %v5897 = vpop.f32.mrf.mxu0
      %5898 = vdwg.mxu0
      %5899 = vmatprep.subr.mxu0 0.0
      %5900 = vmatpush1.msra.mxu0 0.0
      %5901 = vmatprep.subr.mxu0 0.0
      %5902 = vmatpush1.msra.mxu0 0.0
      %5903 = vmatprep.subr.mxu0 0.0
      %5904 = vmatpush1.msra.mxu0 0.0
      %5905 = vmatprep.subr.mxu0 0.0
      %5906 = vmatpush1.msra.mxu0 0.0
      %5907 = vmatprep.subr.mxu0 0.0
      %5908 = vmatpush1.msra.mxu0 0.0
      %5909 = vmatprep.subr.mxu0 0.0
      %5910 = vmatpush1.msra.mxu0 0.0
      %5911 = vmatprep.subr.mxu0 0.0
      %5912 = vmatpush1.msra.mxu0 0.0
      %5913 = vmatprep.subr.mxu0 0.0
      %5914 = vmatpush1.msra.mxu0 0.0
      %5915 = vmatprep.subr.mxu0 0.0
      %5916 = vmatpush1.msra.mxu0 0.0
      %5917 = vmatprep.subr.mxu0 0.0
      %5918 = vmatpush1.msra.mxu0 0.0
      %5919 = vmatprep.subr.mxu0 0.0
      %5920 = vmatpush1.msra.mxu0 0.0
      %5921 = vmatprep.subr.mxu0 0.0
      %5922 = vmatpush1.msra.mxu0 0.0
      %5923 = vmatprep.subr.mxu0 0.0
      %5924 = vmatpush1.msra.mxu0 0.0
      %5925 = vmatprep.subr.mxu0 0.0
      %5926 = vmatpush1.msra.mxu0 0.0
      %5927 = vmatprep.subr.mxu0 0.0
      %v5928 = vand.u32 %v5372, 4294901760
      %v5929 = vsub.f32 %v5372, %v5928
      %v5930 = vand.u32 %v5929, 4294901760
      %5931 = vmatpush1.msra.mxu0 %v5930
      %5932 = vmatprep.subr.mxu0 0.0
      %v5933 = vand.u32 %v5371, 4294901760
      %v5934 = vsub.f32 %v5371, %v5933
      %v5935 = vand.u32 %v5934, 4294901760
      %5936 = vmatpush1.msra.mxu0 %v5935
      %5937 = vmatprep.subr.mxu0 0.0
      %5938 = vmatpush2.msra.mxu0 0.0
      %5939 = vmatprep.subr.mxu0 0.0
      %5940 = vmatpush2.msra.mxu0 0.0
      %5941 = vmatprep.subr.mxu0 0.0
      %5942 = vmatpush2.msra.mxu0 0.0
      %5943 = vmatprep.subr.mxu0 0.0
      %5944 = vmatpush2.msra.mxu0 0.0
      %5945 = vmatprep.subr.mxu0 0.0
      %5946 = vmatpush2.msra.mxu0 0.0
      %5947 = vmatprep.subr.mxu0 0.0
      %5948 = vmatpush2.msra.mxu0 0.0
      %5949 = vmatprep.subr.mxu0 0.0
      %5950 = vmatpush2.msra.mxu0 0.0
      %5951 = vmatprep.subr.mxu0 0.0
      %5952 = vmatpush2.msra.mxu0 0.0
      %5953 = vmatprep.subr.mxu0 0.0
      %5954 = vmatpush2.msra.mxu0 0.0
      %5955 = vmatprep.subr.mxu0 0.0
      %5956 = vmatpush2.msra.mxu0 0.0
      %5957 = vmatprep.subr.mxu0 0.0
      %5958 = vmatpush2.msra.mxu0 0.0
      %5959 = vmatprep.subr.mxu0 0.0
      %5960 = vmatpush2.msra.mxu0 0.0
      %5961 = vmatprep.subr.mxu0 0.0
      %5962 = vmatpush2.msra.mxu0 0.0
      %5963 = vmatprep.subr.mxu0 0.0
      %5964 = vmatpush2.msra.mxu0 0.0
      %5965 = vmatprep.subr.mxu0 0.0
      %5966 = vmatpush2.msra.mxu0 0.0
      %5967 = vmatprep.subr.mxu0 0.0
      %5968 = vmatpush2.msra.mxu0 0.0
      %5969 = vmatprep.mubr.f32.mxu0 0.0
      %v5970 = vand.u32 %v453, 4294901760
      %5971 = vmatmul.mubr.f32.gmra.mxu0 %v5970
      %v5972 = vpop.f32.mrf.mxu0
      %v5973 = vadd.f32 %v5840, %v5972
      %v5974 = vpop.f32.mrf.mxu0
      %5975 = vmatprep.mubr.f32.mxu0 0.0
      %v5976 = vand.u32 %v456, 4294901760
      %5977 = vmatmul.mubr.f32.gmra.mxu0 %v5976
      %v5978 = vpop.f32.mrf.mxu0
      %v5979 = vadd.f32 %v5848, %v5978
      %v5980 = vpop.f32.mrf.mxu0
      %5981 = vmatprep.mubr.f32.mxu0 0.0
      %v5982 = vand.u32 %v459, 4294901760
      %5983 = vmatmul.mubr.f32.gmra.mxu0 %v5982
      %v5984 = vpop.f32.mrf.mxu0
      %v5985 = vadd.f32 %v5856, %v5984
      %v5986 = vpop.f32.mrf.mxu0
      %5987 = vmatprep.mubr.f32.mxu0 0.0
      %v5988 = vand.u32 %v462, 4294901760
      %5989 = vmatmul.mubr.f32.gmra.mxu0 %v5988
      %v5990 = vpop.f32.mrf.mxu0
      %v5991 = vadd.f32 %v5864, %v5990
      %v5992 = vpop.f32.mrf.mxu0
      %5993 = vmatprep.mubr.f32.mxu0 0.0
      %v5994 = vand.u32 %v465, 4294901760
      %5995 = vmatmul.mubr.f32.gmra.mxu0 %v5994
      %v5996 = vpop.f32.mrf.mxu0
      %v5997 = vadd.f32 %v5872, %v5996
      %v5998 = vpop.f32.mrf.mxu0
      %5999 = vmatprep.mubr.f32.mxu0 0.0
      %v6000 = vand.u32 %v468, 4294901760
      %6001 = vmatmul.mubr.f32.gmra.mxu0 %v6000
      %v6002 = vpop.f32.mrf.mxu0
      %v6003 = vadd.f32 %v5880, %v6002
      %v6004 = vpop.f32.mrf.mxu0
      %6005 = vmatprep.mubr.f32.mxu0 0.0
      %v6006 = vand.u32 %v471, 4294901760
      %6007 = vmatmul.mubr.f32.gmra.mxu0 %v6006
      %v6008 = vpop.f32.mrf.mxu0
      %v6009 = vadd.f32 %v5888, %v6008
      %v6010 = vpop.f32.mrf.mxu0
      %6011 = vmatprep.mubr.f32.mxu0 0.0
      %v6012 = vand.u32 %v474, 4294901760
      %6013 = vmatmul.mubr.f32.gmra.mxu0 %v6012
      %v6014 = vpop.f32.mrf.mxu0
      %v6015 = vadd.f32 %v5896, %v6014
      %v6016 = vpop.f32.mrf.mxu0
      %6017 = vdwg.mxu0
      %6018 = vmatprep.subr.mxu0 0.0
      %6019 = vmatpush1.msra.mxu0 0.0
      %6020 = vmatprep.subr.mxu0 0.0
      %6021 = vmatpush1.msra.mxu0 0.0
      %6022 = vmatprep.subr.mxu0 0.0
      %6023 = vmatpush1.msra.mxu0 0.0
      %6024 = vmatprep.subr.mxu0 0.0
      %6025 = vmatpush1.msra.mxu0 0.0
      %6026 = vmatprep.subr.mxu0 0.0
      %6027 = vmatpush1.msra.mxu0 0.0
      %6028 = vmatprep.subr.mxu0 0.0
      %6029 = vmatpush1.msra.mxu0 0.0
      %6030 = vmatprep.subr.mxu0 0.0
      %6031 = vmatpush1.msra.mxu0 0.0
      %6032 = vmatprep.subr.mxu0 0.0
      %6033 = vmatpush1.msra.mxu0 0.0
      %6034 = vmatprep.subr.mxu0 0.0
      %6035 = vmatpush1.msra.mxu0 0.0
      %6036 = vmatprep.subr.mxu0 0.0
      %6037 = vmatpush1.msra.mxu0 0.0
      %6038 = vmatprep.subr.mxu0 0.0
      %6039 = vmatpush1.msra.mxu0 0.0
      %6040 = vmatprep.subr.mxu0 0.0
      %6041 = vmatpush1.msra.mxu0 0.0
      %6042 = vmatprep.subr.mxu0 0.0
      %6043 = vmatpush1.msra.mxu0 0.0
      %6044 = vmatprep.subr.mxu0 0.0
      %6045 = vmatpush1.msra.mxu0 0.0
      %6046 = vmatprep.subr.mxu0 0.0
      %v6047 = vand.u32 %v5372, 4294901760
      %6048 = vmatpush1.msra.mxu0 %v6047
      %6049 = vmatprep.subr.mxu0 0.0
      %v6050 = vand.u32 %v5371, 4294901760
      %6051 = vmatpush1.msra.mxu0 %v6050
      %6052 = vmatprep.subr.mxu0 0.0
      %6053 = vmatpush2.msra.mxu0 0.0
      %6054 = vmatprep.subr.mxu0 0.0
      %6055 = vmatpush2.msra.mxu0 0.0
      %6056 = vmatprep.subr.mxu0 0.0
      %6057 = vmatpush2.msra.mxu0 0.0
      %6058 = vmatprep.subr.mxu0 0.0
      %6059 = vmatpush2.msra.mxu0 0.0
      %6060 = vmatprep.subr.mxu0 0.0
      %6061 = vmatpush2.msra.mxu0 0.0
      %6062 = vmatprep.subr.mxu0 0.0
      %6063 = vmatpush2.msra.mxu0 0.0
      %6064 = vmatprep.subr.mxu0 0.0
      %6065 = vmatpush2.msra.mxu0 0.0
      %6066 = vmatprep.subr.mxu0 0.0
      %6067 = vmatpush2.msra.mxu0 0.0
      %6068 = vmatprep.subr.mxu0 0.0
      %6069 = vmatpush2.msra.mxu0 0.0
      %6070 = vmatprep.subr.mxu0 0.0
      %6071 = vmatpush2.msra.mxu0 0.0
      %6072 = vmatprep.subr.mxu0 0.0
      %6073 = vmatpush2.msra.mxu0 0.0
      %6074 = vmatprep.subr.mxu0 0.0
      %6075 = vmatpush2.msra.mxu0 0.0
      %6076 = vmatprep.subr.mxu0 0.0
      %6077 = vmatpush2.msra.mxu0 0.0
      %6078 = vmatprep.subr.mxu0 0.0
      %6079 = vmatpush2.msra.mxu0 0.0
      %6080 = vmatprep.subr.mxu0 0.0
      %6081 = vmatpush2.msra.mxu0 0.0
      %6082 = vmatprep.subr.mxu0 0.0
      %6083 = vmatpush2.msra.mxu0 0.0
      %6084 = vmatprep.mubr.f32.mxu0 0.0
      %v6085 = vand.u32 %v453, 4294901760
      %6086 = vmatmul.mubr.f32.gmra.mxu0 %v6085
      %v6087 = vpop.f32.mrf.mxu0
      %v6088 = vadd.f32 %v5973, %v6087
      %v6089 = vpop.f32.mrf.mxu0
      %6090 = vmatprep.mubr.f32.mxu0 0.0
      %v6091 = vand.u32 %v456, 4294901760
      %6092 = vmatmul.mubr.f32.gmra.mxu0 %v6091
      %v6093 = vpop.f32.mrf.mxu0
      %v6094 = vadd.f32 %v5979, %v6093
      %v6095 = vpop.f32.mrf.mxu0
      %6096 = vmatprep.mubr.f32.mxu0 0.0
      %v6097 = vand.u32 %v459, 4294901760
      %6098 = vmatmul.mubr.f32.gmra.mxu0 %v6097
      %v6099 = vpop.f32.mrf.mxu0
      %v6100 = vadd.f32 %v5985, %v6099
      %v6101 = vpop.f32.mrf.mxu0
      %6102 = vmatprep.mubr.f32.mxu0 0.0
      %v6103 = vand.u32 %v462, 4294901760
      %6104 = vmatmul.mubr.f32.gmra.mxu0 %v6103
      %v6105 = vpop.f32.mrf.mxu0
      %v6106 = vadd.f32 %v5991, %v6105
      %v6107 = vpop.f32.mrf.mxu0
      %6108 = vmatprep.mubr.f32.mxu0 0.0
      %v6109 = vand.u32 %v465, 4294901760
      %6110 = vmatmul.mubr.f32.gmra.mxu0 %v6109
      %v6111 = vpop.f32.mrf.mxu0
      %v6112 = vadd.f32 %v5997, %v6111
      %v6113 = vpop.f32.mrf.mxu0
      %6114 = vmatprep.mubr.f32.mxu0 0.0
      %v6115 = vand.u32 %v468, 4294901760
      %6116 = vmatmul.mubr.f32.gmra.mxu0 %v6115
      %v6117 = vpop.f32.mrf.mxu0
      %v6118 = vadd.f32 %v6003, %v6117
      %v6119 = vpop.f32.mrf.mxu0
      %6120 = vmatprep.mubr.f32.mxu0 0.0
      %v6121 = vand.u32 %v471, 4294901760
      %6122 = vmatmul.mubr.f32.gmra.mxu0 %v6121
      %v6123 = vpop.f32.mrf.mxu0
      %v6124 = vadd.f32 %v6009, %v6123
      %v6125 = vpop.f32.mrf.mxu0
      %6126 = vmatprep.mubr.f32.mxu0 0.0
      %v6127 = vand.u32 %v474, 4294901760
      %6128 = vmatmul.mubr.f32.gmra.mxu0 %v6127
      %v6129 = vpop.f32.mrf.mxu0
      %v6130 = vadd.f32 %v6015, %v6129
      %v6131 = vpop.f32.mrf.mxu0
      %6132 = vdwg.mxu0
      %s6133 = scalar_lea.vmem %s5, 16
      %v6134 = vld [vmem:[%s6133] sm:$0xff]
      %v6135 = vld [vmem:[%s6133 + $0x8] sm:$0xff]
      %6136 = vmatprep.subr.mxu0 0.0
      %6137 = vmatpush1.msra.mxu0 0.0
      %6138 = vmatprep.subr.mxu0 0.0
      %6139 = vmatpush1.msra.mxu0 0.0
      %6140 = vmatprep.subr.mxu0 0.0
      %6141 = vmatpush1.msra.mxu0 0.0
      %6142 = vmatprep.subr.mxu0 0.0
      %6143 = vmatpush1.msra.mxu0 0.0
      %6144 = vmatprep.subr.mxu0 0.0
      %6145 = vmatpush1.msra.mxu0 0.0
      %6146 = vmatprep.subr.mxu0 0.0
      %6147 = vmatpush1.msra.mxu0 0.0
      %6148 = vmatprep.subr.mxu0 0.0
      %6149 = vmatpush1.msra.mxu0 0.0
      %6150 = vmatprep.subr.mxu0 0.0
      %6151 = vmatpush1.msra.mxu0 0.0
      %6152 = vmatprep.subr.mxu0 0.0
      %6153 = vmatpush1.msra.mxu0 0.0
      %6154 = vmatprep.subr.mxu0 0.0
      %6155 = vmatpush1.msra.mxu0 0.0
      %6156 = vmatprep.subr.mxu0 0.0
      %6157 = vmatpush1.msra.mxu0 0.0
      %6158 = vmatprep.subr.mxu0 0.0
      %6159 = vmatpush1.msra.mxu0 0.0
      %6160 = vmatprep.subr.mxu0 0.0
      %6161 = vmatpush1.msra.mxu0 0.0
      %6162 = vmatprep.subr.mxu0 0.0
      %6163 = vmatpush1.msra.mxu0 0.0
      %6164 = vmatprep.subr.mxu0 0.0
      %v6165 = vand.u32 %v6135, 4294901760
      %6166 = vmatpush1.msra.mxu0 %v6165
      %6167 = vmatprep.subr.mxu0 0.0
      %v6168 = vand.u32 %v6134, 4294901760
      %6169 = vmatpush1.msra.mxu0 %v6168
      %6170 = vmatprep.subr.mxu0 0.0
      %6171 = vmatpush2.msra.mxu0 0.0
      %6172 = vmatprep.subr.mxu0 0.0
      %6173 = vmatpush2.msra.mxu0 0.0
      %6174 = vmatprep.subr.mxu0 0.0
      %6175 = vmatpush2.msra.mxu0 0.0
      %6176 = vmatprep.subr.mxu0 0.0
      %6177 = vmatpush2.msra.mxu0 0.0
      %6178 = vmatprep.subr.mxu0 0.0
      %6179 = vmatpush2.msra.mxu0 0.0
      %6180 = vmatprep.subr.mxu0 0.0
      %6181 = vmatpush2.msra.mxu0 0.0
      %6182 = vmatprep.subr.mxu0 0.0
      %6183 = vmatpush2.msra.mxu0 0.0
      %6184 = vmatprep.subr.mxu0 0.0
      %6185 = vmatpush2.msra.mxu0 0.0
      %6186 = vmatprep.subr.mxu0 0.0
      %6187 = vmatpush2.msra.mxu0 0.0
      %6188 = vmatprep.subr.mxu0 0.0
      %6189 = vmatpush2.msra.mxu0 0.0
      %6190 = vmatprep.subr.mxu0 0.0
      %6191 = vmatpush2.msra.mxu0 0.0
      %6192 = vmatprep.subr.mxu0 0.0
      %6193 = vmatpush2.msra.mxu0 0.0
      %6194 = vmatprep.subr.mxu0 0.0
      %6195 = vmatpush2.msra.mxu0 0.0
      %6196 = vmatprep.subr.mxu0 0.0
      %6197 = vmatpush2.msra.mxu0 0.0
      %6198 = vmatprep.subr.mxu0 0.0
      %6199 = vmatpush2.msra.mxu0 0.0
      %6200 = vmatprep.subr.mxu0 0.0
      %6201 = vmatpush2.msra.mxu0 0.0
      %6202 = vmatprep.mubr.f32.mxu0 0.0
      %v6203 = vand.u32 %v453, 4294901760
      %v6204 = vsub.f32 %v453, %v6203
      %v6205 = vand.u32 %v6204, 4294901760
      %v6206 = vsub.f32 %v6204, %v6205
      %v6207 = vand.u32 %v6206, 4294901760
      %6208 = vmatmul.mubr.f32.gmra.mxu0 %v6207
      %v6209 = vpop.f32.mrf.mxu0
      %v6210 = vadd.f32 0.0, %v6209
      %v6211 = vpop.f32.mrf.mxu0
      %6212 = vmatprep.mubr.f32.mxu0 0.0
      %v6213 = vand.u32 %v456, 4294901760
      %v6214 = vsub.f32 %v456, %v6213
      %v6215 = vand.u32 %v6214, 4294901760
      %v6216 = vsub.f32 %v6214, %v6215
      %v6217 = vand.u32 %v6216, 4294901760
      %6218 = vmatmul.mubr.f32.gmra.mxu0 %v6217
      %v6219 = vpop.f32.mrf.mxu0
      %v6220 = vadd.f32 0.0, %v6219
      %v6221 = vpop.f32.mrf.mxu0
      %6222 = vmatprep.mubr.f32.mxu0 0.0
      %v6223 = vand.u32 %v459, 4294901760
      %v6224 = vsub.f32 %v459, %v6223
      %v6225 = vand.u32 %v6224, 4294901760
      %v6226 = vsub.f32 %v6224, %v6225
      %v6227 = vand.u32 %v6226, 4294901760
      %6228 = vmatmul.mubr.f32.gmra.mxu0 %v6227
      %v6229 = vpop.f32.mrf.mxu0
      %v6230 = vadd.f32 0.0, %v6229
      %v6231 = vpop.f32.mrf.mxu0
      %6232 = vmatprep.mubr.f32.mxu0 0.0
      %v6233 = vand.u32 %v462, 4294901760
      %v6234 = vsub.f32 %v462, %v6233
      %v6235 = vand.u32 %v6234, 4294901760
      %v6236 = vsub.f32 %v6234, %v6235
      %v6237 = vand.u32 %v6236, 4294901760
      %6238 = vmatmul.mubr.f32.gmra.mxu0 %v6237
      %v6239 = vpop.f32.mrf.mxu0
      %v6240 = vadd.f32 0.0, %v6239
      %v6241 = vpop.f32.mrf.mxu0
      %6242 = vmatprep.mubr.f32.mxu0 0.0
      %v6243 = vand.u32 %v465, 4294901760
      %v6244 = vsub.f32 %v465, %v6243
      %v6245 = vand.u32 %v6244, 4294901760
      %v6246 = vsub.f32 %v6244, %v6245
      %v6247 = vand.u32 %v6246, 4294901760
      %6248 = vmatmul.mubr.f32.gmra.mxu0 %v6247
      %v6249 = vpop.f32.mrf.mxu0
      %v6250 = vadd.f32 0.0, %v6249
      %v6251 = vpop.f32.mrf.mxu0
      %6252 = vmatprep.mubr.f32.mxu0 0.0
      %v6253 = vand.u32 %v468, 4294901760
      %v6254 = vsub.f32 %v468, %v6253
      %v6255 = vand.u32 %v6254, 4294901760
      %v6256 = vsub.f32 %v6254, %v6255
      %v6257 = vand.u32 %v6256, 4294901760
      %6258 = vmatmul.mubr.f32.gmra.mxu0 %v6257
      %v6259 = vpop.f32.mrf.mxu0
      %v6260 = vadd.f32 0.0, %v6259
      %v6261 = vpop.f32.mrf.mxu0
      %6262 = vmatprep.mubr.f32.mxu0 0.0
      %v6263 = vand.u32 %v471, 4294901760
      %v6264 = vsub.f32 %v471, %v6263
      %v6265 = vand.u32 %v6264, 4294901760
      %v6266 = vsub.f32 %v6264, %v6265
      %v6267 = vand.u32 %v6266, 4294901760
      %6268 = vmatmul.mubr.f32.gmra.mxu0 %v6267
      %v6269 = vpop.f32.mrf.mxu0
      %v6270 = vadd.f32 0.0, %v6269
      %v6271 = vpop.f32.mrf.mxu0
      %6272 = vmatprep.mubr.f32.mxu0 0.0
      %v6273 = vand.u32 %v474, 4294901760
      %v6274 = vsub.f32 %v474, %v6273
      %v6275 = vand.u32 %v6274, 4294901760
      %v6276 = vsub.f32 %v6274, %v6275
      %v6277 = vand.u32 %v6276, 4294901760
      %6278 = vmatmul.mubr.f32.gmra.mxu0 %v6277
      %v6279 = vpop.f32.mrf.mxu0
      %v6280 = vadd.f32 0.0, %v6279
      %v6281 = vpop.f32.mrf.mxu0
      %6282 = vdwg.mxu0
      %6283 = vmatprep.subr.mxu0 0.0
      %6284 = vmatpush1.msra.mxu0 0.0
      %6285 = vmatprep.subr.mxu0 0.0
      %6286 = vmatpush1.msra.mxu0 0.0
      %6287 = vmatprep.subr.mxu0 0.0
      %6288 = vmatpush1.msra.mxu0 0.0
      %6289 = vmatprep.subr.mxu0 0.0
      %6290 = vmatpush1.msra.mxu0 0.0
      %6291 = vmatprep.subr.mxu0 0.0
      %6292 = vmatpush1.msra.mxu0 0.0
      %6293 = vmatprep.subr.mxu0 0.0
      %6294 = vmatpush1.msra.mxu0 0.0
      %6295 = vmatprep.subr.mxu0 0.0
      %6296 = vmatpush1.msra.mxu0 0.0
      %6297 = vmatprep.subr.mxu0 0.0
      %6298 = vmatpush1.msra.mxu0 0.0
      %6299 = vmatprep.subr.mxu0 0.0
      %6300 = vmatpush1.msra.mxu0 0.0
      %6301 = vmatprep.subr.mxu0 0.0
      %6302 = vmatpush1.msra.mxu0 0.0
      %6303 = vmatprep.subr.mxu0 0.0
      %6304 = vmatpush1.msra.mxu0 0.0
      %6305 = vmatprep.subr.mxu0 0.0
      %6306 = vmatpush1.msra.mxu0 0.0
      %6307 = vmatprep.subr.mxu0 0.0
      %6308 = vmatpush1.msra.mxu0 0.0
      %6309 = vmatprep.subr.mxu0 0.0
      %6310 = vmatpush1.msra.mxu0 0.0
      %6311 = vmatprep.subr.mxu0 0.0
      %v6312 = vand.u32 %v6135, 4294901760
      %v6313 = vsub.f32 %v6135, %v6312
      %v6314 = vand.u32 %v6313, 4294901760
      %v6315 = vsub.f32 %v6313, %v6314
      %v6316 = vand.u32 %v6315, 4294901760
      %6317 = vmatpush1.msra.mxu0 %v6316
      %6318 = vmatprep.subr.mxu0 0.0
      %v6319 = vand.u32 %v6134, 4294901760
      %v6320 = vsub.f32 %v6134, %v6319
      %v6321 = vand.u32 %v6320, 4294901760
      %v6322 = vsub.f32 %v6320, %v6321
      %v6323 = vand.u32 %v6322, 4294901760
      %6324 = vmatpush1.msra.mxu0 %v6323
      %6325 = vmatprep.subr.mxu0 0.0
      %6326 = vmatpush2.msra.mxu0 0.0
      %6327 = vmatprep.subr.mxu0 0.0
      %6328 = vmatpush2.msra.mxu0 0.0
      %6329 = vmatprep.subr.mxu0 0.0
      %6330 = vmatpush2.msra.mxu0 0.0
      %6331 = vmatprep.subr.mxu0 0.0
      %6332 = vmatpush2.msra.mxu0 0.0
      %6333 = vmatprep.subr.mxu0 0.0
      %6334 = vmatpush2.msra.mxu0 0.0
      %6335 = vmatprep.subr.mxu0 0.0
      %6336 = vmatpush2.msra.mxu0 0.0
      %6337 = vmatprep.subr.mxu0 0.0
      %6338 = vmatpush2.msra.mxu0 0.0
      %6339 = vmatprep.subr.mxu0 0.0
      %6340 = vmatpush2.msra.mxu0 0.0
      %6341 = vmatprep.subr.mxu0 0.0
      %6342 = vmatpush2.msra.mxu0 0.0
      %6343 = vmatprep.subr.mxu0 0.0
      %6344 = vmatpush2.msra.mxu0 0.0
      %6345 = vmatprep.subr.mxu0 0.0
      %6346 = vmatpush2.msra.mxu0 0.0
      %6347 = vmatprep.subr.mxu0 0.0
      %6348 = vmatpush2.msra.mxu0 0.0
      %6349 = vmatprep.subr.mxu0 0.0
      %6350 = vmatpush2.msra.mxu0 0.0
      %6351 = vmatprep.subr.mxu0 0.0
      %6352 = vmatpush2.msra.mxu0 0.0
      %6353 = vmatprep.subr.mxu0 0.0
      %6354 = vmatpush2.msra.mxu0 0.0
      %6355 = vmatprep.subr.mxu0 0.0
      %6356 = vmatpush2.msra.mxu0 0.0
      %6357 = vmatprep.mubr.f32.mxu0 0.0
      %v6358 = vand.u32 %v453, 4294901760
      %6359 = vmatmul.mubr.f32.gmra.mxu0 %v6358
      %v6360 = vpop.f32.mrf.mxu0
      %v6361 = vadd.f32 %v6210, %v6360
      %v6362 = vpop.f32.mrf.mxu0
      %6363 = vmatprep.mubr.f32.mxu0 0.0
      %v6364 = vand.u32 %v456, 4294901760
      %6365 = vmatmul.mubr.f32.gmra.mxu0 %v6364
      %v6366 = vpop.f32.mrf.mxu0
      %v6367 = vadd.f32 %v6220, %v6366
      %v6368 = vpop.f32.mrf.mxu0
      %6369 = vmatprep.mubr.f32.mxu0 0.0
      %v6370 = vand.u32 %v459, 4294901760
      %6371 = vmatmul.mubr.f32.gmra.mxu0 %v6370
      %v6372 = vpop.f32.mrf.mxu0
      %v6373 = vadd.f32 %v6230, %v6372
      %v6374 = vpop.f32.mrf.mxu0
      %6375 = vmatprep.mubr.f32.mxu0 0.0
      %v6376 = vand.u32 %v462, 4294901760
      %6377 = vmatmul.mubr.f32.gmra.mxu0 %v6376
      %v6378 = vpop.f32.mrf.mxu0
      %v6379 = vadd.f32 %v6240, %v6378
      %v6380 = vpop.f32.mrf.mxu0
      %6381 = vmatprep.mubr.f32.mxu0 0.0
      %v6382 = vand.u32 %v465, 4294901760
      %6383 = vmatmul.mubr.f32.gmra.mxu0 %v6382
      %v6384 = vpop.f32.mrf.mxu0
      %v6385 = vadd.f32 %v6250, %v6384
      %v6386 = vpop.f32.mrf.mxu0
      %6387 = vmatprep.mubr.f32.mxu0 0.0
      %v6388 = vand.u32 %v468, 4294901760
      %6389 = vmatmul.mubr.f32.gmra.mxu0 %v6388
      %v6390 = vpop.f32.mrf.mxu0
      %v6391 = vadd.f32 %v6260, %v6390
      %v6392 = vpop.f32.mrf.mxu0
      %6393 = vmatprep.mubr.f32.mxu0 0.0
      %v6394 = vand.u32 %v471, 4294901760
      %6395 = vmatmul.mubr.f32.gmra.mxu0 %v6394
      %v6396 = vpop.f32.mrf.mxu0
      %v6397 = vadd.f32 %v6270, %v6396
      %v6398 = vpop.f32.mrf.mxu0
      %6399 = vmatprep.mubr.f32.mxu0 0.0
      %v6400 = vand.u32 %v474, 4294901760
      %6401 = vmatmul.mubr.f32.gmra.mxu0 %v6400
      %v6402 = vpop.f32.mrf.mxu0
      %v6403 = vadd.f32 %v6280, %v6402
      %v6404 = vpop.f32.mrf.mxu0
      %6405 = vdwg.mxu0
      %6406 = vmatprep.subr.mxu0 0.0
      %6407 = vmatpush1.msra.mxu0 0.0
      %6408 = vmatprep.subr.mxu0 0.0
      %6409 = vmatpush1.msra.mxu0 0.0
      %6410 = vmatprep.subr.mxu0 0.0
      %6411 = vmatpush1.msra.mxu0 0.0
      %6412 = vmatprep.subr.mxu0 0.0
      %6413 = vmatpush1.msra.mxu0 0.0
      %6414 = vmatprep.subr.mxu0 0.0
      %6415 = vmatpush1.msra.mxu0 0.0
      %6416 = vmatprep.subr.mxu0 0.0
      %6417 = vmatpush1.msra.mxu0 0.0
      %6418 = vmatprep.subr.mxu0 0.0
      %6419 = vmatpush1.msra.mxu0 0.0
      %6420 = vmatprep.subr.mxu0 0.0
      %6421 = vmatpush1.msra.mxu0 0.0
      %6422 = vmatprep.subr.mxu0 0.0
      %6423 = vmatpush1.msra.mxu0 0.0
      %6424 = vmatprep.subr.mxu0 0.0
      %6425 = vmatpush1.msra.mxu0 0.0
      %6426 = vmatprep.subr.mxu0 0.0
      %6427 = vmatpush1.msra.mxu0 0.0
      %6428 = vmatprep.subr.mxu0 0.0
      %6429 = vmatpush1.msra.mxu0 0.0
      %6430 = vmatprep.subr.mxu0 0.0
      %6431 = vmatpush1.msra.mxu0 0.0
      %6432 = vmatprep.subr.mxu0 0.0
      %6433 = vmatpush1.msra.mxu0 0.0
      %6434 = vmatprep.subr.mxu0 0.0
      %v6435 = vand.u32 %v6135, 4294901760
      %v6436 = vsub.f32 %v6135, %v6435
      %6437 = vmatpush1.msra.mxu0 %v6436
      %6438 = vmatprep.subr.mxu0 0.0
      %v6439 = vand.u32 %v6134, 4294901760
      %v6440 = vsub.f32 %v6134, %v6439
      %6441 = vmatpush1.msra.mxu0 %v6440
      %6442 = vmatprep.subr.mxu0 0.0
      %6443 = vmatpush2.msra.mxu0 0.0
      %6444 = vmatprep.subr.mxu0 0.0
      %6445 = vmatpush2.msra.mxu0 0.0
      %6446 = vmatprep.subr.mxu0 0.0
      %6447 = vmatpush2.msra.mxu0 0.0
      %6448 = vmatprep.subr.mxu0 0.0
      %6449 = vmatpush2.msra.mxu0 0.0
      %6450 = vmatprep.subr.mxu0 0.0
      %6451 = vmatpush2.msra.mxu0 0.0
      %6452 = vmatprep.subr.mxu0 0.0
      %6453 = vmatpush2.msra.mxu0 0.0
      %6454 = vmatprep.subr.mxu0 0.0
      %6455 = vmatpush2.msra.mxu0 0.0
      %6456 = vmatprep.subr.mxu0 0.0
      %6457 = vmatpush2.msra.mxu0 0.0
      %6458 = vmatprep.subr.mxu0 0.0
      %6459 = vmatpush2.msra.mxu0 0.0
      %6460 = vmatprep.subr.mxu0 0.0
      %6461 = vmatpush2.msra.mxu0 0.0
      %6462 = vmatprep.subr.mxu0 0.0
      %6463 = vmatpush2.msra.mxu0 0.0
      %6464 = vmatprep.subr.mxu0 0.0
      %6465 = vmatpush2.msra.mxu0 0.0
      %6466 = vmatprep.subr.mxu0 0.0
      %6467 = vmatpush2.msra.mxu0 0.0
      %6468 = vmatprep.subr.mxu0 0.0
      %6469 = vmatpush2.msra.mxu0 0.0
      %6470 = vmatprep.subr.mxu0 0.0
      %6471 = vmatpush2.msra.mxu0 0.0
      %6472 = vmatprep.subr.mxu0 0.0
      %6473 = vmatpush2.msra.mxu0 0.0
      %6474 = vmatprep.mubr.f32.mxu0 0.0
      %v6475 = vand.u32 %v453, 4294901760
      %v6476 = vsub.f32 %v453, %v6475
      %6477 = vmatmul.mubr.f32.gmra.mxu0 %v6476
      %v6478 = vpop.f32.mrf.mxu0
      %v6479 = vadd.f32 %v6361, %v6478
      %v6480 = vpop.f32.mrf.mxu0
      %6481 = vmatprep.mubr.f32.mxu0 0.0
      %v6482 = vand.u32 %v456, 4294901760
      %v6483 = vsub.f32 %v456, %v6482
      %6484 = vmatmul.mubr.f32.gmra.mxu0 %v6483
      %v6485 = vpop.f32.mrf.mxu0
      %v6486 = vadd.f32 %v6367, %v6485
      %v6487 = vpop.f32.mrf.mxu0
      %6488 = vmatprep.mubr.f32.mxu0 0.0
      %v6489 = vand.u32 %v459, 4294901760
      %v6490 = vsub.f32 %v459, %v6489
      %6491 = vmatmul.mubr.f32.gmra.mxu0 %v6490
      %v6492 = vpop.f32.mrf.mxu0
      %v6493 = vadd.f32 %v6373, %v6492
      %v6494 = vpop.f32.mrf.mxu0
      %6495 = vmatprep.mubr.f32.mxu0 0.0
      %v6496 = vand.u32 %v462, 4294901760
      %v6497 = vsub.f32 %v462, %v6496
      %6498 = vmatmul.mubr.f32.gmra.mxu0 %v6497
      %v6499 = vpop.f32.mrf.mxu0
      %v6500 = vadd.f32 %v6379, %v6499
      %v6501 = vpop.f32.mrf.mxu0
      %6502 = vmatprep.mubr.f32.mxu0 0.0
      %v6503 = vand.u32 %v465, 4294901760
      %v6504 = vsub.f32 %v465, %v6503
      %6505 = vmatmul.mubr.f32.gmra.mxu0 %v6504
      %v6506 = vpop.f32.mrf.mxu0
      %v6507 = vadd.f32 %v6385, %v6506
      %v6508 = vpop.f32.mrf.mxu0
      %6509 = vmatprep.mubr.f32.mxu0 0.0
      %v6510 = vand.u32 %v468, 4294901760
      %v6511 = vsub.f32 %v468, %v6510
      %6512 = vmatmul.mubr.f32.gmra.mxu0 %v6511
      %v6513 = vpop.f32.mrf.mxu0
      %v6514 = vadd.f32 %v6391, %v6513
      %v6515 = vpop.f32.mrf.mxu0
      %6516 = vmatprep.mubr.f32.mxu0 0.0
      %v6517 = vand.u32 %v471, 4294901760
      %v6518 = vsub.f32 %v471, %v6517
      %6519 = vmatmul.mubr.f32.gmra.mxu0 %v6518
      %v6520 = vpop.f32.mrf.mxu0
      %v6521 = vadd.f32 %v6397, %v6520
      %v6522 = vpop.f32.mrf.mxu0
      %6523 = vmatprep.mubr.f32.mxu0 0.0
      %v6524 = vand.u32 %v474, 4294901760
      %v6525 = vsub.f32 %v474, %v6524
      %6526 = vmatmul.mubr.f32.gmra.mxu0 %v6525
      %v6527 = vpop.f32.mrf.mxu0
      %v6528 = vadd.f32 %v6403, %v6527
      %v6529 = vpop.f32.mrf.mxu0
      %6530 = vdwg.mxu0
      %6531 = vmatprep.subr.mxu0 0.0
      %6532 = vmatpush1.msra.mxu0 0.0
      %6533 = vmatprep.subr.mxu0 0.0
      %6534 = vmatpush1.msra.mxu0 0.0
      %6535 = vmatprep.subr.mxu0 0.0
      %6536 = vmatpush1.msra.mxu0 0.0
      %6537 = vmatprep.subr.mxu0 0.0
      %6538 = vmatpush1.msra.mxu0 0.0
      %6539 = vmatprep.subr.mxu0 0.0
      %6540 = vmatpush1.msra.mxu0 0.0
      %6541 = vmatprep.subr.mxu0 0.0
      %6542 = vmatpush1.msra.mxu0 0.0
      %6543 = vmatprep.subr.mxu0 0.0
      %6544 = vmatpush1.msra.mxu0 0.0
      %6545 = vmatprep.subr.mxu0 0.0
      %6546 = vmatpush1.msra.mxu0 0.0
      %6547 = vmatprep.subr.mxu0 0.0
      %6548 = vmatpush1.msra.mxu0 0.0
      %6549 = vmatprep.subr.mxu0 0.0
      %6550 = vmatpush1.msra.mxu0 0.0
      %6551 = vmatprep.subr.mxu0 0.0
      %6552 = vmatpush1.msra.mxu0 0.0
      %6553 = vmatprep.subr.mxu0 0.0
      %6554 = vmatpush1.msra.mxu0 0.0
      %6555 = vmatprep.subr.mxu0 0.0
      %6556 = vmatpush1.msra.mxu0 0.0
      %6557 = vmatprep.subr.mxu0 0.0
      %6558 = vmatpush1.msra.mxu0 0.0
      %6559 = vmatprep.subr.mxu0 0.0
      %v6560 = vand.u32 %v6135, 4294901760
      %6561 = vmatpush1.msra.mxu0 %v6560
      %6562 = vmatprep.subr.mxu0 0.0
      %v6563 = vand.u32 %v6134, 4294901760
      %6564 = vmatpush1.msra.mxu0 %v6563
      %6565 = vmatprep.subr.mxu0 0.0
      %6566 = vmatpush2.msra.mxu0 0.0
      %6567 = vmatprep.subr.mxu0 0.0
      %6568 = vmatpush2.msra.mxu0 0.0
      %6569 = vmatprep.subr.mxu0 0.0
      %6570 = vmatpush2.msra.mxu0 0.0
      %6571 = vmatprep.subr.mxu0 0.0
      %6572 = vmatpush2.msra.mxu0 0.0
      %6573 = vmatprep.subr.mxu0 0.0
      %6574 = vmatpush2.msra.mxu0 0.0
      %6575 = vmatprep.subr.mxu0 0.0
      %6576 = vmatpush2.msra.mxu0 0.0
      %6577 = vmatprep.subr.mxu0 0.0
      %6578 = vmatpush2.msra.mxu0 0.0
      %6579 = vmatprep.subr.mxu0 0.0
      %6580 = vmatpush2.msra.mxu0 0.0
      %6581 = vmatprep.subr.mxu0 0.0
      %6582 = vmatpush2.msra.mxu0 0.0
      %6583 = vmatprep.subr.mxu0 0.0
      %6584 = vmatpush2.msra.mxu0 0.0
      %6585 = vmatprep.subr.mxu0 0.0
      %6586 = vmatpush2.msra.mxu0 0.0
      %6587 = vmatprep.subr.mxu0 0.0
      %6588 = vmatpush2.msra.mxu0 0.0
      %6589 = vmatprep.subr.mxu0 0.0
      %6590 = vmatpush2.msra.mxu0 0.0
      %6591 = vmatprep.subr.mxu0 0.0
      %6592 = vmatpush2.msra.mxu0 0.0
      %6593 = vmatprep.subr.mxu0 0.0
      %6594 = vmatpush2.msra.mxu0 0.0
      %6595 = vmatprep.subr.mxu0 0.0
      %6596 = vmatpush2.msra.mxu0 0.0
      %6597 = vmatprep.mubr.f32.mxu0 0.0
      %v6598 = vand.u32 %v453, 4294901760
      %v6599 = vsub.f32 %v453, %v6598
      %v6600 = vand.u32 %v6599, 4294901760
      %6601 = vmatmul.mubr.f32.gmra.mxu0 %v6600
      %v6602 = vpop.f32.mrf.mxu0
      %v6603 = vadd.f32 %v6479, %v6602
      %v6604 = vpop.f32.mrf.mxu0
      %6605 = vmatprep.mubr.f32.mxu0 0.0
      %v6606 = vand.u32 %v456, 4294901760
      %v6607 = vsub.f32 %v456, %v6606
      %v6608 = vand.u32 %v6607, 4294901760
      %6609 = vmatmul.mubr.f32.gmra.mxu0 %v6608
      %v6610 = vpop.f32.mrf.mxu0
      %v6611 = vadd.f32 %v6486, %v6610
      %v6612 = vpop.f32.mrf.mxu0
      %6613 = vmatprep.mubr.f32.mxu0 0.0
      %v6614 = vand.u32 %v459, 4294901760
      %v6615 = vsub.f32 %v459, %v6614
      %v6616 = vand.u32 %v6615, 4294901760
      %6617 = vmatmul.mubr.f32.gmra.mxu0 %v6616
      %v6618 = vpop.f32.mrf.mxu0
      %v6619 = vadd.f32 %v6493, %v6618
      %v6620 = vpop.f32.mrf.mxu0
      %6621 = vmatprep.mubr.f32.mxu0 0.0
      %v6622 = vand.u32 %v462, 4294901760
      %v6623 = vsub.f32 %v462, %v6622
      %v6624 = vand.u32 %v6623, 4294901760
      %6625 = vmatmul.mubr.f32.gmra.mxu0 %v6624
      %v6626 = vpop.f32.mrf.mxu0
      %v6627 = vadd.f32 %v6500, %v6626
      %v6628 = vpop.f32.mrf.mxu0
      %6629 = vmatprep.mubr.f32.mxu0 0.0
      %v6630 = vand.u32 %v465, 4294901760
      %v6631 = vsub.f32 %v465, %v6630
      %v6632 = vand.u32 %v6631, 4294901760
      %6633 = vmatmul.mubr.f32.gmra.mxu0 %v6632
      %v6634 = vpop.f32.mrf.mxu0
      %v6635 = vadd.f32 %v6507, %v6634
      %v6636 = vpop.f32.mrf.mxu0
      %6637 = vmatprep.mubr.f32.mxu0 0.0
      %v6638 = vand.u32 %v468, 4294901760
      %v6639 = vsub.f32 %v468, %v6638
      %v6640 = vand.u32 %v6639, 4294901760
      %6641 = vmatmul.mubr.f32.gmra.mxu0 %v6640
      %v6642 = vpop.f32.mrf.mxu0
      %v6643 = vadd.f32 %v6514, %v6642
      %v6644 = vpop.f32.mrf.mxu0
      %6645 = vmatprep.mubr.f32.mxu0 0.0
      %v6646 = vand.u32 %v471, 4294901760
      %v6647 = vsub.f32 %v471, %v6646
      %v6648 = vand.u32 %v6647, 4294901760
      %6649 = vmatmul.mubr.f32.gmra.mxu0 %v6648
      %v6650 = vpop.f32.mrf.mxu0
      %v6651 = vadd.f32 %v6521, %v6650
      %v6652 = vpop.f32.mrf.mxu0
      %6653 = vmatprep.mubr.f32.mxu0 0.0
      %v6654 = vand.u32 %v474, 4294901760
      %v6655 = vsub.f32 %v474, %v6654
      %v6656 = vand.u32 %v6655, 4294901760
      %6657 = vmatmul.mubr.f32.gmra.mxu0 %v6656
      %v6658 = vpop.f32.mrf.mxu0
      %v6659 = vadd.f32 %v6528, %v6658
      %v6660 = vpop.f32.mrf.mxu0
      %6661 = vdwg.mxu0
      %6662 = vmatprep.subr.mxu0 0.0
      %6663 = vmatpush1.msra.mxu0 0.0
      %6664 = vmatprep.subr.mxu0 0.0
      %6665 = vmatpush1.msra.mxu0 0.0
      %6666 = vmatprep.subr.mxu0 0.0
      %6667 = vmatpush1.msra.mxu0 0.0
      %6668 = vmatprep.subr.mxu0 0.0
      %6669 = vmatpush1.msra.mxu0 0.0
      %6670 = vmatprep.subr.mxu0 0.0
      %6671 = vmatpush1.msra.mxu0 0.0
      %6672 = vmatprep.subr.mxu0 0.0
      %6673 = vmatpush1.msra.mxu0 0.0
      %6674 = vmatprep.subr.mxu0 0.0
      %6675 = vmatpush1.msra.mxu0 0.0
      %6676 = vmatprep.subr.mxu0 0.0
      %6677 = vmatpush1.msra.mxu0 0.0
      %6678 = vmatprep.subr.mxu0 0.0
      %6679 = vmatpush1.msra.mxu0 0.0
      %6680 = vmatprep.subr.mxu0 0.0
      %6681 = vmatpush1.msra.mxu0 0.0
      %6682 = vmatprep.subr.mxu0 0.0
      %6683 = vmatpush1.msra.mxu0 0.0
      %6684 = vmatprep.subr.mxu0 0.0
      %6685 = vmatpush1.msra.mxu0 0.0
      %6686 = vmatprep.subr.mxu0 0.0
      %6687 = vmatpush1.msra.mxu0 0.0
      %6688 = vmatprep.subr.mxu0 0.0
      %6689 = vmatpush1.msra.mxu0 0.0
      %6690 = vmatprep.subr.mxu0 0.0
      %v6691 = vand.u32 %v6135, 4294901760
      %v6692 = vsub.f32 %v6135, %v6691
      %v6693 = vand.u32 %v6692, 4294901760
      %6694 = vmatpush1.msra.mxu0 %v6693
      %6695 = vmatprep.subr.mxu0 0.0
      %v6696 = vand.u32 %v6134, 4294901760
      %v6697 = vsub.f32 %v6134, %v6696
      %v6698 = vand.u32 %v6697, 4294901760
      %6699 = vmatpush1.msra.mxu0 %v6698
      %6700 = vmatprep.subr.mxu0 0.0
      %6701 = vmatpush2.msra.mxu0 0.0
      %6702 = vmatprep.subr.mxu0 0.0
      %6703 = vmatpush2.msra.mxu0 0.0
      %6704 = vmatprep.subr.mxu0 0.0
      %6705 = vmatpush2.msra.mxu0 0.0
      %6706 = vmatprep.subr.mxu0 0.0
      %6707 = vmatpush2.msra.mxu0 0.0
      %6708 = vmatprep.subr.mxu0 0.0
      %6709 = vmatpush2.msra.mxu0 0.0
      %6710 = vmatprep.subr.mxu0 0.0
      %6711 = vmatpush2.msra.mxu0 0.0
      %6712 = vmatprep.subr.mxu0 0.0
      %6713 = vmatpush2.msra.mxu0 0.0
      %6714 = vmatprep.subr.mxu0 0.0
      %6715 = vmatpush2.msra.mxu0 0.0
      %6716 = vmatprep.subr.mxu0 0.0
      %6717 = vmatpush2.msra.mxu0 0.0
      %6718 = vmatprep.subr.mxu0 0.0
      %6719 = vmatpush2.msra.mxu0 0.0
      %6720 = vmatprep.subr.mxu0 0.0
      %6721 = vmatpush2.msra.mxu0 0.0
      %6722 = vmatprep.subr.mxu0 0.0
      %6723 = vmatpush2.msra.mxu0 0.0
      %6724 = vmatprep.subr.mxu0 0.0
      %6725 = vmatpush2.msra.mxu0 0.0
      %6726 = vmatprep.subr.mxu0 0.0
      %6727 = vmatpush2.msra.mxu0 0.0
      %6728 = vmatprep.subr.mxu0 0.0
      %6729 = vmatpush2.msra.mxu0 0.0
      %6730 = vmatprep.subr.mxu0 0.0
      %6731 = vmatpush2.msra.mxu0 0.0
      %6732 = vmatprep.mubr.f32.mxu0 0.0
      %v6733 = vand.u32 %v453, 4294901760
      %6734 = vmatmul.mubr.f32.gmra.mxu0 %v6733
      %v6735 = vpop.f32.mrf.mxu0
      %v6736 = vadd.f32 %v6603, %v6735
      %v6737 = vpop.f32.mrf.mxu0
      %6738 = vmatprep.mubr.f32.mxu0 0.0
      %v6739 = vand.u32 %v456, 4294901760
      %6740 = vmatmul.mubr.f32.gmra.mxu0 %v6739
      %v6741 = vpop.f32.mrf.mxu0
      %v6742 = vadd.f32 %v6611, %v6741
      %v6743 = vpop.f32.mrf.mxu0
      %6744 = vmatprep.mubr.f32.mxu0 0.0
      %v6745 = vand.u32 %v459, 4294901760
      %6746 = vmatmul.mubr.f32.gmra.mxu0 %v6745
      %v6747 = vpop.f32.mrf.mxu0
      %v6748 = vadd.f32 %v6619, %v6747
      %v6749 = vpop.f32.mrf.mxu0
      %6750 = vmatprep.mubr.f32.mxu0 0.0
      %v6751 = vand.u32 %v462, 4294901760
      %6752 = vmatmul.mubr.f32.gmra.mxu0 %v6751
      %v6753 = vpop.f32.mrf.mxu0
      %v6754 = vadd.f32 %v6627, %v6753
      %v6755 = vpop.f32.mrf.mxu0
      %6756 = vmatprep.mubr.f32.mxu0 0.0
      %v6757 = vand.u32 %v465, 4294901760
      %6758 = vmatmul.mubr.f32.gmra.mxu0 %v6757
      %v6759 = vpop.f32.mrf.mxu0
      %v6760 = vadd.f32 %v6635, %v6759
      %v6761 = vpop.f32.mrf.mxu0
      %6762 = vmatprep.mubr.f32.mxu0 0.0
      %v6763 = vand.u32 %v468, 4294901760
      %6764 = vmatmul.mubr.f32.gmra.mxu0 %v6763
      %v6765 = vpop.f32.mrf.mxu0
      %v6766 = vadd.f32 %v6643, %v6765
      %v6767 = vpop.f32.mrf.mxu0
      %6768 = vmatprep.mubr.f32.mxu0 0.0
      %v6769 = vand.u32 %v471, 4294901760
      %6770 = vmatmul.mubr.f32.gmra.mxu0 %v6769
      %v6771 = vpop.f32.mrf.mxu0
      %v6772 = vadd.f32 %v6651, %v6771
      %v6773 = vpop.f32.mrf.mxu0
      %6774 = vmatprep.mubr.f32.mxu0 0.0
      %v6775 = vand.u32 %v474, 4294901760
      %6776 = vmatmul.mubr.f32.gmra.mxu0 %v6775
      %v6777 = vpop.f32.mrf.mxu0
      %v6778 = vadd.f32 %v6659, %v6777
      %v6779 = vpop.f32.mrf.mxu0
      %6780 = vdwg.mxu0
      %6781 = vmatprep.subr.mxu0 0.0
      %6782 = vmatpush1.msra.mxu0 0.0
      %6783 = vmatprep.subr.mxu0 0.0
      %6784 = vmatpush1.msra.mxu0 0.0
      %6785 = vmatprep.subr.mxu0 0.0
      %6786 = vmatpush1.msra.mxu0 0.0
      %6787 = vmatprep.subr.mxu0 0.0
      %6788 = vmatpush1.msra.mxu0 0.0
      %6789 = vmatprep.subr.mxu0 0.0
      %6790 = vmatpush1.msra.mxu0 0.0
      %6791 = vmatprep.subr.mxu0 0.0
      %6792 = vmatpush1.msra.mxu0 0.0
      %6793 = vmatprep.subr.mxu0 0.0
      %6794 = vmatpush1.msra.mxu0 0.0
      %6795 = vmatprep.subr.mxu0 0.0
      %6796 = vmatpush1.msra.mxu0 0.0
      %6797 = vmatprep.subr.mxu0 0.0
      %6798 = vmatpush1.msra.mxu0 0.0
      %6799 = vmatprep.subr.mxu0 0.0
      %6800 = vmatpush1.msra.mxu0 0.0
      %6801 = vmatprep.subr.mxu0 0.0
      %6802 = vmatpush1.msra.mxu0 0.0
      %6803 = vmatprep.subr.mxu0 0.0
      %6804 = vmatpush1.msra.mxu0 0.0
      %6805 = vmatprep.subr.mxu0 0.0
      %6806 = vmatpush1.msra.mxu0 0.0
      %6807 = vmatprep.subr.mxu0 0.0
      %6808 = vmatpush1.msra.mxu0 0.0
      %6809 = vmatprep.subr.mxu0 0.0
      %v6810 = vand.u32 %v6135, 4294901760
      %6811 = vmatpush1.msra.mxu0 %v6810
      %6812 = vmatprep.subr.mxu0 0.0
      %v6813 = vand.u32 %v6134, 4294901760
      %6814 = vmatpush1.msra.mxu0 %v6813
      %6815 = vmatprep.subr.mxu0 0.0
      %6816 = vmatpush2.msra.mxu0 0.0
      %6817 = vmatprep.subr.mxu0 0.0
      %6818 = vmatpush2.msra.mxu0 0.0
      %6819 = vmatprep.subr.mxu0 0.0
      %6820 = vmatpush2.msra.mxu0 0.0
      %6821 = vmatprep.subr.mxu0 0.0
      %6822 = vmatpush2.msra.mxu0 0.0
      %6823 = vmatprep.subr.mxu0 0.0
      %6824 = vmatpush2.msra.mxu0 0.0
      %6825 = vmatprep.subr.mxu0 0.0
      %6826 = vmatpush2.msra.mxu0 0.0
      %6827 = vmatprep.subr.mxu0 0.0
      %6828 = vmatpush2.msra.mxu0 0.0
      %6829 = vmatprep.subr.mxu0 0.0
      %6830 = vmatpush2.msra.mxu0 0.0
      %6831 = vmatprep.subr.mxu0 0.0
      %6832 = vmatpush2.msra.mxu0 0.0
      %6833 = vmatprep.subr.mxu0 0.0
      %6834 = vmatpush2.msra.mxu0 0.0
      %6835 = vmatprep.subr.mxu0 0.0
      %6836 = vmatpush2.msra.mxu0 0.0
      %6837 = vmatprep.subr.mxu0 0.0
      %6838 = vmatpush2.msra.mxu0 0.0
      %6839 = vmatprep.subr.mxu0 0.0
      %6840 = vmatpush2.msra.mxu0 0.0
      %6841 = vmatprep.subr.mxu0 0.0
      %6842 = vmatpush2.msra.mxu0 0.0
      %6843 = vmatprep.subr.mxu0 0.0
      %6844 = vmatpush2.msra.mxu0 0.0
      %6845 = vmatprep.subr.mxu0 0.0
      %6846 = vmatpush2.msra.mxu0 0.0
      %6847 = vmatprep.mubr.f32.mxu0 0.0
      %v6848 = vand.u32 %v453, 4294901760
      %6849 = vmatmul.mubr.f32.gmra.mxu0 %v6848
      %v6850 = vpop.f32.mrf.mxu0
      %v6851 = vadd.f32 %v6736, %v6850
      %v6852 = vpop.f32.mrf.mxu0
      %6853 = vmatprep.mubr.f32.mxu0 0.0
      %v6854 = vand.u32 %v456, 4294901760
      %6855 = vmatmul.mubr.f32.gmra.mxu0 %v6854
      %v6856 = vpop.f32.mrf.mxu0
      %v6857 = vadd.f32 %v6742, %v6856
      %v6858 = vpop.f32.mrf.mxu0
      %6859 = vmatprep.mubr.f32.mxu0 0.0
      %v6860 = vand.u32 %v459, 4294901760
      %6861 = vmatmul.mubr.f32.gmra.mxu0 %v6860
      %v6862 = vpop.f32.mrf.mxu0
      %v6863 = vadd.f32 %v6748, %v6862
      %v6864 = vpop.f32.mrf.mxu0
      %6865 = vmatprep.mubr.f32.mxu0 0.0
      %v6866 = vand.u32 %v462, 4294901760
      %6867 = vmatmul.mubr.f32.gmra.mxu0 %v6866
      %v6868 = vpop.f32.mrf.mxu0
      %v6869 = vadd.f32 %v6754, %v6868
      %v6870 = vpop.f32.mrf.mxu0
      %6871 = vmatprep.mubr.f32.mxu0 0.0
      %v6872 = vand.u32 %v465, 4294901760
      %6873 = vmatmul.mubr.f32.gmra.mxu0 %v6872
      %v6874 = vpop.f32.mrf.mxu0
      %v6875 = vadd.f32 %v6760, %v6874
      %v6876 = vpop.f32.mrf.mxu0
      %6877 = vmatprep.mubr.f32.mxu0 0.0
      %v6878 = vand.u32 %v468, 4294901760
      %6879 = vmatmul.mubr.f32.gmra.mxu0 %v6878
      %v6880 = vpop.f32.mrf.mxu0
      %v6881 = vadd.f32 %v6766, %v6880
      %v6882 = vpop.f32.mrf.mxu0
      %6883 = vmatprep.mubr.f32.mxu0 0.0
      %v6884 = vand.u32 %v471, 4294901760
      %6885 = vmatmul.mubr.f32.gmra.mxu0 %v6884
      %v6886 = vpop.f32.mrf.mxu0
      %v6887 = vadd.f32 %v6772, %v6886
      %v6888 = vpop.f32.mrf.mxu0
      %6889 = vmatprep.mubr.f32.mxu0 0.0
      %v6890 = vand.u32 %v474, 4294901760
      %6891 = vmatmul.mubr.f32.gmra.mxu0 %v6890
      %v6892 = vpop.f32.mrf.mxu0
      %v6893 = vadd.f32 %v6778, %v6892
      %v6894 = vpop.f32.mrf.mxu0
      %6895 = vdwg.mxu0
      %v6897 = vsel %vm314, %v5325, 0
      %v6900 = vsel %vm314, %v5331, 0
      %v6903 = vsel %vm314, %v5337, 0
      %v6906 = vsel %vm314, %v5343, 0
      %v6909 = vsel %vm314, %v5349, 0
      %v6912 = vsel %vm314, %v5355, 0
      %v6915 = vsel %vm314, %v5361, 0
      %v6918 = vsel %vm314, %v5367, 0
      %v6921 = vsel %vm314, %v6088, 0
      %v6924 = vsel %vm314, %v6094, 0
      %v6927 = vsel %vm314, %v6100, 0
      %v6930 = vsel %vm314, %v6106, 0
      %v6933 = vsel %vm314, %v6112, 0
      %v6936 = vsel %vm314, %v6118, 0
      %v6939 = vsel %vm314, %v6124, 0
      %v6942 = vsel %vm314, %v6130, 0
      %6944 = vmatprep.subr.mxu0 0.0
      %6945 = vmatpush1.xpose.msra.mxu0 0.0
      %6946 = vmatprep.subr.mxu0 0.0
      %6947 = vmatpush1.xpose.msra.mxu0 0.0
      %6948 = vmatprep.subr.mxu0 0.0
      %6949 = vmatpush1.xpose.msra.mxu0 0.0
      %6950 = vmatprep.subr.mxu0 0.0
      %6951 = vmatpush1.xpose.msra.mxu0 0.0
      %6952 = vmatprep.subr.mxu0 0.0
      %6953 = vmatpush1.xpose.msra.mxu0 0.0
      %6954 = vmatprep.subr.mxu0 0.0
      %6955 = vmatpush1.xpose.msra.mxu0 0.0
      %6956 = vmatprep.subr.mxu0 0.0
      %6957 = vmatpush1.xpose.msra.mxu0 0.0
      %6958 = vmatprep.subr.mxu0 0.0
      %6959 = vmatpush1.xpose.msra.mxu0 0.0
      %6960 = vmatprep.subr.mxu0 0.0
      %v6961 = vand.u32 %v6942, 4294901760
      %6962 = vmatpush1.xpose.msra.mxu0 %v6961
      %6963 = vmatprep.subr.mxu0 0.0
      %v6964 = vand.u32 %v6939, 4294901760
      %6965 = vmatpush1.xpose.msra.mxu0 %v6964
      %6966 = vmatprep.subr.mxu0 0.0
      %v6967 = vand.u32 %v6936, 4294901760
      %6968 = vmatpush1.xpose.msra.mxu0 %v6967
      %6969 = vmatprep.subr.mxu0 0.0
      %v6970 = vand.u32 %v6933, 4294901760
      %6971 = vmatpush1.xpose.msra.mxu0 %v6970
      %6972 = vmatprep.subr.mxu0 0.0
      %v6973 = vand.u32 %v6930, 4294901760
      %6974 = vmatpush1.xpose.msra.mxu0 %v6973
      %6975 = vmatprep.subr.mxu0 0.0
      %v6976 = vand.u32 %v6927, 4294901760
      %6977 = vmatpush1.xpose.msra.mxu0 %v6976
      %6978 = vmatprep.subr.mxu0 0.0
      %v6979 = vand.u32 %v6924, 4294901760
      %6980 = vmatpush1.xpose.msra.mxu0 %v6979
      %6981 = vmatprep.subr.mxu0 0.0
      %v6982 = vand.u32 %v6921, 4294901760
      %6983 = vmatpush1.xpose.msra.mxu0 %v6982
      %6984 = vmatprep.subr.mxu0 0.0
      %6985 = vmatpush2.xpose.msra.mxu0 0.0
      %6986 = vmatprep.subr.mxu0 0.0
      %6987 = vmatpush2.xpose.msra.mxu0 0.0
      %6988 = vmatprep.subr.mxu0 0.0
      %6989 = vmatpush2.xpose.msra.mxu0 0.0
      %6990 = vmatprep.subr.mxu0 0.0
      %6991 = vmatpush2.xpose.msra.mxu0 0.0
      %6992 = vmatprep.subr.mxu0 0.0
      %6993 = vmatpush2.xpose.msra.mxu0 0.0
      %6994 = vmatprep.subr.mxu0 0.0
      %6995 = vmatpush2.xpose.msra.mxu0 0.0
      %6996 = vmatprep.subr.mxu0 0.0
      %6997 = vmatpush2.xpose.msra.mxu0 0.0
      %6998 = vmatprep.subr.mxu0 0.0
      %6999 = vmatpush2.xpose.msra.mxu0 0.0
      %7000 = vmatprep.subr.mxu0 0.0
      %7001 = vmatpush2.xpose.msra.mxu0 0.0
      %7002 = vmatprep.subr.mxu0 0.0
      %7003 = vmatpush2.xpose.msra.mxu0 0.0
      %7004 = vmatprep.subr.mxu0 0.0
      %7005 = vmatpush2.xpose.msra.mxu0 0.0
      %7006 = vmatprep.subr.mxu0 0.0
      %7007 = vmatpush2.xpose.msra.mxu0 0.0
      %7008 = vmatprep.subr.mxu0 0.0
      %7009 = vmatpush2.xpose.msra.mxu0 0.0
      %7010 = vmatprep.subr.mxu0 0.0
      %7011 = vmatpush2.xpose.msra.mxu0 0.0
      %7012 = vmatprep.subr.mxu0 0.0
      %7013 = vmatpush2.xpose.msra.mxu0 0.0
      %7014 = vmatprep.subr.mxu0 0.0
      %7015 = vmatpush2.xpose.msra.mxu0 0.0
      %7016 = vmatprep.mubr.f32.mxu0 0.0
      %v7017 = vand.u32 %v6897, 4294901760
      %v7018 = vsub.f32 %v6897, %v7017
      %v7019 = vand.u32 %v7018, 4294901760
      %v7020 = vsub.f32 %v7018, %v7019
      %v7021 = vand.u32 %v7020, 4294901760
      %7022 = vmatmul.mubr.f32.gmra.mxu0 %v7021
      %v7023 = vpop.f32.mrf.mxu0
      %v7024 = vadd.f32 0.0, %v7023
      %v7025 = vpop.f32.mrf.mxu0
      %7026 = vmatprep.mubr.f32.mxu0 0.0
      %v7027 = vand.u32 %v6900, 4294901760
      %v7028 = vsub.f32 %v6900, %v7027
      %v7029 = vand.u32 %v7028, 4294901760
      %v7030 = vsub.f32 %v7028, %v7029
      %v7031 = vand.u32 %v7030, 4294901760
      %7032 = vmatmul.mubr.f32.gmra.mxu0 %v7031
      %v7033 = vpop.f32.mrf.mxu0
      %v7034 = vadd.f32 0.0, %v7033
      %v7035 = vpop.f32.mrf.mxu0
      %7036 = vmatprep.mubr.f32.mxu0 0.0
      %v7037 = vand.u32 %v6903, 4294901760
      %v7038 = vsub.f32 %v6903, %v7037
      %v7039 = vand.u32 %v7038, 4294901760
      %v7040 = vsub.f32 %v7038, %v7039
      %v7041 = vand.u32 %v7040, 4294901760
      %7042 = vmatmul.mubr.f32.gmra.mxu0 %v7041
      %v7043 = vpop.f32.mrf.mxu0
      %v7044 = vadd.f32 0.0, %v7043
      %v7045 = vpop.f32.mrf.mxu0
      %7046 = vmatprep.mubr.f32.mxu0 0.0
      %v7047 = vand.u32 %v6906, 4294901760
      %v7048 = vsub.f32 %v6906, %v7047
      %v7049 = vand.u32 %v7048, 4294901760
      %v7050 = vsub.f32 %v7048, %v7049
      %v7051 = vand.u32 %v7050, 4294901760
      %7052 = vmatmul.mubr.f32.gmra.mxu0 %v7051
      %v7053 = vpop.f32.mrf.mxu0
      %v7054 = vadd.f32 0.0, %v7053
      %v7055 = vpop.f32.mrf.mxu0
      %7056 = vmatprep.mubr.f32.mxu0 0.0
      %v7057 = vand.u32 %v6909, 4294901760
      %v7058 = vsub.f32 %v6909, %v7057
      %v7059 = vand.u32 %v7058, 4294901760
      %v7060 = vsub.f32 %v7058, %v7059
      %v7061 = vand.u32 %v7060, 4294901760
      %7062 = vmatmul.mubr.f32.gmra.mxu0 %v7061
      %v7063 = vpop.f32.mrf.mxu0
      %v7064 = vadd.f32 0.0, %v7063
      %v7065 = vpop.f32.mrf.mxu0
      %7066 = vmatprep.mubr.f32.mxu0 0.0
      %v7067 = vand.u32 %v6912, 4294901760
      %v7068 = vsub.f32 %v6912, %v7067
      %v7069 = vand.u32 %v7068, 4294901760
      %v7070 = vsub.f32 %v7068, %v7069
      %v7071 = vand.u32 %v7070, 4294901760
      %7072 = vmatmul.mubr.f32.gmra.mxu0 %v7071
      %v7073 = vpop.f32.mrf.mxu0
      %v7074 = vadd.f32 0.0, %v7073
      %v7075 = vpop.f32.mrf.mxu0
      %7076 = vmatprep.mubr.f32.mxu0 0.0
      %v7077 = vand.u32 %v6915, 4294901760
      %v7078 = vsub.f32 %v6915, %v7077
      %v7079 = vand.u32 %v7078, 4294901760
      %v7080 = vsub.f32 %v7078, %v7079
      %v7081 = vand.u32 %v7080, 4294901760
      %7082 = vmatmul.mubr.f32.gmra.mxu0 %v7081
      %v7083 = vpop.f32.mrf.mxu0
      %v7084 = vadd.f32 0.0, %v7083
      %v7085 = vpop.f32.mrf.mxu0
      %7086 = vmatprep.mubr.f32.mxu0 0.0
      %v7087 = vand.u32 %v6918, 4294901760
      %v7088 = vsub.f32 %v6918, %v7087
      %v7089 = vand.u32 %v7088, 4294901760
      %v7090 = vsub.f32 %v7088, %v7089
      %v7091 = vand.u32 %v7090, 4294901760
      %7092 = vmatmul.mubr.f32.gmra.mxu0 %v7091
      %v7093 = vpop.f32.mrf.mxu0
      %v7094 = vadd.f32 0.0, %v7093
      %v7095 = vpop.f32.mrf.mxu0
      %7096 = vdwg.mxu0
      %7097 = vmatprep.subr.mxu0 0.0
      %7098 = vmatpush1.xpose.msra.mxu0 0.0
      %7099 = vmatprep.subr.mxu0 0.0
      %7100 = vmatpush1.xpose.msra.mxu0 0.0
      %7101 = vmatprep.subr.mxu0 0.0
      %7102 = vmatpush1.xpose.msra.mxu0 0.0
      %7103 = vmatprep.subr.mxu0 0.0
      %7104 = vmatpush1.xpose.msra.mxu0 0.0
      %7105 = vmatprep.subr.mxu0 0.0
      %7106 = vmatpush1.xpose.msra.mxu0 0.0
      %7107 = vmatprep.subr.mxu0 0.0
      %7108 = vmatpush1.xpose.msra.mxu0 0.0
      %7109 = vmatprep.subr.mxu0 0.0
      %7110 = vmatpush1.xpose.msra.mxu0 0.0
      %7111 = vmatprep.subr.mxu0 0.0
      %7112 = vmatpush1.xpose.msra.mxu0 0.0
      %7113 = vmatprep.subr.mxu0 0.0
      %v7114 = vand.u32 %v6942, 4294901760
      %v7115 = vsub.f32 %v6942, %v7114
      %v7116 = vand.u32 %v7115, 4294901760
      %v7117 = vsub.f32 %v7115, %v7116
      %v7118 = vand.u32 %v7117, 4294901760
      %7119 = vmatpush1.xpose.msra.mxu0 %v7118
      %7120 = vmatprep.subr.mxu0 0.0
      %v7121 = vand.u32 %v6939, 4294901760
      %v7122 = vsub.f32 %v6939, %v7121
      %v7123 = vand.u32 %v7122, 4294901760
      %v7124 = vsub.f32 %v7122, %v7123
      %v7125 = vand.u32 %v7124, 4294901760
      %7126 = vmatpush1.xpose.msra.mxu0 %v7125
      %7127 = vmatprep.subr.mxu0 0.0
      %v7128 = vand.u32 %v6936, 4294901760
      %v7129 = vsub.f32 %v6936, %v7128
      %v7130 = vand.u32 %v7129, 4294901760
      %v7131 = vsub.f32 %v7129, %v7130
      %v7132 = vand.u32 %v7131, 4294901760
      %7133 = vmatpush1.xpose.msra.mxu0 %v7132
      %7134 = vmatprep.subr.mxu0 0.0
      %v7135 = vand.u32 %v6933, 4294901760
      %v7136 = vsub.f32 %v6933, %v7135
      %v7137 = vand.u32 %v7136, 4294901760
      %v7138 = vsub.f32 %v7136, %v7137
      %v7139 = vand.u32 %v7138, 4294901760
      %7140 = vmatpush1.xpose.msra.mxu0 %v7139
      %7141 = vmatprep.subr.mxu0 0.0
      %v7142 = vand.u32 %v6930, 4294901760
      %v7143 = vsub.f32 %v6930, %v7142
      %v7144 = vand.u32 %v7143, 4294901760
      %v7145 = vsub.f32 %v7143, %v7144
      %v7146 = vand.u32 %v7145, 4294901760
      %7147 = vmatpush1.xpose.msra.mxu0 %v7146
      %7148 = vmatprep.subr.mxu0 0.0
      %v7149 = vand.u32 %v6927, 4294901760
      %v7150 = vsub.f32 %v6927, %v7149
      %v7151 = vand.u32 %v7150, 4294901760
      %v7152 = vsub.f32 %v7150, %v7151
      %v7153 = vand.u32 %v7152, 4294901760
      %7154 = vmatpush1.xpose.msra.mxu0 %v7153
      %7155 = vmatprep.subr.mxu0 0.0
      %v7156 = vand.u32 %v6924, 4294901760
      %v7157 = vsub.f32 %v6924, %v7156
      %v7158 = vand.u32 %v7157, 4294901760
      %v7159 = vsub.f32 %v7157, %v7158
      %v7160 = vand.u32 %v7159, 4294901760
      %7161 = vmatpush1.xpose.msra.mxu0 %v7160
      %7162 = vmatprep.subr.mxu0 0.0
      %v7163 = vand.u32 %v6921, 4294901760
      %v7164 = vsub.f32 %v6921, %v7163
      %v7165 = vand.u32 %v7164, 4294901760
      %v7166 = vsub.f32 %v7164, %v7165
      %v7167 = vand.u32 %v7166, 4294901760
      %7168 = vmatpush1.xpose.msra.mxu0 %v7167
      %7169 = vmatprep.subr.mxu0 0.0
      %7170 = vmatpush2.xpose.msra.mxu0 0.0
      %7171 = vmatprep.subr.mxu0 0.0
      %7172 = vmatpush2.xpose.msra.mxu0 0.0
      %7173 = vmatprep.subr.mxu0 0.0
      %7174 = vmatpush2.xpose.msra.mxu0 0.0
      %7175 = vmatprep.subr.mxu0 0.0
      %7176 = vmatpush2.xpose.msra.mxu0 0.0
      %7177 = vmatprep.subr.mxu0 0.0
      %7178 = vmatpush2.xpose.msra.mxu0 0.0
      %7179 = vmatprep.subr.mxu0 0.0
      %7180 = vmatpush2.xpose.msra.mxu0 0.0
      %7181 = vmatprep.subr.mxu0 0.0
      %7182 = vmatpush2.xpose.msra.mxu0 0.0
      %7183 = vmatprep.subr.mxu0 0.0
      %7184 = vmatpush2.xpose.msra.mxu0 0.0
      %7185 = vmatprep.subr.mxu0 0.0
      %7186 = vmatpush2.xpose.msra.mxu0 0.0
      %7187 = vmatprep.subr.mxu0 0.0
      %7188 = vmatpush2.xpose.msra.mxu0 0.0
      %7189 = vmatprep.subr.mxu0 0.0
      %7190 = vmatpush2.xpose.msra.mxu0 0.0
      %7191 = vmatprep.subr.mxu0 0.0
      %7192 = vmatpush2.xpose.msra.mxu0 0.0
      %7193 = vmatprep.subr.mxu0 0.0
      %7194 = vmatpush2.xpose.msra.mxu0 0.0
      %7195 = vmatprep.subr.mxu0 0.0
      %7196 = vmatpush2.xpose.msra.mxu0 0.0
      %7197 = vmatprep.subr.mxu0 0.0
      %7198 = vmatpush2.xpose.msra.mxu0 0.0
      %7199 = vmatprep.subr.mxu0 0.0
      %7200 = vmatpush2.xpose.msra.mxu0 0.0
      %7201 = vmatprep.mubr.f32.mxu0 0.0
      %v7202 = vand.u32 %v6897, 4294901760
      %7203 = vmatmul.mubr.f32.gmra.mxu0 %v7202
      %v7204 = vpop.f32.mrf.mxu0
      %v7205 = vadd.f32 %v7024, %v7204
      %v7206 = vpop.f32.mrf.mxu0
      %7207 = vmatprep.mubr.f32.mxu0 0.0
      %v7208 = vand.u32 %v6900, 4294901760
      %7209 = vmatmul.mubr.f32.gmra.mxu0 %v7208
      %v7210 = vpop.f32.mrf.mxu0
      %v7211 = vadd.f32 %v7034, %v7210
      %v7212 = vpop.f32.mrf.mxu0
      %7213 = vmatprep.mubr.f32.mxu0 0.0
      %v7214 = vand.u32 %v6903, 4294901760
      %7215 = vmatmul.mubr.f32.gmra.mxu0 %v7214
      %v7216 = vpop.f32.mrf.mxu0
      %v7217 = vadd.f32 %v7044, %v7216
      %v7218 = vpop.f32.mrf.mxu0
      %7219 = vmatprep.mubr.f32.mxu0 0.0
      %v7220 = vand.u32 %v6906, 4294901760
      %7221 = vmatmul.mubr.f32.gmra.mxu0 %v7220
      %v7222 = vpop.f32.mrf.mxu0
      %v7223 = vadd.f32 %v7054, %v7222
      %v7224 = vpop.f32.mrf.mxu0
      %7225 = vmatprep.mubr.f32.mxu0 0.0
      %v7226 = vand.u32 %v6909, 4294901760
      %7227 = vmatmul.mubr.f32.gmra.mxu0 %v7226
      %v7228 = vpop.f32.mrf.mxu0
      %v7229 = vadd.f32 %v7064, %v7228
      %v7230 = vpop.f32.mrf.mxu0
      %7231 = vmatprep.mubr.f32.mxu0 0.0
      %v7232 = vand.u32 %v6912, 4294901760
      %7233 = vmatmul.mubr.f32.gmra.mxu0 %v7232
      %v7234 = vpop.f32.mrf.mxu0
      %v7235 = vadd.f32 %v7074, %v7234
      %v7236 = vpop.f32.mrf.mxu0
      %7237 = vmatprep.mubr.f32.mxu0 0.0
      %v7238 = vand.u32 %v6915, 4294901760
      %7239 = vmatmul.mubr.f32.gmra.mxu0 %v7238
      %v7240 = vpop.f32.mrf.mxu0
      %v7241 = vadd.f32 %v7084, %v7240
      %v7242 = vpop.f32.mrf.mxu0
      %7243 = vmatprep.mubr.f32.mxu0 0.0
      %v7244 = vand.u32 %v6918, 4294901760
      %7245 = vmatmul.mubr.f32.gmra.mxu0 %v7244
      %v7246 = vpop.f32.mrf.mxu0
      %v7247 = vadd.f32 %v7094, %v7246
      %v7248 = vpop.f32.mrf.mxu0
      %7249 = vdwg.mxu0
      %7250 = vmatprep.subr.mxu0 0.0
      %7251 = vmatpush1.xpose.msra.mxu0 0.0
      %7252 = vmatprep.subr.mxu0 0.0
      %7253 = vmatpush1.xpose.msra.mxu0 0.0
      %7254 = vmatprep.subr.mxu0 0.0
      %7255 = vmatpush1.xpose.msra.mxu0 0.0
      %7256 = vmatprep.subr.mxu0 0.0
      %7257 = vmatpush1.xpose.msra.mxu0 0.0
      %7258 = vmatprep.subr.mxu0 0.0
      %7259 = vmatpush1.xpose.msra.mxu0 0.0
      %7260 = vmatprep.subr.mxu0 0.0
      %7261 = vmatpush1.xpose.msra.mxu0 0.0
      %7262 = vmatprep.subr.mxu0 0.0
      %7263 = vmatpush1.xpose.msra.mxu0 0.0
      %7264 = vmatprep.subr.mxu0 0.0
      %7265 = vmatpush1.xpose.msra.mxu0 0.0
      %7266 = vmatprep.subr.mxu0 0.0
      %v7267 = vand.u32 %v6942, 4294901760
      %v7268 = vsub.f32 %v6942, %v7267
      %7269 = vmatpush1.xpose.msra.mxu0 %v7268
      %7270 = vmatprep.subr.mxu0 0.0
      %v7271 = vand.u32 %v6939, 4294901760
      %v7272 = vsub.f32 %v6939, %v7271
      %7273 = vmatpush1.xpose.msra.mxu0 %v7272
      %7274 = vmatprep.subr.mxu0 0.0
      %v7275 = vand.u32 %v6936, 4294901760
      %v7276 = vsub.f32 %v6936, %v7275
      %7277 = vmatpush1.xpose.msra.mxu0 %v7276
      %7278 = vmatprep.subr.mxu0 0.0
      %v7279 = vand.u32 %v6933, 4294901760
      %v7280 = vsub.f32 %v6933, %v7279
      %7281 = vmatpush1.xpose.msra.mxu0 %v7280
      %7282 = vmatprep.subr.mxu0 0.0
      %v7283 = vand.u32 %v6930, 4294901760
      %v7284 = vsub.f32 %v6930, %v7283
      %7285 = vmatpush1.xpose.msra.mxu0 %v7284
      %7286 = vmatprep.subr.mxu0 0.0
      %v7287 = vand.u32 %v6927, 4294901760
      %v7288 = vsub.f32 %v6927, %v7287
      %7289 = vmatpush1.xpose.msra.mxu0 %v7288
      %7290 = vmatprep.subr.mxu0 0.0
      %v7291 = vand.u32 %v6924, 4294901760
      %v7292 = vsub.f32 %v6924, %v7291
      %7293 = vmatpush1.xpose.msra.mxu0 %v7292
      %7294 = vmatprep.subr.mxu0 0.0
      %v7295 = vand.u32 %v6921, 4294901760
      %v7296 = vsub.f32 %v6921, %v7295
      %7297 = vmatpush1.xpose.msra.mxu0 %v7296
      %7298 = vmatprep.subr.mxu0 0.0
      %7299 = vmatpush2.xpose.msra.mxu0 0.0
      %7300 = vmatprep.subr.mxu0 0.0
      %7301 = vmatpush2.xpose.msra.mxu0 0.0
      %7302 = vmatprep.subr.mxu0 0.0
      %7303 = vmatpush2.xpose.msra.mxu0 0.0
      %7304 = vmatprep.subr.mxu0 0.0
      %7305 = vmatpush2.xpose.msra.mxu0 0.0
      %7306 = vmatprep.subr.mxu0 0.0
      %7307 = vmatpush2.xpose.msra.mxu0 0.0
      %7308 = vmatprep.subr.mxu0 0.0
      %7309 = vmatpush2.xpose.msra.mxu0 0.0
      %7310 = vmatprep.subr.mxu0 0.0
      %7311 = vmatpush2.xpose.msra.mxu0 0.0
      %7312 = vmatprep.subr.mxu0 0.0
      %7313 = vmatpush2.xpose.msra.mxu0 0.0
      %7314 = vmatprep.subr.mxu0 0.0
      %7315 = vmatpush2.xpose.msra.mxu0 0.0
      %7316 = vmatprep.subr.mxu0 0.0
      %7317 = vmatpush2.xpose.msra.mxu0 0.0
      %7318 = vmatprep.subr.mxu0 0.0
      %7319 = vmatpush2.xpose.msra.mxu0 0.0
      %7320 = vmatprep.subr.mxu0 0.0
      %7321 = vmatpush2.xpose.msra.mxu0 0.0
      %7322 = vmatprep.subr.mxu0 0.0
      %7323 = vmatpush2.xpose.msra.mxu0 0.0
      %7324 = vmatprep.subr.mxu0 0.0
      %7325 = vmatpush2.xpose.msra.mxu0 0.0
      %7326 = vmatprep.subr.mxu0 0.0
      %7327 = vmatpush2.xpose.msra.mxu0 0.0
      %7328 = vmatprep.subr.mxu0 0.0
      %7329 = vmatpush2.xpose.msra.mxu0 0.0
      %7330 = vmatprep.mubr.f32.mxu0 0.0
      %v7331 = vand.u32 %v6897, 4294901760
      %v7332 = vsub.f32 %v6897, %v7331
      %7333 = vmatmul.mubr.f32.gmra.mxu0 %v7332
      %v7334 = vpop.f32.mrf.mxu0
      %v7335 = vadd.f32 %v7205, %v7334
      %v7336 = vpop.f32.mrf.mxu0
      %7337 = vmatprep.mubr.f32.mxu0 0.0
      %v7338 = vand.u32 %v6900, 4294901760
      %v7339 = vsub.f32 %v6900, %v7338
      %7340 = vmatmul.mubr.f32.gmra.mxu0 %v7339
      %v7341 = vpop.f32.mrf.mxu0
      %v7342 = vadd.f32 %v7211, %v7341
      %v7343 = vpop.f32.mrf.mxu0
      %7344 = vmatprep.mubr.f32.mxu0 0.0
      %v7345 = vand.u32 %v6903, 4294901760
      %v7346 = vsub.f32 %v6903, %v7345
      %7347 = vmatmul.mubr.f32.gmra.mxu0 %v7346
      %v7348 = vpop.f32.mrf.mxu0
      %v7349 = vadd.f32 %v7217, %v7348
      %v7350 = vpop.f32.mrf.mxu0
      %7351 = vmatprep.mubr.f32.mxu0 0.0
      %v7352 = vand.u32 %v6906, 4294901760
      %v7353 = vsub.f32 %v6906, %v7352
      %7354 = vmatmul.mubr.f32.gmra.mxu0 %v7353
      %v7355 = vpop.f32.mrf.mxu0
      %v7356 = vadd.f32 %v7223, %v7355
      %v7357 = vpop.f32.mrf.mxu0
      %7358 = vmatprep.mubr.f32.mxu0 0.0
      %v7359 = vand.u32 %v6909, 4294901760
      %v7360 = vsub.f32 %v6909, %v7359
      %7361 = vmatmul.mubr.f32.gmra.mxu0 %v7360
      %v7362 = vpop.f32.mrf.mxu0
      %v7363 = vadd.f32 %v7229, %v7362
      %v7364 = vpop.f32.mrf.mxu0
      %7365 = vmatprep.mubr.f32.mxu0 0.0
      %v7366 = vand.u32 %v6912, 4294901760
      %v7367 = vsub.f32 %v6912, %v7366
      %7368 = vmatmul.mubr.f32.gmra.mxu0 %v7367
      %v7369 = vpop.f32.mrf.mxu0
      %v7370 = vadd.f32 %v7235, %v7369
      %v7371 = vpop.f32.mrf.mxu0
      %7372 = vmatprep.mubr.f32.mxu0 0.0
      %v7373 = vand.u32 %v6915, 4294901760
      %v7374 = vsub.f32 %v6915, %v7373
      %7375 = vmatmul.mubr.f32.gmra.mxu0 %v7374
      %v7376 = vpop.f32.mrf.mxu0
      %v7377 = vadd.f32 %v7241, %v7376
      %v7378 = vpop.f32.mrf.mxu0
      %7379 = vmatprep.mubr.f32.mxu0 0.0
      %v7380 = vand.u32 %v6918, 4294901760
      %v7381 = vsub.f32 %v6918, %v7380
      %7382 = vmatmul.mubr.f32.gmra.mxu0 %v7381
      %v7383 = vpop.f32.mrf.mxu0
      %v7384 = vadd.f32 %v7247, %v7383
      %v7385 = vpop.f32.mrf.mxu0
      %7386 = vdwg.mxu0
      %7387 = vmatprep.subr.mxu0 0.0
      %7388 = vmatpush1.xpose.msra.mxu0 0.0
      %7389 = vmatprep.subr.mxu0 0.0
      %7390 = vmatpush1.xpose.msra.mxu0 0.0
      %7391 = vmatprep.subr.mxu0 0.0
      %7392 = vmatpush1.xpose.msra.mxu0 0.0
      %7393 = vmatprep.subr.mxu0 0.0
      %7394 = vmatpush1.xpose.msra.mxu0 0.0
      %7395 = vmatprep.subr.mxu0 0.0
      %7396 = vmatpush1.xpose.msra.mxu0 0.0
      %7397 = vmatprep.subr.mxu0 0.0
      %7398 = vmatpush1.xpose.msra.mxu0 0.0
      %7399 = vmatprep.subr.mxu0 0.0
      %7400 = vmatpush1.xpose.msra.mxu0 0.0
      %7401 = vmatprep.subr.mxu0 0.0
      %7402 = vmatpush1.xpose.msra.mxu0 0.0
      %7403 = vmatprep.subr.mxu0 0.0
      %v7404 = vand.u32 %v6942, 4294901760
      %7405 = vmatpush1.xpose.msra.mxu0 %v7404
      %7406 = vmatprep.subr.mxu0 0.0
      %v7407 = vand.u32 %v6939, 4294901760
      %7408 = vmatpush1.xpose.msra.mxu0 %v7407
      %7409 = vmatprep.subr.mxu0 0.0
      %v7410 = vand.u32 %v6936, 4294901760
      %7411 = vmatpush1.xpose.msra.mxu0 %v7410
      %7412 = vmatprep.subr.mxu0 0.0
      %v7413 = vand.u32 %v6933, 4294901760
      %7414 = vmatpush1.xpose.msra.mxu0 %v7413
      %7415 = vmatprep.subr.mxu0 0.0
      %v7416 = vand.u32 %v6930, 4294901760
      %7417 = vmatpush1.xpose.msra.mxu0 %v7416
      %7418 = vmatprep.subr.mxu0 0.0
      %v7419 = vand.u32 %v6927, 4294901760
      %7420 = vmatpush1.xpose.msra.mxu0 %v7419
      %7421 = vmatprep.subr.mxu0 0.0
      %v7422 = vand.u32 %v6924, 4294901760
      %7423 = vmatpush1.xpose.msra.mxu0 %v7422
      %7424 = vmatprep.subr.mxu0 0.0
      %v7425 = vand.u32 %v6921, 4294901760
      %7426 = vmatpush1.xpose.msra.mxu0 %v7425
      %7427 = vmatprep.subr.mxu0 0.0
      %7428 = vmatpush2.xpose.msra.mxu0 0.0
      %7429 = vmatprep.subr.mxu0 0.0
      %7430 = vmatpush2.xpose.msra.mxu0 0.0
      %7431 = vmatprep.subr.mxu0 0.0
      %7432 = vmatpush2.xpose.msra.mxu0 0.0
      %7433 = vmatprep.subr.mxu0 0.0
      %7434 = vmatpush2.xpose.msra.mxu0 0.0
      %7435 = vmatprep.subr.mxu0 0.0
      %7436 = vmatpush2.xpose.msra.mxu0 0.0
      %7437 = vmatprep.subr.mxu0 0.0
      %7438 = vmatpush2.xpose.msra.mxu0 0.0
      %7439 = vmatprep.subr.mxu0 0.0
      %7440 = vmatpush2.xpose.msra.mxu0 0.0
      %7441 = vmatprep.subr.mxu0 0.0
      %7442 = vmatpush2.xpose.msra.mxu0 0.0
      %7443 = vmatprep.subr.mxu0 0.0
      %7444 = vmatpush2.xpose.msra.mxu0 0.0
      %7445 = vmatprep.subr.mxu0 0.0
      %7446 = vmatpush2.xpose.msra.mxu0 0.0
      %7447 = vmatprep.subr.mxu0 0.0
      %7448 = vmatpush2.xpose.msra.mxu0 0.0
      %7449 = vmatprep.subr.mxu0 0.0
      %7450 = vmatpush2.xpose.msra.mxu0 0.0
      %7451 = vmatprep.subr.mxu0 0.0
      %7452 = vmatpush2.xpose.msra.mxu0 0.0
      %7453 = vmatprep.subr.mxu0 0.0
      %7454 = vmatpush2.xpose.msra.mxu0 0.0
      %7455 = vmatprep.subr.mxu0 0.0
      %7456 = vmatpush2.xpose.msra.mxu0 0.0
      %7457 = vmatprep.subr.mxu0 0.0
      %7458 = vmatpush2.xpose.msra.mxu0 0.0
      %7459 = vmatprep.mubr.f32.mxu0 0.0
      %v7460 = vand.u32 %v6897, 4294901760
      %v7461 = vsub.f32 %v6897, %v7460
      %v7462 = vand.u32 %v7461, 4294901760
      %7463 = vmatmul.mubr.f32.gmra.mxu0 %v7462
      %v7464 = vpop.f32.mrf.mxu0
      %v7465 = vadd.f32 %v7335, %v7464
      %v7466 = vpop.f32.mrf.mxu0
      %7467 = vmatprep.mubr.f32.mxu0 0.0
      %v7468 = vand.u32 %v6900, 4294901760
      %v7469 = vsub.f32 %v6900, %v7468
      %v7470 = vand.u32 %v7469, 4294901760
      %7471 = vmatmul.mubr.f32.gmra.mxu0 %v7470
      %v7472 = vpop.f32.mrf.mxu0
      %v7473 = vadd.f32 %v7342, %v7472
      %v7474 = vpop.f32.mrf.mxu0
      %7475 = vmatprep.mubr.f32.mxu0 0.0
      %v7476 = vand.u32 %v6903, 4294901760
      %v7477 = vsub.f32 %v6903, %v7476
      %v7478 = vand.u32 %v7477, 4294901760
      %7479 = vmatmul.mubr.f32.gmra.mxu0 %v7478
      %v7480 = vpop.f32.mrf.mxu0
      %v7481 = vadd.f32 %v7349, %v7480
      %v7482 = vpop.f32.mrf.mxu0
      %7483 = vmatprep.mubr.f32.mxu0 0.0
      %v7484 = vand.u32 %v6906, 4294901760
      %v7485 = vsub.f32 %v6906, %v7484
      %v7486 = vand.u32 %v7485, 4294901760
      %7487 = vmatmul.mubr.f32.gmra.mxu0 %v7486
      %v7488 = vpop.f32.mrf.mxu0
      %v7489 = vadd.f32 %v7356, %v7488
      %v7490 = vpop.f32.mrf.mxu0
      %7491 = vmatprep.mubr.f32.mxu0 0.0
      %v7492 = vand.u32 %v6909, 4294901760
      %v7493 = vsub.f32 %v6909, %v7492
      %v7494 = vand.u32 %v7493, 4294901760
      %7495 = vmatmul.mubr.f32.gmra.mxu0 %v7494
      %v7496 = vpop.f32.mrf.mxu0
      %v7497 = vadd.f32 %v7363, %v7496
      %v7498 = vpop.f32.mrf.mxu0
      %7499 = vmatprep.mubr.f32.mxu0 0.0
      %v7500 = vand.u32 %v6912, 4294901760
      %v7501 = vsub.f32 %v6912, %v7500
      %v7502 = vand.u32 %v7501, 4294901760
      %7503 = vmatmul.mubr.f32.gmra.mxu0 %v7502
      %v7504 = vpop.f32.mrf.mxu0
      %v7505 = vadd.f32 %v7370, %v7504
      %v7506 = vpop.f32.mrf.mxu0
      %7507 = vmatprep.mubr.f32.mxu0 0.0
      %v7508 = vand.u32 %v6915, 4294901760
      %v7509 = vsub.f32 %v6915, %v7508
      %v7510 = vand.u32 %v7509, 4294901760
      %7511 = vmatmul.mubr.f32.gmra.mxu0 %v7510
      %v7512 = vpop.f32.mrf.mxu0
      %v7513 = vadd.f32 %v7377, %v7512
      %v7514 = vpop.f32.mrf.mxu0
      %7515 = vmatprep.mubr.f32.mxu0 0.0
      %v7516 = vand.u32 %v6918, 4294901760
      %v7517 = vsub.f32 %v6918, %v7516
      %v7518 = vand.u32 %v7517, 4294901760
      %7519 = vmatmul.mubr.f32.gmra.mxu0 %v7518
      %v7520 = vpop.f32.mrf.mxu0
      %v7521 = vadd.f32 %v7384, %v7520
      %v7522 = vpop.f32.mrf.mxu0
      %7523 = vdwg.mxu0
      %7524 = vmatprep.subr.mxu0 0.0
      %7525 = vmatpush1.xpose.msra.mxu0 0.0
      %7526 = vmatprep.subr.mxu0 0.0
      %7527 = vmatpush1.xpose.msra.mxu0 0.0
      %7528 = vmatprep.subr.mxu0 0.0
      %7529 = vmatpush1.xpose.msra.mxu0 0.0
      %7530 = vmatprep.subr.mxu0 0.0
      %7531 = vmatpush1.xpose.msra.mxu0 0.0
      %7532 = vmatprep.subr.mxu0 0.0
      %7533 = vmatpush1.xpose.msra.mxu0 0.0
      %7534 = vmatprep.subr.mxu0 0.0
      %7535 = vmatpush1.xpose.msra.mxu0 0.0
      %7536 = vmatprep.subr.mxu0 0.0
      %7537 = vmatpush1.xpose.msra.mxu0 0.0
      %7538 = vmatprep.subr.mxu0 0.0
      %7539 = vmatpush1.xpose.msra.mxu0 0.0
      %7540 = vmatprep.subr.mxu0 0.0
      %v7541 = vand.u32 %v6942, 4294901760
      %v7542 = vsub.f32 %v6942, %v7541
      %v7543 = vand.u32 %v7542, 4294901760
      %7544 = vmatpush1.xpose.msra.mxu0 %v7543
      %7545 = vmatprep.subr.mxu0 0.0
      %v7546 = vand.u32 %v6939, 4294901760
      %v7547 = vsub.f32 %v6939, %v7546
      %v7548 = vand.u32 %v7547, 4294901760
      %7549 = vmatpush1.xpose.msra.mxu0 %v7548
      %7550 = vmatprep.subr.mxu0 0.0
      %v7551 = vand.u32 %v6936, 4294901760
      %v7552 = vsub.f32 %v6936, %v7551
      %v7553 = vand.u32 %v7552, 4294901760
      %7554 = vmatpush1.xpose.msra.mxu0 %v7553
      %7555 = vmatprep.subr.mxu0 0.0
      %v7556 = vand.u32 %v6933, 4294901760
      %v7557 = vsub.f32 %v6933, %v7556
      %v7558 = vand.u32 %v7557, 4294901760
      %7559 = vmatpush1.xpose.msra.mxu0 %v7558
      %7560 = vmatprep.subr.mxu0 0.0
      %v7561 = vand.u32 %v6930, 4294901760
      %v7562 = vsub.f32 %v6930, %v7561
      %v7563 = vand.u32 %v7562, 4294901760
      %7564 = vmatpush1.xpose.msra.mxu0 %v7563
      %7565 = vmatprep.subr.mxu0 0.0
      %v7566 = vand.u32 %v6927, 4294901760
      %v7567 = vsub.f32 %v6927, %v7566
      %v7568 = vand.u32 %v7567, 4294901760
      %7569 = vmatpush1.xpose.msra.mxu0 %v7568
      %7570 = vmatprep.subr.mxu0 0.0
      %v7571 = vand.u32 %v6924, 4294901760
      %v7572 = vsub.f32 %v6924, %v7571
      %v7573 = vand.u32 %v7572, 4294901760
      %7574 = vmatpush1.xpose.msra.mxu0 %v7573
      %7575 = vmatprep.subr.mxu0 0.0
      %v7576 = vand.u32 %v6921, 4294901760
      %v7577 = vsub.f32 %v6921, %v7576
      %v7578 = vand.u32 %v7577, 4294901760
      %7579 = vmatpush1.xpose.msra.mxu0 %v7578
      %7580 = vmatprep.subr.mxu0 0.0
      %7581 = vmatpush2.xpose.msra.mxu0 0.0
      %7582 = vmatprep.subr.mxu0 0.0
      %7583 = vmatpush2.xpose.msra.mxu0 0.0
      %7584 = vmatprep.subr.mxu0 0.0
      %7585 = vmatpush2.xpose.msra.mxu0 0.0
      %7586 = vmatprep.subr.mxu0 0.0
      %7587 = vmatpush2.xpose.msra.mxu0 0.0
      %7588 = vmatprep.subr.mxu0 0.0
      %7589 = vmatpush2.xpose.msra.mxu0 0.0
      %7590 = vmatprep.subr.mxu0 0.0
      %7591 = vmatpush2.xpose.msra.mxu0 0.0
      %7592 = vmatprep.subr.mxu0 0.0
      %7593 = vmatpush2.xpose.msra.mxu0 0.0
      %7594 = vmatprep.subr.mxu0 0.0
      %7595 = vmatpush2.xpose.msra.mxu0 0.0
      %7596 = vmatprep.subr.mxu0 0.0
      %7597 = vmatpush2.xpose.msra.mxu0 0.0
      %7598 = vmatprep.subr.mxu0 0.0
      %7599 = vmatpush2.xpose.msra.mxu0 0.0
      %7600 = vmatprep.subr.mxu0 0.0
      %7601 = vmatpush2.xpose.msra.mxu0 0.0
      %7602 = vmatprep.subr.mxu0 0.0
      %7603 = vmatpush2.xpose.msra.mxu0 0.0
      %7604 = vmatprep.subr.mxu0 0.0
      %7605 = vmatpush2.xpose.msra.mxu0 0.0
      %7606 = vmatprep.subr.mxu0 0.0
      %7607 = vmatpush2.xpose.msra.mxu0 0.0
      %7608 = vmatprep.subr.mxu0 0.0
      %7609 = vmatpush2.xpose.msra.mxu0 0.0
      %7610 = vmatprep.subr.mxu0 0.0
      %7611 = vmatpush2.xpose.msra.mxu0 0.0
      %7612 = vmatprep.mubr.f32.mxu0 0.0
      %v7613 = vand.u32 %v6897, 4294901760
      %7614 = vmatmul.mubr.f32.gmra.mxu0 %v7613
      %v7615 = vpop.f32.mrf.mxu0
      %v7616 = vadd.f32 %v7465, %v7615
      %v7617 = vpop.f32.mrf.mxu0
      %7618 = vmatprep.mubr.f32.mxu0 0.0
      %v7619 = vand.u32 %v6900, 4294901760
      %7620 = vmatmul.mubr.f32.gmra.mxu0 %v7619
      %v7621 = vpop.f32.mrf.mxu0
      %v7622 = vadd.f32 %v7473, %v7621
      %v7623 = vpop.f32.mrf.mxu0
      %7624 = vmatprep.mubr.f32.mxu0 0.0
      %v7625 = vand.u32 %v6903, 4294901760
      %7626 = vmatmul.mubr.f32.gmra.mxu0 %v7625
      %v7627 = vpop.f32.mrf.mxu0
      %v7628 = vadd.f32 %v7481, %v7627
      %v7629 = vpop.f32.mrf.mxu0
      %7630 = vmatprep.mubr.f32.mxu0 0.0
      %v7631 = vand.u32 %v6906, 4294901760
      %7632 = vmatmul.mubr.f32.gmra.mxu0 %v7631
      %v7633 = vpop.f32.mrf.mxu0
      %v7634 = vadd.f32 %v7489, %v7633
      %v7635 = vpop.f32.mrf.mxu0
      %7636 = vmatprep.mubr.f32.mxu0 0.0
      %v7637 = vand.u32 %v6909, 4294901760
      %7638 = vmatmul.mubr.f32.gmra.mxu0 %v7637
      %v7639 = vpop.f32.mrf.mxu0
      %v7640 = vadd.f32 %v7497, %v7639
      %v7641 = vpop.f32.mrf.mxu0
      %7642 = vmatprep.mubr.f32.mxu0 0.0
      %v7643 = vand.u32 %v6912, 4294901760
      %7644 = vmatmul.mubr.f32.gmra.mxu0 %v7643
      %v7645 = vpop.f32.mrf.mxu0
      %v7646 = vadd.f32 %v7505, %v7645
      %v7647 = vpop.f32.mrf.mxu0
      %7648 = vmatprep.mubr.f32.mxu0 0.0
      %v7649 = vand.u32 %v6915, 4294901760
      %7650 = vmatmul.mubr.f32.gmra.mxu0 %v7649
      %v7651 = vpop.f32.mrf.mxu0
      %v7652 = vadd.f32 %v7513, %v7651
      %v7653 = vpop.f32.mrf.mxu0
      %7654 = vmatprep.mubr.f32.mxu0 0.0
      %v7655 = vand.u32 %v6918, 4294901760
      %7656 = vmatmul.mubr.f32.gmra.mxu0 %v7655
      %v7657 = vpop.f32.mrf.mxu0
      %v7658 = vadd.f32 %v7521, %v7657
      %v7659 = vpop.f32.mrf.mxu0
      %7660 = vdwg.mxu0
      %7661 = vmatprep.subr.mxu0 0.0
      %7662 = vmatpush1.xpose.msra.mxu0 0.0
      %7663 = vmatprep.subr.mxu0 0.0
      %7664 = vmatpush1.xpose.msra.mxu0 0.0
      %7665 = vmatprep.subr.mxu0 0.0
      %7666 = vmatpush1.xpose.msra.mxu0 0.0
      %7667 = vmatprep.subr.mxu0 0.0
      %7668 = vmatpush1.xpose.msra.mxu0 0.0
      %7669 = vmatprep.subr.mxu0 0.0
      %7670 = vmatpush1.xpose.msra.mxu0 0.0
      %7671 = vmatprep.subr.mxu0 0.0
      %7672 = vmatpush1.xpose.msra.mxu0 0.0
      %7673 = vmatprep.subr.mxu0 0.0
      %7674 = vmatpush1.xpose.msra.mxu0 0.0
      %7675 = vmatprep.subr.mxu0 0.0
      %7676 = vmatpush1.xpose.msra.mxu0 0.0
      %7677 = vmatprep.subr.mxu0 0.0
      %v7678 = vand.u32 %v6942, 4294901760
      %7679 = vmatpush1.xpose.msra.mxu0 %v7678
      %7680 = vmatprep.subr.mxu0 0.0
      %v7681 = vand.u32 %v6939, 4294901760
      %7682 = vmatpush1.xpose.msra.mxu0 %v7681
      %7683 = vmatprep.subr.mxu0 0.0
      %v7684 = vand.u32 %v6936, 4294901760
      %7685 = vmatpush1.xpose.msra.mxu0 %v7684
      %7686 = vmatprep.subr.mxu0 0.0
      %v7687 = vand.u32 %v6933, 4294901760
      %7688 = vmatpush1.xpose.msra.mxu0 %v7687
      %7689 = vmatprep.subr.mxu0 0.0
      %v7690 = vand.u32 %v6930, 4294901760
      %7691 = vmatpush1.xpose.msra.mxu0 %v7690
      %7692 = vmatprep.subr.mxu0 0.0
      %v7693 = vand.u32 %v6927, 4294901760
      %7694 = vmatpush1.xpose.msra.mxu0 %v7693
      %7695 = vmatprep.subr.mxu0 0.0
      %v7696 = vand.u32 %v6924, 4294901760
      %7697 = vmatpush1.xpose.msra.mxu0 %v7696
      %7698 = vmatprep.subr.mxu0 0.0
      %v7699 = vand.u32 %v6921, 4294901760
      %7700 = vmatpush1.xpose.msra.mxu0 %v7699
      %7701 = vmatprep.subr.mxu0 0.0
      %7702 = vmatpush2.xpose.msra.mxu0 0.0
      %7703 = vmatprep.subr.mxu0 0.0
      %7704 = vmatpush2.xpose.msra.mxu0 0.0
      %7705 = vmatprep.subr.mxu0 0.0
      %7706 = vmatpush2.xpose.msra.mxu0 0.0
      %7707 = vmatprep.subr.mxu0 0.0
      %7708 = vmatpush2.xpose.msra.mxu0 0.0
      %7709 = vmatprep.subr.mxu0 0.0
      %7710 = vmatpush2.xpose.msra.mxu0 0.0
      %7711 = vmatprep.subr.mxu0 0.0
      %7712 = vmatpush2.xpose.msra.mxu0 0.0
      %7713 = vmatprep.subr.mxu0 0.0
      %7714 = vmatpush2.xpose.msra.mxu0 0.0
      %7715 = vmatprep.subr.mxu0 0.0
      %7716 = vmatpush2.xpose.msra.mxu0 0.0
      %7717 = vmatprep.subr.mxu0 0.0
      %7718 = vmatpush2.xpose.msra.mxu0 0.0
      %7719 = vmatprep.subr.mxu0 0.0
      %7720 = vmatpush2.xpose.msra.mxu0 0.0
      %7721 = vmatprep.subr.mxu0 0.0
      %7722 = vmatpush2.xpose.msra.mxu0 0.0
      %7723 = vmatprep.subr.mxu0 0.0
      %7724 = vmatpush2.xpose.msra.mxu0 0.0
      %7725 = vmatprep.subr.mxu0 0.0
      %7726 = vmatpush2.xpose.msra.mxu0 0.0
      %7727 = vmatprep.subr.mxu0 0.0
      %7728 = vmatpush2.xpose.msra.mxu0 0.0
      %7729 = vmatprep.subr.mxu0 0.0
      %7730 = vmatpush2.xpose.msra.mxu0 0.0
      %7731 = vmatprep.subr.mxu0 0.0
      %7732 = vmatpush2.xpose.msra.mxu0 0.0
      %7733 = vmatprep.mubr.f32.mxu0 0.0
      %v7734 = vand.u32 %v6897, 4294901760
      %7735 = vmatmul.mubr.f32.gmra.mxu0 %v7734
      %v7736 = vpop.f32.mrf.mxu0
      %v7737 = vadd.f32 %v7616, %v7736
      %v7738 = vpop.f32.mrf.mxu0
      %7739 = vmatprep.mubr.f32.mxu0 0.0
      %v7740 = vand.u32 %v6900, 4294901760
      %7741 = vmatmul.mubr.f32.gmra.mxu0 %v7740
      %v7742 = vpop.f32.mrf.mxu0
      %v7743 = vadd.f32 %v7622, %v7742
      %v7744 = vpop.f32.mrf.mxu0
      %7745 = vmatprep.mubr.f32.mxu0 0.0
      %v7746 = vand.u32 %v6903, 4294901760
      %7747 = vmatmul.mubr.f32.gmra.mxu0 %v7746
      %v7748 = vpop.f32.mrf.mxu0
      %v7749 = vadd.f32 %v7628, %v7748
      %v7750 = vpop.f32.mrf.mxu0
      %7751 = vmatprep.mubr.f32.mxu0 0.0
      %v7752 = vand.u32 %v6906, 4294901760
      %7753 = vmatmul.mubr.f32.gmra.mxu0 %v7752
      %v7754 = vpop.f32.mrf.mxu0
      %v7755 = vadd.f32 %v7634, %v7754
      %v7756 = vpop.f32.mrf.mxu0
      %7757 = vmatprep.mubr.f32.mxu0 0.0
      %v7758 = vand.u32 %v6909, 4294901760
      %7759 = vmatmul.mubr.f32.gmra.mxu0 %v7758
      %v7760 = vpop.f32.mrf.mxu0
      %v7761 = vadd.f32 %v7640, %v7760
      %v7762 = vpop.f32.mrf.mxu0
      %7763 = vmatprep.mubr.f32.mxu0 0.0
      %v7764 = vand.u32 %v6912, 4294901760
      %7765 = vmatmul.mubr.f32.gmra.mxu0 %v7764
      %v7766 = vpop.f32.mrf.mxu0
      %v7767 = vadd.f32 %v7646, %v7766
      %v7768 = vpop.f32.mrf.mxu0
      %7769 = vmatprep.mubr.f32.mxu0 0.0
      %v7770 = vand.u32 %v6915, 4294901760
      %7771 = vmatmul.mubr.f32.gmra.mxu0 %v7770
      %v7772 = vpop.f32.mrf.mxu0
      %v7773 = vadd.f32 %v7652, %v7772
      %v7774 = vpop.f32.mrf.mxu0
      %7775 = vmatprep.mubr.f32.mxu0 0.0
      %v7776 = vand.u32 %v6918, 4294901760
      %7777 = vmatmul.mubr.f32.gmra.mxu0 %v7776
      %v7778 = vpop.f32.mrf.mxu0
      %v7779 = vadd.f32 %v7658, %v7778
      %v7780 = vpop.f32.mrf.mxu0
      %7781 = vdwg.mxu0
      %v7782 = vmul.f32 %v7737, 0.25
      %v7783 = vmul.f32 %v7743, 0.25
      %v7784 = vmul.f32 %v7749, 0.25
      %v7785 = vmul.f32 %v7755, 0.25
      %v7786 = vmul.f32 %v7761, 0.25
      %v7787 = vmul.f32 %v7767, 0.25
      %v7788 = vmul.f32 %v7773, 0.25
      %v7789 = vmul.f32 %v7779, 0.25
      %v7790 = vsel %vm3654, %v7782, -inf
      %7791 = vmax.xlane.f32.xlu0 %v7790
      %v7792 = vpop.xlane.xlu0 %7791
      %v7793 = vsel %vm3654, %v7783, -inf
      %7794 = vmax.xlane.f32.xlu0 %v7793
      %v7795 = vpop.xlane.xlu0 %7794
      %v7796 = vsel %vm3654, %v7784, -inf
      %7797 = vmax.xlane.f32.xlu0 %v7796
      %v7798 = vpop.xlane.xlu0 %7797
      %v7799 = vsel %vm3654, %v7785, -inf
      %7800 = vmax.xlane.f32.xlu0 %v7799
      %v7801 = vpop.xlane.xlu0 %7800
      %v7802 = vsel %vm3654, %v7786, -inf
      %7803 = vmax.xlane.f32.xlu0 %v7802
      %v7804 = vpop.xlane.xlu0 %7803
      %v7805 = vsel %vm3654, %v7787, -inf
      %7806 = vmax.xlane.f32.xlu0 %v7805
      %v7807 = vpop.xlane.xlu0 %7806
      %v7808 = vsel %vm3654, %v7788, -inf
      %7809 = vmax.xlane.f32.xlu0 %v7808
      %v7810 = vpop.xlane.xlu0 %7809
      %v7811 = vsel %vm3654, %v7789, -inf
      %7812 = vmax.xlane.f32.xlu0 %v7811
      %v7813 = vpop.xlane.xlu0 %7812
      %v7814 = vsub.f32 %v7782, %v7792
      %v7815 = vsub.f32 %v7783, %v7795
      %v7816 = vsub.f32 %v7784, %v7798
      %v7817 = vsub.f32 %v7785, %v7801
      %v7818 = vsub.f32 %v7786, %v7804
      %v7819 = vsub.f32 %v7787, %v7807
      %v7820 = vsub.f32 %v7788, %v7810
      %v7821 = vsub.f32 %v7789, %v7813
      %v7822 = vmul.f32 %v7814, 1.442695
      %v7823 = vpow.pop %v7822
      %v7824 = vmul.f32 %v7815, 1.442695
      %v7825 = vpow.pop %v7824
      %v7826 = vmul.f32 %v7816, 1.442695
      %v7827 = vpow.pop %v7826
      %v7828 = vmul.f32 %v7817, 1.442695
      %v7829 = vpow.pop %v7828
      %v7830 = vmul.f32 %v7818, 1.442695
      %v7831 = vpow.pop %v7830
      %v7832 = vmul.f32 %v7819, 1.442695
      %v7833 = vpow.pop %v7832
      %v7834 = vmul.f32 %v7820, 1.442695
      %v7835 = vpow.pop %v7834
      %v7836 = vmul.f32 %v7821, 1.442695
      %v7837 = vpow.pop %v7836
      %v7838 = vsel %vm3654, %v7823, 0.0
      %7839 = vadd.xlane.f32.xlu0 %v7838
      %v7840 = vpop.xlane.xlu0 %7839
      %v7841 = vsel %vm3654, %v7825, 0.0
      %7842 = vadd.xlane.f32.xlu0 %v7841
      %v7843 = vpop.xlane.xlu0 %7842
      %v7844 = vsel %vm3654, %v7827, 0.0
      %7845 = vadd.xlane.f32.xlu0 %v7844
      %v7846 = vpop.xlane.xlu0 %7845
      %v7847 = vsel %vm3654, %v7829, 0.0
      %7848 = vadd.xlane.f32.xlu0 %v7847
      %v7849 = vpop.xlane.xlu0 %7848
      %v7850 = vsel %vm3654, %v7831, 0.0
      %7851 = vadd.xlane.f32.xlu0 %v7850
      %v7852 = vpop.xlane.xlu0 %7851
      %v7853 = vsel %vm3654, %v7833, 0.0
      %7854 = vadd.xlane.f32.xlu0 %v7853
      %v7855 = vpop.xlane.xlu0 %7854
      %v7856 = vsel %vm3654, %v7835, 0.0
      %7857 = vadd.xlane.f32.xlu0 %v7856
      %v7858 = vpop.xlane.xlu0 %7857
      %v7859 = vsel %vm3654, %v7837, 0.0
      %7860 = vadd.xlane.f32.xlu0 %v7859
      %v7861 = vpop.xlane.xlu0 %7860
      %v7862 = vrcp.pop %v7840
      %v7863 = vmul.f32 %v7823, %v7862
      %v7864 = vrcp.pop %v7843
      %v7865 = vmul.f32 %v7825, %v7864
      %v7866 = vrcp.pop %v7846
      %v7867 = vmul.f32 %v7827, %v7866
      %v7868 = vrcp.pop %v7849
      %v7869 = vmul.f32 %v7829, %v7868
      %v7870 = vrcp.pop %v7852
      %v7871 = vmul.f32 %v7831, %v7870
      %v7872 = vrcp.pop %v7855
      %v7873 = vmul.f32 %v7833, %v7872
      %v7874 = vrcp.pop %v7858
      %v7875 = vmul.f32 %v7835, %v7874
      %v7876 = vrcp.pop %v7861
      %v7877 = vmul.f32 %v7837, %v7876
      %v7879 = vsel %vm3654, %v7863, 0
      %v7882 = vsel %vm3654, %v7865, 0
      %v7885 = vsel %vm3654, %v7867, 0
      %v7888 = vsel %vm3654, %v7869, 0
      %v7891 = vsel %vm3654, %v7871, 0
      %v7894 = vsel %vm3654, %v7873, 0
      %v7897 = vsel %vm3654, %v7875, 0
      %v7900 = vsel %vm3654, %v7877, 0
      %7902 = vmatprep.subr.mxu0 0.0
      %7903 = vmatpush1.msra.mxu0 0.0
      %7904 = vmatprep.subr.mxu0 0.0
      %7905 = vmatpush1.msra.mxu0 0.0
      %7906 = vmatprep.subr.mxu0 0.0
      %7907 = vmatpush1.msra.mxu0 0.0
      %7908 = vmatprep.subr.mxu0 0.0
      %7909 = vmatpush1.msra.mxu0 0.0
      %7910 = vmatprep.subr.mxu0 0.0
      %7911 = vmatpush1.msra.mxu0 0.0
      %7912 = vmatprep.subr.mxu0 0.0
      %7913 = vmatpush1.msra.mxu0 0.0
      %7914 = vmatprep.subr.mxu0 0.0
      %7915 = vmatpush1.msra.mxu0 0.0
      %7916 = vmatprep.subr.mxu0 0.0
      %7917 = vmatpush1.msra.mxu0 0.0
      %7918 = vmatprep.subr.mxu0 0.0
      %v7919 = vand.u32 %v6893, 4294901760
      %7920 = vmatpush1.msra.mxu0 %v7919
      %7921 = vmatprep.subr.mxu0 0.0
      %v7922 = vand.u32 %v6887, 4294901760
      %7923 = vmatpush1.msra.mxu0 %v7922
      %7924 = vmatprep.subr.mxu0 0.0
      %v7925 = vand.u32 %v6881, 4294901760
      %7926 = vmatpush1.msra.mxu0 %v7925
      %7927 = vmatprep.subr.mxu0 0.0
      %v7928 = vand.u32 %v6875, 4294901760
      %7929 = vmatpush1.msra.mxu0 %v7928
      %7930 = vmatprep.subr.mxu0 0.0
      %v7931 = vand.u32 %v6869, 4294901760
      %7932 = vmatpush1.msra.mxu0 %v7931
      %7933 = vmatprep.subr.mxu0 0.0
      %v7934 = vand.u32 %v6863, 4294901760
      %7935 = vmatpush1.msra.mxu0 %v7934
      %7936 = vmatprep.subr.mxu0 0.0
      %v7937 = vand.u32 %v6857, 4294901760
      %7938 = vmatpush1.msra.mxu0 %v7937
      %7939 = vmatprep.subr.mxu0 0.0
      %v7940 = vand.u32 %v6851, 4294901760
      %7941 = vmatpush1.msra.mxu0 %v7940
      %7942 = vmatprep.subr.mxu0 0.0
      %7943 = vmatpush2.msra.mxu0 0.0
      %7944 = vmatprep.subr.mxu0 0.0
      %7945 = vmatpush2.msra.mxu0 0.0
      %7946 = vmatprep.subr.mxu0 0.0
      %7947 = vmatpush2.msra.mxu0 0.0
      %7948 = vmatprep.subr.mxu0 0.0
      %7949 = vmatpush2.msra.mxu0 0.0
      %7950 = vmatprep.subr.mxu0 0.0
      %7951 = vmatpush2.msra.mxu0 0.0
      %7952 = vmatprep.subr.mxu0 0.0
      %7953 = vmatpush2.msra.mxu0 0.0
      %7954 = vmatprep.subr.mxu0 0.0
      %7955 = vmatpush2.msra.mxu0 0.0
      %7956 = vmatprep.subr.mxu0 0.0
      %7957 = vmatpush2.msra.mxu0 0.0
      %7958 = vmatprep.subr.mxu0 0.0
      %7959 = vmatpush2.msra.mxu0 0.0
      %7960 = vmatprep.subr.mxu0 0.0
      %7961 = vmatpush2.msra.mxu0 0.0
      %7962 = vmatprep.subr.mxu0 0.0
      %7963 = vmatpush2.msra.mxu0 0.0
      %7964 = vmatprep.subr.mxu0 0.0
      %7965 = vmatpush2.msra.mxu0 0.0
      %7966 = vmatprep.subr.mxu0 0.0
      %7967 = vmatpush2.msra.mxu0 0.0
      %7968 = vmatprep.subr.mxu0 0.0
      %7969 = vmatpush2.msra.mxu0 0.0
      %7970 = vmatprep.subr.mxu0 0.0
      %7971 = vmatpush2.msra.mxu0 0.0
      %7972 = vmatprep.subr.mxu0 0.0
      %7973 = vmatpush2.msra.mxu0 0.0
      %7974 = vmatprep.mubr.f32.mxu0 0.0
      %v7975 = vand.u32 %v7879, 4294901760
      %v7976 = vsub.f32 %v7879, %v7975
      %v7977 = vand.u32 %v7976, 4294901760
      %v7978 = vsub.f32 %v7976, %v7977
      %v7979 = vand.u32 %v7978, 4294901760
      %7980 = vmatmul.mubr.f32.gmra.mxu0 %v7979
      %v7981 = vpop.f32.mrf.mxu0
      %v7982 = vadd.f32 0.0, %v7981
      %v7983 = vpop.f32.mrf.mxu0
      %7984 = vmatprep.mubr.f32.mxu0 0.0
      %v7985 = vand.u32 %v7882, 4294901760
      %v7986 = vsub.f32 %v7882, %v7985
      %v7987 = vand.u32 %v7986, 4294901760
      %v7988 = vsub.f32 %v7986, %v7987
      %v7989 = vand.u32 %v7988, 4294901760
      %7990 = vmatmul.mubr.f32.gmra.mxu0 %v7989
      %v7991 = vpop.f32.mrf.mxu0
      %v7992 = vadd.f32 0.0, %v7991
      %v7993 = vpop.f32.mrf.mxu0
      %7994 = vmatprep.mubr.f32.mxu0 0.0
      %v7995 = vand.u32 %v7885, 4294901760
      %v7996 = vsub.f32 %v7885, %v7995
      %v7997 = vand.u32 %v7996, 4294901760
      %v7998 = vsub.f32 %v7996, %v7997
      %v7999 = vand.u32 %v7998, 4294901760
      %8000 = vmatmul.mubr.f32.gmra.mxu0 %v7999
      %v8001 = vpop.f32.mrf.mxu0
      %v8002 = vadd.f32 0.0, %v8001
      %v8003 = vpop.f32.mrf.mxu0
      %8004 = vmatprep.mubr.f32.mxu0 0.0
      %v8005 = vand.u32 %v7888, 4294901760
      %v8006 = vsub.f32 %v7888, %v8005
      %v8007 = vand.u32 %v8006, 4294901760
      %v8008 = vsub.f32 %v8006, %v8007
      %v8009 = vand.u32 %v8008, 4294901760
      %8010 = vmatmul.mubr.f32.gmra.mxu0 %v8009
      %v8011 = vpop.f32.mrf.mxu0
      %v8012 = vadd.f32 0.0, %v8011
      %v8013 = vpop.f32.mrf.mxu0
      %8014 = vmatprep.mubr.f32.mxu0 0.0
      %v8015 = vand.u32 %v7891, 4294901760
      %v8016 = vsub.f32 %v7891, %v8015
      %v8017 = vand.u32 %v8016, 4294901760
      %v8018 = vsub.f32 %v8016, %v8017
      %v8019 = vand.u32 %v8018, 4294901760
      %8020 = vmatmul.mubr.f32.gmra.mxu0 %v8019
      %v8021 = vpop.f32.mrf.mxu0
      %v8022 = vadd.f32 0.0, %v8021
      %v8023 = vpop.f32.mrf.mxu0
      %8024 = vmatprep.mubr.f32.mxu0 0.0
      %v8025 = vand.u32 %v7894, 4294901760
      %v8026 = vsub.f32 %v7894, %v8025
      %v8027 = vand.u32 %v8026, 4294901760
      %v8028 = vsub.f32 %v8026, %v8027
      %v8029 = vand.u32 %v8028, 4294901760
      %8030 = vmatmul.mubr.f32.gmra.mxu0 %v8029
      %v8031 = vpop.f32.mrf.mxu0
      %v8032 = vadd.f32 0.0, %v8031
      %v8033 = vpop.f32.mrf.mxu0
      %8034 = vmatprep.mubr.f32.mxu0 0.0
      %v8035 = vand.u32 %v7897, 4294901760
      %v8036 = vsub.f32 %v7897, %v8035
      %v8037 = vand.u32 %v8036, 4294901760
      %v8038 = vsub.f32 %v8036, %v8037
      %v8039 = vand.u32 %v8038, 4294901760
      %8040 = vmatmul.mubr.f32.gmra.mxu0 %v8039
      %v8041 = vpop.f32.mrf.mxu0
      %v8042 = vadd.f32 0.0, %v8041
      %v8043 = vpop.f32.mrf.mxu0
      %8044 = vmatprep.mubr.f32.mxu0 0.0
      %v8045 = vand.u32 %v7900, 4294901760
      %v8046 = vsub.f32 %v7900, %v8045
      %v8047 = vand.u32 %v8046, 4294901760
      %v8048 = vsub.f32 %v8046, %v8047
      %v8049 = vand.u32 %v8048, 4294901760
      %8050 = vmatmul.mubr.f32.gmra.mxu0 %v8049
      %v8051 = vpop.f32.mrf.mxu0
      %v8052 = vadd.f32 0.0, %v8051
      %v8053 = vpop.f32.mrf.mxu0
      %8054 = vdwg.mxu0
      %8055 = vmatprep.subr.mxu0 0.0
      %8056 = vmatpush1.msra.mxu0 0.0
      %8057 = vmatprep.subr.mxu0 0.0
      %8058 = vmatpush1.msra.mxu0 0.0
      %8059 = vmatprep.subr.mxu0 0.0
      %8060 = vmatpush1.msra.mxu0 0.0
      %8061 = vmatprep.subr.mxu0 0.0
      %8062 = vmatpush1.msra.mxu0 0.0
      %8063 = vmatprep.subr.mxu0 0.0
      %8064 = vmatpush1.msra.mxu0 0.0
      %8065 = vmatprep.subr.mxu0 0.0
      %8066 = vmatpush1.msra.mxu0 0.0
      %8067 = vmatprep.subr.mxu0 0.0
      %8068 = vmatpush1.msra.mxu0 0.0
      %8069 = vmatprep.subr.mxu0 0.0
      %8070 = vmatpush1.msra.mxu0 0.0
      %8071 = vmatprep.subr.mxu0 0.0
      %v8072 = vand.u32 %v6893, 4294901760
      %v8073 = vsub.f32 %v6893, %v8072
      %v8074 = vand.u32 %v8073, 4294901760
      %v8075 = vsub.f32 %v8073, %v8074
      %v8076 = vand.u32 %v8075, 4294901760
      %8077 = vmatpush1.msra.mxu0 %v8076
      %8078 = vmatprep.subr.mxu0 0.0
      %v8079 = vand.u32 %v6887, 4294901760
      %v8080 = vsub.f32 %v6887, %v8079
      %v8081 = vand.u32 %v8080, 4294901760
      %v8082 = vsub.f32 %v8080, %v8081
      %v8083 = vand.u32 %v8082, 4294901760
      %8084 = vmatpush1.msra.mxu0 %v8083
      %8085 = vmatprep.subr.mxu0 0.0
      %v8086 = vand.u32 %v6881, 4294901760
      %v8087 = vsub.f32 %v6881, %v8086
      %v8088 = vand.u32 %v8087, 4294901760
      %v8089 = vsub.f32 %v8087, %v8088
      %v8090 = vand.u32 %v8089, 4294901760
      %8091 = vmatpush1.msra.mxu0 %v8090
      %8092 = vmatprep.subr.mxu0 0.0
      %v8093 = vand.u32 %v6875, 4294901760
      %v8094 = vsub.f32 %v6875, %v8093
      %v8095 = vand.u32 %v8094, 4294901760
      %v8096 = vsub.f32 %v8094, %v8095
      %v8097 = vand.u32 %v8096, 4294901760
      %8098 = vmatpush1.msra.mxu0 %v8097
      %8099 = vmatprep.subr.mxu0 0.0
      %v8100 = vand.u32 %v6869, 4294901760
      %v8101 = vsub.f32 %v6869, %v8100
      %v8102 = vand.u32 %v8101, 4294901760
      %v8103 = vsub.f32 %v8101, %v8102
      %v8104 = vand.u32 %v8103, 4294901760
      %8105 = vmatpush1.msra.mxu0 %v8104
      %8106 = vmatprep.subr.mxu0 0.0
      %v8107 = vand.u32 %v6863, 4294901760
      %v8108 = vsub.f32 %v6863, %v8107
      %v8109 = vand.u32 %v8108, 4294901760
      %v8110 = vsub.f32 %v8108, %v8109
      %v8111 = vand.u32 %v8110, 4294901760
      %8112 = vmatpush1.msra.mxu0 %v8111
      %8113 = vmatprep.subr.mxu0 0.0
      %v8114 = vand.u32 %v6857, 4294901760
      %v8115 = vsub.f32 %v6857, %v8114
      %v8116 = vand.u32 %v8115, 4294901760
      %v8117 = vsub.f32 %v8115, %v8116
      %v8118 = vand.u32 %v8117, 4294901760
      %8119 = vmatpush1.msra.mxu0 %v8118
      %8120 = vmatprep.subr.mxu0 0.0
      %v8121 = vand.u32 %v6851, 4294901760
      %v8122 = vsub.f32 %v6851, %v8121
      %v8123 = vand.u32 %v8122, 4294901760
      %v8124 = vsub.f32 %v8122, %v8123
      %v8125 = vand.u32 %v8124, 4294901760
      %8126 = vmatpush1.msra.mxu0 %v8125
      %8127 = vmatprep.subr.mxu0 0.0
      %8128 = vmatpush2.msra.mxu0 0.0
      %8129 = vmatprep.subr.mxu0 0.0
      %8130 = vmatpush2.msra.mxu0 0.0
      %8131 = vmatprep.subr.mxu0 0.0
      %8132 = vmatpush2.msra.mxu0 0.0
      %8133 = vmatprep.subr.mxu0 0.0
      %8134 = vmatpush2.msra.mxu0 0.0
      %8135 = vmatprep.subr.mxu0 0.0
      %8136 = vmatpush2.msra.mxu0 0.0
      %8137 = vmatprep.subr.mxu0 0.0
      %8138 = vmatpush2.msra.mxu0 0.0
      %8139 = vmatprep.subr.mxu0 0.0
      %8140 = vmatpush2.msra.mxu0 0.0
      %8141 = vmatprep.subr.mxu0 0.0
      %8142 = vmatpush2.msra.mxu0 0.0
      %8143 = vmatprep.subr.mxu0 0.0
      %8144 = vmatpush2.msra.mxu0 0.0
      %8145 = vmatprep.subr.mxu0 0.0
      %8146 = vmatpush2.msra.mxu0 0.0
      %8147 = vmatprep.subr.mxu0 0.0
      %8148 = vmatpush2.msra.mxu0 0.0
      %8149 = vmatprep.subr.mxu0 0.0
      %8150 = vmatpush2.msra.mxu0 0.0
      %8151 = vmatprep.subr.mxu0 0.0
      %8152 = vmatpush2.msra.mxu0 0.0
      %8153 = vmatprep.subr.mxu0 0.0
      %8154 = vmatpush2.msra.mxu0 0.0
      %8155 = vmatprep.subr.mxu0 0.0
      %8156 = vmatpush2.msra.mxu0 0.0
      %8157 = vmatprep.subr.mxu0 0.0
      %8158 = vmatpush2.msra.mxu0 0.0
      %8159 = vmatprep.mubr.f32.mxu0 0.0
      %v8160 = vand.u32 %v7879, 4294901760
      %8161 = vmatmul.mubr.f32.gmra.mxu0 %v8160
      %v8162 = vpop.f32.mrf.mxu0
      %v8163 = vadd.f32 %v7982, %v8162
      %v8164 = vpop.f32.mrf.mxu0
      %8165 = vmatprep.mubr.f32.mxu0 0.0
      %v8166 = vand.u32 %v7882, 4294901760
      %8167 = vmatmul.mubr.f32.gmra.mxu0 %v8166
      %v8168 = vpop.f32.mrf.mxu0
      %v8169 = vadd.f32 %v7992, %v8168
      %v8170 = vpop.f32.mrf.mxu0
      %8171 = vmatprep.mubr.f32.mxu0 0.0
      %v8172 = vand.u32 %v7885, 4294901760
      %8173 = vmatmul.mubr.f32.gmra.mxu0 %v8172
      %v8174 = vpop.f32.mrf.mxu0
      %v8175 = vadd.f32 %v8002, %v8174
      %v8176 = vpop.f32.mrf.mxu0
      %8177 = vmatprep.mubr.f32.mxu0 0.0
      %v8178 = vand.u32 %v7888, 4294901760
      %8179 = vmatmul.mubr.f32.gmra.mxu0 %v8178
      %v8180 = vpop.f32.mrf.mxu0
      %v8181 = vadd.f32 %v8012, %v8180
      %v8182 = vpop.f32.mrf.mxu0
      %8183 = vmatprep.mubr.f32.mxu0 0.0
      %v8184 = vand.u32 %v7891, 4294901760
      %8185 = vmatmul.mubr.f32.gmra.mxu0 %v8184
      %v8186 = vpop.f32.mrf.mxu0
      %v8187 = vadd.f32 %v8022, %v8186
      %v8188 = vpop.f32.mrf.mxu0
      %8189 = vmatprep.mubr.f32.mxu0 0.0
      %v8190 = vand.u32 %v7894, 4294901760
      %8191 = vmatmul.mubr.f32.gmra.mxu0 %v8190
      %v8192 = vpop.f32.mrf.mxu0
      %v8193 = vadd.f32 %v8032, %v8192
      %v8194 = vpop.f32.mrf.mxu0
      %8195 = vmatprep.mubr.f32.mxu0 0.0
      %v8196 = vand.u32 %v7897, 4294901760
      %8197 = vmatmul.mubr.f32.gmra.mxu0 %v8196
      %v8198 = vpop.f32.mrf.mxu0
      %v8199 = vadd.f32 %v8042, %v8198
      %v8200 = vpop.f32.mrf.mxu0
      %8201 = vmatprep.mubr.f32.mxu0 0.0
      %v8202 = vand.u32 %v7900, 4294901760
      %8203 = vmatmul.mubr.f32.gmra.mxu0 %v8202
      %v8204 = vpop.f32.mrf.mxu0
      %v8205 = vadd.f32 %v8052, %v8204
      %v8206 = vpop.f32.mrf.mxu0
      %8207 = vdwg.mxu0
      %8208 = vmatprep.subr.mxu0 0.0
      %8209 = vmatpush1.msra.mxu0 0.0
      %8210 = vmatprep.subr.mxu0 0.0
      %8211 = vmatpush1.msra.mxu0 0.0
      %8212 = vmatprep.subr.mxu0 0.0
      %8213 = vmatpush1.msra.mxu0 0.0
      %8214 = vmatprep.subr.mxu0 0.0
      %8215 = vmatpush1.msra.mxu0 0.0
      %8216 = vmatprep.subr.mxu0 0.0
      %8217 = vmatpush1.msra.mxu0 0.0
      %8218 = vmatprep.subr.mxu0 0.0
      %8219 = vmatpush1.msra.mxu0 0.0
      %8220 = vmatprep.subr.mxu0 0.0
      %8221 = vmatpush1.msra.mxu0 0.0
      %8222 = vmatprep.subr.mxu0 0.0
      %8223 = vmatpush1.msra.mxu0 0.0
      %8224 = vmatprep.subr.mxu0 0.0
      %v8225 = vand.u32 %v6893, 4294901760
      %v8226 = vsub.f32 %v6893, %v8225
      %8227 = vmatpush1.msra.mxu0 %v8226
      %8228 = vmatprep.subr.mxu0 0.0
      %v8229 = vand.u32 %v6887, 4294901760
      %v8230 = vsub.f32 %v6887, %v8229
      %8231 = vmatpush1.msra.mxu0 %v8230
      %8232 = vmatprep.subr.mxu0 0.0
      %v8233 = vand.u32 %v6881, 4294901760
      %v8234 = vsub.f32 %v6881, %v8233
      %8235 = vmatpush1.msra.mxu0 %v8234
      %8236 = vmatprep.subr.mxu0 0.0
      %v8237 = vand.u32 %v6875, 4294901760
      %v8238 = vsub.f32 %v6875, %v8237
      %8239 = vmatpush1.msra.mxu0 %v8238
      %8240 = vmatprep.subr.mxu0 0.0
      %v8241 = vand.u32 %v6869, 4294901760
      %v8242 = vsub.f32 %v6869, %v8241
      %8243 = vmatpush1.msra.mxu0 %v8242
      %8244 = vmatprep.subr.mxu0 0.0
      %v8245 = vand.u32 %v6863, 4294901760
      %v8246 = vsub.f32 %v6863, %v8245
      %8247 = vmatpush1.msra.mxu0 %v8246
      %8248 = vmatprep.subr.mxu0 0.0
      %v8249 = vand.u32 %v6857, 4294901760
      %v8250 = vsub.f32 %v6857, %v8249
      %8251 = vmatpush1.msra.mxu0 %v8250
      %8252 = vmatprep.subr.mxu0 0.0
      %v8253 = vand.u32 %v6851, 4294901760
      %v8254 = vsub.f32 %v6851, %v8253
      %8255 = vmatpush1.msra.mxu0 %v8254
      %8256 = vmatprep.subr.mxu0 0.0
      %8257 = vmatpush2.msra.mxu0 0.0
      %8258 = vmatprep.subr.mxu0 0.0
      %8259 = vmatpush2.msra.mxu0 0.0
      %8260 = vmatprep.subr.mxu0 0.0
      %8261 = vmatpush2.msra.mxu0 0.0
      %8262 = vmatprep.subr.mxu0 0.0
      %8263 = vmatpush2.msra.mxu0 0.0
      %8264 = vmatprep.subr.mxu0 0.0
      %8265 = vmatpush2.msra.mxu0 0.0
      %8266 = vmatprep.subr.mxu0 0.0
      %8267 = vmatpush2.msra.mxu0 0.0
      %8268 = vmatprep.subr.mxu0 0.0
      %8269 = vmatpush2.msra.mxu0 0.0
      %8270 = vmatprep.subr.mxu0 0.0
      %8271 = vmatpush2.msra.mxu0 0.0
      %8272 = vmatprep.subr.mxu0 0.0
      %8273 = vmatpush2.msra.mxu0 0.0
      %8274 = vmatprep.subr.mxu0 0.0
      %8275 = vmatpush2.msra.mxu0 0.0
      %8276 = vmatprep.subr.mxu0 0.0
      %8277 = vmatpush2.msra.mxu0 0.0
      %8278 = vmatprep.subr.mxu0 0.0
      %8279 = vmatpush2.msra.mxu0 0.0
      %8280 = vmatprep.subr.mxu0 0.0
      %8281 = vmatpush2.msra.mxu0 0.0
      %8282 = vmatprep.subr.mxu0 0.0
      %8283 = vmatpush2.msra.mxu0 0.0
      %8284 = vmatprep.subr.mxu0 0.0
      %8285 = vmatpush2.msra.mxu0 0.0
      %8286 = vmatprep.subr.mxu0 0.0
      %8287 = vmatpush2.msra.mxu0 0.0
      %8288 = vmatprep.mubr.f32.mxu0 0.0
      %v8289 = vand.u32 %v7879, 4294901760
      %v8290 = vsub.f32 %v7879, %v8289
      %8291 = vmatmul.mubr.f32.gmra.mxu0 %v8290
      %v8292 = vpop.f32.mrf.mxu0
      %v8293 = vadd.f32 %v8163, %v8292
      %v8294 = vpop.f32.mrf.mxu0
      %8295 = vmatprep.mubr.f32.mxu0 0.0
      %v8296 = vand.u32 %v7882, 4294901760
      %v8297 = vsub.f32 %v7882, %v8296
      %8298 = vmatmul.mubr.f32.gmra.mxu0 %v8297
      %v8299 = vpop.f32.mrf.mxu0
      %v8300 = vadd.f32 %v8169, %v8299
      %v8301 = vpop.f32.mrf.mxu0
      %8302 = vmatprep.mubr.f32.mxu0 0.0
      %v8303 = vand.u32 %v7885, 4294901760
      %v8304 = vsub.f32 %v7885, %v8303
      %8305 = vmatmul.mubr.f32.gmra.mxu0 %v8304
      %v8306 = vpop.f32.mrf.mxu0
      %v8307 = vadd.f32 %v8175, %v8306
      %v8308 = vpop.f32.mrf.mxu0
      %8309 = vmatprep.mubr.f32.mxu0 0.0
      %v8310 = vand.u32 %v7888, 4294901760
      %v8311 = vsub.f32 %v7888, %v8310
      %8312 = vmatmul.mubr.f32.gmra.mxu0 %v8311
      %v8313 = vpop.f32.mrf.mxu0
      %v8314 = vadd.f32 %v8181, %v8313
      %v8315 = vpop.f32.mrf.mxu0
      %8316 = vmatprep.mubr.f32.mxu0 0.0
      %v8317 = vand.u32 %v7891, 4294901760
      %v8318 = vsub.f32 %v7891, %v8317
      %8319 = vmatmul.mubr.f32.gmra.mxu0 %v8318
      %v8320 = vpop.f32.mrf.mxu0
      %v8321 = vadd.f32 %v8187, %v8320
      %v8322 = vpop.f32.mrf.mxu0
      %8323 = vmatprep.mubr.f32.mxu0 0.0
      %v8324 = vand.u32 %v7894, 4294901760
      %v8325 = vsub.f32 %v7894, %v8324
      %8326 = vmatmul.mubr.f32.gmra.mxu0 %v8325
      %v8327 = vpop.f32.mrf.mxu0
      %v8328 = vadd.f32 %v8193, %v8327
      %v8329 = vpop.f32.mrf.mxu0
      %8330 = vmatprep.mubr.f32.mxu0 0.0
      %v8331 = vand.u32 %v7897, 4294901760
      %v8332 = vsub.f32 %v7897, %v8331
      %8333 = vmatmul.mubr.f32.gmra.mxu0 %v8332
      %v8334 = vpop.f32.mrf.mxu0
      %v8335 = vadd.f32 %v8199, %v8334
      %v8336 = vpop.f32.mrf.mxu0
      %8337 = vmatprep.mubr.f32.mxu0 0.0
      %v8338 = vand.u32 %v7900, 4294901760
      %v8339 = vsub.f32 %v7900, %v8338
      %8340 = vmatmul.mubr.f32.gmra.mxu0 %v8339
      %v8341 = vpop.f32.mrf.mxu0
      %v8342 = vadd.f32 %v8205, %v8341
      %v8343 = vpop.f32.mrf.mxu0
      %8344 = vdwg.mxu0
      %8345 = vmatprep.subr.mxu0 0.0
      %8346 = vmatpush1.msra.mxu0 0.0
      %8347 = vmatprep.subr.mxu0 0.0
      %8348 = vmatpush1.msra.mxu0 0.0
      %8349 = vmatprep.subr.mxu0 0.0
      %8350 = vmatpush1.msra.mxu0 0.0
      %8351 = vmatprep.subr.mxu0 0.0
      %8352 = vmatpush1.msra.mxu0 0.0
      %8353 = vmatprep.subr.mxu0 0.0
      %8354 = vmatpush1.msra.mxu0 0.0
      %8355 = vmatprep.subr.mxu0 0.0
      %8356 = vmatpush1.msra.mxu0 0.0
      %8357 = vmatprep.subr.mxu0 0.0
      %8358 = vmatpush1.msra.mxu0 0.0
      %8359 = vmatprep.subr.mxu0 0.0
      %8360 = vmatpush1.msra.mxu0 0.0
      %8361 = vmatprep.subr.mxu0 0.0
      %v8362 = vand.u32 %v6893, 4294901760
      %8363 = vmatpush1.msra.mxu0 %v8362
      %8364 = vmatprep.subr.mxu0 0.0
      %v8365 = vand.u32 %v6887, 4294901760
      %8366 = vmatpush1.msra.mxu0 %v8365
      %8367 = vmatprep.subr.mxu0 0.0
      %v8368 = vand.u32 %v6881, 4294901760
      %8369 = vmatpush1.msra.mxu0 %v8368
      %8370 = vmatprep.subr.mxu0 0.0
      %v8371 = vand.u32 %v6875, 4294901760
      %8372 = vmatpush1.msra.mxu0 %v8371
      %8373 = vmatprep.subr.mxu0 0.0
      %v8374 = vand.u32 %v6869, 4294901760
      %8375 = vmatpush1.msra.mxu0 %v8374
      %8376 = vmatprep.subr.mxu0 0.0
      %v8377 = vand.u32 %v6863, 4294901760
      %8378 = vmatpush1.msra.mxu0 %v8377
      %8379 = vmatprep.subr.mxu0 0.0
      %v8380 = vand.u32 %v6857, 4294901760
      %8381 = vmatpush1.msra.mxu0 %v8380
      %8382 = vmatprep.subr.mxu0 0.0
      %v8383 = vand.u32 %v6851, 4294901760
      %8384 = vmatpush1.msra.mxu0 %v8383
      %8385 = vmatprep.subr.mxu0 0.0
      %8386 = vmatpush2.msra.mxu0 0.0
      %8387 = vmatprep.subr.mxu0 0.0
      %8388 = vmatpush2.msra.mxu0 0.0
      %8389 = vmatprep.subr.mxu0 0.0
      %8390 = vmatpush2.msra.mxu0 0.0
      %8391 = vmatprep.subr.mxu0 0.0
      %8392 = vmatpush2.msra.mxu0 0.0
      %8393 = vmatprep.subr.mxu0 0.0
      %8394 = vmatpush2.msra.mxu0 0.0
      %8395 = vmatprep.subr.mxu0 0.0
      %8396 = vmatpush2.msra.mxu0 0.0
      %8397 = vmatprep.subr.mxu0 0.0
      %8398 = vmatpush2.msra.mxu0 0.0
      %8399 = vmatprep.subr.mxu0 0.0
      %8400 = vmatpush2.msra.mxu0 0.0
      %8401 = vmatprep.subr.mxu0 0.0
      %8402 = vmatpush2.msra.mxu0 0.0
      %8403 = vmatprep.subr.mxu0 0.0
      %8404 = vmatpush2.msra.mxu0 0.0
      %8405 = vmatprep.subr.mxu0 0.0
      %8406 = vmatpush2.msra.mxu0 0.0
      %8407 = vmatprep.subr.mxu0 0.0
      %8408 = vmatpush2.msra.mxu0 0.0
      %8409 = vmatprep.subr.mxu0 0.0
      %8410 = vmatpush2.msra.mxu0 0.0
      %8411 = vmatprep.subr.mxu0 0.0
      %8412 = vmatpush2.msra.mxu0 0.0
      %8413 = vmatprep.subr.mxu0 0.0
      %8414 = vmatpush2.msra.mxu0 0.0
      %8415 = vmatprep.subr.mxu0 0.0
      %8416 = vmatpush2.msra.mxu0 0.0
      %8417 = vmatprep.mubr.f32.mxu0 0.0
      %v8418 = vand.u32 %v7879, 4294901760
      %v8419 = vsub.f32 %v7879, %v8418
      %v8420 = vand.u32 %v8419, 4294901760
      %8421 = vmatmul.mubr.f32.gmra.mxu0 %v8420
      %v8422 = vpop.f32.mrf.mxu0
      %v8423 = vadd.f32 %v8293, %v8422
      %v8424 = vpop.f32.mrf.mxu0
      %8425 = vmatprep.mubr.f32.mxu0 0.0
      %v8426 = vand.u32 %v7882, 4294901760
      %v8427 = vsub.f32 %v7882, %v8426
      %v8428 = vand.u32 %v8427, 4294901760
      %8429 = vmatmul.mubr.f32.gmra.mxu0 %v8428
      %v8430 = vpop.f32.mrf.mxu0
      %v8431 = vadd.f32 %v8300, %v8430
      %v8432 = vpop.f32.mrf.mxu0
      %8433 = vmatprep.mubr.f32.mxu0 0.0
      %v8434 = vand.u32 %v7885, 4294901760
      %v8435 = vsub.f32 %v7885, %v8434
      %v8436 = vand.u32 %v8435, 4294901760
      %8437 = vmatmul.mubr.f32.gmra.mxu0 %v8436
      %v8438 = vpop.f32.mrf.mxu0
      %v8439 = vadd.f32 %v8307, %v8438
      %v8440 = vpop.f32.mrf.mxu0
      %8441 = vmatprep.mubr.f32.mxu0 0.0
      %v8442 = vand.u32 %v7888, 4294901760
      %v8443 = vsub.f32 %v7888, %v8442
      %v8444 = vand.u32 %v8443, 4294901760
      %8445 = vmatmul.mubr.f32.gmra.mxu0 %v8444
      %v8446 = vpop.f32.mrf.mxu0
      %v8447 = vadd.f32 %v8314, %v8446
      %v8448 = vpop.f32.mrf.mxu0
      %8449 = vmatprep.mubr.f32.mxu0 0.0
      %v8450 = vand.u32 %v7891, 4294901760
      %v8451 = vsub.f32 %v7891, %v8450
      %v8452 = vand.u32 %v8451, 4294901760
      %8453 = vmatmul.mubr.f32.gmra.mxu0 %v8452
      %v8454 = vpop.f32.mrf.mxu0
      %v8455 = vadd.f32 %v8321, %v8454
      %v8456 = vpop.f32.mrf.mxu0
      %8457 = vmatprep.mubr.f32.mxu0 0.0
      %v8458 = vand.u32 %v7894, 4294901760
      %v8459 = vsub.f32 %v7894, %v8458
      %v8460 = vand.u32 %v8459, 4294901760
      %8461 = vmatmul.mubr.f32.gmra.mxu0 %v8460
      %v8462 = vpop.f32.mrf.mxu0
      %v8463 = vadd.f32 %v8328, %v8462
      %v8464 = vpop.f32.mrf.mxu0
      %8465 = vmatprep.mubr.f32.mxu0 0.0
      %v8466 = vand.u32 %v7897, 4294901760
      %v8467 = vsub.f32 %v7897, %v8466
      %v8468 = vand.u32 %v8467, 4294901760
      %8469 = vmatmul.mubr.f32.gmra.mxu0 %v8468
      %v8470 = vpop.f32.mrf.mxu0
      %v8471 = vadd.f32 %v8335, %v8470
      %v8472 = vpop.f32.mrf.mxu0
      %8473 = vmatprep.mubr.f32.mxu0 0.0
      %v8474 = vand.u32 %v7900, 4294901760
      %v8475 = vsub.f32 %v7900, %v8474
      %v8476 = vand.u32 %v8475, 4294901760
      %8477 = vmatmul.mubr.f32.gmra.mxu0 %v8476
      %v8478 = vpop.f32.mrf.mxu0
      %v8479 = vadd.f32 %v8342, %v8478
      %v8480 = vpop.f32.mrf.mxu0
      %8481 = vdwg.mxu0
      %8482 = vmatprep.subr.mxu0 0.0
      %8483 = vmatpush1.msra.mxu0 0.0
      %8484 = vmatprep.subr.mxu0 0.0
      %8485 = vmatpush1.msra.mxu0 0.0
      %8486 = vmatprep.subr.mxu0 0.0
      %8487 = vmatpush1.msra.mxu0 0.0
      %8488 = vmatprep.subr.mxu0 0.0
      %8489 = vmatpush1.msra.mxu0 0.0
      %8490 = vmatprep.subr.mxu0 0.0
      %8491 = vmatpush1.msra.mxu0 0.0
      %8492 = vmatprep.subr.mxu0 0.0
      %8493 = vmatpush1.msra.mxu0 0.0
      %8494 = vmatprep.subr.mxu0 0.0
      %8495 = vmatpush1.msra.mxu0 0.0
      %8496 = vmatprep.subr.mxu0 0.0
      %8497 = vmatpush1.msra.mxu0 0.0
      %8498 = vmatprep.subr.mxu0 0.0
      %v8499 = vand.u32 %v6893, 4294901760
      %v8500 = vsub.f32 %v6893, %v8499
      %v8501 = vand.u32 %v8500, 4294901760
      %8502 = vmatpush1.msra.mxu0 %v8501
      %8503 = vmatprep.subr.mxu0 0.0
      %v8504 = vand.u32 %v6887, 4294901760
      %v8505 = vsub.f32 %v6887, %v8504
      %v8506 = vand.u32 %v8505, 4294901760
      %8507 = vmatpush1.msra.mxu0 %v8506
      %8508 = vmatprep.subr.mxu0 0.0
      %v8509 = vand.u32 %v6881, 4294901760
      %v8510 = vsub.f32 %v6881, %v8509
      %v8511 = vand.u32 %v8510, 4294901760
      %8512 = vmatpush1.msra.mxu0 %v8511
      %8513 = vmatprep.subr.mxu0 0.0
      %v8514 = vand.u32 %v6875, 4294901760
      %v8515 = vsub.f32 %v6875, %v8514
      %v8516 = vand.u32 %v8515, 4294901760
      %8517 = vmatpush1.msra.mxu0 %v8516
      %8518 = vmatprep.subr.mxu0 0.0
      %v8519 = vand.u32 %v6869, 4294901760
      %v8520 = vsub.f32 %v6869, %v8519
      %v8521 = vand.u32 %v8520, 4294901760
      %8522 = vmatpush1.msra.mxu0 %v8521
      %8523 = vmatprep.subr.mxu0 0.0
      %v8524 = vand.u32 %v6863, 4294901760
      %v8525 = vsub.f32 %v6863, %v8524
      %v8526 = vand.u32 %v8525, 4294901760
      %8527 = vmatpush1.msra.mxu0 %v8526
      %8528 = vmatprep.subr.mxu0 0.0
      %v8529 = vand.u32 %v6857, 4294901760
      %v8530 = vsub.f32 %v6857, %v8529
      %v8531 = vand.u32 %v8530, 4294901760
      %8532 = vmatpush1.msra.mxu0 %v8531
      %8533 = vmatprep.subr.mxu0 0.0
      %v8534 = vand.u32 %v6851, 4294901760
      %v8535 = vsub.f32 %v6851, %v8534
      %v8536 = vand.u32 %v8535, 4294901760
      %8537 = vmatpush1.msra.mxu0 %v8536
      %8538 = vmatprep.subr.mxu0 0.0
      %8539 = vmatpush2.msra.mxu0 0.0
      %8540 = vmatprep.subr.mxu0 0.0
      %8541 = vmatpush2.msra.mxu0 0.0
      %8542 = vmatprep.subr.mxu0 0.0
      %8543 = vmatpush2.msra.mxu0 0.0
      %8544 = vmatprep.subr.mxu0 0.0
      %8545 = vmatpush2.msra.mxu0 0.0
      %8546 = vmatprep.subr.mxu0 0.0
      %8547 = vmatpush2.msra.mxu0 0.0
      %8548 = vmatprep.subr.mxu0 0.0
      %8549 = vmatpush2.msra.mxu0 0.0
      %8550 = vmatprep.subr.mxu0 0.0
      %8551 = vmatpush2.msra.mxu0 0.0
      %8552 = vmatprep.subr.mxu0 0.0
      %8553 = vmatpush2.msra.mxu0 0.0
      %8554 = vmatprep.subr.mxu0 0.0
      %8555 = vmatpush2.msra.mxu0 0.0
      %8556 = vmatprep.subr.mxu0 0.0
      %8557 = vmatpush2.msra.mxu0 0.0
      %8558 = vmatprep.subr.mxu0 0.0
      %8559 = vmatpush2.msra.mxu0 0.0
      %8560 = vmatprep.subr.mxu0 0.0
      %8561 = vmatpush2.msra.mxu0 0.0
      %8562 = vmatprep.subr.mxu0 0.0
      %8563 = vmatpush2.msra.mxu0 0.0
      %8564 = vmatprep.subr.mxu0 0.0
      %8565 = vmatpush2.msra.mxu0 0.0
      %8566 = vmatprep.subr.mxu0 0.0
      %8567 = vmatpush2.msra.mxu0 0.0
      %8568 = vmatprep.subr.mxu0 0.0
      %8569 = vmatpush2.msra.mxu0 0.0
      %8570 = vmatprep.mubr.f32.mxu0 0.0
      %v8571 = vand.u32 %v7879, 4294901760
      %8572 = vmatmul.mubr.f32.gmra.mxu0 %v8571
      %v8573 = vpop.f32.mrf.mxu0
      %v8574 = vadd.f32 %v8423, %v8573
      %v8575 = vpop.f32.mrf.mxu0
      %8576 = vmatprep.mubr.f32.mxu0 0.0
      %v8577 = vand.u32 %v7882, 4294901760
      %8578 = vmatmul.mubr.f32.gmra.mxu0 %v8577
      %v8579 = vpop.f32.mrf.mxu0
      %v8580 = vadd.f32 %v8431, %v8579
      %v8581 = vpop.f32.mrf.mxu0
      %8582 = vmatprep.mubr.f32.mxu0 0.0
      %v8583 = vand.u32 %v7885, 4294901760
      %8584 = vmatmul.mubr.f32.gmra.mxu0 %v8583
      %v8585 = vpop.f32.mrf.mxu0
      %v8586 = vadd.f32 %v8439, %v8585
      %v8587 = vpop.f32.mrf.mxu0
      %8588 = vmatprep.mubr.f32.mxu0 0.0
      %v8589 = vand.u32 %v7888, 4294901760
      %8590 = vmatmul.mubr.f32.gmra.mxu0 %v8589
      %v8591 = vpop.f32.mrf.mxu0
      %v8592 = vadd.f32 %v8447, %v8591
      %v8593 = vpop.f32.mrf.mxu0
      %8594 = vmatprep.mubr.f32.mxu0 0.0
      %v8595 = vand.u32 %v7891, 4294901760
      %8596 = vmatmul.mubr.f32.gmra.mxu0 %v8595
      %v8597 = vpop.f32.mrf.mxu0
      %v8598 = vadd.f32 %v8455, %v8597
      %v8599 = vpop.f32.mrf.mxu0
      %8600 = vmatprep.mubr.f32.mxu0 0.0
      %v8601 = vand.u32 %v7894, 4294901760
      %8602 = vmatmul.mubr.f32.gmra.mxu0 %v8601
      %v8603 = vpop.f32.mrf.mxu0
      %v8604 = vadd.f32 %v8463, %v8603
      %v8605 = vpop.f32.mrf.mxu0
      %8606 = vmatprep.mubr.f32.mxu0 0.0
      %v8607 = vand.u32 %v7897, 4294901760
      %8608 = vmatmul.mubr.f32.gmra.mxu0 %v8607
      %v8609 = vpop.f32.mrf.mxu0
      %v8610 = vadd.f32 %v8471, %v8609
      %v8611 = vpop.f32.mrf.mxu0
      %8612 = vmatprep.mubr.f32.mxu0 0.0
      %v8613 = vand.u32 %v7900, 4294901760
      %8614 = vmatmul.mubr.f32.gmra.mxu0 %v8613
      %v8615 = vpop.f32.mrf.mxu0
      %v8616 = vadd.f32 %v8479, %v8615
      %v8617 = vpop.f32.mrf.mxu0
      %8618 = vdwg.mxu0
      %8619 = vmatprep.subr.mxu0 0.0
      %8620 = vmatpush1.msra.mxu0 0.0
      %8621 = vmatprep.subr.mxu0 0.0
      %8622 = vmatpush1.msra.mxu0 0.0
      %8623 = vmatprep.subr.mxu0 0.0
      %8624 = vmatpush1.msra.mxu0 0.0
      %8625 = vmatprep.subr.mxu0 0.0
      %8626 = vmatpush1.msra.mxu0 0.0
      %8627 = vmatprep.subr.mxu0 0.0
      %8628 = vmatpush1.msra.mxu0 0.0
      %8629 = vmatprep.subr.mxu0 0.0
      %8630 = vmatpush1.msra.mxu0 0.0
      %8631 = vmatprep.subr.mxu0 0.0
      %8632 = vmatpush1.msra.mxu0 0.0
      %8633 = vmatprep.subr.mxu0 0.0
      %8634 = vmatpush1.msra.mxu0 0.0
      %8635 = vmatprep.subr.mxu0 0.0
      %v8636 = vand.u32 %v6893, 4294901760
      %8637 = vmatpush1.msra.mxu0 %v8636
      %8638 = vmatprep.subr.mxu0 0.0
      %v8639 = vand.u32 %v6887, 4294901760
      %8640 = vmatpush1.msra.mxu0 %v8639
      %8641 = vmatprep.subr.mxu0 0.0
      %v8642 = vand.u32 %v6881, 4294901760
      %8643 = vmatpush1.msra.mxu0 %v8642
      %8644 = vmatprep.subr.mxu0 0.0
      %v8645 = vand.u32 %v6875, 4294901760
      %8646 = vmatpush1.msra.mxu0 %v8645
      %8647 = vmatprep.subr.mxu0 0.0
      %v8648 = vand.u32 %v6869, 4294901760
      %8649 = vmatpush1.msra.mxu0 %v8648
      %8650 = vmatprep.subr.mxu0 0.0
      %v8651 = vand.u32 %v6863, 4294901760
      %8652 = vmatpush1.msra.mxu0 %v8651
      %8653 = vmatprep.subr.mxu0 0.0
      %v8654 = vand.u32 %v6857, 4294901760
      %8655 = vmatpush1.msra.mxu0 %v8654
      %8656 = vmatprep.subr.mxu0 0.0
      %v8657 = vand.u32 %v6851, 4294901760
      %8658 = vmatpush1.msra.mxu0 %v8657
      %8659 = vmatprep.subr.mxu0 0.0
      %8660 = vmatpush2.msra.mxu0 0.0
      %8661 = vmatprep.subr.mxu0 0.0
      %8662 = vmatpush2.msra.mxu0 0.0
      %8663 = vmatprep.subr.mxu0 0.0
      %8664 = vmatpush2.msra.mxu0 0.0
      %8665 = vmatprep.subr.mxu0 0.0
      %8666 = vmatpush2.msra.mxu0 0.0
      %8667 = vmatprep.subr.mxu0 0.0
      %8668 = vmatpush2.msra.mxu0 0.0
      %8669 = vmatprep.subr.mxu0 0.0
      %8670 = vmatpush2.msra.mxu0 0.0
      %8671 = vmatprep.subr.mxu0 0.0
      %8672 = vmatpush2.msra.mxu0 0.0
      %8673 = vmatprep.subr.mxu0 0.0
      %8674 = vmatpush2.msra.mxu0 0.0
      %8675 = vmatprep.subr.mxu0 0.0
      %8676 = vmatpush2.msra.mxu0 0.0
      %8677 = vmatprep.subr.mxu0 0.0
      %8678 = vmatpush2.msra.mxu0 0.0
      %8679 = vmatprep.subr.mxu0 0.0
      %8680 = vmatpush2.msra.mxu0 0.0
      %8681 = vmatprep.subr.mxu0 0.0
      %8682 = vmatpush2.msra.mxu0 0.0
      %8683 = vmatprep.subr.mxu0 0.0
      %8684 = vmatpush2.msra.mxu0 0.0
      %8685 = vmatprep.subr.mxu0 0.0
      %8686 = vmatpush2.msra.mxu0 0.0
      %8687 = vmatprep.subr.mxu0 0.0
      %8688 = vmatpush2.msra.mxu0 0.0
      %8689 = vmatprep.subr.mxu0 0.0
      %8690 = vmatpush2.msra.mxu0 0.0
      %8691 = vmatprep.mubr.f32.mxu0 0.0
      %v8692 = vand.u32 %v7879, 4294901760
      %8693 = vmatmul.mubr.f32.gmra.mxu0 %v8692
      %v8694 = vpop.f32.mrf.mxu0
      %v8695 = vadd.f32 %v8574, %v8694
      %v8696 = vpop.f32.mrf.mxu0
      %8697 = vmatprep.mubr.f32.mxu0 0.0
      %v8698 = vand.u32 %v7882, 4294901760
      %8699 = vmatmul.mubr.f32.gmra.mxu0 %v8698
      %v8700 = vpop.f32.mrf.mxu0
      %v8701 = vadd.f32 %v8580, %v8700
      %v8702 = vpop.f32.mrf.mxu0
      %8703 = vmatprep.mubr.f32.mxu0 0.0
      %v8704 = vand.u32 %v7885, 4294901760
      %8705 = vmatmul.mubr.f32.gmra.mxu0 %v8704
      %v8706 = vpop.f32.mrf.mxu0
      %v8707 = vadd.f32 %v8586, %v8706
      %v8708 = vpop.f32.mrf.mxu0
      %8709 = vmatprep.mubr.f32.mxu0 0.0
      %v8710 = vand.u32 %v7888, 4294901760
      %8711 = vmatmul.mubr.f32.gmra.mxu0 %v8710
      %v8712 = vpop.f32.mrf.mxu0
      %v8713 = vadd.f32 %v8592, %v8712
      %v8714 = vpop.f32.mrf.mxu0
      %8715 = vmatprep.mubr.f32.mxu0 0.0
      %v8716 = vand.u32 %v7891, 4294901760
      %8717 = vmatmul.mubr.f32.gmra.mxu0 %v8716
      %v8718 = vpop.f32.mrf.mxu0
      %v8719 = vadd.f32 %v8598, %v8718
      %v8720 = vpop.f32.mrf.mxu0
      %8721 = vmatprep.mubr.f32.mxu0 0.0
      %v8722 = vand.u32 %v7894, 4294901760
      %8723 = vmatmul.mubr.f32.gmra.mxu0 %v8722
      %v8724 = vpop.f32.mrf.mxu0
      %v8725 = vadd.f32 %v8604, %v8724
      %v8726 = vpop.f32.mrf.mxu0
      %8727 = vmatprep.mubr.f32.mxu0 0.0
      %v8728 = vand.u32 %v7897, 4294901760
      %8729 = vmatmul.mubr.f32.gmra.mxu0 %v8728
      %v8730 = vpop.f32.mrf.mxu0
      %v8731 = vadd.f32 %v8610, %v8730
      %v8732 = vpop.f32.mrf.mxu0
      %8733 = vmatprep.mubr.f32.mxu0 0.0
      %v8734 = vand.u32 %v7900, 4294901760
      %8735 = vmatmul.mubr.f32.gmra.mxu0 %v8734
      %v8736 = vpop.f32.mrf.mxu0
      %v8737 = vadd.f32 %v8616, %v8736
      %v8738 = vpop.f32.mrf.mxu0
      %8739 = vdwg.mxu0
      %s8740 = scalar_lea.vmem %s6, 16
      %v8741 = vld [vmem:[%s8740] sm:$0xff]
      %v8742 = vld [vmem:[%s8740 + $0x8] sm:$0xff]
      %v8744 = vsel %vm314, %v8695, 0
      %v8747 = vsel %vm314, %v8701, 0
      %v8750 = vsel %vm314, %v8707, 0
      %v8753 = vsel %vm314, %v8713, 0
      %v8756 = vsel %vm314, %v8719, 0
      %v8759 = vsel %vm314, %v8725, 0
      %v8762 = vsel %vm314, %v8731, 0
      %v8765 = vsel %vm314, %v8737, 0
      %8767 = vmatprep.subr.mxu0 0.0
      %8768 = vmatpush1.msra.mxu0 0.0
      %8769 = vmatprep.subr.mxu0 0.0
      %8770 = vmatpush1.msra.mxu0 0.0
      %8771 = vmatprep.subr.mxu0 0.0
      %8772 = vmatpush1.msra.mxu0 0.0
      %8773 = vmatprep.subr.mxu0 0.0
      %8774 = vmatpush1.msra.mxu0 0.0
      %8775 = vmatprep.subr.mxu0 0.0
      %8776 = vmatpush1.msra.mxu0 0.0
      %8777 = vmatprep.subr.mxu0 0.0
      %8778 = vmatpush1.msra.mxu0 0.0
      %8779 = vmatprep.subr.mxu0 0.0
      %8780 = vmatpush1.msra.mxu0 0.0
      %8781 = vmatprep.subr.mxu0 0.0
      %8782 = vmatpush1.msra.mxu0 0.0
      %8783 = vmatprep.subr.mxu0 0.0
      %8784 = vmatpush1.msra.mxu0 0.0
      %8785 = vmatprep.subr.mxu0 0.0
      %8786 = vmatpush1.msra.mxu0 0.0
      %8787 = vmatprep.subr.mxu0 0.0
      %8788 = vmatpush1.msra.mxu0 0.0
      %8789 = vmatprep.subr.mxu0 0.0
      %8790 = vmatpush1.msra.mxu0 0.0
      %8791 = vmatprep.subr.mxu0 0.0
      %8792 = vmatpush1.msra.mxu0 0.0
      %8793 = vmatprep.subr.mxu0 0.0
      %8794 = vmatpush1.msra.mxu0 0.0
      %8795 = vmatprep.subr.mxu0 0.0
      %v8796 = vand.u32 %v8742, 4294901760
      %8797 = vmatpush1.msra.mxu0 %v8796
      %8798 = vmatprep.subr.mxu0 0.0
      %v8799 = vand.u32 %v8741, 4294901760
      %8800 = vmatpush1.msra.mxu0 %v8799
      %8801 = vmatprep.subr.mxu0 0.0
      %8802 = vmatpush2.msra.mxu0 0.0
      %8803 = vmatprep.subr.mxu0 0.0
      %8804 = vmatpush2.msra.mxu0 0.0
      %8805 = vmatprep.subr.mxu0 0.0
      %8806 = vmatpush2.msra.mxu0 0.0
      %8807 = vmatprep.subr.mxu0 0.0
      %8808 = vmatpush2.msra.mxu0 0.0
      %8809 = vmatprep.subr.mxu0 0.0
      %8810 = vmatpush2.msra.mxu0 0.0
      %8811 = vmatprep.subr.mxu0 0.0
      %8812 = vmatpush2.msra.mxu0 0.0
      %8813 = vmatprep.subr.mxu0 0.0
      %8814 = vmatpush2.msra.mxu0 0.0
      %8815 = vmatprep.subr.mxu0 0.0
      %8816 = vmatpush2.msra.mxu0 0.0
      %8817 = vmatprep.subr.mxu0 0.0
      %8818 = vmatpush2.msra.mxu0 0.0
      %8819 = vmatprep.subr.mxu0 0.0
      %8820 = vmatpush2.msra.mxu0 0.0
      %8821 = vmatprep.subr.mxu0 0.0
      %8822 = vmatpush2.msra.mxu0 0.0
      %8823 = vmatprep.subr.mxu0 0.0
      %8824 = vmatpush2.msra.mxu0 0.0
      %8825 = vmatprep.subr.mxu0 0.0
      %8826 = vmatpush2.msra.mxu0 0.0
      %8827 = vmatprep.subr.mxu0 0.0
      %8828 = vmatpush2.msra.mxu0 0.0
      %8829 = vmatprep.subr.mxu0 0.0
      %8830 = vmatpush2.msra.mxu0 0.0
      %8831 = vmatprep.subr.mxu0 0.0
      %8832 = vmatpush2.msra.mxu0 0.0
      %8833 = vmatprep.mubr.f32.mxu0 0.0
      %v8834 = vand.u32 %v8744, 4294901760
      %v8835 = vsub.f32 %v8744, %v8834
      %v8836 = vand.u32 %v8835, 4294901760
      %v8837 = vsub.f32 %v8835, %v8836
      %v8838 = vand.u32 %v8837, 4294901760
      %8839 = vmatmul.mubr.f32.gmra.mxu0 %v8838
      %v8840 = vpop.f32.mrf.mxu0
      %v8841 = vadd.f32 0.0, %v8840
      %v8842 = vpop.f32.mrf.mxu0
      %8843 = vmatprep.mubr.f32.mxu0 0.0
      %v8844 = vand.u32 %v8747, 4294901760
      %v8845 = vsub.f32 %v8747, %v8844
      %v8846 = vand.u32 %v8845, 4294901760
      %v8847 = vsub.f32 %v8845, %v8846
      %v8848 = vand.u32 %v8847, 4294901760
      %8849 = vmatmul.mubr.f32.gmra.mxu0 %v8848
      %v8850 = vpop.f32.mrf.mxu0
      %v8851 = vadd.f32 0.0, %v8850
      %v8852 = vpop.f32.mrf.mxu0
      %8853 = vmatprep.mubr.f32.mxu0 0.0
      %v8854 = vand.u32 %v8750, 4294901760
      %v8855 = vsub.f32 %v8750, %v8854
      %v8856 = vand.u32 %v8855, 4294901760
      %v8857 = vsub.f32 %v8855, %v8856
      %v8858 = vand.u32 %v8857, 4294901760
      %8859 = vmatmul.mubr.f32.gmra.mxu0 %v8858
      %v8860 = vpop.f32.mrf.mxu0
      %v8861 = vadd.f32 0.0, %v8860
      %v8862 = vpop.f32.mrf.mxu0
      %8863 = vmatprep.mubr.f32.mxu0 0.0
      %v8864 = vand.u32 %v8753, 4294901760
      %v8865 = vsub.f32 %v8753, %v8864
      %v8866 = vand.u32 %v8865, 4294901760
      %v8867 = vsub.f32 %v8865, %v8866
      %v8868 = vand.u32 %v8867, 4294901760
      %8869 = vmatmul.mubr.f32.gmra.mxu0 %v8868
      %v8870 = vpop.f32.mrf.mxu0
      %v8871 = vadd.f32 0.0, %v8870
      %v8872 = vpop.f32.mrf.mxu0
      %8873 = vmatprep.mubr.f32.mxu0 0.0
      %v8874 = vand.u32 %v8756, 4294901760
      %v8875 = vsub.f32 %v8756, %v8874
      %v8876 = vand.u32 %v8875, 4294901760
      %v8877 = vsub.f32 %v8875, %v8876
      %v8878 = vand.u32 %v8877, 4294901760
      %8879 = vmatmul.mubr.f32.gmra.mxu0 %v8878
      %v8880 = vpop.f32.mrf.mxu0
      %v8881 = vadd.f32 0.0, %v8880
      %v8882 = vpop.f32.mrf.mxu0
      %8883 = vmatprep.mubr.f32.mxu0 0.0
      %v8884 = vand.u32 %v8759, 4294901760
      %v8885 = vsub.f32 %v8759, %v8884
      %v8886 = vand.u32 %v8885, 4294901760
      %v8887 = vsub.f32 %v8885, %v8886
      %v8888 = vand.u32 %v8887, 4294901760
      %8889 = vmatmul.mubr.f32.gmra.mxu0 %v8888
      %v8890 = vpop.f32.mrf.mxu0
      %v8891 = vadd.f32 0.0, %v8890
      %v8892 = vpop.f32.mrf.mxu0
      %8893 = vmatprep.mubr.f32.mxu0 0.0
      %v8894 = vand.u32 %v8762, 4294901760
      %v8895 = vsub.f32 %v8762, %v8894
      %v8896 = vand.u32 %v8895, 4294901760
      %v8897 = vsub.f32 %v8895, %v8896
      %v8898 = vand.u32 %v8897, 4294901760
      %8899 = vmatmul.mubr.f32.gmra.mxu0 %v8898
      %v8900 = vpop.f32.mrf.mxu0
      %v8901 = vadd.f32 0.0, %v8900
      %v8902 = vpop.f32.mrf.mxu0
      %8903 = vmatprep.mubr.f32.mxu0 0.0
      %v8904 = vand.u32 %v8765, 4294901760
      %v8905 = vsub.f32 %v8765, %v8904
      %v8906 = vand.u32 %v8905, 4294901760
      %v8907 = vsub.f32 %v8905, %v8906
      %v8908 = vand.u32 %v8907, 4294901760
      %8909 = vmatmul.mubr.f32.gmra.mxu0 %v8908
      %v8910 = vpop.f32.mrf.mxu0
      %v8911 = vadd.f32 0.0, %v8910
      %v8912 = vpop.f32.mrf.mxu0
      %8913 = vdwg.mxu0
      %8914 = vmatprep.subr.mxu0 0.0
      %8915 = vmatpush1.msra.mxu0 0.0
      %8916 = vmatprep.subr.mxu0 0.0
      %8917 = vmatpush1.msra.mxu0 0.0
      %8918 = vmatprep.subr.mxu0 0.0
      %8919 = vmatpush1.msra.mxu0 0.0
      %8920 = vmatprep.subr.mxu0 0.0
      %8921 = vmatpush1.msra.mxu0 0.0
      %8922 = vmatprep.subr.mxu0 0.0
      %8923 = vmatpush1.msra.mxu0 0.0
      %8924 = vmatprep.subr.mxu0 0.0
      %8925 = vmatpush1.msra.mxu0 0.0
      %8926 = vmatprep.subr.mxu0 0.0
      %8927 = vmatpush1.msra.mxu0 0.0
      %8928 = vmatprep.subr.mxu0 0.0
      %8929 = vmatpush1.msra.mxu0 0.0
      %8930 = vmatprep.subr.mxu0 0.0
      %8931 = vmatpush1.msra.mxu0 0.0
      %8932 = vmatprep.subr.mxu0 0.0
      %8933 = vmatpush1.msra.mxu0 0.0
      %8934 = vmatprep.subr.mxu0 0.0
      %8935 = vmatpush1.msra.mxu0 0.0
      %8936 = vmatprep.subr.mxu0 0.0
      %8937 = vmatpush1.msra.mxu0 0.0
      %8938 = vmatprep.subr.mxu0 0.0
      %8939 = vmatpush1.msra.mxu0 0.0
      %8940 = vmatprep.subr.mxu0 0.0
      %8941 = vmatpush1.msra.mxu0 0.0
      %8942 = vmatprep.subr.mxu0 0.0
      %v8943 = vand.u32 %v8742, 4294901760
      %v8944 = vsub.f32 %v8742, %v8943
      %v8945 = vand.u32 %v8944, 4294901760
      %v8946 = vsub.f32 %v8944, %v8945
      %v8947 = vand.u32 %v8946, 4294901760
      %8948 = vmatpush1.msra.mxu0 %v8947
      %8949 = vmatprep.subr.mxu0 0.0
      %v8950 = vand.u32 %v8741, 4294901760
      %v8951 = vsub.f32 %v8741, %v8950
      %v8952 = vand.u32 %v8951, 4294901760
      %v8953 = vsub.f32 %v8951, %v8952
      %v8954 = vand.u32 %v8953, 4294901760
      %8955 = vmatpush1.msra.mxu0 %v8954
      %8956 = vmatprep.subr.mxu0 0.0
      %8957 = vmatpush2.msra.mxu0 0.0
      %8958 = vmatprep.subr.mxu0 0.0
      %8959 = vmatpush2.msra.mxu0 0.0
      %8960 = vmatprep.subr.mxu0 0.0
      %8961 = vmatpush2.msra.mxu0 0.0
      %8962 = vmatprep.subr.mxu0 0.0
      %8963 = vmatpush2.msra.mxu0 0.0
      %8964 = vmatprep.subr.mxu0 0.0
      %8965 = vmatpush2.msra.mxu0 0.0
      %8966 = vmatprep.subr.mxu0 0.0
      %8967 = vmatpush2.msra.mxu0 0.0
      %8968 = vmatprep.subr.mxu0 0.0
      %8969 = vmatpush2.msra.mxu0 0.0
      %8970 = vmatprep.subr.mxu0 0.0
      %8971 = vmatpush2.msra.mxu0 0.0
      %8972 = vmatprep.subr.mxu0 0.0
      %8973 = vmatpush2.msra.mxu0 0.0
      %8974 = vmatprep.subr.mxu0 0.0
      %8975 = vmatpush2.msra.mxu0 0.0
      %8976 = vmatprep.subr.mxu0 0.0
      %8977 = vmatpush2.msra.mxu0 0.0
      %8978 = vmatprep.subr.mxu0 0.0
      %8979 = vmatpush2.msra.mxu0 0.0
      %8980 = vmatprep.subr.mxu0 0.0
      %8981 = vmatpush2.msra.mxu0 0.0
      %8982 = vmatprep.subr.mxu0 0.0
      %8983 = vmatpush2.msra.mxu0 0.0
      %8984 = vmatprep.subr.mxu0 0.0
      %8985 = vmatpush2.msra.mxu0 0.0
      %8986 = vmatprep.subr.mxu0 0.0
      %8987 = vmatpush2.msra.mxu0 0.0
      %8988 = vmatprep.mubr.f32.mxu0 0.0
      %v8989 = vand.u32 %v8744, 4294901760
      %8990 = vmatmul.mubr.f32.gmra.mxu0 %v8989
      %v8991 = vpop.f32.mrf.mxu0
      %v8992 = vadd.f32 %v8841, %v8991
      %v8993 = vpop.f32.mrf.mxu0
      %8994 = vmatprep.mubr.f32.mxu0 0.0
      %v8995 = vand.u32 %v8747, 4294901760
      %8996 = vmatmul.mubr.f32.gmra.mxu0 %v8995
      %v8997 = vpop.f32.mrf.mxu0
      %v8998 = vadd.f32 %v8851, %v8997
      %v8999 = vpop.f32.mrf.mxu0
      %9000 = vmatprep.mubr.f32.mxu0 0.0
      %v9001 = vand.u32 %v8750, 4294901760
      %9002 = vmatmul.mubr.f32.gmra.mxu0 %v9001
      %v9003 = vpop.f32.mrf.mxu0
      %v9004 = vadd.f32 %v8861, %v9003
      %v9005 = vpop.f32.mrf.mxu0
      %9006 = vmatprep.mubr.f32.mxu0 0.0
      %v9007 = vand.u32 %v8753, 4294901760
      %9008 = vmatmul.mubr.f32.gmra.mxu0 %v9007
      %v9009 = vpop.f32.mrf.mxu0
      %v9010 = vadd.f32 %v8871, %v9009
      %v9011 = vpop.f32.mrf.mxu0
      %9012 = vmatprep.mubr.f32.mxu0 0.0
      %v9013 = vand.u32 %v8756, 4294901760
      %9014 = vmatmul.mubr.f32.gmra.mxu0 %v9013
      %v9015 = vpop.f32.mrf.mxu0
      %v9016 = vadd.f32 %v8881, %v9015
      %v9017 = vpop.f32.mrf.mxu0
      %9018 = vmatprep.mubr.f32.mxu0 0.0
      %v9019 = vand.u32 %v8759, 4294901760
      %9020 = vmatmul.mubr.f32.gmra.mxu0 %v9019
      %v9021 = vpop.f32.mrf.mxu0
      %v9022 = vadd.f32 %v8891, %v9021
      %v9023 = vpop.f32.mrf.mxu0
      %9024 = vmatprep.mubr.f32.mxu0 0.0
      %v9025 = vand.u32 %v8762, 4294901760
      %9026 = vmatmul.mubr.f32.gmra.mxu0 %v9025
      %v9027 = vpop.f32.mrf.mxu0
      %v9028 = vadd.f32 %v8901, %v9027
      %v9029 = vpop.f32.mrf.mxu0
      %9030 = vmatprep.mubr.f32.mxu0 0.0
      %v9031 = vand.u32 %v8765, 4294901760
      %9032 = vmatmul.mubr.f32.gmra.mxu0 %v9031
      %v9033 = vpop.f32.mrf.mxu0
      %v9034 = vadd.f32 %v8911, %v9033
      %v9035 = vpop.f32.mrf.mxu0
      %9036 = vdwg.mxu0
      %9037 = vmatprep.subr.mxu0 0.0
      %9038 = vmatpush1.msra.mxu0 0.0
      %9039 = vmatprep.subr.mxu0 0.0
      %9040 = vmatpush1.msra.mxu0 0.0
      %9041 = vmatprep.subr.mxu0 0.0
      %9042 = vmatpush1.msra.mxu0 0.0
      %9043 = vmatprep.subr.mxu0 0.0
      %9044 = vmatpush1.msra.mxu0 0.0
      %9045 = vmatprep.subr.mxu0 0.0
      %9046 = vmatpush1.msra.mxu0 0.0
      %9047 = vmatprep.subr.mxu0 0.0
      %9048 = vmatpush1.msra.mxu0 0.0
      %9049 = vmatprep.subr.mxu0 0.0
      %9050 = vmatpush1.msra.mxu0 0.0
      %9051 = vmatprep.subr.mxu0 0.0
      %9052 = vmatpush1.msra.mxu0 0.0
      %9053 = vmatprep.subr.mxu0 0.0
      %9054 = vmatpush1.msra.mxu0 0.0
      %9055 = vmatprep.subr.mxu0 0.0
      %9056 = vmatpush1.msra.mxu0 0.0
      %9057 = vmatprep.subr.mxu0 0.0
      %9058 = vmatpush1.msra.mxu0 0.0
      %9059 = vmatprep.subr.mxu0 0.0
      %9060 = vmatpush1.msra.mxu0 0.0
      %9061 = vmatprep.subr.mxu0 0.0
      %9062 = vmatpush1.msra.mxu0 0.0
      %9063 = vmatprep.subr.mxu0 0.0
      %9064 = vmatpush1.msra.mxu0 0.0
      %9065 = vmatprep.subr.mxu0 0.0
      %v9066 = vand.u32 %v8742, 4294901760
      %v9067 = vsub.f32 %v8742, %v9066
      %9068 = vmatpush1.msra.mxu0 %v9067
      %9069 = vmatprep.subr.mxu0 0.0
      %v9070 = vand.u32 %v8741, 4294901760
      %v9071 = vsub.f32 %v8741, %v9070
      %9072 = vmatpush1.msra.mxu0 %v9071
      %9073 = vmatprep.subr.mxu0 0.0
      %9074 = vmatpush2.msra.mxu0 0.0
      %9075 = vmatprep.subr.mxu0 0.0
      %9076 = vmatpush2.msra.mxu0 0.0
      %9077 = vmatprep.subr.mxu0 0.0
      %9078 = vmatpush2.msra.mxu0 0.0
      %9079 = vmatprep.subr.mxu0 0.0
      %9080 = vmatpush2.msra.mxu0 0.0
      %9081 = vmatprep.subr.mxu0 0.0
      %9082 = vmatpush2.msra.mxu0 0.0
      %9083 = vmatprep.subr.mxu0 0.0
      %9084 = vmatpush2.msra.mxu0 0.0
      %9085 = vmatprep.subr.mxu0 0.0
      %9086 = vmatpush2.msra.mxu0 0.0
      %9087 = vmatprep.subr.mxu0 0.0
      %9088 = vmatpush2.msra.mxu0 0.0
      %9089 = vmatprep.subr.mxu0 0.0
      %9090 = vmatpush2.msra.mxu0 0.0
      %9091 = vmatprep.subr.mxu0 0.0
      %9092 = vmatpush2.msra.mxu0 0.0
      %9093 = vmatprep.subr.mxu0 0.0
      %9094 = vmatpush2.msra.mxu0 0.0
      %9095 = vmatprep.subr.mxu0 0.0
      %9096 = vmatpush2.msra.mxu0 0.0
      %9097 = vmatprep.subr.mxu0 0.0
      %9098 = vmatpush2.msra.mxu0 0.0
      %9099 = vmatprep.subr.mxu0 0.0
      %9100 = vmatpush2.msra.mxu0 0.0
      %9101 = vmatprep.subr.mxu0 0.0
      %9102 = vmatpush2.msra.mxu0 0.0
      %9103 = vmatprep.subr.mxu0 0.0
      %9104 = vmatpush2.msra.mxu0 0.0
      %9105 = vmatprep.mubr.f32.mxu0 0.0
      %v9106 = vand.u32 %v8744, 4294901760
      %v9107 = vsub.f32 %v8744, %v9106
      %9108 = vmatmul.mubr.f32.gmra.mxu0 %v9107
      %v9109 = vpop.f32.mrf.mxu0
      %v9110 = vadd.f32 %v8992, %v9109
      %v9111 = vpop.f32.mrf.mxu0
      %9112 = vmatprep.mubr.f32.mxu0 0.0
      %v9113 = vand.u32 %v8747, 4294901760
      %v9114 = vsub.f32 %v8747, %v9113
      %9115 = vmatmul.mubr.f32.gmra.mxu0 %v9114
      %v9116 = vpop.f32.mrf.mxu0
      %v9117 = vadd.f32 %v8998, %v9116
      %v9118 = vpop.f32.mrf.mxu0
      %9119 = vmatprep.mubr.f32.mxu0 0.0
      %v9120 = vand.u32 %v8750, 4294901760
      %v9121 = vsub.f32 %v8750, %v9120
      %9122 = vmatmul.mubr.f32.gmra.mxu0 %v9121
      %v9123 = vpop.f32.mrf.mxu0
      %v9124 = vadd.f32 %v9004, %v9123
      %v9125 = vpop.f32.mrf.mxu0
      %9126 = vmatprep.mubr.f32.mxu0 0.0
      %v9127 = vand.u32 %v8753, 4294901760
      %v9128 = vsub.f32 %v8753, %v9127
      %9129 = vmatmul.mubr.f32.gmra.mxu0 %v9128
      %v9130 = vpop.f32.mrf.mxu0
      %v9131 = vadd.f32 %v9010, %v9130
      %v9132 = vpop.f32.mrf.mxu0
      %9133 = vmatprep.mubr.f32.mxu0 0.0
      %v9134 = vand.u32 %v8756, 4294901760
      %v9135 = vsub.f32 %v8756, %v9134
      %9136 = vmatmul.mubr.f32.gmra.mxu0 %v9135
      %v9137 = vpop.f32.mrf.mxu0
      %v9138 = vadd.f32 %v9016, %v9137
      %v9139 = vpop.f32.mrf.mxu0
      %9140 = vmatprep.mubr.f32.mxu0 0.0
      %v9141 = vand.u32 %v8759, 4294901760
      %v9142 = vsub.f32 %v8759, %v9141
      %9143 = vmatmul.mubr.f32.gmra.mxu0 %v9142
      %v9144 = vpop.f32.mrf.mxu0
      %v9145 = vadd.f32 %v9022, %v9144
      %v9146 = vpop.f32.mrf.mxu0
      %9147 = vmatprep.mubr.f32.mxu0 0.0
      %v9148 = vand.u32 %v8762, 4294901760
      %v9149 = vsub.f32 %v8762, %v9148
      %9150 = vmatmul.mubr.f32.gmra.mxu0 %v9149
      %v9151 = vpop.f32.mrf.mxu0
      %v9152 = vadd.f32 %v9028, %v9151
      %v9153 = vpop.f32.mrf.mxu0
      %9154 = vmatprep.mubr.f32.mxu0 0.0
      %v9155 = vand.u32 %v8765, 4294901760
      %v9156 = vsub.f32 %v8765, %v9155
      %9157 = vmatmul.mubr.f32.gmra.mxu0 %v9156
      %v9158 = vpop.f32.mrf.mxu0
      %v9159 = vadd.f32 %v9034, %v9158
      %v9160 = vpop.f32.mrf.mxu0
      %9161 = vdwg.mxu0
      %9162 = vmatprep.subr.mxu0 0.0
      %9163 = vmatpush1.msra.mxu0 0.0
      %9164 = vmatprep.subr.mxu0 0.0
      %9165 = vmatpush1.msra.mxu0 0.0
      %9166 = vmatprep.subr.mxu0 0.0
      %9167 = vmatpush1.msra.mxu0 0.0
      %9168 = vmatprep.subr.mxu0 0.0
      %9169 = vmatpush1.msra.mxu0 0.0
      %9170 = vmatprep.subr.mxu0 0.0
      %9171 = vmatpush1.msra.mxu0 0.0
      %9172 = vmatprep.subr.mxu0 0.0
      %9173 = vmatpush1.msra.mxu0 0.0
      %9174 = vmatprep.subr.mxu0 0.0
      %9175 = vmatpush1.msra.mxu0 0.0
      %9176 = vmatprep.subr.mxu0 0.0
      %9177 = vmatpush1.msra.mxu0 0.0
      %9178 = vmatprep.subr.mxu0 0.0
      %9179 = vmatpush1.msra.mxu0 0.0
      %9180 = vmatprep.subr.mxu0 0.0
      %9181 = vmatpush1.msra.mxu0 0.0
      %9182 = vmatprep.subr.mxu0 0.0
      %9183 = vmatpush1.msra.mxu0 0.0
      %9184 = vmatprep.subr.mxu0 0.0
      %9185 = vmatpush1.msra.mxu0 0.0
      %9186 = vmatprep.subr.mxu0 0.0
      %9187 = vmatpush1.msra.mxu0 0.0
      %9188 = vmatprep.subr.mxu0 0.0
      %9189 = vmatpush1.msra.mxu0 0.0
      %9190 = vmatprep.subr.mxu0 0.0
      %v9191 = vand.u32 %v8742, 4294901760
      %9192 = vmatpush1.msra.mxu0 %v9191
      %9193 = vmatprep.subr.mxu0 0.0
      %v9194 = vand.u32 %v8741, 4294901760
      %9195 = vmatpush1.msra.mxu0 %v9194
      %9196 = vmatprep.subr.mxu0 0.0
      %9197 = vmatpush2.msra.mxu0 0.0
      %9198 = vmatprep.subr.mxu0 0.0
      %9199 = vmatpush2.msra.mxu0 0.0
      %9200 = vmatprep.subr.mxu0 0.0
      %9201 = vmatpush2.msra.mxu0 0.0
      %9202 = vmatprep.subr.mxu0 0.0
      %9203 = vmatpush2.msra.mxu0 0.0
      %9204 = vmatprep.subr.mxu0 0.0
      %9205 = vmatpush2.msra.mxu0 0.0
      %9206 = vmatprep.subr.mxu0 0.0
      %9207 = vmatpush2.msra.mxu0 0.0
      %9208 = vmatprep.subr.mxu0 0.0
      %9209 = vmatpush2.msra.mxu0 0.0
      %9210 = vmatprep.subr.mxu0 0.0
      %9211 = vmatpush2.msra.mxu0 0.0
      %9212 = vmatprep.subr.mxu0 0.0
      %9213 = vmatpush2.msra.mxu0 0.0
      %9214 = vmatprep.subr.mxu0 0.0
      %9215 = vmatpush2.msra.mxu0 0.0
      %9216 = vmatprep.subr.mxu0 0.0
      %9217 = vmatpush2.msra.mxu0 0.0
      %9218 = vmatprep.subr.mxu0 0.0
      %9219 = vmatpush2.msra.mxu0 0.0
      %9220 = vmatprep.subr.mxu0 0.0
      %9221 = vmatpush2.msra.mxu0 0.0
      %9222 = vmatprep.subr.mxu0 0.0
      %9223 = vmatpush2.msra.mxu0 0.0
      %9224 = vmatprep.subr.mxu0 0.0
      %9225 = vmatpush2.msra.mxu0 0.0
      %9226 = vmatprep.subr.mxu0 0.0
      %9227 = vmatpush2.msra.mxu0 0.0
      %9228 = vmatprep.mubr.f32.mxu0 0.0
      %v9229 = vand.u32 %v8744, 4294901760
      %v9230 = vsub.f32 %v8744, %v9229
      %v9231 = vand.u32 %v9230, 4294901760
      %9232 = vmatmul.mubr.f32.gmra.mxu0 %v9231
      %v9233 = vpop.f32.mrf.mxu0
      %v9234 = vadd.f32 %v9110, %v9233
      %v9235 = vpop.f32.mrf.mxu0
      %9236 = vmatprep.mubr.f32.mxu0 0.0
      %v9237 = vand.u32 %v8747, 4294901760
      %v9238 = vsub.f32 %v8747, %v9237
      %v9239 = vand.u32 %v9238, 4294901760
      %9240 = vmatmul.mubr.f32.gmra.mxu0 %v9239
      %v9241 = vpop.f32.mrf.mxu0
      %v9242 = vadd.f32 %v9117, %v9241
      %v9243 = vpop.f32.mrf.mxu0
      %9244 = vmatprep.mubr.f32.mxu0 0.0
      %v9245 = vand.u32 %v8750, 4294901760
      %v9246 = vsub.f32 %v8750, %v9245
      %v9247 = vand.u32 %v9246, 4294901760
      %9248 = vmatmul.mubr.f32.gmra.mxu0 %v9247
      %v9249 = vpop.f32.mrf.mxu0
      %v9250 = vadd.f32 %v9124, %v9249
      %v9251 = vpop.f32.mrf.mxu0
      %9252 = vmatprep.mubr.f32.mxu0 0.0
      %v9253 = vand.u32 %v8753, 4294901760
      %v9254 = vsub.f32 %v8753, %v9253
      %v9255 = vand.u32 %v9254, 4294901760
      %9256 = vmatmul.mubr.f32.gmra.mxu0 %v9255
      %v9257 = vpop.f32.mrf.mxu0
      %v9258 = vadd.f32 %v9131, %v9257
      %v9259 = vpop.f32.mrf.mxu0
      %9260 = vmatprep.mubr.f32.mxu0 0.0
      %v9261 = vand.u32 %v8756, 4294901760
      %v9262 = vsub.f32 %v8756, %v9261
      %v9263 = vand.u32 %v9262, 4294901760
      %9264 = vmatmul.mubr.f32.gmra.mxu0 %v9263
      %v9265 = vpop.f32.mrf.mxu0
      %v9266 = vadd.f32 %v9138, %v9265
      %v9267 = vpop.f32.mrf.mxu0
      %9268 = vmatprep.mubr.f32.mxu0 0.0
      %v9269 = vand.u32 %v8759, 4294901760
      %v9270 = vsub.f32 %v8759, %v9269
      %v9271 = vand.u32 %v9270, 4294901760
      %9272 = vmatmul.mubr.f32.gmra.mxu0 %v9271
      %v9273 = vpop.f32.mrf.mxu0
      %v9274 = vadd.f32 %v9145, %v9273
      %v9275 = vpop.f32.mrf.mxu0
      %9276 = vmatprep.mubr.f32.mxu0 0.0
      %v9277 = vand.u32 %v8762, 4294901760
      %v9278 = vsub.f32 %v8762, %v9277
      %v9279 = vand.u32 %v9278, 4294901760
      %9280 = vmatmul.mubr.f32.gmra.mxu0 %v9279
      %v9281 = vpop.f32.mrf.mxu0
      %v9282 = vadd.f32 %v9152, %v9281
      %v9283 = vpop.f32.mrf.mxu0
      %9284 = vmatprep.mubr.f32.mxu0 0.0
      %v9285 = vand.u32 %v8765, 4294901760
      %v9286 = vsub.f32 %v8765, %v9285
      %v9287 = vand.u32 %v9286, 4294901760
      %9288 = vmatmul.mubr.f32.gmra.mxu0 %v9287
      %v9289 = vpop.f32.mrf.mxu0
      %v9290 = vadd.f32 %v9159, %v9289
      %v9291 = vpop.f32.mrf.mxu0
      %9292 = vdwg.mxu0
      %9293 = vmatprep.subr.mxu0 0.0
      %9294 = vmatpush1.msra.mxu0 0.0
      %9295 = vmatprep.subr.mxu0 0.0
      %9296 = vmatpush1.msra.mxu0 0.0
      %9297 = vmatprep.subr.mxu0 0.0
      %9298 = vmatpush1.msra.mxu0 0.0
      %9299 = vmatprep.subr.mxu0 0.0
      %9300 = vmatpush1.msra.mxu0 0.0
      %9301 = vmatprep.subr.mxu0 0.0
      %9302 = vmatpush1.msra.mxu0 0.0
      %9303 = vmatprep.subr.mxu0 0.0
      %9304 = vmatpush1.msra.mxu0 0.0
      %9305 = vmatprep.subr.mxu0 0.0
      %9306 = vmatpush1.msra.mxu0 0.0
      %9307 = vmatprep.subr.mxu0 0.0
      %9308 = vmatpush1.msra.mxu0 0.0
      %9309 = vmatprep.subr.mxu0 0.0
      %9310 = vmatpush1.msra.mxu0 0.0
      %9311 = vmatprep.subr.mxu0 0.0
      %9312 = vmatpush1.msra.mxu0 0.0
      %9313 = vmatprep.subr.mxu0 0.0
      %9314 = vmatpush1.msra.mxu0 0.0
      %9315 = vmatprep.subr.mxu0 0.0
      %9316 = vmatpush1.msra.mxu0 0.0
      %9317 = vmatprep.subr.mxu0 0.0
      %9318 = vmatpush1.msra.mxu0 0.0
      %9319 = vmatprep.subr.mxu0 0.0
      %9320 = vmatpush1.msra.mxu0 0.0
      %9321 = vmatprep.subr.mxu0 0.0
      %v9322 = vand.u32 %v8742, 4294901760
      %v9323 = vsub.f32 %v8742, %v9322
      %v9324 = vand.u32 %v9323, 4294901760
      %9325 = vmatpush1.msra.mxu0 %v9324
      %9326 = vmatprep.subr.mxu0 0.0
      %v9327 = vand.u32 %v8741, 4294901760
      %v9328 = vsub.f32 %v8741, %v9327
      %v9329 = vand.u32 %v9328, 4294901760
      %9330 = vmatpush1.msra.mxu0 %v9329
      %9331 = vmatprep.subr.mxu0 0.0
      %9332 = vmatpush2.msra.mxu0 0.0
      %9333 = vmatprep.subr.mxu0 0.0
      %9334 = vmatpush2.msra.mxu0 0.0
      %9335 = vmatprep.subr.mxu0 0.0
      %9336 = vmatpush2.msra.mxu0 0.0
      %9337 = vmatprep.subr.mxu0 0.0
      %9338 = vmatpush2.msra.mxu0 0.0
      %9339 = vmatprep.subr.mxu0 0.0
      %9340 = vmatpush2.msra.mxu0 0.0
      %9341 = vmatprep.subr.mxu0 0.0
      %9342 = vmatpush2.msra.mxu0 0.0
      %9343 = vmatprep.subr.mxu0 0.0
      %9344 = vmatpush2.msra.mxu0 0.0
      %9345 = vmatprep.subr.mxu0 0.0
      %9346 = vmatpush2.msra.mxu0 0.0
      %9347 = vmatprep.subr.mxu0 0.0
      %9348 = vmatpush2.msra.mxu0 0.0
      %9349 = vmatprep.subr.mxu0 0.0
      %9350 = vmatpush2.msra.mxu0 0.0
      %9351 = vmatprep.subr.mxu0 0.0
      %9352 = vmatpush2.msra.mxu0 0.0
      %9353 = vmatprep.subr.mxu0 0.0
      %9354 = vmatpush2.msra.mxu0 0.0
      %9355 = vmatprep.subr.mxu0 0.0
      %9356 = vmatpush2.msra.mxu0 0.0
      %9357 = vmatprep.subr.mxu0 0.0
      %9358 = vmatpush2.msra.mxu0 0.0
      %9359 = vmatprep.subr.mxu0 0.0
      %9360 = vmatpush2.msra.mxu0 0.0
      %9361 = vmatprep.subr.mxu0 0.0
      %9362 = vmatpush2.msra.mxu0 0.0
      %9363 = vmatprep.mubr.f32.mxu0 0.0
      %v9364 = vand.u32 %v8744, 4294901760
      %9365 = vmatmul.mubr.f32.gmra.mxu0 %v9364
      %v9366 = vpop.f32.mrf.mxu0
      %v9367 = vadd.f32 %v9234, %v9366
      %v9368 = vpop.f32.mrf.mxu0
      %9369 = vmatprep.mubr.f32.mxu0 0.0
      %v9370 = vand.u32 %v8747, 4294901760
      %9371 = vmatmul.mubr.f32.gmra.mxu0 %v9370
      %v9372 = vpop.f32.mrf.mxu0
      %v9373 = vadd.f32 %v9242, %v9372
      %v9374 = vpop.f32.mrf.mxu0
      %9375 = vmatprep.mubr.f32.mxu0 0.0
      %v9376 = vand.u32 %v8750, 4294901760
      %9377 = vmatmul.mubr.f32.gmra.mxu0 %v9376
      %v9378 = vpop.f32.mrf.mxu0
      %v9379 = vadd.f32 %v9250, %v9378
      %v9380 = vpop.f32.mrf.mxu0
      %9381 = vmatprep.mubr.f32.mxu0 0.0
      %v9382 = vand.u32 %v8753, 4294901760
      %9383 = vmatmul.mubr.f32.gmra.mxu0 %v9382
      %v9384 = vpop.f32.mrf.mxu0
      %v9385 = vadd.f32 %v9258, %v9384
      %v9386 = vpop.f32.mrf.mxu0
      %9387 = vmatprep.mubr.f32.mxu0 0.0
      %v9388 = vand.u32 %v8756, 4294901760
      %9389 = vmatmul.mubr.f32.gmra.mxu0 %v9388
      %v9390 = vpop.f32.mrf.mxu0
      %v9391 = vadd.f32 %v9266, %v9390
      %v9392 = vpop.f32.mrf.mxu0
      %9393 = vmatprep.mubr.f32.mxu0 0.0
      %v9394 = vand.u32 %v8759, 4294901760
      %9395 = vmatmul.mubr.f32.gmra.mxu0 %v9394
      %v9396 = vpop.f32.mrf.mxu0
      %v9397 = vadd.f32 %v9274, %v9396
      %v9398 = vpop.f32.mrf.mxu0
      %9399 = vmatprep.mubr.f32.mxu0 0.0
      %v9400 = vand.u32 %v8762, 4294901760
      %9401 = vmatmul.mubr.f32.gmra.mxu0 %v9400
      %v9402 = vpop.f32.mrf.mxu0
      %v9403 = vadd.f32 %v9282, %v9402
      %v9404 = vpop.f32.mrf.mxu0
      %9405 = vmatprep.mubr.f32.mxu0 0.0
      %v9406 = vand.u32 %v8765, 4294901760
      %9407 = vmatmul.mubr.f32.gmra.mxu0 %v9406
      %v9408 = vpop.f32.mrf.mxu0
      %v9409 = vadd.f32 %v9290, %v9408
      %v9410 = vpop.f32.mrf.mxu0
      %9411 = vdwg.mxu0
      %9412 = vmatprep.subr.mxu0 0.0
      %9413 = vmatpush1.msra.mxu0 0.0
      %9414 = vmatprep.subr.mxu0 0.0
      %9415 = vmatpush1.msra.mxu0 0.0
      %9416 = vmatprep.subr.mxu0 0.0
      %9417 = vmatpush1.msra.mxu0 0.0
      %9418 = vmatprep.subr.mxu0 0.0
      %9419 = vmatpush1.msra.mxu0 0.0
      %9420 = vmatprep.subr.mxu0 0.0
      %9421 = vmatpush1.msra.mxu0 0.0
      %9422 = vmatprep.subr.mxu0 0.0
      %9423 = vmatpush1.msra.mxu0 0.0
      %9424 = vmatprep.subr.mxu0 0.0
      %9425 = vmatpush1.msra.mxu0 0.0
      %9426 = vmatprep.subr.mxu0 0.0
      %9427 = vmatpush1.msra.mxu0 0.0
      %9428 = vmatprep.subr.mxu0 0.0
      %9429 = vmatpush1.msra.mxu0 0.0
      %9430 = vmatprep.subr.mxu0 0.0
      %9431 = vmatpush1.msra.mxu0 0.0
      %9432 = vmatprep.subr.mxu0 0.0
      %9433 = vmatpush1.msra.mxu0 0.0
      %9434 = vmatprep.subr.mxu0 0.0
      %9435 = vmatpush1.msra.mxu0 0.0
      %9436 = vmatprep.subr.mxu0 0.0
      %9437 = vmatpush1.msra.mxu0 0.0
      %9438 = vmatprep.subr.mxu0 0.0
      %9439 = vmatpush1.msra.mxu0 0.0
      %9440 = vmatprep.subr.mxu0 0.0
      %v9441 = vand.u32 %v8742, 4294901760
      %9442 = vmatpush1.msra.mxu0 %v9441
      %9443 = vmatprep.subr.mxu0 0.0
      %v9444 = vand.u32 %v8741, 4294901760
      %9445 = vmatpush1.msra.mxu0 %v9444
      %9446 = vmatprep.subr.mxu0 0.0
      %9447 = vmatpush2.msra.mxu0 0.0
      %9448 = vmatprep.subr.mxu0 0.0
      %9449 = vmatpush2.msra.mxu0 0.0
      %9450 = vmatprep.subr.mxu0 0.0
      %9451 = vmatpush2.msra.mxu0 0.0
      %9452 = vmatprep.subr.mxu0 0.0
      %9453 = vmatpush2.msra.mxu0 0.0
      %9454 = vmatprep.subr.mxu0 0.0
      %9455 = vmatpush2.msra.mxu0 0.0
      %9456 = vmatprep.subr.mxu0 0.0
      %9457 = vmatpush2.msra.mxu0 0.0
      %9458 = vmatprep.subr.mxu0 0.0
      %9459 = vmatpush2.msra.mxu0 0.0
      %9460 = vmatprep.subr.mxu0 0.0
      %9461 = vmatpush2.msra.mxu0 0.0
      %9462 = vmatprep.subr.mxu0 0.0
      %9463 = vmatpush2.msra.mxu0 0.0
      %9464 = vmatprep.subr.mxu0 0.0
      %9465 = vmatpush2.msra.mxu0 0.0
      %9466 = vmatprep.subr.mxu0 0.0
      %9467 = vmatpush2.msra.mxu0 0.0
      %9468 = vmatprep.subr.mxu0 0.0
      %9469 = vmatpush2.msra.mxu0 0.0
      %9470 = vmatprep.subr.mxu0 0.0
      %9471 = vmatpush2.msra.mxu0 0.0
      %9472 = vmatprep.subr.mxu0 0.0
      %9473 = vmatpush2.msra.mxu0 0.0
      %9474 = vmatprep.subr.mxu0 0.0
      %9475 = vmatpush2.msra.mxu0 0.0
      %9476 = vmatprep.subr.mxu0 0.0
      %9477 = vmatpush2.msra.mxu0 0.0
      %9478 = vmatprep.mubr.f32.mxu0 0.0
      %v9479 = vand.u32 %v8744, 4294901760
      %9480 = vmatmul.mubr.f32.gmra.mxu0 %v9479
      %v9481 = vpop.f32.mrf.mxu0
      %v9482 = vadd.f32 %v9367, %v9481
      %v9483 = vpop.f32.mrf.mxu0
      %9484 = vmatprep.mubr.f32.mxu0 0.0
      %v9485 = vand.u32 %v8747, 4294901760
      %9486 = vmatmul.mubr.f32.gmra.mxu0 %v9485
      %v9487 = vpop.f32.mrf.mxu0
      %v9488 = vadd.f32 %v9373, %v9487
      %v9489 = vpop.f32.mrf.mxu0
      %9490 = vmatprep.mubr.f32.mxu0 0.0
      %v9491 = vand.u32 %v8750, 4294901760
      %9492 = vmatmul.mubr.f32.gmra.mxu0 %v9491
      %v9493 = vpop.f32.mrf.mxu0
      %v9494 = vadd.f32 %v9379, %v9493
      %v9495 = vpop.f32.mrf.mxu0
      %9496 = vmatprep.mubr.f32.mxu0 0.0
      %v9497 = vand.u32 %v8753, 4294901760
      %9498 = vmatmul.mubr.f32.gmra.mxu0 %v9497
      %v9499 = vpop.f32.mrf.mxu0
      %v9500 = vadd.f32 %v9385, %v9499
      %v9501 = vpop.f32.mrf.mxu0
      %9502 = vmatprep.mubr.f32.mxu0 0.0
      %v9503 = vand.u32 %v8756, 4294901760
      %9504 = vmatmul.mubr.f32.gmra.mxu0 %v9503
      %v9505 = vpop.f32.mrf.mxu0
      %v9506 = vadd.f32 %v9391, %v9505
      %v9507 = vpop.f32.mrf.mxu0
      %9508 = vmatprep.mubr.f32.mxu0 0.0
      %v9509 = vand.u32 %v8759, 4294901760
      %9510 = vmatmul.mubr.f32.gmra.mxu0 %v9509
      %v9511 = vpop.f32.mrf.mxu0
      %v9512 = vadd.f32 %v9397, %v9511
      %v9513 = vpop.f32.mrf.mxu0
      %9514 = vmatprep.mubr.f32.mxu0 0.0
      %v9515 = vand.u32 %v8762, 4294901760
      %9516 = vmatmul.mubr.f32.gmra.mxu0 %v9515
      %v9517 = vpop.f32.mrf.mxu0
      %v9518 = vadd.f32 %v9403, %v9517
      %v9519 = vpop.f32.mrf.mxu0
      %9520 = vmatprep.mubr.f32.mxu0 0.0
      %v9521 = vand.u32 %v8765, 4294901760
      %9522 = vmatmul.mubr.f32.gmra.mxu0 %v9521
      %v9523 = vpop.f32.mrf.mxu0
      %v9524 = vadd.f32 %v9409, %v9523
      %v9525 = vpop.f32.mrf.mxu0
      %9526 = vdwg.mxu0
      %v9528 = vsel %vm314, %v4560, 0
      %v9531 = vsel %vm314, %v4566, 0
      %v9534 = vsel %vm314, %v4572, 0
      %v9537 = vsel %vm314, %v4578, 0
      %v9540 = vsel %vm314, %v4584, 0
      %v9543 = vsel %vm314, %v4590, 0
      %v9546 = vsel %vm314, %v4596, 0
      %v9549 = vsel %vm314, %v4602, 0
      %9551 = vmatprep.subr.mxu0 0.0
      %9552 = vmatpush1.msra.mxu0 0.0
      %9553 = vmatprep.subr.mxu0 0.0
      %9554 = vmatpush1.msra.mxu0 0.0
      %9555 = vmatprep.subr.mxu0 0.0
      %9556 = vmatpush1.msra.mxu0 0.0
      %9557 = vmatprep.subr.mxu0 0.0
      %9558 = vmatpush1.msra.mxu0 0.0
      %9559 = vmatprep.subr.mxu0 0.0
      %9560 = vmatpush1.msra.mxu0 0.0
      %9561 = vmatprep.subr.mxu0 0.0
      %9562 = vmatpush1.msra.mxu0 0.0
      %9563 = vmatprep.subr.mxu0 0.0
      %9564 = vmatpush1.msra.mxu0 0.0
      %9565 = vmatprep.subr.mxu0 0.0
      %9566 = vmatpush1.msra.mxu0 0.0
      %9567 = vmatprep.subr.mxu0 0.0
      %9568 = vmatpush1.msra.mxu0 0.0
      %9569 = vmatprep.subr.mxu0 0.0
      %9570 = vmatpush1.msra.mxu0 0.0
      %9571 = vmatprep.subr.mxu0 0.0
      %9572 = vmatpush1.msra.mxu0 0.0
      %9573 = vmatprep.subr.mxu0 0.0
      %9574 = vmatpush1.msra.mxu0 0.0
      %9575 = vmatprep.subr.mxu0 0.0
      %9576 = vmatpush1.msra.mxu0 0.0
      %9577 = vmatprep.subr.mxu0 0.0
      %9578 = vmatpush1.msra.mxu0 0.0
      %9579 = vmatprep.subr.mxu0 0.0
      %v9580 = vand.u32 %v4606, 4294901760
      %9581 = vmatpush1.msra.mxu0 %v9580
      %9582 = vmatprep.subr.mxu0 0.0
      %v9583 = vand.u32 %v4605, 4294901760
      %9584 = vmatpush1.msra.mxu0 %v9583
      %9585 = vmatprep.subr.mxu0 0.0
      %9586 = vmatpush2.msra.mxu0 0.0
      %9587 = vmatprep.subr.mxu0 0.0
      %9588 = vmatpush2.msra.mxu0 0.0
      %9589 = vmatprep.subr.mxu0 0.0
      %9590 = vmatpush2.msra.mxu0 0.0
      %9591 = vmatprep.subr.mxu0 0.0
      %9592 = vmatpush2.msra.mxu0 0.0
      %9593 = vmatprep.subr.mxu0 0.0
      %9594 = vmatpush2.msra.mxu0 0.0
      %9595 = vmatprep.subr.mxu0 0.0
      %9596 = vmatpush2.msra.mxu0 0.0
      %9597 = vmatprep.subr.mxu0 0.0
      %9598 = vmatpush2.msra.mxu0 0.0
      %9599 = vmatprep.subr.mxu0 0.0
      %9600 = vmatpush2.msra.mxu0 0.0
      %9601 = vmatprep.subr.mxu0 0.0
      %9602 = vmatpush2.msra.mxu0 0.0
      %9603 = vmatprep.subr.mxu0 0.0
      %9604 = vmatpush2.msra.mxu0 0.0
      %9605 = vmatprep.subr.mxu0 0.0
      %9606 = vmatpush2.msra.mxu0 0.0
      %9607 = vmatprep.subr.mxu0 0.0
      %9608 = vmatpush2.msra.mxu0 0.0
      %9609 = vmatprep.subr.mxu0 0.0
      %9610 = vmatpush2.msra.mxu0 0.0
      %9611 = vmatprep.subr.mxu0 0.0
      %9612 = vmatpush2.msra.mxu0 0.0
      %9613 = vmatprep.subr.mxu0 0.0
      %9614 = vmatpush2.msra.mxu0 0.0
      %9615 = vmatprep.subr.mxu0 0.0
      %9616 = vmatpush2.msra.mxu0 0.0
      %9617 = vmatprep.mubr.f32.mxu0 0.0
      %v9618 = vand.u32 %v9528, 4294901760
      %v9619 = vsub.f32 %v9528, %v9618
      %v9620 = vand.u32 %v9619, 4294901760
      %v9621 = vsub.f32 %v9619, %v9620
      %v9622 = vand.u32 %v9621, 4294901760
      %9623 = vmatmul.mubr.f32.gmra.mxu0 %v9622
      %v9624 = vpop.f32.mrf.mxu0
      %v9625 = vadd.f32 %v9482, %v9624
      %v9626 = vpop.f32.mrf.mxu0
      %9627 = vmatprep.mubr.f32.mxu0 0.0
      %v9628 = vand.u32 %v9531, 4294901760
      %v9629 = vsub.f32 %v9531, %v9628
      %v9630 = vand.u32 %v9629, 4294901760
      %v9631 = vsub.f32 %v9629, %v9630
      %v9632 = vand.u32 %v9631, 4294901760
      %9633 = vmatmul.mubr.f32.gmra.mxu0 %v9632
      %v9634 = vpop.f32.mrf.mxu0
      %v9635 = vadd.f32 %v9488, %v9634
      %v9636 = vpop.f32.mrf.mxu0
      %9637 = vmatprep.mubr.f32.mxu0 0.0
      %v9638 = vand.u32 %v9534, 4294901760
      %v9639 = vsub.f32 %v9534, %v9638
      %v9640 = vand.u32 %v9639, 4294901760
      %v9641 = vsub.f32 %v9639, %v9640
      %v9642 = vand.u32 %v9641, 4294901760
      %9643 = vmatmul.mubr.f32.gmra.mxu0 %v9642
      %v9644 = vpop.f32.mrf.mxu0
      %v9645 = vadd.f32 %v9494, %v9644
      %v9646 = vpop.f32.mrf.mxu0
      %9647 = vmatprep.mubr.f32.mxu0 0.0
      %v9648 = vand.u32 %v9537, 4294901760
      %v9649 = vsub.f32 %v9537, %v9648
      %v9650 = vand.u32 %v9649, 4294901760
      %v9651 = vsub.f32 %v9649, %v9650
      %v9652 = vand.u32 %v9651, 4294901760
      %9653 = vmatmul.mubr.f32.gmra.mxu0 %v9652
      %v9654 = vpop.f32.mrf.mxu0
      %v9655 = vadd.f32 %v9500, %v9654
      %v9656 = vpop.f32.mrf.mxu0
      %9657 = vmatprep.mubr.f32.mxu0 0.0
      %v9658 = vand.u32 %v9540, 4294901760
      %v9659 = vsub.f32 %v9540, %v9658
      %v9660 = vand.u32 %v9659, 4294901760
      %v9661 = vsub.f32 %v9659, %v9660
      %v9662 = vand.u32 %v9661, 4294901760
      %9663 = vmatmul.mubr.f32.gmra.mxu0 %v9662
      %v9664 = vpop.f32.mrf.mxu0
      %v9665 = vadd.f32 %v9506, %v9664
      %v9666 = vpop.f32.mrf.mxu0
      %9667 = vmatprep.mubr.f32.mxu0 0.0
      %v9668 = vand.u32 %v9543, 4294901760
      %v9669 = vsub.f32 %v9543, %v9668
      %v9670 = vand.u32 %v9669, 4294901760
      %v9671 = vsub.f32 %v9669, %v9670
      %v9672 = vand.u32 %v9671, 4294901760
      %9673 = vmatmul.mubr.f32.gmra.mxu0 %v9672
      %v9674 = vpop.f32.mrf.mxu0
      %v9675 = vadd.f32 %v9512, %v9674
      %v9676 = vpop.f32.mrf.mxu0
      %9677 = vmatprep.mubr.f32.mxu0 0.0
      %v9678 = vand.u32 %v9546, 4294901760
      %v9679 = vsub.f32 %v9546, %v9678
      %v9680 = vand.u32 %v9679, 4294901760
      %v9681 = vsub.f32 %v9679, %v9680
      %v9682 = vand.u32 %v9681, 4294901760
      %9683 = vmatmul.mubr.f32.gmra.mxu0 %v9682
      %v9684 = vpop.f32.mrf.mxu0
      %v9685 = vadd.f32 %v9518, %v9684
      %v9686 = vpop.f32.mrf.mxu0
      %9687 = vmatprep.mubr.f32.mxu0 0.0
      %v9688 = vand.u32 %v9549, 4294901760
      %v9689 = vsub.f32 %v9549, %v9688
      %v9690 = vand.u32 %v9689, 4294901760
      %v9691 = vsub.f32 %v9689, %v9690
      %v9692 = vand.u32 %v9691, 4294901760
      %9693 = vmatmul.mubr.f32.gmra.mxu0 %v9692
      %v9694 = vpop.f32.mrf.mxu0
      %v9695 = vadd.f32 %v9524, %v9694
      %v9696 = vpop.f32.mrf.mxu0
      %9697 = vdwg.mxu0
      %9698 = vmatprep.subr.mxu0 0.0
      %9699 = vmatpush1.msra.mxu0 0.0
      %9700 = vmatprep.subr.mxu0 0.0
      %9701 = vmatpush1.msra.mxu0 0.0
      %9702 = vmatprep.subr.mxu0 0.0
      %9703 = vmatpush1.msra.mxu0 0.0
      %9704 = vmatprep.subr.mxu0 0.0
      %9705 = vmatpush1.msra.mxu0 0.0
      %9706 = vmatprep.subr.mxu0 0.0
      %9707 = vmatpush1.msra.mxu0 0.0
      %9708 = vmatprep.subr.mxu0 0.0
      %9709 = vmatpush1.msra.mxu0 0.0
      %9710 = vmatprep.subr.mxu0 0.0
      %9711 = vmatpush1.msra.mxu0 0.0
      %9712 = vmatprep.subr.mxu0 0.0
      %9713 = vmatpush1.msra.mxu0 0.0
      %9714 = vmatprep.subr.mxu0 0.0
      %9715 = vmatpush1.msra.mxu0 0.0
      %9716 = vmatprep.subr.mxu0 0.0
      %9717 = vmatpush1.msra.mxu0 0.0
      %9718 = vmatprep.subr.mxu0 0.0
      %9719 = vmatpush1.msra.mxu0 0.0
      %9720 = vmatprep.subr.mxu0 0.0
      %9721 = vmatpush1.msra.mxu0 0.0
      %9722 = vmatprep.subr.mxu0 0.0
      %9723 = vmatpush1.msra.mxu0 0.0
      %9724 = vmatprep.subr.mxu0 0.0
      %9725 = vmatpush1.msra.mxu0 0.0
      %9726 = vmatprep.subr.mxu0 0.0
      %v9727 = vand.u32 %v4606, 4294901760
      %v9728 = vsub.f32 %v4606, %v9727
      %v9729 = vand.u32 %v9728, 4294901760
      %v9730 = vsub.f32 %v9728, %v9729
      %v9731 = vand.u32 %v9730, 4294901760
      %9732 = vmatpush1.msra.mxu0 %v9731
      %9733 = vmatprep.subr.mxu0 0.0
      %v9734 = vand.u32 %v4605, 4294901760
      %v9735 = vsub.f32 %v4605, %v9734
      %v9736 = vand.u32 %v9735, 4294901760
      %v9737 = vsub.f32 %v9735, %v9736
      %v9738 = vand.u32 %v9737, 4294901760
      %9739 = vmatpush1.msra.mxu0 %v9738
      %9740 = vmatprep.subr.mxu0 0.0
      %9741 = vmatpush2.msra.mxu0 0.0
      %9742 = vmatprep.subr.mxu0 0.0
      %9743 = vmatpush2.msra.mxu0 0.0
      %9744 = vmatprep.subr.mxu0 0.0
      %9745 = vmatpush2.msra.mxu0 0.0
      %9746 = vmatprep.subr.mxu0 0.0
      %9747 = vmatpush2.msra.mxu0 0.0
      %9748 = vmatprep.subr.mxu0 0.0
      %9749 = vmatpush2.msra.mxu0 0.0
      %9750 = vmatprep.subr.mxu0 0.0
      %9751 = vmatpush2.msra.mxu0 0.0
      %9752 = vmatprep.subr.mxu0 0.0
      %9753 = vmatpush2.msra.mxu0 0.0
      %9754 = vmatprep.subr.mxu0 0.0
      %9755 = vmatpush2.msra.mxu0 0.0
      %9756 = vmatprep.subr.mxu0 0.0
      %9757 = vmatpush2.msra.mxu0 0.0
      %9758 = vmatprep.subr.mxu0 0.0
      %9759 = vmatpush2.msra.mxu0 0.0
      %9760 = vmatprep.subr.mxu0 0.0
      %9761 = vmatpush2.msra.mxu0 0.0
      %9762 = vmatprep.subr.mxu0 0.0
      %9763 = vmatpush2.msra.mxu0 0.0
      %9764 = vmatprep.subr.mxu0 0.0
      %9765 = vmatpush2.msra.mxu0 0.0
      %9766 = vmatprep.subr.mxu0 0.0
      %9767 = vmatpush2.msra.mxu0 0.0
      %9768 = vmatprep.subr.mxu0 0.0
      %9769 = vmatpush2.msra.mxu0 0.0
      %9770 = vmatprep.subr.mxu0 0.0
      %9771 = vmatpush2.msra.mxu0 0.0
      %9772 = vmatprep.mubr.f32.mxu0 0.0
      %v9773 = vand.u32 %v9528, 4294901760
      %9774 = vmatmul.mubr.f32.gmra.mxu0 %v9773
      %v9775 = vpop.f32.mrf.mxu0
      %v9776 = vadd.f32 %v9625, %v9775
      %v9777 = vpop.f32.mrf.mxu0
      %9778 = vmatprep.mubr.f32.mxu0 0.0
      %v9779 = vand.u32 %v9531, 4294901760
      %9780 = vmatmul.mubr.f32.gmra.mxu0 %v9779
      %v9781 = vpop.f32.mrf.mxu0
      %v9782 = vadd.f32 %v9635, %v9781
      %v9783 = vpop.f32.mrf.mxu0
      %9784 = vmatprep.mubr.f32.mxu0 0.0
      %v9785 = vand.u32 %v9534, 4294901760
      %9786 = vmatmul.mubr.f32.gmra.mxu0 %v9785
      %v9787 = vpop.f32.mrf.mxu0
      %v9788 = vadd.f32 %v9645, %v9787
      %v9789 = vpop.f32.mrf.mxu0
      %9790 = vmatprep.mubr.f32.mxu0 0.0
      %v9791 = vand.u32 %v9537, 4294901760
      %9792 = vmatmul.mubr.f32.gmra.mxu0 %v9791
      %v9793 = vpop.f32.mrf.mxu0
      %v9794 = vadd.f32 %v9655, %v9793
      %v9795 = vpop.f32.mrf.mxu0
      %9796 = vmatprep.mubr.f32.mxu0 0.0
      %v9797 = vand.u32 %v9540, 4294901760
      %9798 = vmatmul.mubr.f32.gmra.mxu0 %v9797
      %v9799 = vpop.f32.mrf.mxu0
      %v9800 = vadd.f32 %v9665, %v9799
      %v9801 = vpop.f32.mrf.mxu0
      %9802 = vmatprep.mubr.f32.mxu0 0.0
      %v9803 = vand.u32 %v9543, 4294901760
      %9804 = vmatmul.mubr.f32.gmra.mxu0 %v9803
      %v9805 = vpop.f32.mrf.mxu0
      %v9806 = vadd.f32 %v9675, %v9805
      %v9807 = vpop.f32.mrf.mxu0
      %9808 = vmatprep.mubr.f32.mxu0 0.0
      %v9809 = vand.u32 %v9546, 4294901760
      %9810 = vmatmul.mubr.f32.gmra.mxu0 %v9809
      %v9811 = vpop.f32.mrf.mxu0
      %v9812 = vadd.f32 %v9685, %v9811
      %v9813 = vpop.f32.mrf.mxu0
      %9814 = vmatprep.mubr.f32.mxu0 0.0
      %v9815 = vand.u32 %v9549, 4294901760
      %9816 = vmatmul.mubr.f32.gmra.mxu0 %v9815
      %v9817 = vpop.f32.mrf.mxu0
      %v9818 = vadd.f32 %v9695, %v9817
      %v9819 = vpop.f32.mrf.mxu0
      %9820 = vdwg.mxu0
      %9821 = vmatprep.subr.mxu0 0.0
      %9822 = vmatpush1.msra.mxu0 0.0
      %9823 = vmatprep.subr.mxu0 0.0
      %9824 = vmatpush1.msra.mxu0 0.0
      %9825 = vmatprep.subr.mxu0 0.0
      %9826 = vmatpush1.msra.mxu0 0.0
      %9827 = vmatprep.subr.mxu0 0.0
      %9828 = vmatpush1.msra.mxu0 0.0
      %9829 = vmatprep.subr.mxu0 0.0
      %9830 = vmatpush1.msra.mxu0 0.0
      %9831 = vmatprep.subr.mxu0 0.0
      %9832 = vmatpush1.msra.mxu0 0.0
      %9833 = vmatprep.subr.mxu0 0.0
      %9834 = vmatpush1.msra.mxu0 0.0
      %9835 = vmatprep.subr.mxu0 0.0
      %9836 = vmatpush1.msra.mxu0 0.0
      %9837 = vmatprep.subr.mxu0 0.0
      %9838 = vmatpush1.msra.mxu0 0.0
      %9839 = vmatprep.subr.mxu0 0.0
      %9840 = vmatpush1.msra.mxu0 0.0
      %9841 = vmatprep.subr.mxu0 0.0
      %9842 = vmatpush1.msra.mxu0 0.0
      %9843 = vmatprep.subr.mxu0 0.0
      %9844 = vmatpush1.msra.mxu0 0.0
      %9845 = vmatprep.subr.mxu0 0.0
      %9846 = vmatpush1.msra.mxu0 0.0
      %9847 = vmatprep.subr.mxu0 0.0
      %9848 = vmatpush1.msra.mxu0 0.0
      %9849 = vmatprep.subr.mxu0 0.0
      %v9850 = vand.u32 %v4606, 4294901760
      %v9851 = vsub.f32 %v4606, %v9850
      %9852 = vmatpush1.msra.mxu0 %v9851
      %9853 = vmatprep.subr.mxu0 0.0
      %v9854 = vand.u32 %v4605, 4294901760
      %v9855 = vsub.f32 %v4605, %v9854
      %9856 = vmatpush1.msra.mxu0 %v9855
      %9857 = vmatprep.subr.mxu0 0.0
      %9858 = vmatpush2.msra.mxu0 0.0
      %9859 = vmatprep.subr.mxu0 0.0
      %9860 = vmatpush2.msra.mxu0 0.0
      %9861 = vmatprep.subr.mxu0 0.0
      %9862 = vmatpush2.msra.mxu0 0.0
      %9863 = vmatprep.subr.mxu0 0.0
      %9864 = vmatpush2.msra.mxu0 0.0
      %9865 = vmatprep.subr.mxu0 0.0
      %9866 = vmatpush2.msra.mxu0 0.0
      %9867 = vmatprep.subr.mxu0 0.0
      %9868 = vmatpush2.msra.mxu0 0.0
      %9869 = vmatprep.subr.mxu0 0.0
      %9870 = vmatpush2.msra.mxu0 0.0
      %9871 = vmatprep.subr.mxu0 0.0
      %9872 = vmatpush2.msra.mxu0 0.0
      %9873 = vmatprep.subr.mxu0 0.0
      %9874 = vmatpush2.msra.mxu0 0.0
      %9875 = vmatprep.subr.mxu0 0.0
      %9876 = vmatpush2.msra.mxu0 0.0
      %9877 = vmatprep.subr.mxu0 0.0
      %9878 = vmatpush2.msra.mxu0 0.0
      %9879 = vmatprep.subr.mxu0 0.0
      %9880 = vmatpush2.msra.mxu0 0.0
      %9881 = vmatprep.subr.mxu0 0.0
      %9882 = vmatpush2.msra.mxu0 0.0
      %9883 = vmatprep.subr.mxu0 0.0
      %9884 = vmatpush2.msra.mxu0 0.0
      %9885 = vmatprep.subr.mxu0 0.0
      %9886 = vmatpush2.msra.mxu0 0.0
      %9887 = vmatprep.subr.mxu0 0.0
      %9888 = vmatpush2.msra.mxu0 0.0
      %9889 = vmatprep.mubr.f32.mxu0 0.0
      %v9890 = vand.u32 %v9528, 4294901760
      %v9891 = vsub.f32 %v9528, %v9890
      %9892 = vmatmul.mubr.f32.gmra.mxu0 %v9891
      %v9893 = vpop.f32.mrf.mxu0
      %v9894 = vadd.f32 %v9776, %v9893
      %v9895 = vpop.f32.mrf.mxu0
      %9896 = vmatprep.mubr.f32.mxu0 0.0
      %v9897 = vand.u32 %v9531, 4294901760
      %v9898 = vsub.f32 %v9531, %v9897
      %9899 = vmatmul.mubr.f32.gmra.mxu0 %v9898
      %v9900 = vpop.f32.mrf.mxu0
      %v9901 = vadd.f32 %v9782, %v9900
      %v9902 = vpop.f32.mrf.mxu0
      %9903 = vmatprep.mubr.f32.mxu0 0.0
      %v9904 = vand.u32 %v9534, 4294901760
      %v9905 = vsub.f32 %v9534, %v9904
      %9906 = vmatmul.mubr.f32.gmra.mxu0 %v9905
      %v9907 = vpop.f32.mrf.mxu0
      %v9908 = vadd.f32 %v9788, %v9907
      %v9909 = vpop.f32.mrf.mxu0
      %9910 = vmatprep.mubr.f32.mxu0 0.0
      %v9911 = vand.u32 %v9537, 4294901760
      %v9912 = vsub.f32 %v9537, %v9911
      %9913 = vmatmul.mubr.f32.gmra.mxu0 %v9912
      %v9914 = vpop.f32.mrf.mxu0
      %v9915 = vadd.f32 %v9794, %v9914
      %v9916 = vpop.f32.mrf.mxu0
      %9917 = vmatprep.mubr.f32.mxu0 0.0
      %v9918 = vand.u32 %v9540, 4294901760
      %v9919 = vsub.f32 %v9540, %v9918
      %9920 = vmatmul.mubr.f32.gmra.mxu0 %v9919
      %v9921 = vpop.f32.mrf.mxu0
      %v9922 = vadd.f32 %v9800, %v9921
      %v9923 = vpop.f32.mrf.mxu0
      %9924 = vmatprep.mubr.f32.mxu0 0.0
      %v9925 = vand.u32 %v9543, 4294901760
      %v9926 = vsub.f32 %v9543, %v9925
      %9927 = vmatmul.mubr.f32.gmra.mxu0 %v9926
      %v9928 = vpop.f32.mrf.mxu0
      %v9929 = vadd.f32 %v9806, %v9928
      %v9930 = vpop.f32.mrf.mxu0
      %9931 = vmatprep.mubr.f32.mxu0 0.0
      %v9932 = vand.u32 %v9546, 4294901760
      %v9933 = vsub.f32 %v9546, %v9932
      %9934 = vmatmul.mubr.f32.gmra.mxu0 %v9933
      %v9935 = vpop.f32.mrf.mxu0
      %v9936 = vadd.f32 %v9812, %v9935
      %v9937 = vpop.f32.mrf.mxu0
      %9938 = vmatprep.mubr.f32.mxu0 0.0
      %v9939 = vand.u32 %v9549, 4294901760
      %v9940 = vsub.f32 %v9549, %v9939
      %9941 = vmatmul.mubr.f32.gmra.mxu0 %v9940
      %v9942 = vpop.f32.mrf.mxu0
      %v9943 = vadd.f32 %v9818, %v9942
      %v9944 = vpop.f32.mrf.mxu0
      %9945 = vdwg.mxu0
      %9946 = vmatprep.subr.mxu0 0.0
      %9947 = vmatpush1.msra.mxu0 0.0
      %9948 = vmatprep.subr.mxu0 0.0
      %9949 = vmatpush1.msra.mxu0 0.0
      %9950 = vmatprep.subr.mxu0 0.0
      %9951 = vmatpush1.msra.mxu0 0.0
      %9952 = vmatprep.subr.mxu0 0.0
      %9953 = vmatpush1.msra.mxu0 0.0
      %9954 = vmatprep.subr.mxu0 0.0
      %9955 = vmatpush1.msra.mxu0 0.0
      %9956 = vmatprep.subr.mxu0 0.0
      %9957 = vmatpush1.msra.mxu0 0.0
      %9958 = vmatprep.subr.mxu0 0.0
      %9959 = vmatpush1.msra.mxu0 0.0
      %9960 = vmatprep.subr.mxu0 0.0
      %9961 = vmatpush1.msra.mxu0 0.0
      %9962 = vmatprep.subr.mxu0 0.0
      %9963 = vmatpush1.msra.mxu0 0.0
      %9964 = vmatprep.subr.mxu0 0.0
      %9965 = vmatpush1.msra.mxu0 0.0
      %9966 = vmatprep.subr.mxu0 0.0
      %9967 = vmatpush1.msra.mxu0 0.0
      %9968 = vmatprep.subr.mxu0 0.0
      %9969 = vmatpush1.msra.mxu0 0.0
      %9970 = vmatprep.subr.mxu0 0.0
      %9971 = vmatpush1.msra.mxu0 0.0
      %9972 = vmatprep.subr.mxu0 0.0
      %9973 = vmatpush1.msra.mxu0 0.0
      %9974 = vmatprep.subr.mxu0 0.0
      %v9975 = vand.u32 %v4606, 4294901760
      %9976 = vmatpush1.msra.mxu0 %v9975
      %9977 = vmatprep.subr.mxu0 0.0
      %v9978 = vand.u32 %v4605, 4294901760
      %9979 = vmatpush1.msra.mxu0 %v9978
      %9980 = vmatprep.subr.mxu0 0.0
      %9981 = vmatpush2.msra.mxu0 0.0
      %9982 = vmatprep.subr.mxu0 0.0
      %9983 = vmatpush2.msra.mxu0 0.0
      %9984 = vmatprep.subr.mxu0 0.0
      %9985 = vmatpush2.msra.mxu0 0.0
      %9986 = vmatprep.subr.mxu0 0.0
      %9987 = vmatpush2.msra.mxu0 0.0
      %9988 = vmatprep.subr.mxu0 0.0
      %9989 = vmatpush2.msra.mxu0 0.0
      %9990 = vmatprep.subr.mxu0 0.0
      %9991 = vmatpush2.msra.mxu0 0.0
      %9992 = vmatprep.subr.mxu0 0.0
      %9993 = vmatpush2.msra.mxu0 0.0
      %9994 = vmatprep.subr.mxu0 0.0
      %9995 = vmatpush2.msra.mxu0 0.0
      %9996 = vmatprep.subr.mxu0 0.0
      %9997 = vmatpush2.msra.mxu0 0.0
      %9998 = vmatprep.subr.mxu0 0.0
      %9999 = vmatpush2.msra.mxu0 0.0
      %10000 = vmatprep.subr.mxu0 0.0
      %10001 = vmatpush2.msra.mxu0 0.0
      %10002 = vmatprep.subr.mxu0 0.0
      %10003 = vmatpush2.msra.mxu0 0.0
      %10004 = vmatprep.subr.mxu0 0.0
      %10005 = vmatpush2.msra.mxu0 0.0
      %10006 = vmatprep.subr.mxu0 0.0
      %10007 = vmatpush2.msra.mxu0 0.0
      %10008 = vmatprep.subr.mxu0 0.0
      %10009 = vmatpush2.msra.mxu0 0.0
      %10010 = vmatprep.subr.mxu0 0.0
      %10011 = vmatpush2.msra.mxu0 0.0
      %10012 = vmatprep.mubr.f32.mxu0 0.0
      %v10013 = vand.u32 %v9528, 4294901760
      %v10014 = vsub.f32 %v9528, %v10013
      %v10015 = vand.u32 %v10014, 4294901760
      %10016 = vmatmul.mubr.f32.gmra.mxu0 %v10015
      %v10017 = vpop.f32.mrf.mxu0
      %v10018 = vadd.f32 %v9894, %v10017
      %v10019 = vpop.f32.mrf.mxu0
      %10020 = vmatprep.mubr.f32.mxu0 0.0
      %v10021 = vand.u32 %v9531, 4294901760
      %v10022 = vsub.f32 %v9531, %v10021
      %v10023 = vand.u32 %v10022, 4294901760
      %10024 = vmatmul.mubr.f32.gmra.mxu0 %v10023
      %v10025 = vpop.f32.mrf.mxu0
      %v10026 = vadd.f32 %v9901, %v10025
      %v10027 = vpop.f32.mrf.mxu0
      %10028 = vmatprep.mubr.f32.mxu0 0.0
      %v10029 = vand.u32 %v9534, 4294901760
      %v10030 = vsub.f32 %v9534, %v10029
      %v10031 = vand.u32 %v10030, 4294901760
      %10032 = vmatmul.mubr.f32.gmra.mxu0 %v10031
      %v10033 = vpop.f32.mrf.mxu0
      %v10034 = vadd.f32 %v9908, %v10033
      %v10035 = vpop.f32.mrf.mxu0
      %10036 = vmatprep.mubr.f32.mxu0 0.0
      %v10037 = vand.u32 %v9537, 4294901760
      %v10038 = vsub.f32 %v9537, %v10037
      %v10039 = vand.u32 %v10038, 4294901760
      %10040 = vmatmul.mubr.f32.gmra.mxu0 %v10039
      %v10041 = vpop.f32.mrf.mxu0
      %v10042 = vadd.f32 %v9915, %v10041
      %v10043 = vpop.f32.mrf.mxu0
      %10044 = vmatprep.mubr.f32.mxu0 0.0
      %v10045 = vand.u32 %v9540, 4294901760
      %v10046 = vsub.f32 %v9540, %v10045
      %v10047 = vand.u32 %v10046, 4294901760
      %10048 = vmatmul.mubr.f32.gmra.mxu0 %v10047
      %v10049 = vpop.f32.mrf.mxu0
      %v10050 = vadd.f32 %v9922, %v10049
      %v10051 = vpop.f32.mrf.mxu0
      %10052 = vmatprep.mubr.f32.mxu0 0.0
      %v10053 = vand.u32 %v9543, 4294901760
      %v10054 = vsub.f32 %v9543, %v10053
      %v10055 = vand.u32 %v10054, 4294901760
      %10056 = vmatmul.mubr.f32.gmra.mxu0 %v10055
      %v10057 = vpop.f32.mrf.mxu0
      %v10058 = vadd.f32 %v9929, %v10057
      %v10059 = vpop.f32.mrf.mxu0
      %10060 = vmatprep.mubr.f32.mxu0 0.0
      %v10061 = vand.u32 %v9546, 4294901760
      %v10062 = vsub.f32 %v9546, %v10061
      %v10063 = vand.u32 %v10062, 4294901760
      %10064 = vmatmul.mubr.f32.gmra.mxu0 %v10063
      %v10065 = vpop.f32.mrf.mxu0
      %v10066 = vadd.f32 %v9936, %v10065
      %v10067 = vpop.f32.mrf.mxu0
      %10068 = vmatprep.mubr.f32.mxu0 0.0
      %v10069 = vand.u32 %v9549, 4294901760
      %v10070 = vsub.f32 %v9549, %v10069
      %v10071 = vand.u32 %v10070, 4294901760
      %10072 = vmatmul.mubr.f32.gmra.mxu0 %v10071
      %v10073 = vpop.f32.mrf.mxu0
      %v10074 = vadd.f32 %v9943, %v10073
      %v10075 = vpop.f32.mrf.mxu0
      %10076 = vdwg.mxu0
      %10077 = vmatprep.subr.mxu0 0.0
      %10078 = vmatpush1.msra.mxu0 0.0
      %10079 = vmatprep.subr.mxu0 0.0
      %10080 = vmatpush1.msra.mxu0 0.0
      %10081 = vmatprep.subr.mxu0 0.0
      %10082 = vmatpush1.msra.mxu0 0.0
      %10083 = vmatprep.subr.mxu0 0.0
      %10084 = vmatpush1.msra.mxu0 0.0
      %10085 = vmatprep.subr.mxu0 0.0
      %10086 = vmatpush1.msra.mxu0 0.0
      %10087 = vmatprep.subr.mxu0 0.0
      %10088 = vmatpush1.msra.mxu0 0.0
      %10089 = vmatprep.subr.mxu0 0.0
      %10090 = vmatpush1.msra.mxu0 0.0
      %10091 = vmatprep.subr.mxu0 0.0
      %10092 = vmatpush1.msra.mxu0 0.0
      %10093 = vmatprep.subr.mxu0 0.0
      %10094 = vmatpush1.msra.mxu0 0.0
      %10095 = vmatprep.subr.mxu0 0.0
      %10096 = vmatpush1.msra.mxu0 0.0
      %10097 = vmatprep.subr.mxu0 0.0
      %10098 = vmatpush1.msra.mxu0 0.0
      %10099 = vmatprep.subr.mxu0 0.0
      %10100 = vmatpush1.msra.mxu0 0.0
      %10101 = vmatprep.subr.mxu0 0.0
      %10102 = vmatpush1.msra.mxu0 0.0
      %10103 = vmatprep.subr.mxu0 0.0
      %10104 = vmatpush1.msra.mxu0 0.0
      %10105 = vmatprep.subr.mxu0 0.0
      %v10106 = vand.u32 %v4606, 4294901760
      %v10107 = vsub.f32 %v4606, %v10106
      %v10108 = vand.u32 %v10107, 4294901760
      %10109 = vmatpush1.msra.mxu0 %v10108
      %10110 = vmatprep.subr.mxu0 0.0
      %v10111 = vand.u32 %v4605, 4294901760
      %v10112 = vsub.f32 %v4605, %v10111
      %v10113 = vand.u32 %v10112, 4294901760
      %10114 = vmatpush1.msra.mxu0 %v10113
      %10115 = vmatprep.subr.mxu0 0.0
      %10116 = vmatpush2.msra.mxu0 0.0
      %10117 = vmatprep.subr.mxu0 0.0
      %10118 = vmatpush2.msra.mxu0 0.0
      %10119 = vmatprep.subr.mxu0 0.0
      %10120 = vmatpush2.msra.mxu0 0.0
      %10121 = vmatprep.subr.mxu0 0.0
      %10122 = vmatpush2.msra.mxu0 0.0
      %10123 = vmatprep.subr.mxu0 0.0
      %10124 = vmatpush2.msra.mxu0 0.0
      %10125 = vmatprep.subr.mxu0 0.0
      %10126 = vmatpush2.msra.mxu0 0.0
      %10127 = vmatprep.subr.mxu0 0.0
      %10128 = vmatpush2.msra.mxu0 0.0
      %10129 = vmatprep.subr.mxu0 0.0
      %10130 = vmatpush2.msra.mxu0 0.0
      %10131 = vmatprep.subr.mxu0 0.0
      %10132 = vmatpush2.msra.mxu0 0.0
      %10133 = vmatprep.subr.mxu0 0.0
      %10134 = vmatpush2.msra.mxu0 0.0
      %10135 = vmatprep.subr.mxu0 0.0
      %10136 = vmatpush2.msra.mxu0 0.0
      %10137 = vmatprep.subr.mxu0 0.0
      %10138 = vmatpush2.msra.mxu0 0.0
      %10139 = vmatprep.subr.mxu0 0.0
      %10140 = vmatpush2.msra.mxu0 0.0
      %10141 = vmatprep.subr.mxu0 0.0
      %10142 = vmatpush2.msra.mxu0 0.0
      %10143 = vmatprep.subr.mxu0 0.0
      %10144 = vmatpush2.msra.mxu0 0.0
      %10145 = vmatprep.subr.mxu0 0.0
      %10146 = vmatpush2.msra.mxu0 0.0
      %10147 = vmatprep.mubr.f32.mxu0 0.0
      %v10148 = vand.u32 %v9528, 4294901760
      %10149 = vmatmul.mubr.f32.gmra.mxu0 %v10148
      %v10150 = vpop.f32.mrf.mxu0
      %v10151 = vadd.f32 %v10018, %v10150
      %v10152 = vpop.f32.mrf.mxu0
      %10153 = vmatprep.mubr.f32.mxu0 0.0
      %v10154 = vand.u32 %v9531, 4294901760
      %10155 = vmatmul.mubr.f32.gmra.mxu0 %v10154
      %v10156 = vpop.f32.mrf.mxu0
      %v10157 = vadd.f32 %v10026, %v10156
      %v10158 = vpop.f32.mrf.mxu0
      %10159 = vmatprep.mubr.f32.mxu0 0.0
      %v10160 = vand.u32 %v9534, 4294901760
      %10161 = vmatmul.mubr.f32.gmra.mxu0 %v10160
      %v10162 = vpop.f32.mrf.mxu0
      %v10163 = vadd.f32 %v10034, %v10162
      %v10164 = vpop.f32.mrf.mxu0
      %10165 = vmatprep.mubr.f32.mxu0 0.0
      %v10166 = vand.u32 %v9537, 4294901760
      %10167 = vmatmul.mubr.f32.gmra.mxu0 %v10166
      %v10168 = vpop.f32.mrf.mxu0
      %v10169 = vadd.f32 %v10042, %v10168
      %v10170 = vpop.f32.mrf.mxu0
      %10171 = vmatprep.mubr.f32.mxu0 0.0
      %v10172 = vand.u32 %v9540, 4294901760
      %10173 = vmatmul.mubr.f32.gmra.mxu0 %v10172
      %v10174 = vpop.f32.mrf.mxu0
      %v10175 = vadd.f32 %v10050, %v10174
      %v10176 = vpop.f32.mrf.mxu0
      %10177 = vmatprep.mubr.f32.mxu0 0.0
      %v10178 = vand.u32 %v9543, 4294901760
      %10179 = vmatmul.mubr.f32.gmra.mxu0 %v10178
      %v10180 = vpop.f32.mrf.mxu0
      %v10181 = vadd.f32 %v10058, %v10180
      %v10182 = vpop.f32.mrf.mxu0
      %10183 = vmatprep.mubr.f32.mxu0 0.0
      %v10184 = vand.u32 %v9546, 4294901760
      %10185 = vmatmul.mubr.f32.gmra.mxu0 %v10184
      %v10186 = vpop.f32.mrf.mxu0
      %v10187 = vadd.f32 %v10066, %v10186
      %v10188 = vpop.f32.mrf.mxu0
      %10189 = vmatprep.mubr.f32.mxu0 0.0
      %v10190 = vand.u32 %v9549, 4294901760
      %10191 = vmatmul.mubr.f32.gmra.mxu0 %v10190
      %v10192 = vpop.f32.mrf.mxu0
      %v10193 = vadd.f32 %v10074, %v10192
      %v10194 = vpop.f32.mrf.mxu0
      %10195 = vdwg.mxu0
      %10196 = vmatprep.subr.mxu0 0.0
      %10197 = vmatpush1.msra.mxu0 0.0
      %10198 = vmatprep.subr.mxu0 0.0
      %10199 = vmatpush1.msra.mxu0 0.0
      %10200 = vmatprep.subr.mxu0 0.0
      %10201 = vmatpush1.msra.mxu0 0.0
      %10202 = vmatprep.subr.mxu0 0.0
      %10203 = vmatpush1.msra.mxu0 0.0
      %10204 = vmatprep.subr.mxu0 0.0
      %10205 = vmatpush1.msra.mxu0 0.0
      %10206 = vmatprep.subr.mxu0 0.0
      %10207 = vmatpush1.msra.mxu0 0.0
      %10208 = vmatprep.subr.mxu0 0.0
      %10209 = vmatpush1.msra.mxu0 0.0
      %10210 = vmatprep.subr.mxu0 0.0
      %10211 = vmatpush1.msra.mxu0 0.0
      %10212 = vmatprep.subr.mxu0 0.0
      %10213 = vmatpush1.msra.mxu0 0.0
      %10214 = vmatprep.subr.mxu0 0.0
      %10215 = vmatpush1.msra.mxu0 0.0
      %10216 = vmatprep.subr.mxu0 0.0
      %10217 = vmatpush1.msra.mxu0 0.0
      %10218 = vmatprep.subr.mxu0 0.0
      %10219 = vmatpush1.msra.mxu0 0.0
      %10220 = vmatprep.subr.mxu0 0.0
      %10221 = vmatpush1.msra.mxu0 0.0
      %10222 = vmatprep.subr.mxu0 0.0
      %10223 = vmatpush1.msra.mxu0 0.0
      %10224 = vmatprep.subr.mxu0 0.0
      %v10225 = vand.u32 %v4606, 4294901760
      %10226 = vmatpush1.msra.mxu0 %v10225
      %10227 = vmatprep.subr.mxu0 0.0
      %v10228 = vand.u32 %v4605, 4294901760
      %10229 = vmatpush1.msra.mxu0 %v10228
      %10230 = vmatprep.subr.mxu0 0.0
      %10231 = vmatpush2.msra.mxu0 0.0
      %10232 = vmatprep.subr.mxu0 0.0
      %10233 = vmatpush2.msra.mxu0 0.0
      %10234 = vmatprep.subr.mxu0 0.0
      %10235 = vmatpush2.msra.mxu0 0.0
      %10236 = vmatprep.subr.mxu0 0.0
      %10237 = vmatpush2.msra.mxu0 0.0
      %10238 = vmatprep.subr.mxu0 0.0
      %10239 = vmatpush2.msra.mxu0 0.0
      %10240 = vmatprep.subr.mxu0 0.0
      %10241 = vmatpush2.msra.mxu0 0.0
      %10242 = vmatprep.subr.mxu0 0.0
      %10243 = vmatpush2.msra.mxu0 0.0
      %10244 = vmatprep.subr.mxu0 0.0
      %10245 = vmatpush2.msra.mxu0 0.0
      %10246 = vmatprep.subr.mxu0 0.0
      %10247 = vmatpush2.msra.mxu0 0.0
      %10248 = vmatprep.subr.mxu0 0.0
      %10249 = vmatpush2.msra.mxu0 0.0
      %10250 = vmatprep.subr.mxu0 0.0
      %10251 = vmatpush2.msra.mxu0 0.0
      %10252 = vmatprep.subr.mxu0 0.0
      %10253 = vmatpush2.msra.mxu0 0.0
      %10254 = vmatprep.subr.mxu0 0.0
      %10255 = vmatpush2.msra.mxu0 0.0
      %10256 = vmatprep.subr.mxu0 0.0
      %10257 = vmatpush2.msra.mxu0 0.0
      %10258 = vmatprep.subr.mxu0 0.0
      %10259 = vmatpush2.msra.mxu0 0.0
      %10260 = vmatprep.subr.mxu0 0.0
      %10261 = vmatpush2.msra.mxu0 0.0
      %10262 = vmatprep.mubr.f32.mxu0 0.0
      %v10263 = vand.u32 %v9528, 4294901760
      %10264 = vmatmul.mubr.f32.gmra.mxu0 %v10263
      %v10265 = vpop.f32.mrf.mxu0
      %v10266 = vadd.f32 %v10151, %v10265
      %v10267 = vpop.f32.mrf.mxu0
      %10268 = vmatprep.mubr.f32.mxu0 0.0
      %v10269 = vand.u32 %v9531, 4294901760
      %10270 = vmatmul.mubr.f32.gmra.mxu0 %v10269
      %v10271 = vpop.f32.mrf.mxu0
      %v10272 = vadd.f32 %v10157, %v10271
      %v10273 = vpop.f32.mrf.mxu0
      %10274 = vmatprep.mubr.f32.mxu0 0.0
      %v10275 = vand.u32 %v9534, 4294901760
      %10276 = vmatmul.mubr.f32.gmra.mxu0 %v10275
      %v10277 = vpop.f32.mrf.mxu0
      %v10278 = vadd.f32 %v10163, %v10277
      %v10279 = vpop.f32.mrf.mxu0
      %10280 = vmatprep.mubr.f32.mxu0 0.0
      %v10281 = vand.u32 %v9537, 4294901760
      %10282 = vmatmul.mubr.f32.gmra.mxu0 %v10281
      %v10283 = vpop.f32.mrf.mxu0
      %v10284 = vadd.f32 %v10169, %v10283
      %v10285 = vpop.f32.mrf.mxu0
      %10286 = vmatprep.mubr.f32.mxu0 0.0
      %v10287 = vand.u32 %v9540, 4294901760
      %10288 = vmatmul.mubr.f32.gmra.mxu0 %v10287
      %v10289 = vpop.f32.mrf.mxu0
      %v10290 = vadd.f32 %v10175, %v10289
      %v10291 = vpop.f32.mrf.mxu0
      %10292 = vmatprep.mubr.f32.mxu0 0.0
      %v10293 = vand.u32 %v9543, 4294901760
      %10294 = vmatmul.mubr.f32.gmra.mxu0 %v10293
      %v10295 = vpop.f32.mrf.mxu0
      %v10296 = vadd.f32 %v10181, %v10295
      %v10297 = vpop.f32.mrf.mxu0
      %10298 = vmatprep.mubr.f32.mxu0 0.0
      %v10299 = vand.u32 %v9546, 4294901760
      %10300 = vmatmul.mubr.f32.gmra.mxu0 %v10299
      %v10301 = vpop.f32.mrf.mxu0
      %v10302 = vadd.f32 %v10187, %v10301
      %v10303 = vpop.f32.mrf.mxu0
      %10304 = vmatprep.mubr.f32.mxu0 0.0
      %v10305 = vand.u32 %v9549, 4294901760
      %10306 = vmatmul.mubr.f32.gmra.mxu0 %v10305
      %v10307 = vpop.f32.mrf.mxu0
      %v10308 = vadd.f32 %v10193, %v10307
      %v10309 = vpop.f32.mrf.mxu0
      %10310 = vdwg.mxu0
      %v10311 = vadd.f32 %v306, %v10266
      %v10312 = vadd.f32 %v307, %v10272
      %v10313 = vadd.f32 %v308, %v10278
      %v10314 = vadd.f32 %v309, %v10284
      %v10315 = vadd.f32 %v310, %v10290
      %v10316 = vadd.f32 %v311, %v10296
      %v10317 = vadd.f32 %v312, %v10302
      %v10318 = vadd.f32 %v313, %v10308
      %v10319 = vld [vmem:[%s7] sm:$0x1]
      %v10321 = vlaneseq
      %v10322 = vshrl.u32 %v10321, 7
      %v10323 = vsub.s32 0, %v10322
      %v10324 = vrot.slane %v10319, %v10323
      %v10326 = vadd.f32 %v10311, %v10324
      %v10327 = vadd.f32 %v10312, %v10324
      %v10328 = vadd.f32 %v10313, %v10324
      %v10329 = vadd.f32 %v10314, %v10324
      %v10330 = vadd.f32 %v10315, %v10324
      %v10331 = vadd.f32 %v10316, %v10324
      %v10332 = vadd.f32 %v10317, %v10324
      %v10333 = vadd.f32 %v10318, %v10324
      %10334 = vst.msk [vmem:[%s305] sm:$0xff] %vm314, %v10326
      %10335 = vst.msk [vmem:[%s305 + $0x8] sm:$0xff] %vm314, %v10327
      %10336 = vst.msk [vmem:[%s305 + $0x10] sm:$0xff] %vm314, %v10328
      %10337 = vst.msk [vmem:[%s305 + $0x18] sm:$0xff] %vm314, %v10329
      %10338 = vst.msk [vmem:[%s305 + $0x20] sm:$0xff] %vm314, %v10330
      %10339 = vst.msk [vmem:[%s305 + $0x28] sm:$0xff] %vm314, %v10331
      %10340 = vst.msk [vmem:[%s305 + $0x30] sm:$0xff] %vm314, %v10332
      %10341 = vst.msk [vmem:[%s305 + $0x38] sm:$0xff] %vm314, %v10333
      %p10342 = scmp.lt.s32.totalorder %s19, 1
      %s10343 = scalar_select %p10342, %s19, 1
      %s10344 = smul.addr %s10343, 8
      %s10345 = smul.addr %s10344, 8
      %s10346 = scalar_lea.vmem %s8, %s10345
      // Predicated region
      $region53: #{tpu_custom_call.1} parent=51 // pred_check
        %p10347 = pneg %p210
      $region54: #{tpu_custom_call.1} parent=51 // pred_check_branch
        %10349 = sbr.rel (%p10347) target = $region56
      $region55: #{tpu_custom_call.1} parent=51 // pred_region
        _
      $region56: #{tpu_custom_call.1} parent=51 // pred_fallthru
        _
    $region52: #{tpu_custom_call.1} parent=5 // pred_fallthru
      _
    %p10350 = scmp.le.s32.totalorder 2, %s14
    // Predicated region
    $region57: #{tpu_custom_call.1} parent=5 // pred_check
      %p10351 = pneg %p10350
    $region58: #{tpu_custom_call.1} parent=5 // pred_check_branch
      %10353 = sbr.rel (%p10351) target = $region60
    $region59: #{tpu_custom_call.1} parent=5 // pred_region
      %s10354 = ssub.s32 %s14, 2
      // Predicated region
      $region61: #{tpu_custom_call.1} parent=59 // pred_check
        %p10355 = pneg %p216
      $region62: #{tpu_custom_call.1} parent=59 // pred_check_branch
        %10357 = sbr.rel (%p10355) target = $region64
      $region63: #{tpu_custom_call.1} parent=59 // pred_region
        %p10358 = scmp.lt.s32.totalorder %s20, 1
        %s10359 = scalar_select %p10358, %s20, 1
        %s10360 = smul.addr %s10359, 8
        %s10361 = smul.addr %s10360, 8
        %s10362 = scalar_lea.vmem %s8, %s10361
      $region64: #{tpu_custom_call.1} parent=59 // pred_fallthru
        _
    $region60: #{tpu_custom_call.1} parent=5 // pred_fallthru
      _
  $region6: #{tpu_custom_call.1} parent=0 // loop_footer
    %s18 = sadd.s32 1, %s14
  $region7: #{tpu_custom_call.1} parent=0 // loop_footer_branch
    %13 = sbr.rel target = $region3
  $region8: #{tpu_custom_call.1} parent=0 // loop_exit
    _

</llo_original>
